<compile_context>
chip_gen: v7x
topology: tpu7x:2x2x1
jax: 0.10.0
libtpu: 0.0.40
codegen_flags: <defaults>
</compile_context>

<pallas_src>
import numpy as np

import jax
import jax.numpy as jnp
from jax.experimental import pallas as pl
from jax.experimental.pallas import tpu as pltpu


def _conv_out(n: int) -> int:
    return (n - 3) // 2 + 1


# ----------------------------------------------------------------------------
# Fused forward kernel: 4 x (conv + bias + ReLU) -> flatten -> fc1 -> ReLU -> fc2
# ----------------------------------------------------------------------------
def _fused_forward_kernel(*refs):
    x_ref = refs[0]                       # (H, Cin*W) input activation, lane-dense
    conv_refs = refs[1:13]                # (S3d, Q3d, B2d) x 4 layers
    wf1_ref, bf1_ref, wf2_ref, bf2_ref = refs[13:17]
    o_ref = refs[17]                      # (1, 1) output

    x = x_ref[...]
    for layer in range(4):
        s_ref, q_ref, b_ref = conv_refs[3 * layer: 3 * layer + 3]
        acc = None
        # Height taps; width taps + channel mixing are folded into Q (pure MXU work).
        for kh in range(3):
            t = jnp.dot(s_ref[kh], x, preferred_element_type=jnp.float32)    # (Ho, Cin*W)
            p = jnp.dot(t, q_ref[kh], preferred_element_type=jnp.float32)    # (Ho, Cout*Wo)
            acc = p if acc is None else acc + p
        # conv bias -> dropout (identity, eval) -> ReLU
        x = jnp.maximum(acc + b_ref[...], 0.0)

    # x is now conv4's output in layout (Ho4, Cout*Wo4) = (4, 64).
    # fc1 over the torch.flatten(NCHW) order (baked into wf1), then dropout(id) -> ReLU.
    h = bf1_ref[...]                                                         # (1, 10)
    for r in range(wf1_ref.shape[0]):
        h = h + jnp.dot(x[r:r + 1, :], wf1_ref[r], preferred_element_type=jnp.float32)
    h = jnp.maximum(h, 0.0)
    # fc2 (no relu)
    o_ref[...] = jnp.dot(h, wf2_ref[...], preferred_element_type=jnp.float32) + bf2_ref[...]


# ----------------------------------------------------------------------------
# Forward wrapper: one pallas_call, everything VMEM-resident, no pipelining.
# ----------------------------------------------------------------------------
def regression_net_forward(x_nchw, ops):
    n, c, h, w = x_nchw.shape
    assert n == 1, "torch.flatten merges the batch dim; RegressionNet implies batch=1"
    # The only per-forward XLA op: lay the raw input out as (H, Cin*W), col = ci*W + w.
    x2d = jnp.transpose(x_nchw[0], (1, 0, 2)).reshape(h, c * w)
    n_in = 1 + len(ops)
    out = pl.pallas_call(
        _fused_forward_kernel,
        out_shape=jax.ShapeDtypeStruct((1, 1), jnp.float32),
        in_specs=[pl.BlockSpec(memory_space=pltpu.MemorySpace.VMEM)] * n_in,
        out_specs=pl.BlockSpec(memory_space=pltpu.MemorySpace.VMEM),
        compiler_params=pltpu.CompilerParams(vmem_limit_bytes=32 * 1024 * 1024),
    )(x2d, *ops)
    return out.reshape(-1)                # shape (1,), like PyTorch's 1-D output


# ----------------------------------------------------------------------------
# One-time (init) operand preparation: fold conv weights + strides into matmul
# operands and permute fc1 weights into the kernel's layout.  Nothing here runs
# per forward pass.
# ----------------------------------------------------------------------------
def _build_conv_operands(w, b, H, W):
    w = np.asarray(w, np.float32)         # (Cout, Cin, 3, 3)
    b = np.asarray(b, np.float32)         # (Cout,)
    cout, cin, kh_, kw_ = w.shape
    assert (kh_, kw_) == (3, 3)
    Ho, Wo = _conv_out(H), _conv_out(W)

    # S[kh, ho, h] = 1 iff h == 2*ho + kh   (height stride-2 selection)
    S = np.zeros((3, Ho, H), np.float32)
    ho = np.arange(Ho)
    for kh in range(3):
        S[kh, ho, 2 * ho + kh] = 1.0

    # Q[kh, ci*W + 2*wo + kw, co*Wo + wo] = w[co, ci, kh, kw]  (width stride + channel mix)
    Q = np.zeros((3, cin * W, cout * Wo), np.float32)
    wo = np.arange(Wo)
    for kh in range(3):
        for kw in range(3):
            for ci in range(cin):
                for co in range(cout):
                    Q[kh, ci * W + 2 * wo + kw, co * Wo + wo] = w[co, ci, kh, kw]

    B = np.repeat(b, Wo)[None, :]         # (1, cout*Wo), col = co*Wo + wo
    return jnp.asarray(S), jnp.asarray(Q), jnp.asarray(B), Ho, Wo


def _build_fc_operands(fc1_w, fc1_b, fc2_w, fc2_b, cout, Ho, Wo):
    # torch.flatten on (1, cout, Ho, Wo): flat index i = co*(Ho*Wo) + h*Wo + w
    # kernel's conv4 output layout: x[h, co*Wo + w]
    fc1_w = np.asarray(fc1_w, np.float32)                       # (10, cout*Ho*Wo)
    wf1 = fc1_w.reshape(10, cout, Ho, Wo)                       # [j, co, h, w]
    wf1 = np.transpose(wf1, (2, 1, 3, 0)).reshape(Ho, cout * Wo, 10)  # [h, co*Wo + w, j]
    bf1 = np.asarray(fc1_b, np.float32)[None, :]                # (1, 10)
    wf2 = np.asarray(fc2_w, np.float32).T                       # (10, 1)
    bf2 = np.asarray(fc2_b, np.float32).reshape(1, 1)           # (1, 1)
    return jnp.asarray(wf1), jnp.asarray(bf1), jnp.asarray(wf2), jnp.asarray(bf2)


def prepare_forward_operands(params, in_h, in_w):
    ops = []
    h, w = in_h, in_w
    for i in (1, 2, 3, 4):
        S, Q, B, h, w = _build_conv_operands(params[f"conv{i}_w"], params[f"conv{i}_b"], h, w)
        ops += [S, Q, B]
    cout = params["conv4_w"].shape[0]
    ops += list(_build_fc_operands(params["fc1_w"], params["fc1_b"],
                                   params["fc2_w"], params["fc2_b"], cout, h, w))
    return ops


# ----------------------------------------------------------------------------
# Parameter init (matches the module's layer shapes for the small input).
# ----------------------------------------------------------------------------
def init_params(key, in_h, in_w):
    conv_depth = 16
    h, w = in_h, in_w
    for _ in range(4):
        h, w = _conv_out(h), _conv_out(w)
    fc1_in = conv_depth * h * w           # 90480 in the original full-size model

    keys = jax.random.split(key, 12)

    def dense_init(k, shape, fan_in):
        return (jax.random.normal(k, shape, jnp.float32) / jnp.sqrt(fan_in)).astype(jnp.float32)

    return {
        "conv1_w": dense_init(keys[0], (conv_depth, 3, 3, 3), 3 * 9),
        "conv1_b": dense_init(keys[1], (conv_depth,), 3 * 9),
        "conv2_w": dense_init(keys[2], (conv_depth, conv_depth, 3, 3), conv_depth * 9),
        "conv2_b": dense_init(keys[3], (conv_depth,), conv_depth * 9),
        "conv3_w": dense_init(keys[4], (conv_depth, conv_depth, 3, 3), conv_depth * 9),
        "conv3_b": dense_init(keys[5], (conv_depth,), conv_depth * 9),
        "conv4_w": dense_init(keys[6], (conv_depth, conv_depth, 3, 3), conv_depth * 9),
        "conv4_b": dense_init(keys[7], (conv_depth,), conv_depth * 9),
        "fc1_w": dense_init(keys[8], (10, fc1_in), fc1_in),
        "fc1_b": dense_init(keys[9], (10,), fc1_in),
        "fc2_w": dense_init(keys[10], (1, 10), 10),
        "fc2_b": dense_init(keys[11], (1,), 10),
    }


# ----------------------------------------------------------------------------
# Plain-JAX reference (matches the PyTorch forward in eval mode) for validation.
# ----------------------------------------------------------------------------
def regression_net_reference(x, params):
    hi = jax.lax.Precision.HIGHEST

    def conv_relu(x, w, b):
        y = jax.lax.conv_general_dilated(
            x, w, window_strides=(2, 2), padding="VALID",
            dimension_numbers=("NCHW", "OIHW", "NCHW"), precision=hi)
        return jax.nn.relu(y + b[None, :, None, None])

    x = conv_relu(x, params["conv1_w"], params["conv1_b"])
    x = conv_relu(x, params["conv2_w"], params["conv2_b"])
    x = conv_relu(x, params["conv3_w"], params["conv3_b"])
    x = conv_relu(x, params["conv4_w"], params["conv4_b"])
    flat = x.reshape(-1)                                         # torch.flatten (batch=1)
    h = jax.nn.relu(jnp.dot(params["fc1_w"], flat, precision=hi) + params["fc1_b"])
    return jnp.dot(params["fc2_w"], h, precision=hi) + params["fc2_b"]


if __name__ == "__main__":
    key = jax.random.PRNGKey(0)
    k_x, k_p = jax.random.split(key)

    # Small input consistent with the module; batch must be 1 (torch.flatten flattens batch).
    H = W = 79
    x = jax.random.normal(k_x, (1, 3, H, W), jnp.float32)
    params = init_params(k_p, H, W)
    ops = prepare_forward_operands(params, H, W)     # init-time only

    fwd = jax.jit(regression_net_forward)
    out = jax.block_until_ready(fwd(x, ops))
    assert out.shape == (1,) and out.dtype == jnp.float32

    ref = jax.block_until_ready(regression_net_reference(x, params))
    np.testing.assert_allclose(np.asarray(out), np.asarray(ref), rtol=2e-2, atol=2e-2)

    print("KERNEL_OK")
</pallas_src>

<mosaic_0001>
module attributes {stable_mosaic.version = 11 : i64} {
  func.func @_fused_forward_kernel(%arg0: memref<79x237xf32, #tpu.memory_space<vmem>>, %arg1: memref<3x39x79xf32, #tpu.memory_space<vmem>>, %arg2: memref<3x237x624xf32, #tpu.memory_space<vmem>>, %arg3: memref<1x624xf32, #tpu.memory_space<vmem>>, %arg4: memref<3x19x39xf32, #tpu.memory_space<vmem>>, %arg5: memref<3x624x304xf32, #tpu.memory_space<vmem>>, %arg6: memref<1x304xf32, #tpu.memory_space<vmem>>, %arg7: memref<3x9x19xf32, #tpu.memory_space<vmem>>, %arg8: memref<3x304x144xf32, #tpu.memory_space<vmem>>, %arg9: memref<1x144xf32, #tpu.memory_space<vmem>>, %arg10: memref<3x4x9xf32, #tpu.memory_space<vmem>>, %arg11: memref<3x144x64xf32, #tpu.memory_space<vmem>>, %arg12: memref<1x64xf32, #tpu.memory_space<vmem>>, %arg13: memref<4x64x10xf32, #tpu.memory_space<vmem>>, %arg14: memref<1x10xf32, #tpu.memory_space<vmem>>, %arg15: memref<10x1xf32, #tpu.memory_space<vmem>>, %arg16: memref<1x1xf32, #tpu.memory_space<vmem>>, %arg17: memref<1x1xf32, #tpu.memory_space<vmem>>) attributes {dimension_semantics = [], scalar_prefetch = 0 : i64, scratch_operands = 0 : i64, tpu.core_type = #tpu.core_type<tc>} {
    %c0 = arith.constant 0 : index
    %c0_0 = arith.constant 0 : index
    %0 = vector.load %arg0[%c0, %c0_0] : memref<79x237xf32, #tpu.memory_space<vmem>>, vector<79x237xf32>
    %c0_1 = arith.constant 0 : index
    %c0_2 = arith.constant 0 : index
    %c0_3 = arith.constant 0 : index
    %1 = vector.load %arg1[%c0_1, %c0_2, %c0_3] : memref<3x39x79xf32, #tpu.memory_space<vmem>>, vector<1x39x79xf32>
    %2 = vector.shape_cast %1 : vector<1x39x79xf32> to vector<39x79xf32>
    %cst = arith.constant dense<0.000000e+00> : vector<39x237xf32>
    %3 = tpu.matmul %2, %0, %cst {dimension_numbers = #tpu.dot_dimension_numbers<[1], [0], [0], [1], [0, 0, 1, 1], [], []>} : vector<39x79xf32>, vector<79x237xf32>, vector<39x237xf32> -> vector<39x237xf32>
    %c0_4 = arith.constant 0 : index
    %c0_5 = arith.constant 0 : index
    %c0_6 = arith.constant 0 : index
    %4 = vector.load %arg2[%c0_4, %c0_5, %c0_6] : memref<3x237x624xf32, #tpu.memory_space<vmem>>, vector<1x237x624xf32>
    %5 = vector.shape_cast %4 : vector<1x237x624xf32> to vector<237x624xf32>
    %cst_7 = arith.constant dense<0.000000e+00> : vector<39x624xf32>
    %6 = tpu.matmul %3, %5, %cst_7 {dimension_numbers = #tpu.dot_dimension_numbers<[1], [0], [0], [1], [0, 0, 1, 1], [], []>} : vector<39x237xf32>, vector<237x624xf32>, vector<39x624xf32> -> vector<39x624xf32>
    %c1 = arith.constant 1 : index
    %c0_8 = arith.constant 0 : index
    %c0_9 = arith.constant 0 : index
    %7 = vector.load %arg1[%c1, %c0_8, %c0_9] : memref<3x39x79xf32, #tpu.memory_space<vmem>>, vector<1x39x79xf32>
    %8 = vector.shape_cast %7 : vector<1x39x79xf32> to vector<39x79xf32>
    %cst_10 = arith.constant dense<0.000000e+00> : vector<39x237xf32>
    %9 = tpu.matmul %8, %0, %cst_10 {dimension_numbers = #tpu.dot_dimension_numbers<[1], [0], [0], [1], [0, 0, 1, 1], [], []>} : vector<39x79xf32>, vector<79x237xf32>, vector<39x237xf32> -> vector<39x237xf32>
    %c1_11 = arith.constant 1 : index
    %c0_12 = arith.constant 0 : index
    %c0_13 = arith.constant 0 : index
    %10 = vector.load %arg2[%c1_11, %c0_12, %c0_13] : memref<3x237x624xf32, #tpu.memory_space<vmem>>, vector<1x237x624xf32>
    %11 = vector.shape_cast %10 : vector<1x237x624xf32> to vector<237x624xf32>
    %cst_14 = arith.constant dense<0.000000e+00> : vector<39x624xf32>
    %12 = tpu.matmul %9, %11, %cst_14 {dimension_numbers = #tpu.dot_dimension_numbers<[1], [0], [0], [1], [0, 0, 1, 1], [], []>} : vector<39x237xf32>, vector<237x624xf32>, vector<39x624xf32> -> vector<39x624xf32>
    %13 = arith.addf %6, %12 : vector<39x624xf32>
    %c2 = arith.constant 2 : index
    %c0_15 = arith.constant 0 : index
    %c0_16 = arith.constant 0 : index
    %14 = vector.load %arg1[%c2, %c0_15, %c0_16] : memref<3x39x79xf32, #tpu.memory_space<vmem>>, vector<1x39x79xf32>
    %15 = vector.shape_cast %14 : vector<1x39x79xf32> to vector<39x79xf32>
    %cst_17 = arith.constant dense<0.000000e+00> : vector<39x237xf32>
    %16 = tpu.matmul %15, %0, %cst_17 {dimension_numbers = #tpu.dot_dimension_numbers<[1], [0], [0], [1], [0, 0, 1, 1], [], []>} : vector<39x79xf32>, vector<79x237xf32>, vector<39x237xf32> -> vector<39x237xf32>
    %c2_18 = arith.constant 2 : index
    %c0_19 = arith.constant 0 : index
    %c0_20 = arith.constant 0 : index
    %17 = vector.load %arg2[%c2_18, %c0_19, %c0_20] : memref<3x237x624xf32, #tpu.memory_space<vmem>>, vector<1x237x624xf32>
    %18 = vector.shape_cast %17 : vector<1x237x624xf32> to vector<237x624xf32>
    %cst_21 = arith.constant dense<0.000000e+00> : vector<39x624xf32>
    %19 = tpu.matmul %16, %18, %cst_21 {dimension_numbers = #tpu.dot_dimension_numbers<[1], [0], [0], [1], [0, 0, 1, 1], [], []>} : vector<39x237xf32>, vector<237x624xf32>, vector<39x624xf32> -> vector<39x624xf32>
    %20 = arith.addf %13, %19 : vector<39x624xf32>
    %c0_22 = arith.constant 0 : index
    %c0_23 = arith.constant 0 : index
    %21 = vector.load %arg3[%c0_22, %c0_23] : memref<1x624xf32, #tpu.memory_space<vmem>>, vector<1x624xf32>
    %22 = vector.broadcast %21 : vector<1x624xf32> to vector<39x624xf32>
    %23 = arith.addf %20, %22 : vector<39x624xf32>
    %cst_24 = arith.constant 0.000000e+00 : f32
    %24 = vector.broadcast %cst_24 : f32 to vector<39x624xf32>
    %25 = arith.maximumf %23, %24 : vector<39x624xf32>
    %c0_25 = arith.constant 0 : index
    %c0_26 = arith.constant 0 : index
    %c0_27 = arith.constant 0 : index
    %26 = vector.load %arg4[%c0_25, %c0_26, %c0_27] : memref<3x19x39xf32, #tpu.memory_space<vmem>>, vector<1x19x39xf32>
    %27 = vector.shape_cast %26 : vector<1x19x39xf32> to vector<19x39xf32>
    %cst_28 = arith.constant dense<0.000000e+00> : vector<19x624xf32>
    %28 = tpu.matmul %27, %25, %cst_28 {dimension_numbers = #tpu.dot_dimension_numbers<[1], [0], [0], [1], [0, 0, 1, 1], [], []>} : vector<19x39xf32>, vector<39x624xf32>, vector<19x624xf32> -> vector<19x624xf32>
    %c0_29 = arith.constant 0 : index
    %c0_30 = arith.constant 0 : index
    %c0_31 = arith.constant 0 : index
    %29 = vector.load %arg5[%c0_29, %c0_30, %c0_31] : memref<3x624x304xf32, #tpu.memory_space<vmem>>, vector<1x624x304xf32>
    %30 = vector.shape_cast %29 : vector<1x624x304xf32> to vector<624x304xf32>
    %cst_32 = arith.constant dense<0.000000e+00> : vector<19x304xf32>
    %31 = tpu.matmul %28, %30, %cst_32 {dimension_numbers = #tpu.dot_dimension_numbers<[1], [0], [0], [1], [0, 0, 1, 1], [], []>} : vector<19x624xf32>, vector<624x304xf32>, vector<19x304xf32> -> vector<19x304xf32>
    %c1_33 = arith.constant 1 : index
    %c0_34 = arith.constant 0 : index
    %c0_35 = arith.constant 0 : index
    %32 = vector.load %arg4[%c1_33, %c0_34, %c0_35] : memref<3x19x39xf32, #tpu.memory_space<vmem>>, vector<1x19x39xf32>
    %33 = vector.shape_cast %32 : vector<1x19x39xf32> to vector<19x39xf32>
    %cst_36 = arith.constant dense<0.000000e+00> : vector<19x624xf32>
    %34 = tpu.matmul %33, %25, %cst_36 {dimension_numbers = #tpu.dot_dimension_numbers<[1], [0], [0], [1], [0, 0, 1, 1], [], []>} : vector<19x39xf32>, vector<39x624xf32>, vector<19x624xf32> -> vector<19x624xf32>
    %c1_37 = arith.constant 1 : index
    %c0_38 = arith.constant 0 : index
    %c0_39 = arith.constant 0 : index
    %35 = vector.load %arg5[%c1_37, %c0_38, %c0_39] : memref<3x624x304xf32, #tpu.memory_space<vmem>>, vector<1x624x304xf32>
    %36 = vector.shape_cast %35 : vector<1x624x304xf32> to vector<624x304xf32>
    %cst_40 = arith.constant dense<0.000000e+00> : vector<19x304xf32>
    %37 = tpu.matmul %34, %36, %cst_40 {dimension_numbers = #tpu.dot_dimension_numbers<[1], [0], [0], [1], [0, 0, 1, 1], [], []>} : vector<19x624xf32>, vector<624x304xf32>, vector<19x304xf32> -> vector<19x304xf32>
    %38 = arith.addf %31, %37 : vector<19x304xf32>
    %c2_41 = arith.constant 2 : index
    %c0_42 = arith.constant 0 : index
    %c0_43 = arith.constant 0 : index
    %39 = vector.load %arg4[%c2_41, %c0_42, %c0_43] : memref<3x19x39xf32, #tpu.memory_space<vmem>>, vector<1x19x39xf32>
    %40 = vector.shape_cast %39 : vector<1x19x39xf32> to vector<19x39xf32>
    %cst_44 = arith.constant dense<0.000000e+00> : vector<19x624xf32>
    %41 = tpu.matmul %40, %25, %cst_44 {dimension_numbers = #tpu.dot_dimension_numbers<[1], [0], [0], [1], [0, 0, 1, 1], [], []>} : vector<19x39xf32>, vector<39x624xf32>, vector<19x624xf32> -> vector<19x624xf32>
    %c2_45 = arith.constant 2 : index
    %c0_46 = arith.constant 0 : index
    %c0_47 = arith.constant 0 : index
    %42 = vector.load %arg5[%c2_45, %c0_46, %c0_47] : memref<3x624x304xf32, #tpu.memory_space<vmem>>, vector<1x624x304xf32>
    %43 = vector.shape_cast %42 : vector<1x624x304xf32> to vector<624x304xf32>
    %cst_48 = arith.constant dense<0.000000e+00> : vector<19x304xf32>
    %44 = tpu.matmul %41, %43, %cst_48 {dimension_numbers = #tpu.dot_dimension_numbers<[1], [0], [0], [1], [0, 0, 1, 1], [], []>} : vector<19x624xf32>, vector<624x304xf32>, vector<19x304xf32> -> vector<19x304xf32>
    %45 = arith.addf %38, %44 : vector<19x304xf32>
    %c0_49 = arith.constant 0 : index
    %c0_50 = arith.constant 0 : index
    %46 = vector.load %arg6[%c0_49, %c0_50] : memref<1x304xf32, #tpu.memory_space<vmem>>, vector<1x304xf32>
    %47 = vector.broadcast %46 : vector<1x304xf32> to vector<19x304xf32>
    %48 = arith.addf %45, %47 : vector<19x304xf32>
    %cst_51 = arith.constant 0.000000e+00 : f32
    %49 = vector.broadcast %cst_51 : f32 to vector<19x304xf32>
    %50 = arith.maximumf %48, %49 : vector<19x304xf32>
    %c0_52 = arith.constant 0 : index
    %c0_53 = arith.constant 0 : index
    %c0_54 = arith.constant 0 : index
    %51 = vector.load %arg7[%c0_52, %c0_53, %c0_54] : memref<3x9x19xf32, #tpu.memory_space<vmem>>, vector<1x9x19xf32>
    %52 = vector.shape_cast %51 : vector<1x9x19xf32> to vector<9x19xf32>
    %cst_55 = arith.constant dense<0.000000e+00> : vector<9x304xf32>
    %53 = tpu.matmul %52, %50, %cst_55 {dimension_numbers = #tpu.dot_dimension_numbers<[1], [0], [0], [1], [0, 0, 1, 1], [], []>} : vector<9x19xf32>, vector<19x304xf32>, vector<9x304xf32> -> vector<9x304xf32>
    %c0_56 = arith.constant 0 : index
    %c0_57 = arith.constant 0 : index
    %c0_58 = arith.constant 0 : index
    %54 = vector.load %arg8[%c0_56, %c0_57, %c0_58] : memref<3x304x144xf32, #tpu.memory_space<vmem>>, vector<1x304x144xf32>
    %55 = vector.shape_cast %54 : vector<1x304x144xf32> to vector<304x144xf32>
    %cst_59 = arith.constant dense<0.000000e+00> : vector<9x144xf32>
    %56 = tpu.matmul %53, %55, %cst_59 {dimension_numbers = #tpu.dot_dimension_numbers<[1], [0], [0], [1], [0, 0, 1, 1], [], []>} : vector<9x304xf32>, vector<304x144xf32>, vector<9x144xf32> -> vector<9x144xf32>
    %c1_60 = arith.constant 1 : index
    %c0_61 = arith.constant 0 : index
    %c0_62 = arith.constant 0 : index
    %57 = vector.load %arg7[%c1_60, %c0_61, %c0_62] : memref<3x9x19xf32, #tpu.memory_space<vmem>>, vector<1x9x19xf32>
    %58 = vector.shape_cast %57 : vector<1x9x19xf32> to vector<9x19xf32>
    %cst_63 = arith.constant dense<0.000000e+00> : vector<9x304xf32>
    %59 = tpu.matmul %58, %50, %cst_63 {dimension_numbers = #tpu.dot_dimension_numbers<[1], [0], [0], [1], [0, 0, 1, 1], [], []>} : vector<9x19xf32>, vector<19x304xf32>, vector<9x304xf32> -> vector<9x304xf32>
    %c1_64 = arith.constant 1 : index
    %c0_65 = arith.constant 0 : index
    %c0_66 = arith.constant 0 : index
    %60 = vector.load %arg8[%c1_64, %c0_65, %c0_66] : memref<3x304x144xf32, #tpu.memory_space<vmem>>, vector<1x304x144xf32>
    %61 = vector.shape_cast %60 : vector<1x304x144xf32> to vector<304x144xf32>
    %cst_67 = arith.constant dense<0.000000e+00> : vector<9x144xf32>
    %62 = tpu.matmul %59, %61, %cst_67 {dimension_numbers = #tpu.dot_dimension_numbers<[1], [0], [0], [1], [0, 0, 1, 1], [], []>} : vector<9x304xf32>, vector<304x144xf32>, vector<9x144xf32> -> vector<9x144xf32>
    %63 = arith.addf %56, %62 : vector<9x144xf32>
    %c2_68 = arith.constant 2 : index
    %c0_69 = arith.constant 0 : index
    %c0_70 = arith.constant 0 : index
    %64 = vector.load %arg7[%c2_68, %c0_69, %c0_70] : memref<3x9x19xf32, #tpu.memory_space<vmem>>, vector<1x9x19xf32>
    %65 = vector.shape_cast %64 : vector<1x9x19xf32> to vector<9x19xf32>
    %cst_71 = arith.constant dense<0.000000e+00> : vector<9x304xf32>
    %66 = tpu.matmul %65, %50, %cst_71 {dimension_numbers = #tpu.dot_dimension_numbers<[1], [0], [0], [1], [0, 0, 1, 1], [], []>} : vector<9x19xf32>, vector<19x304xf32>, vector<9x304xf32> -> vector<9x304xf32>
    %c2_72 = arith.constant 2 : index
    %c0_73 = arith.constant 0 : index
    %c0_74 = arith.constant 0 : index
    %67 = vector.load %arg8[%c2_72, %c0_73, %c0_74] : memref<3x304x144xf32, #tpu.memory_space<vmem>>, vector<1x304x144xf32>
    %68 = vector.shape_cast %67 : vector<1x304x144xf32> to vector<304x144xf32>
    %cst_75 = arith.constant dense<0.000000e+00> : vector<9x144xf32>
    %69 = tpu.matmul %66, %68, %cst_75 {dimension_numbers = #tpu.dot_dimension_numbers<[1], [0], [0], [1], [0, 0, 1, 1], [], []>} : vector<9x304xf32>, vector<304x144xf32>, vector<9x144xf32> -> vector<9x144xf32>
    %70 = arith.addf %63, %69 : vector<9x144xf32>
    %c0_76 = arith.constant 0 : index
    %c0_77 = arith.constant 0 : index
    %71 = vector.load %arg9[%c0_76, %c0_77] : memref<1x144xf32, #tpu.memory_space<vmem>>, vector<1x144xf32>
    %72 = vector.broadcast %71 : vector<1x144xf32> to vector<9x144xf32>
    %73 = arith.addf %70, %72 : vector<9x144xf32>
    %cst_78 = arith.constant 0.000000e+00 : f32
    %74 = vector.broadcast %cst_78 : f32 to vector<9x144xf32>
    %75 = arith.maximumf %73, %74 : vector<9x144xf32>
    %c0_79 = arith.constant 0 : index
    %c0_80 = arith.constant 0 : index
    %c0_81 = arith.constant 0 : index
    %76 = vector.load %arg10[%c0_79, %c0_80, %c0_81] : memref<3x4x9xf32, #tpu.memory_space<vmem>>, vector<1x4x9xf32>
    %77 = vector.shape_cast %76 : vector<1x4x9xf32> to vector<4x9xf32>
    %cst_82 = arith.constant dense<0.000000e+00> : vector<4x144xf32>
    %78 = tpu.matmul %77, %75, %cst_82 {dimension_numbers = #tpu.dot_dimension_numbers<[1], [0], [0], [1], [0, 0, 1, 1], [], []>} : vector<4x9xf32>, vector<9x144xf32>, vector<4x144xf32> -> vector<4x144xf32>
    %c0_83 = arith.constant 0 : index
    %c0_84 = arith.constant 0 : index
    %c0_85 = arith.constant 0 : index
    %79 = vector.load %arg11[%c0_83, %c0_84, %c0_85] : memref<3x144x64xf32, #tpu.memory_space<vmem>>, vector<1x144x64xf32>
    %80 = vector.shape_cast %79 : vector<1x144x64xf32> to vector<144x64xf32>
    %cst_86 = arith.constant dense<0.000000e+00> : vector<4x64xf32>
    %81 = tpu.matmul %78, %80, %cst_86 {dimension_numbers = #tpu.dot_dimension_numbers<[1], [0], [0], [1], [0, 0, 1, 1], [], []>} : vector<4x144xf32>, vector<144x64xf32>, vector<4x64xf32> -> vector<4x64xf32>
    %c1_87 = arith.constant 1 : index
    %c0_88 = arith.constant 0 : index
    %c0_89 = arith.constant 0 : index
    %82 = vector.load %arg10[%c1_87, %c0_88, %c0_89] : memref<3x4x9xf32, #tpu.memory_space<vmem>>, vector<1x4x9xf32>
    %83 = vector.shape_cast %82 : vector<1x4x9xf32> to vector<4x9xf32>
    %cst_90 = arith.constant dense<0.000000e+00> : vector<4x144xf32>
    %84 = tpu.matmul %83, %75, %cst_90 {dimension_numbers = #tpu.dot_dimension_numbers<[1], [0], [0], [1], [0, 0, 1, 1], [], []>} : vector<4x9xf32>, vector<9x144xf32>, vector<4x144xf32> -> vector<4x144xf32>
    %c1_91 = arith.constant 1 : index
    %c0_92 = arith.constant 0 : index
    %c0_93 = arith.constant 0 : index
    %85 = vector.load %arg11[%c1_91, %c0_92, %c0_93] : memref<3x144x64xf32, #tpu.memory_space<vmem>>, vector<1x144x64xf32>
    %86 = vector.shape_cast %85 : vector<1x144x64xf32> to vector<144x64xf32>
    %cst_94 = arith.constant dense<0.000000e+00> : vector<4x64xf32>
    %87 = tpu.matmul %84, %86, %cst_94 {dimension_numbers = #tpu.dot_dimension_numbers<[1], [0], [0], [1], [0, 0, 1, 1], [], []>} : vector<4x144xf32>, vector<144x64xf32>, vector<4x64xf32> -> vector<4x64xf32>
    %88 = arith.addf %81, %87 : vector<4x64xf32>
    %c2_95 = arith.constant 2 : index
    %c0_96 = arith.constant 0 : index
    %c0_97 = arith.constant 0 : index
    %89 = vector.load %arg10[%c2_95, %c0_96, %c0_97] : memref<3x4x9xf32, #tpu.memory_space<vmem>>, vector<1x4x9xf32>
    %90 = vector.shape_cast %89 : vector<1x4x9xf32> to vector<4x9xf32>
    %cst_98 = arith.constant dense<0.000000e+00> : vector<4x144xf32>
    %91 = tpu.matmul %90, %75, %cst_98 {dimension_numbers = #tpu.dot_dimension_numbers<[1], [0], [0], [1], [0, 0, 1, 1], [], []>} : vector<4x9xf32>, vector<9x144xf32>, vector<4x144xf32> -> vector<4x144xf32>
    %c2_99 = arith.constant 2 : index
    %c0_100 = arith.constant 0 : index
    %c0_101 = arith.constant 0 : index
    %92 = vector.load %arg11[%c2_99, %c0_100, %c0_101] : memref<3x144x64xf32, #tpu.memory_space<vmem>>, vector<1x144x64xf32>
    %93 = vector.shape_cast %92 : vector<1x144x64xf32> to vector<144x64xf32>
    %cst_102 = arith.constant dense<0.000000e+00> : vector<4x64xf32>
    %94 = tpu.matmul %91, %93, %cst_102 {dimension_numbers = #tpu.dot_dimension_numbers<[1], [0], [0], [1], [0, 0, 1, 1], [], []>} : vector<4x144xf32>, vector<144x64xf32>, vector<4x64xf32> -> vector<4x64xf32>
    %95 = arith.addf %88, %94 : vector<4x64xf32>
    %c0_103 = arith.constant 0 : index
    %c0_104 = arith.constant 0 : index
    %96 = vector.load %arg12[%c0_103, %c0_104] : memref<1x64xf32, #tpu.memory_space<vmem>>, vector<1x64xf32>
    %97 = vector.broadcast %96 : vector<1x64xf32> to vector<4x64xf32>
    %98 = arith.addf %95, %97 : vector<4x64xf32>
    %cst_105 = arith.constant 0.000000e+00 : f32
    %99 = vector.broadcast %cst_105 : f32 to vector<4x64xf32>
    %100 = arith.maximumf %98, %99 : vector<4x64xf32>
    %c0_106 = arith.constant 0 : index
    %c0_107 = arith.constant 0 : index
    %101 = vector.load %arg14[%c0_106, %c0_107] : memref<1x10xf32, #tpu.memory_space<vmem>>, vector<1x10xf32>
    %102 = vector.extract_strided_slice %100 {offsets = [0, 0], sizes = [1, 64], strides = [1, 1]} : vector<4x64xf32> to vector<1x64xf32>
    %c0_108 = arith.constant 0 : index
    %c0_109 = arith.constant 0 : index
    %c0_110 = arith.constant 0 : index
    %103 = vector.load %arg13[%c0_108, %c0_109, %c0_110] : memref<4x64x10xf32, #tpu.memory_space<vmem>>, vector<1x64x10xf32>
    %104 = vector.shape_cast %103 : vector<1x64x10xf32> to vector<64x10xf32>
    %cst_111 = arith.constant dense<0.000000e+00> : vector<1x10xf32>
    %105 = tpu.matmul %102, %104, %cst_111 {dimension_numbers = #tpu.dot_dimension_numbers<[1], [0], [0], [1], [0, 0, 1, 1], [], []>} : vector<1x64xf32>, vector<64x10xf32>, vector<1x10xf32> -> vector<1x10xf32>
    %106 = arith.addf %101, %105 : vector<1x10xf32>
    %107 = vector.extract_strided_slice %100 {offsets = [1, 0], sizes = [1, 64], strides = [1, 1]} : vector<4x64xf32> to vector<1x64xf32>
    %c1_112 = arith.constant 1 : index
    %c0_113 = arith.constant 0 : index
    %c0_114 = arith.constant 0 : index
    %108 = vector.load %arg13[%c1_112, %c0_113, %c0_114] : memref<4x64x10xf32, #tpu.memory_space<vmem>>, vector<1x64x10xf32>
    %109 = vector.shape_cast %108 : vector<1x64x10xf32> to vector<64x10xf32>
    %cst_115 = arith.constant dense<0.000000e+00> : vector<1x10xf32>
    %110 = tpu.matmul %107, %109, %cst_115 {dimension_numbers = #tpu.dot_dimension_numbers<[1], [0], [0], [1], [0, 0, 1, 1], [], []>} : vector<1x64xf32>, vector<64x10xf32>, vector<1x10xf32> -> vector<1x10xf32>
    %111 = arith.addf %106, %110 : vector<1x10xf32>
    %112 = vector.extract_strided_slice %100 {offsets = [2, 0], sizes = [1, 64], strides = [1, 1]} : vector<4x64xf32> to vector<1x64xf32>
    %c2_116 = arith.constant 2 : index
    %c0_117 = arith.constant 0 : index
    %c0_118 = arith.constant 0 : index
    %113 = vector.load %arg13[%c2_116, %c0_117, %c0_118] : memref<4x64x10xf32, #tpu.memory_space<vmem>>, vector<1x64x10xf32>
    %114 = vector.shape_cast %113 : vector<1x64x10xf32> to vector<64x10xf32>
    %cst_119 = arith.constant dense<0.000000e+00> : vector<1x10xf32>
    %115 = tpu.matmul %112, %114, %cst_119 {dimension_numbers = #tpu.dot_dimension_numbers<[1], [0], [0], [1], [0, 0, 1, 1], [], []>} : vector<1x64xf32>, vector<64x10xf32>, vector<1x10xf32> -> vector<1x10xf32>
    %116 = arith.addf %111, %115 : vector<1x10xf32>
    %117 = vector.extract_strided_slice %100 {offsets = [3, 0], sizes = [1, 64], strides = [1, 1]} : vector<4x64xf32> to vector<1x64xf32>
    %c3 = arith.constant 3 : index
    %c0_120 = arith.constant 0 : index
    %c0_121 = arith.constant 0 : index
    %118 = vector.load %arg13[%c3, %c0_120, %c0_121] : memref<4x64x10xf32, #tpu.memory_space<vmem>>, vector<1x64x10xf32>
    %119 = vector.shape_cast %118 : vector<1x64x10xf32> to vector<64x10xf32>
    %cst_122 = arith.constant dense<0.000000e+00> : vector<1x10xf32>
    %120 = tpu.matmul %117, %119, %cst_122 {dimension_numbers = #tpu.dot_dimension_numbers<[1], [0], [0], [1], [0, 0, 1, 1], [], []>} : vector<1x64xf32>, vector<64x10xf32>, vector<1x10xf32> -> vector<1x10xf32>
    %121 = arith.addf %116, %120 : vector<1x10xf32>
    %cst_123 = arith.constant 0.000000e+00 : f32
    %122 = vector.broadcast %cst_123 : f32 to vector<1x10xf32>
    %123 = arith.maximumf %121, %122 : vector<1x10xf32>
    %c0_124 = arith.constant 0 : index
    %c0_125 = arith.constant 0 : index
    %124 = vector.load %arg15[%c0_124, %c0_125] : memref<10x1xf32, #tpu.memory_space<vmem>>, vector<10x1xf32>
    %cst_126 = arith.constant dense<0.000000e+00> : vector<1x1xf32>
    %125 = tpu.matmul %123, %124, %cst_126 {dimension_numbers = #tpu.dot_dimension_numbers<[1], [0], [0], [1], [0, 0, 1, 1], [], []>} : vector<1x10xf32>, vector<10x1xf32>, vector<1x1xf32> -> vector<1x1xf32>
    %c0_127 = arith.constant 0 : index
    %c0_128 = arith.constant 0 : index
    %126 = vector.load %arg16[%c0_127, %c0_128] : memref<1x1xf32, #tpu.memory_space<vmem>>, vector<1x1xf32>
    %127 = arith.addf %125, %126 : vector<1x1xf32>
    %c0_129 = arith.constant 0 : index
    %c0_130 = arith.constant 0 : index
    %128 = vector.load %arg17[%c0_129, %c0_130] : memref<1x1xf32, #tpu.memory_space<vmem>>, vector<1x1xf32>
    tpu.vector_store %arg17[%c0_129, %c0_130], %127 {strides = array<i32>} : memref<1x1xf32, #tpu.memory_space<vmem>>, vector<1x1xf32>,
    return
  }
}

</mosaic_0001>

<llo_original>
// kernel: regression_net_forward.1
$region0: #{regression_net_forward.1}
  #allocation0 [shape = 'u32[]', space=smem, size = 0x4, offset = 0x4, fixed_abs, tag = 'smem constant byte address 0x4 - core index']
  #allocation1 [shape = 'u32[144,128]{1,0:T(1,128)}', space=vmem, size = 0x12000, scoped, tag = 'internal scratch']
  #allocation2 [shape = 'f32[1,1]{1,0:T(1,128)S(1)}', space=vmem, size = 0x200, scoped, tag = 'scoped memory for regression_net_forward.1']
  %s0 = inlined_call_operand.vmem [shape: f32[79,237], index: 0, kind: input, shape index: {}]
  %s1 = inlined_call_operand.vmem [shape: f32[3,39,79], index: 1, kind: input, shape index: {}]
  %s2 = inlined_call_operand.vmem [shape: f32[3,237,624], index: 2, kind: input, shape index: {}]
  %s3 = inlined_call_operand.vmem [shape: f32[1,624], index: 3, kind: input, shape index: {}]
  %s4 = inlined_call_operand.vmem [shape: f32[3,19,39], index: 4, kind: input, shape index: {}]
  %s5 = inlined_call_operand.vmem [shape: f32[3,624,304], index: 5, kind: input, shape index: {}]
  %s6 = inlined_call_operand.vmem [shape: f32[1,304], index: 6, kind: input, shape index: {}]
  %s7 = inlined_call_operand.vmem [shape: f32[3,9,19], index: 7, kind: input, shape index: {}]
  %s8 = inlined_call_operand.vmem [shape: f32[3,304,144], index: 8, kind: input, shape index: {}]
  %s9 = inlined_call_operand.vmem [shape: f32[1,144], index: 9, kind: input, shape index: {}]
  %s10 = inlined_call_operand.vmem [shape: f32[3,4,9], index: 10, kind: input, shape index: {}]
  %s11 = inlined_call_operand.vmem [shape: f32[3,144,64], index: 11, kind: input, shape index: {}]
  %s12 = inlined_call_operand.vmem [shape: f32[1,64], index: 12, kind: input, shape index: {}]
  %s13 = inlined_call_operand.vmem [shape: f32[4,64,10], index: 13, kind: input, shape index: {}]
  %s14 = inlined_call_operand.vmem [shape: f32[1,10], index: 14, kind: input, shape index: {}]
  %s15 = inlined_call_operand.vmem [shape: f32[10,1], index: 15, kind: input, shape index: {}]
  %s16 = inlined_call_operand.<no memory space> [shape: f32[1,1], index: 16, kind: input, shape index: {}]
  %s17 = inlined_call_operand.hbm [shape: f32[1,1], index: 17, kind: output, shape index: {}]
  %s18 = sld [smem:[#allocation0]]
  $region78: #{regression_net_forward.1} parent=0
    _
  %s20 = ssub.s32 1, %s18
  %s21 = scalar_select 0, %s20, %s18
  %v22 = vstv %s16
  %23 = vst [vmem:[#allocation2] sm:$0x1] %v22
  $region1: #{regression_net_forward.1} parent=0
    #allocation3 [shape = 'u8[512]{0}', space=vmem, size = 0x400, scoped, tag = 'output window, operand 0, single buffered']
    #allocation4 [shape = 's32[1]{0}', space=sflag, size = 0x4, scoped, tag = 'scoped memory for regression_net_forward.1']
    %24 = vsyncpa [#allocation4], 0
    // Predicated region
    $region2: #{regression_net_forward.1} parent=1 // pred_check
      _
    $region3: #{regression_net_forward.1} parent=1 // pred_check_branch
      %26 = sbr.rel (0) target = $region5
    $region4: #{regression_net_forward.1} parent=1 // pred_region
      _
    $region5: #{regression_net_forward.1} parent=1 // pred_fallthru
      _
    // Predicated region
    $region6: #{regression_net_forward.1} parent=1 // pred_check
      _
    $region7: #{regression_net_forward.1} parent=1 // pred_check_branch
      %28 = sbr.rel (0) target = $region9
    $region8: #{regression_net_forward.1} parent=1 // pred_region
      _
    $region9: #{regression_net_forward.1} parent=1 // pred_fallthru
      _
    // Predicated region
    $region10: #{regression_net_forward.1} parent=1 // pred_check
      _
    $region11: #{regression_net_forward.1} parent=1 // pred_check_branch
      %30 = sbr.rel (0) target = $region13
    $region12: #{regression_net_forward.1} parent=1 // pred_region
      _
    $region13: #{regression_net_forward.1} parent=1 // pred_fallthru
      _
    // Predicated region
    $region14: #{regression_net_forward.1} parent=1 // pred_check
      _
    $region15: #{regression_net_forward.1} parent=1 // pred_check_branch
      %32 = sbr.rel (0) target = $region17
    $region16: #{regression_net_forward.1} parent=1 // pred_region
      _
    $region17: #{regression_net_forward.1} parent=1 // pred_fallthru
      _
    // Predicated region
    $region18: #{regression_net_forward.1} parent=1 // pred_check
      _
    $region19: #{regression_net_forward.1} parent=1 // pred_check_branch
      %34 = sbr.rel (0) target = $region21
    $region20: #{regression_net_forward.1} parent=1 // pred_region
      _
    $region21: #{regression_net_forward.1} parent=1 // pred_fallthru
      _
    // Predicated region
    $region22: #{regression_net_forward.1} parent=1 // pred_check
      _
    $region23: #{regression_net_forward.1} parent=1 // pred_check_branch
      %36 = sbr.rel (0) target = $region25
    $region24: #{regression_net_forward.1} parent=1 // pred_region
      _
    $region25: #{regression_net_forward.1} parent=1 // pred_fallthru
      _
    // Predicated region
    $region26: #{regression_net_forward.1} parent=1 // pred_check
      _
    $region27: #{regression_net_forward.1} parent=1 // pred_check_branch
      %38 = sbr.rel (0) target = $region29
    $region28: #{regression_net_forward.1} parent=1 // pred_region
      _
    $region29: #{regression_net_forward.1} parent=1 // pred_fallthru
      _
    // Predicated region
    $region30: #{regression_net_forward.1} parent=1 // pred_check
      _
    $region31: #{regression_net_forward.1} parent=1 // pred_check_branch
      %40 = sbr.rel (0) target = $region33
    $region32: #{regression_net_forward.1} parent=1 // pred_region
      _
    $region33: #{regression_net_forward.1} parent=1 // pred_fallthru
      _
    // Predicated region
    $region34: #{regression_net_forward.1} parent=1 // pred_check
      _
    $region35: #{regression_net_forward.1} parent=1 // pred_check_branch
      %42 = sbr.rel (0) target = $region37
    $region36: #{regression_net_forward.1} parent=1 // pred_region
      _
    $region37: #{regression_net_forward.1} parent=1 // pred_fallthru
      _
    // Predicated region
    $region38: #{regression_net_forward.1} parent=1 // pred_check
      _
    $region39: #{regression_net_forward.1} parent=1 // pred_check_branch
      %44 = sbr.rel (0) target = $region41
    $region40: #{regression_net_forward.1} parent=1 // pred_region
      _
    $region41: #{regression_net_forward.1} parent=1 // pred_fallthru
      _
    // Predicated region
    $region42: #{regression_net_forward.1} parent=1 // pred_check
      _
    $region43: #{regression_net_forward.1} parent=1 // pred_check_branch
      %46 = sbr.rel (0) target = $region45
    $region44: #{regression_net_forward.1} parent=1 // pred_region
      _
    $region45: #{regression_net_forward.1} parent=1 // pred_fallthru
      _
    // Predicated region
    $region46: #{regression_net_forward.1} parent=1 // pred_check
      _
    $region47: #{regression_net_forward.1} parent=1 // pred_check_branch
      %48 = sbr.rel (0) target = $region49
    $region48: #{regression_net_forward.1} parent=1 // pred_region
      _
    $region49: #{regression_net_forward.1} parent=1 // pred_fallthru
      _
    // Predicated region
    $region50: #{regression_net_forward.1} parent=1 // pred_check
      _
    $region51: #{regression_net_forward.1} parent=1 // pred_check_branch
      %50 = sbr.rel (0) target = $region53
    $region52: #{regression_net_forward.1} parent=1 // pred_region
      _
    $region53: #{regression_net_forward.1} parent=1 // pred_fallthru
      _
    // Predicated region
    $region54: #{regression_net_forward.1} parent=1 // pred_check
      _
    $region55: #{regression_net_forward.1} parent=1 // pred_check_branch
      %52 = sbr.rel (0) target = $region57
    $region56: #{regression_net_forward.1} parent=1 // pred_region
      _
    $region57: #{regression_net_forward.1} parent=1 // pred_fallthru
      _
    // Predicated region
    $region58: #{regression_net_forward.1} parent=1 // pred_check
      _
    $region59: #{regression_net_forward.1} parent=1 // pred_check_branch
      %54 = sbr.rel (0) target = $region61
    $region60: #{regression_net_forward.1} parent=1 // pred_region
      _
    $region61: #{regression_net_forward.1} parent=1 // pred_fallthru
      _
    // Predicated region
    $region62: #{regression_net_forward.1} parent=1 // pred_check
      _
    $region63: #{regression_net_forward.1} parent=1 // pred_check_branch
      %56 = sbr.rel (0) target = $region65
    $region64: #{regression_net_forward.1} parent=1 // pred_region
      _
    $region65: #{regression_net_forward.1} parent=1 // pred_fallthru
      _
    // Predicated region
    $region66: #{regression_net_forward.1} parent=1 // pred_check
      _
    $region67: #{regression_net_forward.1} parent=1 // pred_check_branch
      %58 = sbr.rel (0) target = $region69
    $region68: #{regression_net_forward.1} parent=1 // pred_region
      _
    $region69: #{regression_net_forward.1} parent=1 // pred_fallthru
      _
    %v59 = vld [vmem:[%s0] sm:$0xff]
    %v60 = vld [vmem:[%s0 + $0x8] sm:$0xff]
    %v61 = vld [vmem:[%s0 + $0x10] sm:$0xff]
    %v62 = vld [vmem:[%s0 + $0x18] sm:$0xff]
    %v63 = vld [vmem:[%s0 + $0x20] sm:$0xff]
    %v64 = vld [vmem:[%s0 + $0x28] sm:$0xff]
    %v65 = vld [vmem:[%s0 + $0x30] sm:$0xff]
    %v66 = vld [vmem:[%s0 + $0x38] sm:$0xff]
    %v67 = vld [vmem:[%s0 + $0x40] sm:$0xff]
    %v68 = vld [vmem:[%s0 + $0x48] sm:$0xff]
    %v69 = vld [vmem:[%s0 + $0x50] sm:$0xff]
    %v70 = vld [vmem:[%s0 + $0x58] sm:$0xff]
    %v71 = vld [vmem:[%s0 + $0x60] sm:$0xff]
    %v72 = vld [vmem:[%s0 + $0x68] sm:$0xff]
    %v73 = vld [vmem:[%s0 + $0x70] sm:$0xff]
    %v74 = vld [vmem:[%s0 + $0x78] sm:$0xff]
    %v75 = vld [vmem:[%s0 + $0x80] sm:$0xff]
    %v76 = vld [vmem:[%s0 + $0x88] sm:$0xff]
    %v77 = vld [vmem:[%s0 + $0x90] sm:$0x7f]
    %v78 = vld [vmem:[%s0 + $0x98] sm:$0x7f]
    %v79 = vld [vmem:[%s1] sm:$0xff]
    %v80 = vld [vmem:[%s1 + $0x8] sm:$0xff]
    %v81 = vld [vmem:[%s1 + $0x10] sm:$0xff]
    %v82 = vld [vmem:[%s1 + $0x18] sm:$0xff]
    %v83 = vld [vmem:[%s1 + $0x20] sm:$0x7f]
    %vm84 = vcmask 646144
    %v86 = vsel %vm84, %v79, 0
    %v89 = vsel %vm84, %v80, 0
    %v92 = vsel %vm84, %v81, 0
    %v95 = vsel %vm84, %v82, 0
    %v98 = vsel %vm84, %v83, 0
    %vm100 = vcmask 1046528
    %v102 = vsel %vm100, %v77, 0
    %v105 = vsel %vm100, %v78, 0
    %107 = vmatprep.subr.mxu0 %v60
    %108 = vmatpush1.msra.mxu0 %v59
    %109 = vmatprep.subr.mxu0 %v62
    %110 = vmatpush1.msra.mxu0 %v61
    %111 = vmatprep.subr.mxu0 %v64
    %112 = vmatpush1.msra.mxu0 %v63
    %113 = vmatprep.subr.mxu0 %v66
    %114 = vmatpush1.msra.mxu0 %v65
    %115 = vmatprep.subr.mxu0 %v68
    %116 = vmatpush1.msra.mxu0 %v67
    %117 = vmatprep.subr.mxu0 %v70
    %118 = vmatpush1.msra.mxu0 %v69
    %119 = vmatprep.subr.mxu0 %v72
    %120 = vmatpush1.msra.mxu0 %v71
    %121 = vmatprep.subr.mxu0 %v74
    %122 = vmatpush1.msra.mxu0 %v73
    %123 = vmatprep.subr.mxu0 %v76
    %124 = vmatpush1.msra.mxu0 %v75
    %125 = vmatprep.subr.mxu0 %v105
    %126 = vmatpush1.msra.mxu0 %v102
    %127 = vmatprep.subr.mxu0 0.0
    %128 = vmatpush1.msra.mxu0 0.0
    %129 = vmatprep.subr.mxu0 0.0
    %130 = vmatpush1.msra.mxu0 0.0
    %131 = vmatprep.subr.mxu0 0.0
    %132 = vmatpush1.msra.mxu0 0.0
    %133 = vmatprep.subr.mxu0 0.0
    %134 = vmatpush1.msra.mxu0 0.0
    %135 = vmatprep.subr.mxu0 0.0
    %136 = vmatpush1.msra.mxu0 0.0
    %137 = vmatprep.subr.mxu0 0.0
    %138 = vmatpush1.msra.mxu0 0.0
    %139 = vmatprep.subr.mxu0 0.0
    %140 = vmatpush1.msra.mxu0 0.0
    %141 = vmatprep.subr.mxu0 0.0
    %142 = vmatpush1.msra.mxu0 0.0
    %143 = vmatprep.subr.mxu0 0.0
    %144 = vmatpush1.msra.mxu0 0.0
    %145 = vmatprep.subr.mxu0 0.0
    %146 = vmatpush1.msra.mxu0 0.0
    %147 = vmatprep.subr.mxu0 0.0
    %148 = vmatpush1.msra.mxu0 0.0
    %149 = vmatprep.subr.mxu0 0.0
    %150 = vmatpush1.msra.mxu0 0.0
    %151 = vmatprep.subr.mxu0 0.0
    %152 = vmatpush1.msra.mxu0 0.0
    %153 = vmatprep.subr.mxu0 0.0
    %154 = vmatpush1.msra.mxu0 0.0
    %155 = vmatprep.subr.mxu0 0.0
    %156 = vmatpush1.msra.mxu0 0.0
    %157 = vmatprep.subr.mxu0 0.0
    %158 = vmatpush1.msra.mxu0 0.0
    %159 = vmatprep.subr.mxu0 0.0
    %160 = vmatpush1.msra.mxu0 0.0
    %161 = vmatprep.subr.mxu0 0.0
    %162 = vmatpush1.msra.mxu0 0.0
    %163 = vmatprep.subr.mxu0 0.0
    %164 = vmatpush1.msra.mxu0 0.0
    %165 = vmatprep.subr.mxu0 0.0
    %166 = vmatpush1.msra.mxu0 0.0
    %167 = vmatprep.subr.mxu0 0.0
    %168 = vmatpush1.msra.mxu0 0.0
    %169 = vmatprep.subr.mxu0 0.0
    %170 = vmatpush1.msra.mxu0 0.0
    %171 = vmatprep.mubr.f32.mxu0 0.0
    %172 = vmatmul.mubr.f32.gmra.mrb[0].mxu0 %v86
    %v173 = vpop.f32.mrb[0].mxu0
    %v174 = vadd.f32 0.0, %v173
    %v175 = vpop.f32.mrb[0].mxu0
    %v176 = vadd.f32 0.0, %v175
    %177 = vmatprep.mubr.f32.mxu0 0.0
    %178 = vmatmul.mubr.f32.gmra.mrb[0].mxu0 %v89
    %v179 = vpop.f32.mrb[0].mxu0
    %v180 = vadd.f32 0.0, %v179
    %v181 = vpop.f32.mrb[0].mxu0
    %v182 = vadd.f32 0.0, %v181
    %183 = vmatprep.mubr.f32.mxu0 0.0
    %184 = vmatmul.mubr.f32.gmra.mrb[0].mxu0 %v92
    %v185 = vpop.f32.mrb[0].mxu0
    %v186 = vadd.f32 0.0, %v185
    %v187 = vpop.f32.mrb[0].mxu0
    %v188 = vadd.f32 0.0, %v187
    %189 = vmatprep.mubr.f32.mxu0 0.0
    %190 = vmatmul.mubr.f32.gmra.mrb[0].mxu0 %v95
    %v191 = vpop.f32.mrb[0].mxu0
    %v192 = vadd.f32 0.0, %v191
    %v193 = vpop.f32.mrb[0].mxu0
    %v194 = vadd.f32 0.0, %v193
    %195 = vmatprep.mubr.f32.mxu0 0.0
    %196 = vmatmul.mubr.f32.gmra.mrb[0].mxu0 %v98
    %v197 = vpop.f32.mrb[0].mxu0
    %v198 = vadd.f32 0.0, %v197
    %v199 = vpop.f32.mrb[0].mxu0
    %v200 = vadd.f32 0.0, %v199
    %201 = vdwg.mxu0
    %v202 = vld [vmem:[%s2] sm:$0xff]
    %v203 = vld [vmem:[%s2 + $0x8] sm:$0xff]
    %v204 = vld [vmem:[%s2 + $0x10] sm:$0xff]
    %v205 = vld [vmem:[%s2 + $0x18] sm:$0xff]
    %v206 = vld [vmem:[%s2 + $0x20] sm:$0xff]
    %v207 = vld [vmem:[%s2 + $0x28] sm:$0xff]
    %v208 = vld [vmem:[%s2 + $0x30] sm:$0xff]
    %v209 = vld [vmem:[%s2 + $0x38] sm:$0xff]
    %v210 = vld [vmem:[%s2 + $0x40] sm:$0xff]
    %v211 = vld [vmem:[%s2 + $0x48] sm:$0xff]
    %v212 = vld [vmem:[%s2 + $0x50] sm:$0xff]
    %v213 = vld [vmem:[%s2 + $0x58] sm:$0xff]
    %v214 = vld [vmem:[%s2 + $0x60] sm:$0xff]
    %v215 = vld [vmem:[%s2 + $0x68] sm:$0xff]
    %v216 = vld [vmem:[%s2 + $0x70] sm:$0xff]
    %v217 = vld [vmem:[%s2 + $0x78] sm:$0xff]
    %v218 = vld [vmem:[%s2 + $0x80] sm:$0xff]
    %v219 = vld [vmem:[%s2 + $0x88] sm:$0xff]
    %v220 = vld [vmem:[%s2 + $0x90] sm:$0xff]
    %v221 = vld [vmem:[%s2 + $0x98] sm:$0xff]
    %v222 = vld [vmem:[%s2 + $0xa0] sm:$0xff]
    %v223 = vld [vmem:[%s2 + $0xa8] sm:$0xff]
    %v224 = vld [vmem:[%s2 + $0xb0] sm:$0xff]
    %v225 = vld [vmem:[%s2 + $0xb8] sm:$0xff]
    %v226 = vld [vmem:[%s2 + $0xc0] sm:$0xff]
    %v227 = vld [vmem:[%s2 + $0xc8] sm:$0xff]
    %v228 = vld [vmem:[%s2 + $0xd0] sm:$0xff]
    %v229 = vld [vmem:[%s2 + $0xd8] sm:$0xff]
    %v230 = vld [vmem:[%s2 + $0xe0] sm:$0xff]
    %v231 = vld [vmem:[%s2 + $0xe8] sm:$0xff]
    %v232 = vld [vmem:[%s2 + $0xf0] sm:$0xff]
    %v233 = vld [vmem:[%s2 + $0xf8] sm:$0xff]
    %v234 = vld [vmem:[%s2 + $0x100] sm:$0xff]
    %v235 = vld [vmem:[%s2 + $0x108] sm:$0xff]
    %v236 = vld [vmem:[%s2 + $0x110] sm:$0xff]
    %v237 = vld [vmem:[%s2 + $0x118] sm:$0xff]
    %v238 = vld [vmem:[%s2 + $0x120] sm:$0xff]
    %v239 = vld [vmem:[%s2 + $0x128] sm:$0xff]
    %v240 = vld [vmem:[%s2 + $0x130] sm:$0xff]
    %v241 = vld [vmem:[%s2 + $0x138] sm:$0xff]
    %v242 = vld [vmem:[%s2 + $0x140] sm:$0xff]
    %v243 = vld [vmem:[%s2 + $0x148] sm:$0xff]
    %v244 = vld [vmem:[%s2 + $0x150] sm:$0xff]
    %v245 = vld [vmem:[%s2 + $0x158] sm:$0xff]
    %v246 = vld [vmem:[%s2 + $0x160] sm:$0xff]
    %v247 = vld [vmem:[%s2 + $0x168] sm:$0xff]
    %v248 = vld [vmem:[%s2 + $0x170] sm:$0xff]
    %v249 = vld [vmem:[%s2 + $0x178] sm:$0xff]
    %v250 = vld [vmem:[%s2 + $0x180] sm:$0xff]
    %v251 = vld [vmem:[%s2 + $0x188] sm:$0xff]
    %v252 = vld [vmem:[%s2 + $0x190] sm:$0xff]
    %v253 = vld [vmem:[%s2 + $0x198] sm:$0xff]
    %v254 = vld [vmem:[%s2 + $0x1a0] sm:$0xff]
    %v255 = vld [vmem:[%s2 + $0x1a8] sm:$0xff]
    %v256 = vld [vmem:[%s2 + $0x1b0] sm:$0xff]
    %v257 = vld [vmem:[%s2 + $0x1b8] sm:$0xff]
    %v258 = vld [vmem:[%s2 + $0x1c0] sm:$0xff]
    %v259 = vld [vmem:[%s2 + $0x1c8] sm:$0xff]
    %v260 = vld [vmem:[%s2 + $0x1d0] sm:$0xff]
    %v261 = vld [vmem:[%s2 + $0x1d8] sm:$0xff]
    %v262 = vld [vmem:[%s2 + $0x1e0] sm:$0xff]
    %v263 = vld [vmem:[%s2 + $0x1e8] sm:$0xff]
    %v264 = vld [vmem:[%s2 + $0x1f0] sm:$0xff]
    %v265 = vld [vmem:[%s2 + $0x1f8] sm:$0xff]
    %v266 = vld [vmem:[%s2 + $0x200] sm:$0xff]
    %v267 = vld [vmem:[%s2 + $0x208] sm:$0xff]
    %v268 = vld [vmem:[%s2 + $0x210] sm:$0xff]
    %v269 = vld [vmem:[%s2 + $0x218] sm:$0xff]
    %v270 = vld [vmem:[%s2 + $0x220] sm:$0xff]
    %v271 = vld [vmem:[%s2 + $0x228] sm:$0xff]
    %v272 = vld [vmem:[%s2 + $0x230] sm:$0xff]
    %v273 = vld [vmem:[%s2 + $0x238] sm:$0xff]
    %v274 = vld [vmem:[%s2 + $0x240] sm:$0xff]
    %v275 = vld [vmem:[%s2 + $0x248] sm:$0xff]
    %v276 = vld [vmem:[%s2 + $0x250] sm:$0xff]
    %v277 = vld [vmem:[%s2 + $0x258] sm:$0xff]
    %v278 = vld [vmem:[%s2 + $0x260] sm:$0xff]
    %v279 = vld [vmem:[%s2 + $0x268] sm:$0xff]
    %v280 = vld [vmem:[%s2 + $0x270] sm:$0xff]
    %v281 = vld [vmem:[%s2 + $0x278] sm:$0xff]
    %v282 = vld [vmem:[%s2 + $0x280] sm:$0xff]
    %v283 = vld [vmem:[%s2 + $0x288] sm:$0xff]
    %v284 = vld [vmem:[%s2 + $0x290] sm:$0xff]
    %v285 = vld [vmem:[%s2 + $0x298] sm:$0xff]
    %v286 = vld [vmem:[%s2 + $0x2a0] sm:$0xff]
    %v287 = vld [vmem:[%s2 + $0x2a8] sm:$0xff]
    %v288 = vld [vmem:[%s2 + $0x2b0] sm:$0xff]
    %v289 = vld [vmem:[%s2 + $0x2b8] sm:$0xff]
    %v290 = vld [vmem:[%s2 + $0x2c0] sm:$0xff]
    %v291 = vld [vmem:[%s2 + $0x2c8] sm:$0xff]
    %v292 = vld [vmem:[%s2 + $0x2d0] sm:$0xff]
    %v293 = vld [vmem:[%s2 + $0x2d8] sm:$0xff]
    %v294 = vld [vmem:[%s2 + $0x2e0] sm:$0xff]
    %v295 = vld [vmem:[%s2 + $0x2e8] sm:$0xff]
    %v296 = vld [vmem:[%s2 + $0x2f0] sm:$0xff]
    %v297 = vld [vmem:[%s2 + $0x2f8] sm:$0xff]
    %v298 = vld [vmem:[%s2 + $0x300] sm:$0xff]
    %v299 = vld [vmem:[%s2 + $0x308] sm:$0xff]
    %v300 = vld [vmem:[%s2 + $0x310] sm:$0xff]
    %v301 = vld [vmem:[%s2 + $0x318] sm:$0xff]
    %v302 = vld [vmem:[%s2 + $0x320] sm:$0xff]
    %v303 = vld [vmem:[%s2 + $0x328] sm:$0xff]
    %v304 = vld [vmem:[%s2 + $0x330] sm:$0xff]
    %v305 = vld [vmem:[%s2 + $0x338] sm:$0xff]
    %v306 = vld [vmem:[%s2 + $0x340] sm:$0xff]
    %v307 = vld [vmem:[%s2 + $0x348] sm:$0xff]
    %v308 = vld [vmem:[%s2 + $0x350] sm:$0xff]
    %v309 = vld [vmem:[%s2 + $0x358] sm:$0xff]
    %v310 = vld [vmem:[%s2 + $0x360] sm:$0xff]
    %v311 = vld [vmem:[%s2 + $0x368] sm:$0xff]
    %v312 = vld [vmem:[%s2 + $0x370] sm:$0xff]
    %v313 = vld [vmem:[%s2 + $0x378] sm:$0xff]
    %v314 = vld [vmem:[%s2 + $0x380] sm:$0xff]
    %v315 = vld [vmem:[%s2 + $0x388] sm:$0xff]
    %v316 = vld [vmem:[%s2 + $0x390] sm:$0xff]
    %v317 = vld [vmem:[%s2 + $0x398] sm:$0xff]
    %v318 = vld [vmem:[%s2 + $0x3a0] sm:$0xff]
    %v319 = vld [vmem:[%s2 + $0x3a8] sm:$0xff]
    %v320 = vld [vmem:[%s2 + $0x3b0] sm:$0xff]
    %v321 = vld [vmem:[%s2 + $0x3b8] sm:$0xff]
    %v322 = vld [vmem:[%s2 + $0x3c0] sm:$0xff]
    %v323 = vld [vmem:[%s2 + $0x3c8] sm:$0xff]
    %v324 = vld [vmem:[%s2 + $0x3d0] sm:$0xff]
    %v325 = vld [vmem:[%s2 + $0x3d8] sm:$0xff]
    %v326 = vld [vmem:[%s2 + $0x3e0] sm:$0xff]
    %v327 = vld [vmem:[%s2 + $0x3e8] sm:$0xff]
    %v328 = vld [vmem:[%s2 + $0x3f0] sm:$0xff]
    %v329 = vld [vmem:[%s2 + $0x3f8] sm:$0xff]
    %v330 = vld [vmem:[%s2 + $0x400] sm:$0xff]
    %v331 = vld [vmem:[%s2 + $0x408] sm:$0xff]
    %v332 = vld [vmem:[%s2 + $0x410] sm:$0xff]
    %v333 = vld [vmem:[%s2 + $0x418] sm:$0xff]
    %v334 = vld [vmem:[%s2 + $0x420] sm:$0xff]
    %v335 = vld [vmem:[%s2 + $0x428] sm:$0xff]
    %v336 = vld [vmem:[%s2 + $0x430] sm:$0xff]
    %v337 = vld [vmem:[%s2 + $0x438] sm:$0xff]
    %v338 = vld [vmem:[%s2 + $0x440] sm:$0xff]
    %v339 = vld [vmem:[%s2 + $0x448] sm:$0xff]
    %v340 = vld [vmem:[%s2 + $0x450] sm:$0xff]
    %v341 = vld [vmem:[%s2 + $0x458] sm:$0xff]
    %v342 = vld [vmem:[%s2 + $0x460] sm:$0xff]
    %v343 = vld [vmem:[%s2 + $0x468] sm:$0xff]
    %v344 = vld [vmem:[%s2 + $0x470] sm:$0xff]
    %v345 = vld [vmem:[%s2 + $0x478] sm:$0xff]
    %v346 = vld [vmem:[%s2 + $0x480] sm:$0xff]
    %v347 = vld [vmem:[%s2 + $0x488] sm:$0x1f]
    %v348 = vld [vmem:[%s2 + $0x490] sm:$0x1f]
    %v349 = vld [vmem:[%s2 + $0x498] sm:$0x1f]
    %v350 = vld [vmem:[%s2 + $0x4a0] sm:$0x1f]
    %v351 = vld [vmem:[%s2 + $0x4a8] sm:$0x1f]
    %s352 = scalar_lea.vmem %s1, 40
    %v353 = vld [vmem:[%s352] sm:$0xff]
    %v354 = vld [vmem:[%s352 + $0x8] sm:$0xff]
    %v355 = vld [vmem:[%s352 + $0x10] sm:$0xff]
    %v356 = vld [vmem:[%s352 + $0x18] sm:$0xff]
    %v357 = vld [vmem:[%s352 + $0x20] sm:$0x7f]
    %v359 = vsel %vm84, %v353, 0
    %v362 = vsel %vm84, %v354, 0
    %v365 = vsel %vm84, %v355, 0
    %v368 = vsel %vm84, %v356, 0
    %v371 = vsel %vm84, %v357, 0
    %373 = vmatprep.subr.mxu0 %v60
    %374 = vmatpush1.msra.mxu0 %v59
    %375 = vmatprep.subr.mxu0 %v62
    %376 = vmatpush1.msra.mxu0 %v61
    %377 = vmatprep.subr.mxu0 %v64
    %378 = vmatpush1.msra.mxu0 %v63
    %379 = vmatprep.subr.mxu0 %v66
    %380 = vmatpush1.msra.mxu0 %v65
    %381 = vmatprep.subr.mxu0 %v68
    %382 = vmatpush1.msra.mxu0 %v67
    %383 = vmatprep.subr.mxu0 %v70
    %384 = vmatpush1.msra.mxu0 %v69
    %385 = vmatprep.subr.mxu0 %v72
    %386 = vmatpush1.msra.mxu0 %v71
    %387 = vmatprep.subr.mxu0 %v74
    %388 = vmatpush1.msra.mxu0 %v73
    %389 = vmatprep.subr.mxu0 %v76
    %390 = vmatpush1.msra.mxu0 %v75
    %391 = vmatprep.subr.mxu0 %v105
    %392 = vmatpush1.msra.mxu0 %v102
    %393 = vmatprep.subr.mxu0 0.0
    %394 = vmatpush1.msra.mxu0 0.0
    %395 = vmatprep.subr.mxu0 0.0
    %396 = vmatpush1.msra.mxu0 0.0
    %397 = vmatprep.subr.mxu0 0.0
    %398 = vmatpush1.msra.mxu0 0.0
    %399 = vmatprep.subr.mxu0 0.0
    %400 = vmatpush1.msra.mxu0 0.0
    %401 = vmatprep.subr.mxu0 0.0
    %402 = vmatpush1.msra.mxu0 0.0
    %403 = vmatprep.subr.mxu0 0.0
    %404 = vmatpush1.msra.mxu0 0.0
    %405 = vmatprep.subr.mxu0 0.0
    %406 = vmatpush1.msra.mxu0 0.0
    %407 = vmatprep.subr.mxu0 0.0
    %408 = vmatpush1.msra.mxu0 0.0
    %409 = vmatprep.subr.mxu0 0.0
    %410 = vmatpush1.msra.mxu0 0.0
    %411 = vmatprep.subr.mxu0 0.0
    %412 = vmatpush1.msra.mxu0 0.0
    %413 = vmatprep.subr.mxu0 0.0
    %414 = vmatpush1.msra.mxu0 0.0
    %415 = vmatprep.subr.mxu0 0.0
    %416 = vmatpush1.msra.mxu0 0.0
    %417 = vmatprep.subr.mxu0 0.0
    %418 = vmatpush1.msra.mxu0 0.0
    %419 = vmatprep.subr.mxu0 0.0
    %420 = vmatpush1.msra.mxu0 0.0
    %421 = vmatprep.subr.mxu0 0.0
    %422 = vmatpush1.msra.mxu0 0.0
    %423 = vmatprep.subr.mxu0 0.0
    %424 = vmatpush1.msra.mxu0 0.0
    %425 = vmatprep.subr.mxu0 0.0
    %426 = vmatpush1.msra.mxu0 0.0
    %427 = vmatprep.subr.mxu0 0.0
    %428 = vmatpush1.msra.mxu0 0.0
    %429 = vmatprep.subr.mxu0 0.0
    %430 = vmatpush1.msra.mxu0 0.0
    %431 = vmatprep.subr.mxu0 0.0
    %432 = vmatpush1.msra.mxu0 0.0
    %433 = vmatprep.subr.mxu0 0.0
    %434 = vmatpush1.msra.mxu0 0.0
    %435 = vmatprep.subr.mxu0 0.0
    %436 = vmatpush1.msra.mxu0 0.0
    %437 = vmatprep.mubr.f32.mxu0 0.0
    %438 = vmatmul.mubr.f32.gmra.mrb[0].mxu0 %v359
    %v439 = vpop.f32.mrb[0].mxu0
    %v440 = vadd.f32 0.0, %v439
    %v441 = vpop.f32.mrb[0].mxu0
    %v442 = vadd.f32 0.0, %v441
    %443 = vmatprep.mubr.f32.mxu0 0.0
    %444 = vmatmul.mubr.f32.gmra.mrb[0].mxu0 %v362
    %v445 = vpop.f32.mrb[0].mxu0
    %v446 = vadd.f32 0.0, %v445
    %v447 = vpop.f32.mrb[0].mxu0
    %v448 = vadd.f32 0.0, %v447
    %449 = vmatprep.mubr.f32.mxu0 0.0
    %450 = vmatmul.mubr.f32.gmra.mrb[0].mxu0 %v365
    %v451 = vpop.f32.mrb[0].mxu0
    %v452 = vadd.f32 0.0, %v451
    %v453 = vpop.f32.mrb[0].mxu0
    %v454 = vadd.f32 0.0, %v453
    %455 = vmatprep.mubr.f32.mxu0 0.0
    %456 = vmatmul.mubr.f32.gmra.mrb[0].mxu0 %v368
    %v457 = vpop.f32.mrb[0].mxu0
    %v458 = vadd.f32 0.0, %v457
    %v459 = vpop.f32.mrb[0].mxu0
    %v460 = vadd.f32 0.0, %v459
    %461 = vmatprep.mubr.f32.mxu0 0.0
    %462 = vmatmul.mubr.f32.gmra.mrb[0].mxu0 %v371
    %v463 = vpop.f32.mrb[0].mxu0
    %v464 = vadd.f32 0.0, %v463
    %v465 = vpop.f32.mrb[0].mxu0
    %v466 = vadd.f32 0.0, %v465
    %467 = vdwg.mxu0
    %s468 = scalar_lea.vmem %s2, 1200
    %v469 = vld [vmem:[%s468] sm:$0xff]
    %v470 = vld [vmem:[%s468 + $0x8] sm:$0xff]
    %v471 = vld [vmem:[%s468 + $0x10] sm:$0xff]
    %v472 = vld [vmem:[%s468 + $0x18] sm:$0xff]
    %v473 = vld [vmem:[%s468 + $0x20] sm:$0xff]
    %v474 = vld [vmem:[%s468 + $0x28] sm:$0xff]
    %v475 = vld [vmem:[%s468 + $0x30] sm:$0xff]
    %v476 = vld [vmem:[%s468 + $0x38] sm:$0xff]
    %v477 = vld [vmem:[%s468 + $0x40] sm:$0xff]
    %v478 = vld [vmem:[%s468 + $0x48] sm:$0xff]
    %v479 = vld [vmem:[%s468 + $0x50] sm:$0xff]
    %v480 = vld [vmem:[%s468 + $0x58] sm:$0xff]
    %v481 = vld [vmem:[%s468 + $0x60] sm:$0xff]
    %v482 = vld [vmem:[%s468 + $0x68] sm:$0xff]
    %v483 = vld [vmem:[%s468 + $0x70] sm:$0xff]
    %v484 = vld [vmem:[%s468 + $0x78] sm:$0xff]
    %v485 = vld [vmem:[%s468 + $0x80] sm:$0xff]
    %v486 = vld [vmem:[%s468 + $0x88] sm:$0xff]
    %v487 = vld [vmem:[%s468 + $0x90] sm:$0xff]
    %v488 = vld [vmem:[%s468 + $0x98] sm:$0xff]
    %v489 = vld [vmem:[%s468 + $0xa0] sm:$0xff]
    %v490 = vld [vmem:[%s468 + $0xa8] sm:$0xff]
    %v491 = vld [vmem:[%s468 + $0xb0] sm:$0xff]
    %v492 = vld [vmem:[%s468 + $0xb8] sm:$0xff]
    %v493 = vld [vmem:[%s468 + $0xc0] sm:$0xff]
    %v494 = vld [vmem:[%s468 + $0xc8] sm:$0xff]
    %v495 = vld [vmem:[%s468 + $0xd0] sm:$0xff]
    %v496 = vld [vmem:[%s468 + $0xd8] sm:$0xff]
    %v497 = vld [vmem:[%s468 + $0xe0] sm:$0xff]
    %v498 = vld [vmem:[%s468 + $0xe8] sm:$0xff]
    %v499 = vld [vmem:[%s468 + $0xf0] sm:$0xff]
    %v500 = vld [vmem:[%s468 + $0xf8] sm:$0xff]
    %v501 = vld [vmem:[%s468 + $0x100] sm:$0xff]
    %v502 = vld [vmem:[%s468 + $0x108] sm:$0xff]
    %v503 = vld [vmem:[%s468 + $0x110] sm:$0xff]
    %v504 = vld [vmem:[%s468 + $0x118] sm:$0xff]
    %v505 = vld [vmem:[%s468 + $0x120] sm:$0xff]
    %v506 = vld [vmem:[%s468 + $0x128] sm:$0xff]
    %v507 = vld [vmem:[%s468 + $0x130] sm:$0xff]
    %v508 = vld [vmem:[%s468 + $0x138] sm:$0xff]
    %v509 = vld [vmem:[%s468 + $0x140] sm:$0xff]
    %v510 = vld [vmem:[%s468 + $0x148] sm:$0xff]
    %v511 = vld [vmem:[%s468 + $0x150] sm:$0xff]
    %v512 = vld [vmem:[%s468 + $0x158] sm:$0xff]
    %v513 = vld [vmem:[%s468 + $0x160] sm:$0xff]
    %v514 = vld [vmem:[%s468 + $0x168] sm:$0xff]
    %v515 = vld [vmem:[%s468 + $0x170] sm:$0xff]
    %v516 = vld [vmem:[%s468 + $0x178] sm:$0xff]
    %v517 = vld [vmem:[%s468 + $0x180] sm:$0xff]
    %v518 = vld [vmem:[%s468 + $0x188] sm:$0xff]
    %v519 = vld [vmem:[%s468 + $0x190] sm:$0xff]
    %v520 = vld [vmem:[%s468 + $0x198] sm:$0xff]
    %v521 = vld [vmem:[%s468 + $0x1a0] sm:$0xff]
    %v522 = vld [vmem:[%s468 + $0x1a8] sm:$0xff]
    %v523 = vld [vmem:[%s468 + $0x1b0] sm:$0xff]
    %v524 = vld [vmem:[%s468 + $0x1b8] sm:$0xff]
    %v525 = vld [vmem:[%s468 + $0x1c0] sm:$0xff]
    %v526 = vld [vmem:[%s468 + $0x1c8] sm:$0xff]
    %v527 = vld [vmem:[%s468 + $0x1d0] sm:$0xff]
    %v528 = vld [vmem:[%s468 + $0x1d8] sm:$0xff]
    %v529 = vld [vmem:[%s468 + $0x1e0] sm:$0xff]
    %v530 = vld [vmem:[%s468 + $0x1e8] sm:$0xff]
    %v531 = vld [vmem:[%s468 + $0x1f0] sm:$0xff]
    %v532 = vld [vmem:[%s468 + $0x1f8] sm:$0xff]
    %v533 = vld [vmem:[%s468 + $0x200] sm:$0xff]
    %v534 = vld [vmem:[%s468 + $0x208] sm:$0xff]
    %v535 = vld [vmem:[%s468 + $0x210] sm:$0xff]
    %v536 = vld [vmem:[%s468 + $0x218] sm:$0xff]
    %v537 = vld [vmem:[%s468 + $0x220] sm:$0xff]
    %v538 = vld [vmem:[%s468 + $0x228] sm:$0xff]
    %v539 = vld [vmem:[%s468 + $0x230] sm:$0xff]
    %v540 = vld [vmem:[%s468 + $0x238] sm:$0xff]
    %v541 = vld [vmem:[%s468 + $0x240] sm:$0xff]
    %v542 = vld [vmem:[%s468 + $0x248] sm:$0xff]
    %v543 = vld [vmem:[%s468 + $0x250] sm:$0xff]
    %v544 = vld [vmem:[%s468 + $0x258] sm:$0xff]
    %v545 = vld [vmem:[%s468 + $0x260] sm:$0xff]
    %v546 = vld [vmem:[%s468 + $0x268] sm:$0xff]
    %v547 = vld [vmem:[%s468 + $0x270] sm:$0xff]
    %v548 = vld [vmem:[%s468 + $0x278] sm:$0xff]
    %v549 = vld [vmem:[%s468 + $0x280] sm:$0xff]
    %v550 = vld [vmem:[%s468 + $0x288] sm:$0xff]
    %v551 = vld [vmem:[%s468 + $0x290] sm:$0xff]
    %v552 = vld [vmem:[%s468 + $0x298] sm:$0xff]
    %v553 = vld [vmem:[%s468 + $0x2a0] sm:$0xff]
    %v554 = vld [vmem:[%s468 + $0x2a8] sm:$0xff]
    %v555 = vld [vmem:[%s468 + $0x2b0] sm:$0xff]
    %v556 = vld [vmem:[%s468 + $0x2b8] sm:$0xff]
    %v557 = vld [vmem:[%s468 + $0x2c0] sm:$0xff]
    %v558 = vld [vmem:[%s468 + $0x2c8] sm:$0xff]
    %v559 = vld [vmem:[%s468 + $0x2d0] sm:$0xff]
    %v560 = vld [vmem:[%s468 + $0x2d8] sm:$0xff]
    %v561 = vld [vmem:[%s468 + $0x2e0] sm:$0xff]
    %v562 = vld [vmem:[%s468 + $0x2e8] sm:$0xff]
    %v563 = vld [vmem:[%s468 + $0x2f0] sm:$0xff]
    %v564 = vld [vmem:[%s468 + $0x2f8] sm:$0xff]
    %v565 = vld [vmem:[%s468 + $0x300] sm:$0xff]
    %v566 = vld [vmem:[%s468 + $0x308] sm:$0xff]
    %v567 = vld [vmem:[%s468 + $0x310] sm:$0xff]
    %v568 = vld [vmem:[%s468 + $0x318] sm:$0xff]
    %v569 = vld [vmem:[%s468 + $0x320] sm:$0xff]
    %v570 = vld [vmem:[%s468 + $0x328] sm:$0xff]
    %v571 = vld [vmem:[%s468 + $0x330] sm:$0xff]
    %v572 = vld [vmem:[%s468 + $0x338] sm:$0xff]
    %v573 = vld [vmem:[%s468 + $0x340] sm:$0xff]
    %v574 = vld [vmem:[%s468 + $0x348] sm:$0xff]
    %v575 = vld [vmem:[%s468 + $0x350] sm:$0xff]
    %v576 = vld [vmem:[%s468 + $0x358] sm:$0xff]
    %v577 = vld [vmem:[%s468 + $0x360] sm:$0xff]
    %v578 = vld [vmem:[%s468 + $0x368] sm:$0xff]
    %v579 = vld [vmem:[%s468 + $0x370] sm:$0xff]
    %v580 = vld [vmem:[%s468 + $0x378] sm:$0xff]
    %v581 = vld [vmem:[%s468 + $0x380] sm:$0xff]
    %v582 = vld [vmem:[%s468 + $0x388] sm:$0xff]
    %v583 = vld [vmem:[%s468 + $0x390] sm:$0xff]
    %v584 = vld [vmem:[%s468 + $0x398] sm:$0xff]
    %v585 = vld [vmem:[%s468 + $0x3a0] sm:$0xff]
    %v586 = vld [vmem:[%s468 + $0x3a8] sm:$0xff]
    %v587 = vld [vmem:[%s468 + $0x3b0] sm:$0xff]
    %v588 = vld [vmem:[%s468 + $0x3b8] sm:$0xff]
    %v589 = vld [vmem:[%s468 + $0x3c0] sm:$0xff]
    %v590 = vld [vmem:[%s468 + $0x3c8] sm:$0xff]
    %v591 = vld [vmem:[%s468 + $0x3d0] sm:$0xff]
    %v592 = vld [vmem:[%s468 + $0x3d8] sm:$0xff]
    %v593 = vld [vmem:[%s468 + $0x3e0] sm:$0xff]
    %v594 = vld [vmem:[%s468 + $0x3e8] sm:$0xff]
    %v595 = vld [vmem:[%s468 + $0x3f0] sm:$0xff]
    %v596 = vld [vmem:[%s468 + $0x3f8] sm:$0xff]
    %v597 = vld [vmem:[%s468 + $0x400] sm:$0xff]
    %v598 = vld [vmem:[%s468 + $0x408] sm:$0xff]
    %v599 = vld [vmem:[%s468 + $0x410] sm:$0xff]
    %v600 = vld [vmem:[%s468 + $0x418] sm:$0xff]
    %v601 = vld [vmem:[%s468 + $0x420] sm:$0xff]
    %v602 = vld [vmem:[%s468 + $0x428] sm:$0xff]
    %v603 = vld [vmem:[%s468 + $0x430] sm:$0xff]
    %v604 = vld [vmem:[%s468 + $0x438] sm:$0xff]
    %v605 = vld [vmem:[%s468 + $0x440] sm:$0xff]
    %v606 = vld [vmem:[%s468 + $0x448] sm:$0xff]
    %v607 = vld [vmem:[%s468 + $0x450] sm:$0xff]
    %v608 = vld [vmem:[%s468 + $0x458] sm:$0xff]
    %v609 = vld [vmem:[%s468 + $0x460] sm:$0xff]
    %v610 = vld [vmem:[%s468 + $0x468] sm:$0xff]
    %v611 = vld [vmem:[%s468 + $0x470] sm:$0xff]
    %v612 = vld [vmem:[%s468 + $0x478] sm:$0xff]
    %v613 = vld [vmem:[%s468 + $0x480] sm:$0xff]
    %v614 = vld [vmem:[%s468 + $0x488] sm:$0x1f]
    %v615 = vld [vmem:[%s468 + $0x490] sm:$0x1f]
    %v616 = vld [vmem:[%s468 + $0x498] sm:$0x1f]
    %v617 = vld [vmem:[%s468 + $0x4a0] sm:$0x1f]
    %v618 = vld [vmem:[%s468 + $0x4a8] sm:$0x1f]
    %vm619 = vcmask 891904
    %v621 = vsel %vm619, %v442, 0
    %v624 = vsel %vm619, %v448, 0
    %v627 = vsel %vm619, %v454, 0
    %v630 = vsel %vm619, %v460, 0
    %v633 = vsel %vm619, %v466, 0
    %vm635 = vcmask 1044480
    %v637 = vsel %vm635, %v614, 0
    %v640 = vsel %vm635, %v615, 0
    %v643 = vsel %vm635, %v616, 0
    %v646 = vsel %vm635, %v617, 0
    %v649 = vsel %vm635, %v618, 0
    %651 = vmatprep.subr.mxu0 %v470
    %652 = vmatpush1.msra.mxu0 %v469
    %653 = vmatprep.subr.mxu0 %v475
    %654 = vmatpush1.msra.mxu0 %v474
    %655 = vmatprep.subr.mxu0 %v480
    %656 = vmatpush1.msra.mxu0 %v479
    %657 = vmatprep.subr.mxu0 %v485
    %658 = vmatpush1.msra.mxu0 %v484
    %659 = vmatprep.subr.mxu0 %v490
    %660 = vmatpush1.msra.mxu0 %v489
    %661 = vmatprep.subr.mxu0 %v495
    %662 = vmatpush1.msra.mxu0 %v494
    %663 = vmatprep.subr.mxu0 %v500
    %664 = vmatpush1.msra.mxu0 %v499
    %665 = vmatprep.subr.mxu0 %v505
    %666 = vmatpush1.msra.mxu0 %v504
    %667 = vmatprep.subr.mxu0 %v510
    %668 = vmatpush1.msra.mxu0 %v509
    %669 = vmatprep.subr.mxu0 %v515
    %670 = vmatpush1.msra.mxu0 %v514
    %671 = vmatprep.subr.mxu0 %v520
    %672 = vmatpush1.msra.mxu0 %v519
    %673 = vmatprep.subr.mxu0 %v525
    %674 = vmatpush1.msra.mxu0 %v524
    %675 = vmatprep.subr.mxu0 %v530
    %676 = vmatpush1.msra.mxu0 %v529
    %677 = vmatprep.subr.mxu0 %v535
    %678 = vmatpush1.msra.mxu0 %v534
    %679 = vmatprep.subr.mxu0 %v540
    %680 = vmatpush1.msra.mxu0 %v539
    %681 = vmatprep.subr.mxu0 %v545
    %682 = vmatpush1.msra.mxu0 %v544
    %683 = vmatprep.subr.mxu0 %v550
    %684 = vmatpush1.msra.mxu0 %v549
    %685 = vmatprep.subr.mxu0 %v555
    %686 = vmatpush1.msra.mxu0 %v554
    %687 = vmatprep.subr.mxu0 %v560
    %688 = vmatpush1.msra.mxu0 %v559
    %689 = vmatprep.subr.mxu0 %v565
    %690 = vmatpush1.msra.mxu0 %v564
    %691 = vmatprep.subr.mxu0 %v570
    %692 = vmatpush1.msra.mxu0 %v569
    %693 = vmatprep.subr.mxu0 %v575
    %694 = vmatpush1.msra.mxu0 %v574
    %695 = vmatprep.subr.mxu0 %v580
    %696 = vmatpush1.msra.mxu0 %v579
    %697 = vmatprep.subr.mxu0 %v585
    %698 = vmatpush1.msra.mxu0 %v584
    %699 = vmatprep.subr.mxu0 %v590
    %700 = vmatpush1.msra.mxu0 %v589
    %701 = vmatprep.subr.mxu0 %v595
    %702 = vmatpush1.msra.mxu0 %v594
    %703 = vmatprep.subr.mxu0 %v600
    %704 = vmatpush1.msra.mxu0 %v599
    %705 = vmatprep.subr.mxu0 %v605
    %706 = vmatpush1.msra.mxu0 %v604
    %707 = vmatprep.subr.mxu0 %v610
    %708 = vmatpush1.msra.mxu0 %v609
    %709 = vmatprep.subr.mxu0 %v640
    %710 = vmatpush1.msra.mxu0 %v637
    %711 = vmatprep.subr.mxu0 0.0
    %712 = vmatpush1.msra.mxu0 0.0
    %713 = vmatprep.subr.mxu0 0.0
    %714 = vmatpush1.msra.mxu0 0.0
    %715 = vmatprep.mubr.f32.mxu0 %v621
    %716 = vmatmul.mubr.f32.gmra.mrb[0].mxu0 %v440
    %v717 = vpop.f32.mrb[0].mxu0
    %v718 = vadd.f32 0.0, %v717
    %v719 = vpop.f32.mrb[0].mxu0
    %v720 = vadd.f32 0.0, %v719
    %721 = vmatprep.mubr.f32.mxu0 %v624
    %722 = vmatmul.mubr.f32.gmra.mrb[0].mxu0 %v446
    %v723 = vpop.f32.mrb[0].mxu0
    %v724 = vadd.f32 0.0, %v723
    %v725 = vpop.f32.mrb[0].mxu0
    %v726 = vadd.f32 0.0, %v725
    %727 = vmatprep.mubr.f32.mxu0 %v627
    %728 = vmatmul.mubr.f32.gmra.mrb[0].mxu0 %v452
    %v729 = vpop.f32.mrb[0].mxu0
    %v730 = vadd.f32 0.0, %v729
    %v731 = vpop.f32.mrb[0].mxu0
    %v732 = vadd.f32 0.0, %v731
    %733 = vmatprep.mubr.f32.mxu0 %v630
    %734 = vmatmul.mubr.f32.gmra.mrb[0].mxu0 %v458
    %v735 = vpop.f32.mrb[0].mxu0
    %v736 = vadd.f32 0.0, %v735
    %v737 = vpop.f32.mrb[0].mxu0
    %v738 = vadd.f32 0.0, %v737
    %739 = vmatprep.mubr.f32.mxu0 %v633
    %740 = vmatmul.mubr.f32.gmra.mrb[0].mxu0 %v464
    %v741 = vpop.f32.mrb[0].mxu0
    %v742 = vadd.f32 0.0, %v741
    %v743 = vpop.f32.mrb[0].mxu0
    %v744 = vadd.f32 0.0, %v743
    %745 = vdwg.mxu0
    %746 = vmatprep.subr.mxu0 %v472
    %747 = vmatpush1.msra.mxu0 %v471
    %748 = vmatprep.subr.mxu0 %v477
    %749 = vmatpush1.msra.mxu0 %v476
    %750 = vmatprep.subr.mxu0 %v482
    %751 = vmatpush1.msra.mxu0 %v481
    %752 = vmatprep.subr.mxu0 %v487
    %753 = vmatpush1.msra.mxu0 %v486
    %754 = vmatprep.subr.mxu0 %v492
    %755 = vmatpush1.msra.mxu0 %v491
    %756 = vmatprep.subr.mxu0 %v497
    %757 = vmatpush1.msra.mxu0 %v496
    %758 = vmatprep.subr.mxu0 %v502
    %759 = vmatpush1.msra.mxu0 %v501
    %760 = vmatprep.subr.mxu0 %v507
    %761 = vmatpush1.msra.mxu0 %v506
    %762 = vmatprep.subr.mxu0 %v512
    %763 = vmatpush1.msra.mxu0 %v511
    %764 = vmatprep.subr.mxu0 %v517
    %765 = vmatpush1.msra.mxu0 %v516
    %766 = vmatprep.subr.mxu0 %v522
    %767 = vmatpush1.msra.mxu0 %v521
    %768 = vmatprep.subr.mxu0 %v527
    %769 = vmatpush1.msra.mxu0 %v526
    %770 = vmatprep.subr.mxu0 %v532
    %771 = vmatpush1.msra.mxu0 %v531
    %772 = vmatprep.subr.mxu0 %v537
    %773 = vmatpush1.msra.mxu0 %v536
    %774 = vmatprep.subr.mxu0 %v542
    %775 = vmatpush1.msra.mxu0 %v541
    %776 = vmatprep.subr.mxu0 %v547
    %777 = vmatpush1.msra.mxu0 %v546
    %778 = vmatprep.subr.mxu0 %v552
    %779 = vmatpush1.msra.mxu0 %v551
    %780 = vmatprep.subr.mxu0 %v557
    %781 = vmatpush1.msra.mxu0 %v556
    %782 = vmatprep.subr.mxu0 %v562
    %783 = vmatpush1.msra.mxu0 %v561
    %784 = vmatprep.subr.mxu0 %v567
    %785 = vmatpush1.msra.mxu0 %v566
    %786 = vmatprep.subr.mxu0 %v572
    %787 = vmatpush1.msra.mxu0 %v571
    %788 = vmatprep.subr.mxu0 %v577
    %789 = vmatpush1.msra.mxu0 %v576
    %790 = vmatprep.subr.mxu0 %v582
    %791 = vmatpush1.msra.mxu0 %v581
    %792 = vmatprep.subr.mxu0 %v587
    %793 = vmatpush1.msra.mxu0 %v586
    %794 = vmatprep.subr.mxu0 %v592
    %795 = vmatpush1.msra.mxu0 %v591
    %796 = vmatprep.subr.mxu0 %v597
    %797 = vmatpush1.msra.mxu0 %v596
    %798 = vmatprep.subr.mxu0 %v602
    %799 = vmatpush1.msra.mxu0 %v601
    %800 = vmatprep.subr.mxu0 %v607
    %801 = vmatpush1.msra.mxu0 %v606
    %802 = vmatprep.subr.mxu0 %v612
    %803 = vmatpush1.msra.mxu0 %v611
    %804 = vmatprep.subr.mxu0 %v646
    %805 = vmatpush1.msra.mxu0 %v643
    %806 = vmatprep.subr.mxu0 0.0
    %807 = vmatpush1.msra.mxu0 0.0
    %808 = vmatprep.subr.mxu0 0.0
    %809 = vmatpush1.msra.mxu0 0.0
    %810 = vmatprep.mubr.f32.mxu0 %v621
    %811 = vmatmul.mubr.f32.gmra.mrb[0].mxu0 %v440
    %v812 = vpop.f32.mrb[0].mxu0
    %v813 = vadd.f32 0.0, %v812
    %v814 = vpop.f32.mrb[0].mxu0
    %v815 = vadd.f32 0.0, %v814
    %816 = vmatprep.mubr.f32.mxu0 %v624
    %817 = vmatmul.mubr.f32.gmra.mrb[0].mxu0 %v446
    %v818 = vpop.f32.mrb[0].mxu0
    %v819 = vadd.f32 0.0, %v818
    %v820 = vpop.f32.mrb[0].mxu0
    %v821 = vadd.f32 0.0, %v820
    %822 = vmatprep.mubr.f32.mxu0 %v627
    %823 = vmatmul.mubr.f32.gmra.mrb[0].mxu0 %v452
    %v824 = vpop.f32.mrb[0].mxu0
    %v825 = vadd.f32 0.0, %v824
    %v826 = vpop.f32.mrb[0].mxu0
    %v827 = vadd.f32 0.0, %v826
    %828 = vmatprep.mubr.f32.mxu0 %v630
    %829 = vmatmul.mubr.f32.gmra.mrb[0].mxu0 %v458
    %v830 = vpop.f32.mrb[0].mxu0
    %v831 = vadd.f32 0.0, %v830
    %v832 = vpop.f32.mrb[0].mxu0
    %v833 = vadd.f32 0.0, %v832
    %834 = vmatprep.mubr.f32.mxu0 %v633
    %835 = vmatmul.mubr.f32.gmra.mrb[0].mxu0 %v464
    %v836 = vpop.f32.mrb[0].mxu0
    %v837 = vadd.f32 0.0, %v836
    %v838 = vpop.f32.mrb[0].mxu0
    %v839 = vadd.f32 0.0, %v838
    %840 = vdwg.mxu0
    %841 = vmatprep.subr.mxu0 0.0
    %842 = vmatpush1.msra.mxu0 %v473
    %843 = vmatprep.subr.mxu0 0.0
    %844 = vmatpush1.msra.mxu0 %v478
    %845 = vmatprep.subr.mxu0 0.0
    %846 = vmatpush1.msra.mxu0 %v483
    %847 = vmatprep.subr.mxu0 0.0
    %848 = vmatpush1.msra.mxu0 %v488
    %849 = vmatprep.subr.mxu0 0.0
    %850 = vmatpush1.msra.mxu0 %v493
    %851 = vmatprep.subr.mxu0 0.0
    %852 = vmatpush1.msra.mxu0 %v498
    %853 = vmatprep.subr.mxu0 0.0
    %854 = vmatpush1.msra.mxu0 %v503
    %855 = vmatprep.subr.mxu0 0.0
    %856 = vmatpush1.msra.mxu0 %v508
    %857 = vmatprep.subr.mxu0 0.0
    %858 = vmatpush1.msra.mxu0 %v513
    %859 = vmatprep.subr.mxu0 0.0
    %860 = vmatpush1.msra.mxu0 %v518
    %861 = vmatprep.subr.mxu0 0.0
    %862 = vmatpush1.msra.mxu0 %v523
    %863 = vmatprep.subr.mxu0 0.0
    %864 = vmatpush1.msra.mxu0 %v528
    %865 = vmatprep.subr.mxu0 0.0
    %866 = vmatpush1.msra.mxu0 %v533
    %867 = vmatprep.subr.mxu0 0.0
    %868 = vmatpush1.msra.mxu0 %v538
    %869 = vmatprep.subr.mxu0 0.0
    %870 = vmatpush1.msra.mxu0 %v543
    %871 = vmatprep.subr.mxu0 0.0
    %872 = vmatpush1.msra.mxu0 %v548
    %873 = vmatprep.subr.mxu0 0.0
    %874 = vmatpush1.msra.mxu0 %v553
    %875 = vmatprep.subr.mxu0 0.0
    %876 = vmatpush1.msra.mxu0 %v558
    %877 = vmatprep.subr.mxu0 0.0
    %878 = vmatpush1.msra.mxu0 %v563
    %879 = vmatprep.subr.mxu0 0.0
    %880 = vmatpush1.msra.mxu0 %v568
    %881 = vmatprep.subr.mxu0 0.0
    %882 = vmatpush1.msra.mxu0 %v573
    %883 = vmatprep.subr.mxu0 0.0
    %884 = vmatpush1.msra.mxu0 %v578
    %885 = vmatprep.subr.mxu0 0.0
    %886 = vmatpush1.msra.mxu0 %v583
    %887 = vmatprep.subr.mxu0 0.0
    %888 = vmatpush1.msra.mxu0 %v588
    %889 = vmatprep.subr.mxu0 0.0
    %890 = vmatpush1.msra.mxu0 %v593
    %891 = vmatprep.subr.mxu0 0.0
    %892 = vmatpush1.msra.mxu0 %v598
    %893 = vmatprep.subr.mxu0 0.0
    %894 = vmatpush1.msra.mxu0 %v603
    %895 = vmatprep.subr.mxu0 0.0
    %896 = vmatpush1.msra.mxu0 %v608
    %897 = vmatprep.subr.mxu0 0.0
    %898 = vmatpush1.msra.mxu0 %v613
    %899 = vmatprep.subr.mxu0 0.0
    %900 = vmatpush1.msra.mxu0 %v649
    %901 = vmatprep.subr.mxu0 0.0
    %902 = vmatpush1.msra.mxu0 0.0
    %903 = vmatprep.subr.mxu0 0.0
    %904 = vmatpush1.msra.mxu0 0.0
    %905 = vmatprep.mubr.f32.mxu0 %v621
    %906 = vmatmul.mubr.f32.gmra.mrb[0].mxu0 %v440
    %v907 = vpop.f32.mrb[0].mxu0
    %v908 = vadd.f32 0.0, %v907
    %v909 = vpop.f32.mrb[0].mxu0
    %910 = vmatprep.mubr.f32.mxu0 %v624
    %911 = vmatmul.mubr.f32.gmra.mrb[0].mxu0 %v446
    %v912 = vpop.f32.mrb[0].mxu0
    %v913 = vadd.f32 0.0, %v912
    %v914 = vpop.f32.mrb[0].mxu0
    %915 = vmatprep.mubr.f32.mxu0 %v627
    %916 = vmatmul.mubr.f32.gmra.mrb[0].mxu0 %v452
    %v917 = vpop.f32.mrb[0].mxu0
    %v918 = vadd.f32 0.0, %v917
    %v919 = vpop.f32.mrb[0].mxu0
    %920 = vmatprep.mubr.f32.mxu0 %v630
    %921 = vmatmul.mubr.f32.gmra.mrb[0].mxu0 %v458
    %v922 = vpop.f32.mrb[0].mxu0
    %v923 = vadd.f32 0.0, %v922
    %v924 = vpop.f32.mrb[0].mxu0
    %925 = vmatprep.mubr.f32.mxu0 %v633
    %926 = vmatmul.mubr.f32.gmra.mrb[0].mxu0 %v464
    %v927 = vpop.f32.mrb[0].mxu0
    %v928 = vadd.f32 0.0, %v927
    %v929 = vpop.f32.mrb[0].mxu0
    %930 = vdwg.mxu0
    %v932 = vsel %vm619, %v176, 0
    %v935 = vsel %vm619, %v182, 0
    %v938 = vsel %vm619, %v188, 0
    %v941 = vsel %vm619, %v194, 0
    %v944 = vsel %vm619, %v200, 0
    %v947 = vsel %vm635, %v347, 0
    %v950 = vsel %vm635, %v348, 0
    %v953 = vsel %vm635, %v349, 0
    %v956 = vsel %vm635, %v350, 0
    %v959 = vsel %vm635, %v351, 0
    %961 = vmatprep.subr.mxu0 %v203
    %962 = vmatpush1.msra.mxu0 %v202
    %963 = vmatprep.subr.mxu0 %v208
    %964 = vmatpush1.msra.mxu0 %v207
    %965 = vmatprep.subr.mxu0 %v213
    %966 = vmatpush1.msra.mxu0 %v212
    %967 = vmatprep.subr.mxu0 %v218
    %968 = vmatpush1.msra.mxu0 %v217
    %969 = vmatprep.subr.mxu0 %v223
    %970 = vmatpush1.msra.mxu0 %v222
    %971 = vmatprep.subr.mxu0 %v228
    %972 = vmatpush1.msra.mxu0 %v227
    %973 = vmatprep.subr.mxu0 %v233
    %974 = vmatpush1.msra.mxu0 %v232
    %975 = vmatprep.subr.mxu0 %v238
    %976 = vmatpush1.msra.mxu0 %v237
    %977 = vmatprep.subr.mxu0 %v243
    %978 = vmatpush1.msra.mxu0 %v242
    %979 = vmatprep.subr.mxu0 %v248
    %980 = vmatpush1.msra.mxu0 %v247
    %981 = vmatprep.subr.mxu0 %v253
    %982 = vmatpush1.msra.mxu0 %v252
    %983 = vmatprep.subr.mxu0 %v258
    %984 = vmatpush1.msra.mxu0 %v257
    %985 = vmatprep.subr.mxu0 %v263
    %986 = vmatpush1.msra.mxu0 %v262
    %987 = vmatprep.subr.mxu0 %v268
    %988 = vmatpush1.msra.mxu0 %v267
    %989 = vmatprep.subr.mxu0 %v273
    %990 = vmatpush1.msra.mxu0 %v272
    %991 = vmatprep.subr.mxu0 %v278
    %992 = vmatpush1.msra.mxu0 %v277
    %993 = vmatprep.subr.mxu0 %v283
    %994 = vmatpush1.msra.mxu0 %v282
    %995 = vmatprep.subr.mxu0 %v288
    %996 = vmatpush1.msra.mxu0 %v287
    %997 = vmatprep.subr.mxu0 %v293
    %998 = vmatpush1.msra.mxu0 %v292
    %999 = vmatprep.subr.mxu0 %v298
    %1000 = vmatpush1.msra.mxu0 %v297
    %1001 = vmatprep.subr.mxu0 %v303
    %1002 = vmatpush1.msra.mxu0 %v302
    %1003 = vmatprep.subr.mxu0 %v308
    %1004 = vmatpush1.msra.mxu0 %v307
    %1005 = vmatprep.subr.mxu0 %v313
    %1006 = vmatpush1.msra.mxu0 %v312
    %1007 = vmatprep.subr.mxu0 %v318
    %1008 = vmatpush1.msra.mxu0 %v317
    %1009 = vmatprep.subr.mxu0 %v323
    %1010 = vmatpush1.msra.mxu0 %v322
    %1011 = vmatprep.subr.mxu0 %v328
    %1012 = vmatpush1.msra.mxu0 %v327
    %1013 = vmatprep.subr.mxu0 %v333
    %1014 = vmatpush1.msra.mxu0 %v332
    %1015 = vmatprep.subr.mxu0 %v338
    %1016 = vmatpush1.msra.mxu0 %v337
    %1017 = vmatprep.subr.mxu0 %v343
    %1018 = vmatpush1.msra.mxu0 %v342
    %1019 = vmatprep.subr.mxu0 %v950
    %1020 = vmatpush1.msra.mxu0 %v947
    %1021 = vmatprep.subr.mxu0 0.0
    %1022 = vmatpush1.msra.mxu0 0.0
    %1023 = vmatprep.subr.mxu0 0.0
    %1024 = vmatpush1.msra.mxu0 0.0
    %1025 = vmatprep.mubr.f32.mxu0 %v932
    %1026 = vmatmul.mubr.f32.gmra.mrb[0].mxu0 %v174
    %v1027 = vpop.f32.mrb[0].mxu0
    %v1028 = vadd.f32 %v718, %v1027
    %v1029 = vpop.f32.mrb[0].mxu0
    %v1030 = vadd.f32 %v720, %v1029
    %1031 = vmatprep.mubr.f32.mxu0 %v935
    %1032 = vmatmul.mubr.f32.gmra.mrb[0].mxu0 %v180
    %v1033 = vpop.f32.mrb[0].mxu0
    %v1034 = vadd.f32 %v724, %v1033
    %v1035 = vpop.f32.mrb[0].mxu0
    %v1036 = vadd.f32 %v726, %v1035
    %1037 = vmatprep.mubr.f32.mxu0 %v938
    %1038 = vmatmul.mubr.f32.gmra.mrb[0].mxu0 %v186
    %v1039 = vpop.f32.mrb[0].mxu0
    %v1040 = vadd.f32 %v730, %v1039
    %v1041 = vpop.f32.mrb[0].mxu0
    %v1042 = vadd.f32 %v732, %v1041
    %1043 = vmatprep.mubr.f32.mxu0 %v941
    %1044 = vmatmul.mubr.f32.gmra.mrb[0].mxu0 %v192
    %v1045 = vpop.f32.mrb[0].mxu0
    %v1046 = vadd.f32 %v736, %v1045
    %v1047 = vpop.f32.mrb[0].mxu0
    %v1048 = vadd.f32 %v738, %v1047
    %1049 = vmatprep.mubr.f32.mxu0 %v944
    %1050 = vmatmul.mubr.f32.gmra.mrb[0].mxu0 %v198
    %v1051 = vpop.f32.mrb[0].mxu0
    %v1052 = vadd.f32 %v742, %v1051
    %v1053 = vpop.f32.mrb[0].mxu0
    %v1054 = vadd.f32 %v744, %v1053
    %1055 = vdwg.mxu0
    %1056 = vmatprep.subr.mxu0 %v205
    %1057 = vmatpush1.msra.mxu0 %v204
    %1058 = vmatprep.subr.mxu0 %v210
    %1059 = vmatpush1.msra.mxu0 %v209
    %1060 = vmatprep.subr.mxu0 %v215
    %1061 = vmatpush1.msra.mxu0 %v214
    %1062 = vmatprep.subr.mxu0 %v220
    %1063 = vmatpush1.msra.mxu0 %v219
    %1064 = vmatprep.subr.mxu0 %v225
    %1065 = vmatpush1.msra.mxu0 %v224
    %1066 = vmatprep.subr.mxu0 %v230
    %1067 = vmatpush1.msra.mxu0 %v229
    %1068 = vmatprep.subr.mxu0 %v235
    %1069 = vmatpush1.msra.mxu0 %v234
    %1070 = vmatprep.subr.mxu0 %v240
    %1071 = vmatpush1.msra.mxu0 %v239
    %1072 = vmatprep.subr.mxu0 %v245
    %1073 = vmatpush1.msra.mxu0 %v244
    %1074 = vmatprep.subr.mxu0 %v250
    %1075 = vmatpush1.msra.mxu0 %v249
    %1076 = vmatprep.subr.mxu0 %v255
    %1077 = vmatpush1.msra.mxu0 %v254
    %1078 = vmatprep.subr.mxu0 %v260
    %1079 = vmatpush1.msra.mxu0 %v259
    %1080 = vmatprep.subr.mxu0 %v265
    %1081 = vmatpush1.msra.mxu0 %v264
    %1082 = vmatprep.subr.mxu0 %v270
    %1083 = vmatpush1.msra.mxu0 %v269
    %1084 = vmatprep.subr.mxu0 %v275
    %1085 = vmatpush1.msra.mxu0 %v274
    %1086 = vmatprep.subr.mxu0 %v280
    %1087 = vmatpush1.msra.mxu0 %v279
    %1088 = vmatprep.subr.mxu0 %v285
    %1089 = vmatpush1.msra.mxu0 %v284
    %1090 = vmatprep.subr.mxu0 %v290
    %1091 = vmatpush1.msra.mxu0 %v289
    %1092 = vmatprep.subr.mxu0 %v295
    %1093 = vmatpush1.msra.mxu0 %v294
    %1094 = vmatprep.subr.mxu0 %v300
    %1095 = vmatpush1.msra.mxu0 %v299
    %1096 = vmatprep.subr.mxu0 %v305
    %1097 = vmatpush1.msra.mxu0 %v304
    %1098 = vmatprep.subr.mxu0 %v310
    %1099 = vmatpush1.msra.mxu0 %v309
    %1100 = vmatprep.subr.mxu0 %v315
    %1101 = vmatpush1.msra.mxu0 %v314
    %1102 = vmatprep.subr.mxu0 %v320
    %1103 = vmatpush1.msra.mxu0 %v319
    %1104 = vmatprep.subr.mxu0 %v325
    %1105 = vmatpush1.msra.mxu0 %v324
    %1106 = vmatprep.subr.mxu0 %v330
    %1107 = vmatpush1.msra.mxu0 %v329
    %1108 = vmatprep.subr.mxu0 %v335
    %1109 = vmatpush1.msra.mxu0 %v334
    %1110 = vmatprep.subr.mxu0 %v340
    %1111 = vmatpush1.msra.mxu0 %v339
    %1112 = vmatprep.subr.mxu0 %v345
    %1113 = vmatpush1.msra.mxu0 %v344
    %1114 = vmatprep.subr.mxu0 %v956
    %1115 = vmatpush1.msra.mxu0 %v953
    %1116 = vmatprep.subr.mxu0 0.0
    %1117 = vmatpush1.msra.mxu0 0.0
    %1118 = vmatprep.subr.mxu0 0.0
    %1119 = vmatpush1.msra.mxu0 0.0
    %1120 = vmatprep.mubr.f32.mxu0 %v932
    %1121 = vmatmul.mubr.f32.gmra.mrb[0].mxu0 %v174
    %v1122 = vpop.f32.mrb[0].mxu0
    %v1123 = vadd.f32 %v813, %v1122
    %v1124 = vpop.f32.mrb[0].mxu0
    %v1125 = vadd.f32 %v815, %v1124
    %1126 = vmatprep.mubr.f32.mxu0 %v935
    %1127 = vmatmul.mubr.f32.gmra.mrb[0].mxu0 %v180
    %v1128 = vpop.f32.mrb[0].mxu0
    %v1129 = vadd.f32 %v819, %v1128
    %v1130 = vpop.f32.mrb[0].mxu0
    %v1131 = vadd.f32 %v821, %v1130
    %1132 = vmatprep.mubr.f32.mxu0 %v938
    %1133 = vmatmul.mubr.f32.gmra.mrb[0].mxu0 %v186
    %v1134 = vpop.f32.mrb[0].mxu0
    %v1135 = vadd.f32 %v825, %v1134
    %v1136 = vpop.f32.mrb[0].mxu0
    %v1137 = vadd.f32 %v827, %v1136
    %1138 = vmatprep.mubr.f32.mxu0 %v941
    %1139 = vmatmul.mubr.f32.gmra.mrb[0].mxu0 %v192
    %v1140 = vpop.f32.mrb[0].mxu0
    %v1141 = vadd.f32 %v831, %v1140
    %v1142 = vpop.f32.mrb[0].mxu0
    %v1143 = vadd.f32 %v833, %v1142
    %1144 = vmatprep.mubr.f32.mxu0 %v944
    %1145 = vmatmul.mubr.f32.gmra.mrb[0].mxu0 %v198
    %v1146 = vpop.f32.mrb[0].mxu0
    %v1147 = vadd.f32 %v837, %v1146
    %v1148 = vpop.f32.mrb[0].mxu0
    %v1149 = vadd.f32 %v839, %v1148
    %1150 = vdwg.mxu0
    %1151 = vmatprep.subr.mxu0 0.0
    %1152 = vmatpush1.msra.mxu0 %v206
    %1153 = vmatprep.subr.mxu0 0.0
    %1154 = vmatpush1.msra.mxu0 %v211
    %1155 = vmatprep.subr.mxu0 0.0
    %1156 = vmatpush1.msra.mxu0 %v216
    %1157 = vmatprep.subr.mxu0 0.0
    %1158 = vmatpush1.msra.mxu0 %v221
    %1159 = vmatprep.subr.mxu0 0.0
    %1160 = vmatpush1.msra.mxu0 %v226
    %1161 = vmatprep.subr.mxu0 0.0
    %1162 = vmatpush1.msra.mxu0 %v231
    %1163 = vmatprep.subr.mxu0 0.0
    %1164 = vmatpush1.msra.mxu0 %v236
    %1165 = vmatprep.subr.mxu0 0.0
    %1166 = vmatpush1.msra.mxu0 %v241
    %1167 = vmatprep.subr.mxu0 0.0
    %1168 = vmatpush1.msra.mxu0 %v246
    %1169 = vmatprep.subr.mxu0 0.0
    %1170 = vmatpush1.msra.mxu0 %v251
    %1171 = vmatprep.subr.mxu0 0.0
    %1172 = vmatpush1.msra.mxu0 %v256
    %1173 = vmatprep.subr.mxu0 0.0
    %1174 = vmatpush1.msra.mxu0 %v261
    %1175 = vmatprep.subr.mxu0 0.0
    %1176 = vmatpush1.msra.mxu0 %v266
    %1177 = vmatprep.subr.mxu0 0.0
    %1178 = vmatpush1.msra.mxu0 %v271
    %1179 = vmatprep.subr.mxu0 0.0
    %1180 = vmatpush1.msra.mxu0 %v276
    %1181 = vmatprep.subr.mxu0 0.0
    %1182 = vmatpush1.msra.mxu0 %v281
    %1183 = vmatprep.subr.mxu0 0.0
    %1184 = vmatpush1.msra.mxu0 %v286
    %1185 = vmatprep.subr.mxu0 0.0
    %1186 = vmatpush1.msra.mxu0 %v291
    %1187 = vmatprep.subr.mxu0 0.0
    %1188 = vmatpush1.msra.mxu0 %v296
    %1189 = vmatprep.subr.mxu0 0.0
    %1190 = vmatpush1.msra.mxu0 %v301
    %1191 = vmatprep.subr.mxu0 0.0
    %1192 = vmatpush1.msra.mxu0 %v306
    %1193 = vmatprep.subr.mxu0 0.0
    %1194 = vmatpush1.msra.mxu0 %v311
    %1195 = vmatprep.subr.mxu0 0.0
    %1196 = vmatpush1.msra.mxu0 %v316
    %1197 = vmatprep.subr.mxu0 0.0
    %1198 = vmatpush1.msra.mxu0 %v321
    %1199 = vmatprep.subr.mxu0 0.0
    %1200 = vmatpush1.msra.mxu0 %v326
    %1201 = vmatprep.subr.mxu0 0.0
    %1202 = vmatpush1.msra.mxu0 %v331
    %1203 = vmatprep.subr.mxu0 0.0
    %1204 = vmatpush1.msra.mxu0 %v336
    %1205 = vmatprep.subr.mxu0 0.0
    %1206 = vmatpush1.msra.mxu0 %v341
    %1207 = vmatprep.subr.mxu0 0.0
    %1208 = vmatpush1.msra.mxu0 %v346
    %1209 = vmatprep.subr.mxu0 0.0
    %1210 = vmatpush1.msra.mxu0 %v959
    %1211 = vmatprep.subr.mxu0 0.0
    %1212 = vmatpush1.msra.mxu0 0.0
    %1213 = vmatprep.subr.mxu0 0.0
    %1214 = vmatpush1.msra.mxu0 0.0
    %1215 = vmatprep.mubr.f32.mxu0 %v932
    %1216 = vmatmul.mubr.f32.gmra.mrb[0].mxu0 %v174
    %v1217 = vpop.f32.mrb[0].mxu0
    %v1218 = vadd.f32 %v908, %v1217
    %v1219 = vpop.f32.mrb[0].mxu0
    %1220 = vmatprep.mubr.f32.mxu0 %v935
    %1221 = vmatmul.mubr.f32.gmra.mrb[0].mxu0 %v180
    %v1222 = vpop.f32.mrb[0].mxu0
    %v1223 = vadd.f32 %v913, %v1222
    %v1224 = vpop.f32.mrb[0].mxu0
    %1225 = vmatprep.mubr.f32.mxu0 %v938
    %1226 = vmatmul.mubr.f32.gmra.mrb[0].mxu0 %v186
    %v1227 = vpop.f32.mrb[0].mxu0
    %v1228 = vadd.f32 %v918, %v1227
    %v1229 = vpop.f32.mrb[0].mxu0
    %1230 = vmatprep.mubr.f32.mxu0 %v941
    %1231 = vmatmul.mubr.f32.gmra.mrb[0].mxu0 %v192
    %v1232 = vpop.f32.mrb[0].mxu0
    %v1233 = vadd.f32 %v923, %v1232
    %v1234 = vpop.f32.mrb[0].mxu0
    %1235 = vmatprep.mubr.f32.mxu0 %v944
    %1236 = vmatmul.mubr.f32.gmra.mrb[0].mxu0 %v198
    %v1237 = vpop.f32.mrb[0].mxu0
    %v1238 = vadd.f32 %v928, %v1237
    %v1239 = vpop.f32.mrb[0].mxu0
    %1240 = vdwg.mxu0
    %s1241 = scalar_lea.vmem %s1, 80
    %v1242 = vld [vmem:[%s1241] sm:$0xff]
    %v1243 = vld [vmem:[%s1241 + $0x8] sm:$0xff]
    %v1244 = vld [vmem:[%s1241 + $0x10] sm:$0xff]
    %v1245 = vld [vmem:[%s1241 + $0x18] sm:$0xff]
    %v1246 = vld [vmem:[%s1241 + $0x20] sm:$0x7f]
    %v1248 = vsel %vm84, %v1242, 0
    %v1251 = vsel %vm84, %v1243, 0
    %v1254 = vsel %vm84, %v1244, 0
    %v1257 = vsel %vm84, %v1245, 0
    %v1260 = vsel %vm84, %v1246, 0
    %1262 = vmatprep.subr.mxu0 %v60
    %1263 = vmatpush1.msra.mxu0 %v59
    %1264 = vmatprep.subr.mxu0 %v62
    %1265 = vmatpush1.msra.mxu0 %v61
    %1266 = vmatprep.subr.mxu0 %v64
    %1267 = vmatpush1.msra.mxu0 %v63
    %1268 = vmatprep.subr.mxu0 %v66
    %1269 = vmatpush1.msra.mxu0 %v65
    %1270 = vmatprep.subr.mxu0 %v68
    %1271 = vmatpush1.msra.mxu0 %v67
    %1272 = vmatprep.subr.mxu0 %v70
    %1273 = vmatpush1.msra.mxu0 %v69
    %1274 = vmatprep.subr.mxu0 %v72
    %1275 = vmatpush1.msra.mxu0 %v71
    %1276 = vmatprep.subr.mxu0 %v74
    %1277 = vmatpush1.msra.mxu0 %v73
    %1278 = vmatprep.subr.mxu0 %v76
    %1279 = vmatpush1.msra.mxu0 %v75
    %1280 = vmatprep.subr.mxu0 %v105
    %1281 = vmatpush1.msra.mxu0 %v102
    %1282 = vmatprep.subr.mxu0 0.0
    %1283 = vmatpush1.msra.mxu0 0.0
    %1284 = vmatprep.subr.mxu0 0.0
    %1285 = vmatpush1.msra.mxu0 0.0
    %1286 = vmatprep.subr.mxu0 0.0
    %1287 = vmatpush1.msra.mxu0 0.0
    %1288 = vmatprep.subr.mxu0 0.0
    %1289 = vmatpush1.msra.mxu0 0.0
    %1290 = vmatprep.subr.mxu0 0.0
    %1291 = vmatpush1.msra.mxu0 0.0
    %1292 = vmatprep.subr.mxu0 0.0
    %1293 = vmatpush1.msra.mxu0 0.0
    %1294 = vmatprep.subr.mxu0 0.0
    %1295 = vmatpush1.msra.mxu0 0.0
    %1296 = vmatprep.subr.mxu0 0.0
    %1297 = vmatpush1.msra.mxu0 0.0
    %1298 = vmatprep.subr.mxu0 0.0
    %1299 = vmatpush1.msra.mxu0 0.0
    %1300 = vmatprep.subr.mxu0 0.0
    %1301 = vmatpush1.msra.mxu0 0.0
    %1302 = vmatprep.subr.mxu0 0.0
    %1303 = vmatpush1.msra.mxu0 0.0
    %1304 = vmatprep.subr.mxu0 0.0
    %1305 = vmatpush1.msra.mxu0 0.0
    %1306 = vmatprep.subr.mxu0 0.0
    %1307 = vmatpush1.msra.mxu0 0.0
    %1308 = vmatprep.subr.mxu0 0.0
    %1309 = vmatpush1.msra.mxu0 0.0
    %1310 = vmatprep.subr.mxu0 0.0
    %1311 = vmatpush1.msra.mxu0 0.0
    %1312 = vmatprep.subr.mxu0 0.0
    %1313 = vmatpush1.msra.mxu0 0.0
    %1314 = vmatprep.subr.mxu0 0.0
    %1315 = vmatpush1.msra.mxu0 0.0
    %1316 = vmatprep.subr.mxu0 0.0
    %1317 = vmatpush1.msra.mxu0 0.0
    %1318 = vmatprep.subr.mxu0 0.0
    %1319 = vmatpush1.msra.mxu0 0.0
    %1320 = vmatprep.subr.mxu0 0.0
    %1321 = vmatpush1.msra.mxu0 0.0
    %1322 = vmatprep.subr.mxu0 0.0
    %1323 = vmatpush1.msra.mxu0 0.0
    %1324 = vmatprep.subr.mxu0 0.0
    %1325 = vmatpush1.msra.mxu0 0.0
    %1326 = vmatprep.mubr.f32.mxu0 0.0
    %1327 = vmatmul.mubr.f32.gmra.mrb[0].mxu0 %v1248
    %v1328 = vpop.f32.mrb[0].mxu0
    %v1329 = vadd.f32 0.0, %v1328
    %v1330 = vpop.f32.mrb[0].mxu0
    %v1331 = vadd.f32 0.0, %v1330
    %1332 = vmatprep.mubr.f32.mxu0 0.0
    %1333 = vmatmul.mubr.f32.gmra.mrb[0].mxu0 %v1251
    %v1334 = vpop.f32.mrb[0].mxu0
    %v1335 = vadd.f32 0.0, %v1334
    %v1336 = vpop.f32.mrb[0].mxu0
    %v1337 = vadd.f32 0.0, %v1336
    %1338 = vmatprep.mubr.f32.mxu0 0.0
    %1339 = vmatmul.mubr.f32.gmra.mrb[0].mxu0 %v1254
    %v1340 = vpop.f32.mrb[0].mxu0
    %v1341 = vadd.f32 0.0, %v1340
    %v1342 = vpop.f32.mrb[0].mxu0
    %v1343 = vadd.f32 0.0, %v1342
    %1344 = vmatprep.mubr.f32.mxu0 0.0
    %1345 = vmatmul.mubr.f32.gmra.mrb[0].mxu0 %v1257
    %v1346 = vpop.f32.mrb[0].mxu0
    %v1347 = vadd.f32 0.0, %v1346
    %v1348 = vpop.f32.mrb[0].mxu0
    %v1349 = vadd.f32 0.0, %v1348
    %1350 = vmatprep.mubr.f32.mxu0 0.0
    %1351 = vmatmul.mubr.f32.gmra.mrb[0].mxu0 %v1260
    %v1352 = vpop.f32.mrb[0].mxu0
    %v1353 = vadd.f32 0.0, %v1352
    %v1354 = vpop.f32.mrb[0].mxu0
    %v1355 = vadd.f32 0.0, %v1354
    %1356 = vdwg.mxu0
    %s1357 = scalar_lea.vmem %s2, 2400
    %v1358 = vld [vmem:[%s1357] sm:$0xff]
    %v1359 = vld [vmem:[%s1357 + $0x8] sm:$0xff]
    %v1360 = vld [vmem:[%s1357 + $0x10] sm:$0xff]
    %v1361 = vld [vmem:[%s1357 + $0x18] sm:$0xff]
    %v1362 = vld [vmem:[%s1357 + $0x20] sm:$0xff]
    %v1363 = vld [vmem:[%s1357 + $0x28] sm:$0xff]
    %v1364 = vld [vmem:[%s1357 + $0x30] sm:$0xff]
    %v1365 = vld [vmem:[%s1357 + $0x38] sm:$0xff]
    %v1366 = vld [vmem:[%s1357 + $0x40] sm:$0xff]
    %v1367 = vld [vmem:[%s1357 + $0x48] sm:$0xff]
    %v1368 = vld [vmem:[%s1357 + $0x50] sm:$0xff]
    %v1369 = vld [vmem:[%s1357 + $0x58] sm:$0xff]
    %v1370 = vld [vmem:[%s1357 + $0x60] sm:$0xff]
    %v1371 = vld [vmem:[%s1357 + $0x68] sm:$0xff]
    %v1372 = vld [vmem:[%s1357 + $0x70] sm:$0xff]
    %v1373 = vld [vmem:[%s1357 + $0x78] sm:$0xff]
    %v1374 = vld [vmem:[%s1357 + $0x80] sm:$0xff]
    %v1375 = vld [vmem:[%s1357 + $0x88] sm:$0xff]
    %v1376 = vld [vmem:[%s1357 + $0x90] sm:$0xff]
    %v1377 = vld [vmem:[%s1357 + $0x98] sm:$0xff]
    %v1378 = vld [vmem:[%s1357 + $0xa0] sm:$0xff]
    %v1379 = vld [vmem:[%s1357 + $0xa8] sm:$0xff]
    %v1380 = vld [vmem:[%s1357 + $0xb0] sm:$0xff]
    %v1381 = vld [vmem:[%s1357 + $0xb8] sm:$0xff]
    %v1382 = vld [vmem:[%s1357 + $0xc0] sm:$0xff]
    %v1383 = vld [vmem:[%s1357 + $0xc8] sm:$0xff]
    %v1384 = vld [vmem:[%s1357 + $0xd0] sm:$0xff]
    %v1385 = vld [vmem:[%s1357 + $0xd8] sm:$0xff]
    %v1386 = vld [vmem:[%s1357 + $0xe0] sm:$0xff]
    %v1387 = vld [vmem:[%s1357 + $0xe8] sm:$0xff]
    %v1388 = vld [vmem:[%s1357 + $0xf0] sm:$0xff]
    %v1389 = vld [vmem:[%s1357 + $0xf8] sm:$0xff]
    %v1390 = vld [vmem:[%s1357 + $0x100] sm:$0xff]
    %v1391 = vld [vmem:[%s1357 + $0x108] sm:$0xff]
    %v1392 = vld [vmem:[%s1357 + $0x110] sm:$0xff]
    %v1393 = vld [vmem:[%s1357 + $0x118] sm:$0xff]
    %v1394 = vld [vmem:[%s1357 + $0x120] sm:$0xff]
    %v1395 = vld [vmem:[%s1357 + $0x128] sm:$0xff]
    %v1396 = vld [vmem:[%s1357 + $0x130] sm:$0xff]
    %v1397 = vld [vmem:[%s1357 + $0x138] sm:$0xff]
    %v1398 = vld [vmem:[%s1357 + $0x140] sm:$0xff]
    %v1399 = vld [vmem:[%s1357 + $0x148] sm:$0xff]
    %v1400 = vld [vmem:[%s1357 + $0x150] sm:$0xff]
    %v1401 = vld [vmem:[%s1357 + $0x158] sm:$0xff]
    %v1402 = vld [vmem:[%s1357 + $0x160] sm:$0xff]
    %v1403 = vld [vmem:[%s1357 + $0x168] sm:$0xff]
    %v1404 = vld [vmem:[%s1357 + $0x170] sm:$0xff]
    %v1405 = vld [vmem:[%s1357 + $0x178] sm:$0xff]
    %v1406 = vld [vmem:[%s1357 + $0x180] sm:$0xff]
    %v1407 = vld [vmem:[%s1357 + $0x188] sm:$0xff]
    %v1408 = vld [vmem:[%s1357 + $0x190] sm:$0xff]
    %v1409 = vld [vmem:[%s1357 + $0x198] sm:$0xff]
    %v1410 = vld [vmem:[%s1357 + $0x1a0] sm:$0xff]
    %v1411 = vld [vmem:[%s1357 + $0x1a8] sm:$0xff]
    %v1412 = vld [vmem:[%s1357 + $0x1b0] sm:$0xff]
    %v1413 = vld [vmem:[%s1357 + $0x1b8] sm:$0xff]
    %v1414 = vld [vmem:[%s1357 + $0x1c0] sm:$0xff]
    %v1415 = vld [vmem:[%s1357 + $0x1c8] sm:$0xff]
    %v1416 = vld [vmem:[%s1357 + $0x1d0] sm:$0xff]
    %v1417 = vld [vmem:[%s1357 + $0x1d8] sm:$0xff]
    %v1418 = vld [vmem:[%s1357 + $0x1e0] sm:$0xff]
    %v1419 = vld [vmem:[%s1357 + $0x1e8] sm:$0xff]
    %v1420 = vld [vmem:[%s1357 + $0x1f0] sm:$0xff]
    %v1421 = vld [vmem:[%s1357 + $0x1f8] sm:$0xff]
    %v1422 = vld [vmem:[%s1357 + $0x200] sm:$0xff]
    %v1423 = vld [vmem:[%s1357 + $0x208] sm:$0xff]
    %v1424 = vld [vmem:[%s1357 + $0x210] sm:$0xff]
    %v1425 = vld [vmem:[%s1357 + $0x218] sm:$0xff]
    %v1426 = vld [vmem:[%s1357 + $0x220] sm:$0xff]
    %v1427 = vld [vmem:[%s1357 + $0x228] sm:$0xff]
    %v1428 = vld [vmem:[%s1357 + $0x230] sm:$0xff]
    %v1429 = vld [vmem:[%s1357 + $0x238] sm:$0xff]
    %v1430 = vld [vmem:[%s1357 + $0x240] sm:$0xff]
    %v1431 = vld [vmem:[%s1357 + $0x248] sm:$0xff]
    %v1432 = vld [vmem:[%s1357 + $0x250] sm:$0xff]
    %v1433 = vld [vmem:[%s1357 + $0x258] sm:$0xff]
    %v1434 = vld [vmem:[%s1357 + $0x260] sm:$0xff]
    %v1435 = vld [vmem:[%s1357 + $0x268] sm:$0xff]
    %v1436 = vld [vmem:[%s1357 + $0x270] sm:$0xff]
    %v1437 = vld [vmem:[%s1357 + $0x278] sm:$0xff]
    %v1438 = vld [vmem:[%s1357 + $0x280] sm:$0xff]
    %v1439 = vld [vmem:[%s1357 + $0x288] sm:$0xff]
    %v1440 = vld [vmem:[%s1357 + $0x290] sm:$0xff]
    %v1441 = vld [vmem:[%s1357 + $0x298] sm:$0xff]
    %v1442 = vld [vmem:[%s1357 + $0x2a0] sm:$0xff]
    %v1443 = vld [vmem:[%s1357 + $0x2a8] sm:$0xff]
    %v1444 = vld [vmem:[%s1357 + $0x2b0] sm:$0xff]
    %v1445 = vld [vmem:[%s1357 + $0x2b8] sm:$0xff]
    %v1446 = vld [vmem:[%s1357 + $0x2c0] sm:$0xff]
    %v1447 = vld [vmem:[%s1357 + $0x2c8] sm:$0xff]
    %v1448 = vld [vmem:[%s1357 + $0x2d0] sm:$0xff]
    %v1449 = vld [vmem:[%s1357 + $0x2d8] sm:$0xff]
    %v1450 = vld [vmem:[%s1357 + $0x2e0] sm:$0xff]
    %v1451 = vld [vmem:[%s1357 + $0x2e8] sm:$0xff]
    %v1452 = vld [vmem:[%s1357 + $0x2f0] sm:$0xff]
    %v1453 = vld [vmem:[%s1357 + $0x2f8] sm:$0xff]
    %v1454 = vld [vmem:[%s1357 + $0x300] sm:$0xff]
    %v1455 = vld [vmem:[%s1357 + $0x308] sm:$0xff]
    %v1456 = vld [vmem:[%s1357 + $0x310] sm:$0xff]
    %v1457 = vld [vmem:[%s1357 + $0x318] sm:$0xff]
    %v1458 = vld [vmem:[%s1357 + $0x320] sm:$0xff]
    %v1459 = vld [vmem:[%s1357 + $0x328] sm:$0xff]
    %v1460 = vld [vmem:[%s1357 + $0x330] sm:$0xff]
    %v1461 = vld [vmem:[%s1357 + $0x338] sm:$0xff]
    %v1462 = vld [vmem:[%s1357 + $0x340] sm:$0xff]
    %v1463 = vld [vmem:[%s1357 + $0x348] sm:$0xff]
    %v1464 = vld [vmem:[%s1357 + $0x350] sm:$0xff]
    %v1465 = vld [vmem:[%s1357 + $0x358] sm:$0xff]
    %v1466 = vld [vmem:[%s1357 + $0x360] sm:$0xff]
    %v1467 = vld [vmem:[%s1357 + $0x368] sm:$0xff]
    %v1468 = vld [vmem:[%s1357 + $0x370] sm:$0xff]
    %v1469 = vld [vmem:[%s1357 + $0x378] sm:$0xff]
    %v1470 = vld [vmem:[%s1357 + $0x380] sm:$0xff]
    %v1471 = vld [vmem:[%s1357 + $0x388] sm:$0xff]
    %v1472 = vld [vmem:[%s1357 + $0x390] sm:$0xff]
    %v1473 = vld [vmem:[%s1357 + $0x398] sm:$0xff]
    %v1474 = vld [vmem:[%s1357 + $0x3a0] sm:$0xff]
    %v1475 = vld [vmem:[%s1357 + $0x3a8] sm:$0xff]
    %v1476 = vld [vmem:[%s1357 + $0x3b0] sm:$0xff]
    %v1477 = vld [vmem:[%s1357 + $0x3b8] sm:$0xff]
    %v1478 = vld [vmem:[%s1357 + $0x3c0] sm:$0xff]
    %v1479 = vld [vmem:[%s1357 + $0x3c8] sm:$0xff]
    %v1480 = vld [vmem:[%s1357 + $0x3d0] sm:$0xff]
    %v1481 = vld [vmem:[%s1357 + $0x3d8] sm:$0xff]
    %v1482 = vld [vmem:[%s1357 + $0x3e0] sm:$0xff]
    %v1483 = vld [vmem:[%s1357 + $0x3e8] sm:$0xff]
    %v1484 = vld [vmem:[%s1357 + $0x3f0] sm:$0xff]
    %v1485 = vld [vmem:[%s1357 + $0x3f8] sm:$0xff]
    %v1486 = vld [vmem:[%s1357 + $0x400] sm:$0xff]
    %v1487 = vld [vmem:[%s1357 + $0x408] sm:$0xff]
    %v1488 = vld [vmem:[%s1357 + $0x410] sm:$0xff]
    %v1489 = vld [vmem:[%s1357 + $0x418] sm:$0xff]
    %v1490 = vld [vmem:[%s1357 + $0x420] sm:$0xff]
    %v1491 = vld [vmem:[%s1357 + $0x428] sm:$0xff]
    %v1492 = vld [vmem:[%s1357 + $0x430] sm:$0xff]
    %v1493 = vld [vmem:[%s1357 + $0x438] sm:$0xff]
    %v1494 = vld [vmem:[%s1357 + $0x440] sm:$0xff]
    %v1495 = vld [vmem:[%s1357 + $0x448] sm:$0xff]
    %v1496 = vld [vmem:[%s1357 + $0x450] sm:$0xff]
    %v1497 = vld [vmem:[%s1357 + $0x458] sm:$0xff]
    %v1498 = vld [vmem:[%s1357 + $0x460] sm:$0xff]
    %v1499 = vld [vmem:[%s1357 + $0x468] sm:$0xff]
    %v1500 = vld [vmem:[%s1357 + $0x470] sm:$0xff]
    %v1501 = vld [vmem:[%s1357 + $0x478] sm:$0xff]
    %v1502 = vld [vmem:[%s1357 + $0x480] sm:$0xff]
    %v1503 = vld [vmem:[%s1357 + $0x488] sm:$0x1f]
    %v1504 = vld [vmem:[%s1357 + $0x490] sm:$0x1f]
    %v1505 = vld [vmem:[%s1357 + $0x498] sm:$0x1f]
    %v1506 = vld [vmem:[%s1357 + $0x4a0] sm:$0x1f]
    %v1507 = vld [vmem:[%s1357 + $0x4a8] sm:$0x1f]
    %v1509 = vsel %vm619, %v1331, 0
    %v1512 = vsel %vm619, %v1337, 0
    %v1515 = vsel %vm619, %v1343, 0
    %v1518 = vsel %vm619, %v1349, 0
    %v1521 = vsel %vm619, %v1355, 0
    %v1524 = vsel %vm635, %v1503, 0
    %v1527 = vsel %vm635, %v1504, 0
    %v1530 = vsel %vm635, %v1505, 0
    %v1533 = vsel %vm635, %v1506, 0
    %v1536 = vsel %vm635, %v1507, 0
    %1538 = vmatprep.subr.mxu0 %v1359
    %1539 = vmatpush1.msra.mxu0 %v1358
    %1540 = vmatprep.subr.mxu0 %v1364
    %1541 = vmatpush1.msra.mxu0 %v1363
    %1542 = vmatprep.subr.mxu0 %v1369
    %1543 = vmatpush1.msra.mxu0 %v1368
    %1544 = vmatprep.subr.mxu0 %v1374
    %1545 = vmatpush1.msra.mxu0 %v1373
    %1546 = vmatprep.subr.mxu0 %v1379
    %1547 = vmatpush1.msra.mxu0 %v1378
    %1548 = vmatprep.subr.mxu0 %v1384
    %1549 = vmatpush1.msra.mxu0 %v1383
    %1550 = vmatprep.subr.mxu0 %v1389
    %1551 = vmatpush1.msra.mxu0 %v1388
    %1552 = vmatprep.subr.mxu0 %v1394
    %1553 = vmatpush1.msra.mxu0 %v1393
    %1554 = vmatprep.subr.mxu0 %v1399
    %1555 = vmatpush1.msra.mxu0 %v1398
    %1556 = vmatprep.subr.mxu0 %v1404
    %1557 = vmatpush1.msra.mxu0 %v1403
    %1558 = vmatprep.subr.mxu0 %v1409
    %1559 = vmatpush1.msra.mxu0 %v1408
    %1560 = vmatprep.subr.mxu0 %v1414
    %1561 = vmatpush1.msra.mxu0 %v1413
    %1562 = vmatprep.subr.mxu0 %v1419
    %1563 = vmatpush1.msra.mxu0 %v1418
    %1564 = vmatprep.subr.mxu0 %v1424
    %1565 = vmatpush1.msra.mxu0 %v1423
    %1566 = vmatprep.subr.mxu0 %v1429
    %1567 = vmatpush1.msra.mxu0 %v1428
    %1568 = vmatprep.subr.mxu0 %v1434
    %1569 = vmatpush1.msra.mxu0 %v1433
    %1570 = vmatprep.subr.mxu0 %v1439
    %1571 = vmatpush1.msra.mxu0 %v1438
    %1572 = vmatprep.subr.mxu0 %v1444
    %1573 = vmatpush1.msra.mxu0 %v1443
    %1574 = vmatprep.subr.mxu0 %v1449
    %1575 = vmatpush1.msra.mxu0 %v1448
    %1576 = vmatprep.subr.mxu0 %v1454
    %1577 = vmatpush1.msra.mxu0 %v1453
    %1578 = vmatprep.subr.mxu0 %v1459
    %1579 = vmatpush1.msra.mxu0 %v1458
    %1580 = vmatprep.subr.mxu0 %v1464
    %1581 = vmatpush1.msra.mxu0 %v1463
    %1582 = vmatprep.subr.mxu0 %v1469
    %1583 = vmatpush1.msra.mxu0 %v1468
    %1584 = vmatprep.subr.mxu0 %v1474
    %1585 = vmatpush1.msra.mxu0 %v1473
    %1586 = vmatprep.subr.mxu0 %v1479
    %1587 = vmatpush1.msra.mxu0 %v1478
    %1588 = vmatprep.subr.mxu0 %v1484
    %1589 = vmatpush1.msra.mxu0 %v1483
    %1590 = vmatprep.subr.mxu0 %v1489
    %1591 = vmatpush1.msra.mxu0 %v1488
    %1592 = vmatprep.subr.mxu0 %v1494
    %1593 = vmatpush1.msra.mxu0 %v1493
    %1594 = vmatprep.subr.mxu0 %v1499
    %1595 = vmatpush1.msra.mxu0 %v1498
    %1596 = vmatprep.subr.mxu0 %v1527
    %1597 = vmatpush1.msra.mxu0 %v1524
    %1598 = vmatprep.subr.mxu0 0.0
    %1599 = vmatpush1.msra.mxu0 0.0
    %1600 = vmatprep.subr.mxu0 0.0
    %1601 = vmatpush1.msra.mxu0 0.0
    %1602 = vmatprep.mubr.f32.mxu0 %v1509
    %1603 = vmatmul.mubr.f32.gmra.mrb[0].mxu0 %v1329
    %v1604 = vpop.f32.mrb[0].mxu0
    %v1605 = vadd.f32 0.0, %v1604
    %v1606 = vpop.f32.mrb[0].mxu0
    %v1607 = vadd.f32 0.0, %v1606
    %1608 = vmatprep.mubr.f32.mxu0 %v1512
    %1609 = vmatmul.mubr.f32.gmra.mrb[0].mxu0 %v1335
    %v1610 = vpop.f32.mrb[0].mxu0
    %v1611 = vadd.f32 0.0, %v1610
    %v1612 = vpop.f32.mrb[0].mxu0
    %v1613 = vadd.f32 0.0, %v1612
    %1614 = vmatprep.mubr.f32.mxu0 %v1515
    %1615 = vmatmul.mubr.f32.gmra.mrb[0].mxu0 %v1341
    %v1616 = vpop.f32.mrb[0].mxu0
    %v1617 = vadd.f32 0.0, %v1616
    %v1618 = vpop.f32.mrb[0].mxu0
    %v1619 = vadd.f32 0.0, %v1618
    %1620 = vmatprep.mubr.f32.mxu0 %v1518
    %1621 = vmatmul.mubr.f32.gmra.mrb[0].mxu0 %v1347
    %v1622 = vpop.f32.mrb[0].mxu0
    %v1623 = vadd.f32 0.0, %v1622
    %v1624 = vpop.f32.mrb[0].mxu0
    %v1625 = vadd.f32 0.0, %v1624
    %1626 = vmatprep.mubr.f32.mxu0 %v1521
    %1627 = vmatmul.mubr.f32.gmra.mrb[0].mxu0 %v1353
    %v1628 = vpop.f32.mrb[0].mxu0
    %v1629 = vadd.f32 0.0, %v1628
    %v1630 = vpop.f32.mrb[0].mxu0
    %v1631 = vadd.f32 0.0, %v1630
    %1632 = vdwg.mxu0
    %1633 = vmatprep.subr.mxu0 %v1361
    %1634 = vmatpush1.msra.mxu0 %v1360
    %1635 = vmatprep.subr.mxu0 %v1366
    %1636 = vmatpush1.msra.mxu0 %v1365
    %1637 = vmatprep.subr.mxu0 %v1371
    %1638 = vmatpush1.msra.mxu0 %v1370
    %1639 = vmatprep.subr.mxu0 %v1376
    %1640 = vmatpush1.msra.mxu0 %v1375
    %1641 = vmatprep.subr.mxu0 %v1381
    %1642 = vmatpush1.msra.mxu0 %v1380
    %1643 = vmatprep.subr.mxu0 %v1386
    %1644 = vmatpush1.msra.mxu0 %v1385
    %1645 = vmatprep.subr.mxu0 %v1391
    %1646 = vmatpush1.msra.mxu0 %v1390
    %1647 = vmatprep.subr.mxu0 %v1396
    %1648 = vmatpush1.msra.mxu0 %v1395
    %1649 = vmatprep.subr.mxu0 %v1401
    %1650 = vmatpush1.msra.mxu0 %v1400
    %1651 = vmatprep.subr.mxu0 %v1406
    %1652 = vmatpush1.msra.mxu0 %v1405
    %1653 = vmatprep.subr.mxu0 %v1411
    %1654 = vmatpush1.msra.mxu0 %v1410
    %1655 = vmatprep.subr.mxu0 %v1416
    %1656 = vmatpush1.msra.mxu0 %v1415
    %1657 = vmatprep.subr.mxu0 %v1421
    %1658 = vmatpush1.msra.mxu0 %v1420
    %1659 = vmatprep.subr.mxu0 %v1426
    %1660 = vmatpush1.msra.mxu0 %v1425
    %1661 = vmatprep.subr.mxu0 %v1431
    %1662 = vmatpush1.msra.mxu0 %v1430
    %1663 = vmatprep.subr.mxu0 %v1436
    %1664 = vmatpush1.msra.mxu0 %v1435
    %1665 = vmatprep.subr.mxu0 %v1441
    %1666 = vmatpush1.msra.mxu0 %v1440
    %1667 = vmatprep.subr.mxu0 %v1446
    %1668 = vmatpush1.msra.mxu0 %v1445
    %1669 = vmatprep.subr.mxu0 %v1451
    %1670 = vmatpush1.msra.mxu0 %v1450
    %1671 = vmatprep.subr.mxu0 %v1456
    %1672 = vmatpush1.msra.mxu0 %v1455
    %1673 = vmatprep.subr.mxu0 %v1461
    %1674 = vmatpush1.msra.mxu0 %v1460
    %1675 = vmatprep.subr.mxu0 %v1466
    %1676 = vmatpush1.msra.mxu0 %v1465
    %1677 = vmatprep.subr.mxu0 %v1471
    %1678 = vmatpush1.msra.mxu0 %v1470
    %1679 = vmatprep.subr.mxu0 %v1476
    %1680 = vmatpush1.msra.mxu0 %v1475
    %1681 = vmatprep.subr.mxu0 %v1481
    %1682 = vmatpush1.msra.mxu0 %v1480
    %1683 = vmatprep.subr.mxu0 %v1486
    %1684 = vmatpush1.msra.mxu0 %v1485
    %1685 = vmatprep.subr.mxu0 %v1491
    %1686 = vmatpush1.msra.mxu0 %v1490
    %1687 = vmatprep.subr.mxu0 %v1496
    %1688 = vmatpush1.msra.mxu0 %v1495
    %1689 = vmatprep.subr.mxu0 %v1501
    %1690 = vmatpush1.msra.mxu0 %v1500
    %1691 = vmatprep.subr.mxu0 %v1533
    %1692 = vmatpush1.msra.mxu0 %v1530
    %1693 = vmatprep.subr.mxu0 0.0
    %1694 = vmatpush1.msra.mxu0 0.0
    %1695 = vmatprep.subr.mxu0 0.0
    %1696 = vmatpush1.msra.mxu0 0.0
    %1697 = vmatprep.mubr.f32.mxu0 %v1509
    %1698 = vmatmul.mubr.f32.gmra.mrb[0].mxu0 %v1329
    %v1699 = vpop.f32.mrb[0].mxu0
    %v1700 = vadd.f32 0.0, %v1699
    %v1701 = vpop.f32.mrb[0].mxu0
    %v1702 = vadd.f32 0.0, %v1701
    %1703 = vmatprep.mubr.f32.mxu0 %v1512
    %1704 = vmatmul.mubr.f32.gmra.mrb[0].mxu0 %v1335
    %v1705 = vpop.f32.mrb[0].mxu0
    %v1706 = vadd.f32 0.0, %v1705
    %v1707 = vpop.f32.mrb[0].mxu0
    %v1708 = vadd.f32 0.0, %v1707
    %1709 = vmatprep.mubr.f32.mxu0 %v1515
    %1710 = vmatmul.mubr.f32.gmra.mrb[0].mxu0 %v1341
    %v1711 = vpop.f32.mrb[0].mxu0
    %v1712 = vadd.f32 0.0, %v1711
    %v1713 = vpop.f32.mrb[0].mxu0
    %v1714 = vadd.f32 0.0, %v1713
    %1715 = vmatprep.mubr.f32.mxu0 %v1518
    %1716 = vmatmul.mubr.f32.gmra.mrb[0].mxu0 %v1347
    %v1717 = vpop.f32.mrb[0].mxu0
    %v1718 = vadd.f32 0.0, %v1717
    %v1719 = vpop.f32.mrb[0].mxu0
    %v1720 = vadd.f32 0.0, %v1719
    %1721 = vmatprep.mubr.f32.mxu0 %v1521
    %1722 = vmatmul.mubr.f32.gmra.mrb[0].mxu0 %v1353
    %v1723 = vpop.f32.mrb[0].mxu0
    %v1724 = vadd.f32 0.0, %v1723
    %v1725 = vpop.f32.mrb[0].mxu0
    %v1726 = vadd.f32 0.0, %v1725
    %1727 = vdwg.mxu0
    %1728 = vmatprep.subr.mxu0 0.0
    %1729 = vmatpush1.msra.mxu0 %v1362
    %1730 = vmatprep.subr.mxu0 0.0
    %1731 = vmatpush1.msra.mxu0 %v1367
    %1732 = vmatprep.subr.mxu0 0.0
    %1733 = vmatpush1.msra.mxu0 %v1372
    %1734 = vmatprep.subr.mxu0 0.0
    %1735 = vmatpush1.msra.mxu0 %v1377
    %1736 = vmatprep.subr.mxu0 0.0
    %1737 = vmatpush1.msra.mxu0 %v1382
    %1738 = vmatprep.subr.mxu0 0.0
    %1739 = vmatpush1.msra.mxu0 %v1387
    %1740 = vmatprep.subr.mxu0 0.0
    %1741 = vmatpush1.msra.mxu0 %v1392
    %1742 = vmatprep.subr.mxu0 0.0
    %1743 = vmatpush1.msra.mxu0 %v1397
    %1744 = vmatprep.subr.mxu0 0.0
    %1745 = vmatpush1.msra.mxu0 %v1402
    %1746 = vmatprep.subr.mxu0 0.0
    %1747 = vmatpush1.msra.mxu0 %v1407
    %1748 = vmatprep.subr.mxu0 0.0
    %1749 = vmatpush1.msra.mxu0 %v1412
    %1750 = vmatprep.subr.mxu0 0.0
    %1751 = vmatpush1.msra.mxu0 %v1417
    %1752 = vmatprep.subr.mxu0 0.0
    %1753 = vmatpush1.msra.mxu0 %v1422
    %1754 = vmatprep.subr.mxu0 0.0
    %1755 = vmatpush1.msra.mxu0 %v1427
    %1756 = vmatprep.subr.mxu0 0.0
    %1757 = vmatpush1.msra.mxu0 %v1432
    %1758 = vmatprep.subr.mxu0 0.0
    %1759 = vmatpush1.msra.mxu0 %v1437
    %1760 = vmatprep.subr.mxu0 0.0
    %1761 = vmatpush1.msra.mxu0 %v1442
    %1762 = vmatprep.subr.mxu0 0.0
    %1763 = vmatpush1.msra.mxu0 %v1447
    %1764 = vmatprep.subr.mxu0 0.0
    %1765 = vmatpush1.msra.mxu0 %v1452
    %1766 = vmatprep.subr.mxu0 0.0
    %1767 = vmatpush1.msra.mxu0 %v1457
    %1768 = vmatprep.subr.mxu0 0.0
    %1769 = vmatpush1.msra.mxu0 %v1462
    %1770 = vmatprep.subr.mxu0 0.0
    %1771 = vmatpush1.msra.mxu0 %v1467
    %1772 = vmatprep.subr.mxu0 0.0
    %1773 = vmatpush1.msra.mxu0 %v1472
    %1774 = vmatprep.subr.mxu0 0.0
    %1775 = vmatpush1.msra.mxu0 %v1477
    %1776 = vmatprep.subr.mxu0 0.0
    %1777 = vmatpush1.msra.mxu0 %v1482
    %1778 = vmatprep.subr.mxu0 0.0
    %1779 = vmatpush1.msra.mxu0 %v1487
    %1780 = vmatprep.subr.mxu0 0.0
    %1781 = vmatpush1.msra.mxu0 %v1492
    %1782 = vmatprep.subr.mxu0 0.0
    %1783 = vmatpush1.msra.mxu0 %v1497
    %1784 = vmatprep.subr.mxu0 0.0
    %1785 = vmatpush1.msra.mxu0 %v1502
    %1786 = vmatprep.subr.mxu0 0.0
    %1787 = vmatpush1.msra.mxu0 %v1536
    %1788 = vmatprep.subr.mxu0 0.0
    %1789 = vmatpush1.msra.mxu0 0.0
    %1790 = vmatprep.subr.mxu0 0.0
    %1791 = vmatpush1.msra.mxu0 0.0
    %1792 = vmatprep.mubr.f32.mxu0 %v1509
    %1793 = vmatmul.mubr.f32.gmra.mrb[0].mxu0 %v1329
    %v1794 = vpop.f32.mrb[0].mxu0
    %v1795 = vadd.f32 0.0, %v1794
    %v1796 = vpop.f32.mrb[0].mxu0
    %1797 = vmatprep.mubr.f32.mxu0 %v1512
    %1798 = vmatmul.mubr.f32.gmra.mrb[0].mxu0 %v1335
    %v1799 = vpop.f32.mrb[0].mxu0
    %v1800 = vadd.f32 0.0, %v1799
    %v1801 = vpop.f32.mrb[0].mxu0
    %1802 = vmatprep.mubr.f32.mxu0 %v1515
    %1803 = vmatmul.mubr.f32.gmra.mrb[0].mxu0 %v1341
    %v1804 = vpop.f32.mrb[0].mxu0
    %v1805 = vadd.f32 0.0, %v1804
    %v1806 = vpop.f32.mrb[0].mxu0
    %1807 = vmatprep.mubr.f32.mxu0 %v1518
    %1808 = vmatmul.mubr.f32.gmra.mrb[0].mxu0 %v1347
    %v1809 = vpop.f32.mrb[0].mxu0
    %v1810 = vadd.f32 0.0, %v1809
    %v1811 = vpop.f32.mrb[0].mxu0
    %1812 = vmatprep.mubr.f32.mxu0 %v1521
    %1813 = vmatmul.mubr.f32.gmra.mrb[0].mxu0 %v1353
    %v1814 = vpop.f32.mrb[0].mxu0
    %v1815 = vadd.f32 0.0, %v1814
    %v1816 = vpop.f32.mrb[0].mxu0
    %1817 = vdwg.mxu0
    %v1818 = vadd.f32 %v1028, %v1605
    %v1819 = vadd.f32 %v1030, %v1607
    %v1820 = vadd.f32 %v1123, %v1700
    %v1821 = vadd.f32 %v1125, %v1702
    %v1822 = vadd.f32 %v1218, %v1795
    %v1823 = vadd.f32 %v1034, %v1611
    %v1824 = vadd.f32 %v1036, %v1613
    %v1825 = vadd.f32 %v1129, %v1706
    %v1826 = vadd.f32 %v1131, %v1708
    %v1827 = vadd.f32 %v1223, %v1800
    %v1828 = vadd.f32 %v1040, %v1617
    %v1829 = vadd.f32 %v1042, %v1619
    %v1830 = vadd.f32 %v1135, %v1712
    %v1831 = vadd.f32 %v1137, %v1714
    %v1832 = vadd.f32 %v1228, %v1805
    %v1833 = vadd.f32 %v1046, %v1623
    %v1834 = vadd.f32 %v1048, %v1625
    %v1835 = vadd.f32 %v1141, %v1718
    %v1836 = vadd.f32 %v1143, %v1720
    %v1837 = vadd.f32 %v1233, %v1810
    %v1838 = vadd.f32 %v1052, %v1629
    %v1839 = vadd.f32 %v1054, %v1631
    %v1840 = vadd.f32 %v1147, %v1724
    %v1841 = vadd.f32 %v1149, %v1726
    %v1842 = vadd.f32 %v1238, %v1815
    %v1843 = vld [vmem:[%s3] sm:$0x1f]
    %v1845 = vlaneseq
    %v1846 = vshrl.u32 %v1845, 7
    %v1847 = vsub.s32 0, %v1846
    %v1848 = vrot.slane %v1843, %v1847
    %v1849 = vlaneseq
    %v1850 = vshrl.u32 %v1849, 7
    %v1851 = vsub.s32 1, %v1850
    %v1852 = vrot.slane %v1843, %v1851
    %v1853 = vlaneseq
    %v1854 = vshrl.u32 %v1853, 7
    %v1855 = vsub.s32 2, %v1854
    %v1856 = vrot.slane %v1843, %v1855
    %v1857 = vlaneseq
    %v1858 = vshrl.u32 %v1857, 7
    %v1859 = vsub.s32 3, %v1858
    %v1860 = vrot.slane %v1843, %v1859
    %v1861 = vlaneseq
    %v1862 = vshrl.u32 %v1861, 7
    %v1863 = vsub.s32 4, %v1862
    %v1864 = vrot.slane %v1843, %v1863
    %v1870 = vadd.f32 %v1818, %v1848
    %v1871 = vadd.f32 %v1819, %v1852
    %v1872 = vadd.f32 %v1820, %v1856
    %v1873 = vadd.f32 %v1821, %v1860
    %v1874 = vadd.f32 %v1822, %v1864
    %v1875 = vadd.f32 %v1823, %v1848
    %v1876 = vadd.f32 %v1824, %v1852
    %v1877 = vadd.f32 %v1825, %v1856
    %v1878 = vadd.f32 %v1826, %v1860
    %v1879 = vadd.f32 %v1827, %v1864
    %v1880 = vadd.f32 %v1828, %v1848
    %v1881 = vadd.f32 %v1829, %v1852
    %v1882 = vadd.f32 %v1830, %v1856
    %v1883 = vadd.f32 %v1831, %v1860
    %v1884 = vadd.f32 %v1832, %v1864
    %v1885 = vadd.f32 %v1833, %v1848
    %v1886 = vadd.f32 %v1834, %v1852
    %v1887 = vadd.f32 %v1835, %v1856
    %v1888 = vadd.f32 %v1836, %v1860
    %v1889 = vadd.f32 %v1837, %v1864
    %v1890 = vadd.f32 %v1838, %v1848
    %v1891 = vadd.f32 %v1839, %v1852
    %v1892 = vadd.f32 %v1840, %v1856
    %v1893 = vadd.f32 %v1841, %v1860
    %v1894 = vadd.f32 %v1842, %v1864
    %v1895 = vmax.f32 %v1870, 0.0
    %v1896 = vmax.f32 %v1871, 0.0
    %v1897 = vmax.f32 %v1872, 0.0
    %v1898 = vmax.f32 %v1873, 0.0
    %v1899 = vmax.f32 %v1874, 0.0
    %v1900 = vmax.f32 %v1875, 0.0
    %v1901 = vmax.f32 %v1876, 0.0
    %v1902 = vmax.f32 %v1877, 0.0
    %v1903 = vmax.f32 %v1878, 0.0
    %v1904 = vmax.f32 %v1879, 0.0
    %v1905 = vmax.f32 %v1880, 0.0
    %v1906 = vmax.f32 %v1881, 0.0
    %v1907 = vmax.f32 %v1882, 0.0
    %v1908 = vmax.f32 %v1883, 0.0
    %v1909 = vmax.f32 %v1884, 0.0
    %v1910 = vmax.f32 %v1885, 0.0
    %v1911 = vmax.f32 %v1886, 0.0
    %v1912 = vmax.f32 %v1887, 0.0
    %v1913 = vmax.f32 %v1888, 0.0
    %v1914 = vmax.f32 %v1889, 0.0
    %v1915 = vmax.f32 %v1890, 0.0
    %v1916 = vmax.f32 %v1891, 0.0
    %v1917 = vmax.f32 %v1892, 0.0
    %v1918 = vmax.f32 %v1893, 0.0
    %v1919 = vmax.f32 %v1894, 0.0
    %v1920 = vld [vmem:[%s4] sm:$0xff]
    %v1921 = vld [vmem:[%s4 + $0x8] sm:$0xff]
    %v1922 = vld [vmem:[%s4 + $0x10] sm:$0x7]
    %vm1923 = vcmask 318464
    %v1925 = vsel %vm1923, %v1920, 0
    %v1928 = vsel %vm1923, %v1921, 0
    %v1931 = vsel %vm1923, %v1922, 0
    %v1934 = vsel %vm100, %v1915, 0
    %v1937 = vsel %vm100, %v1916, 0
    %v1940 = vsel %vm100, %v1917, 0
    %v1943 = vsel %vm100, %v1918, 0
    %v1946 = vsel %vm100, %v1919, 0
    %1948 = vmatprep.subr.mxu0 %v1896
    %1949 = vmatpush1.msra.mxu0 %v1895
    %1950 = vmatprep.subr.mxu0 %v1901
    %1951 = vmatpush1.msra.mxu0 %v1900
    %1952 = vmatprep.subr.mxu0 %v1906
    %1953 = vmatpush1.msra.mxu0 %v1905
    %1954 = vmatprep.subr.mxu0 %v1911
    %1955 = vmatpush1.msra.mxu0 %v1910
    %1956 = vmatprep.subr.mxu0 %v1937
    %1957 = vmatpush1.msra.mxu0 %v1934
    %1958 = vmatprep.subr.mxu0 0.0
    %1959 = vmatpush1.msra.mxu0 0.0
    %1960 = vmatprep.subr.mxu0 0.0
    %1961 = vmatpush1.msra.mxu0 0.0
    %1962 = vmatprep.subr.mxu0 0.0
    %1963 = vmatpush1.msra.mxu0 0.0
    %1964 = vmatprep.subr.mxu0 0.0
    %1965 = vmatpush1.msra.mxu0 0.0
    %1966 = vmatprep.subr.mxu0 0.0
    %1967 = vmatpush1.msra.mxu0 0.0
    %1968 = vmatprep.subr.mxu0 0.0
    %1969 = vmatpush1.msra.mxu0 0.0
    %1970 = vmatprep.subr.mxu0 0.0
    %1971 = vmatpush1.msra.mxu0 0.0
    %1972 = vmatprep.subr.mxu0 0.0
    %1973 = vmatpush1.msra.mxu0 0.0
    %1974 = vmatprep.subr.mxu0 0.0
    %1975 = vmatpush1.msra.mxu0 0.0
    %1976 = vmatprep.subr.mxu0 0.0
    %1977 = vmatpush1.msra.mxu0 0.0
    %1978 = vmatprep.subr.mxu0 0.0
    %1979 = vmatpush1.msra.mxu0 0.0
    %1980 = vmatprep.subr.mxu0 0.0
    %1981 = vmatpush1.msra.mxu0 0.0
    %1982 = vmatprep.subr.mxu0 0.0
    %1983 = vmatpush1.msra.mxu0 0.0
    %1984 = vmatprep.subr.mxu0 0.0
    %1985 = vmatpush1.msra.mxu0 0.0
    %1986 = vmatprep.subr.mxu0 0.0
    %1987 = vmatpush1.msra.mxu0 0.0
    %1988 = vmatprep.subr.mxu0 0.0
    %1989 = vmatpush1.msra.mxu0 0.0
    %1990 = vmatprep.subr.mxu0 0.0
    %1991 = vmatpush1.msra.mxu0 0.0
    %1992 = vmatprep.subr.mxu0 0.0
    %1993 = vmatpush1.msra.mxu0 0.0
    %1994 = vmatprep.subr.mxu0 0.0
    %1995 = vmatpush1.msra.mxu0 0.0
    %1996 = vmatprep.subr.mxu0 0.0
    %1997 = vmatpush1.msra.mxu0 0.0
    %1998 = vmatprep.subr.mxu0 0.0
    %1999 = vmatpush1.msra.mxu0 0.0
    %2000 = vmatprep.subr.mxu0 0.0
    %2001 = vmatpush1.msra.mxu0 0.0
    %2002 = vmatprep.subr.mxu0 0.0
    %2003 = vmatpush1.msra.mxu0 0.0
    %2004 = vmatprep.subr.mxu0 0.0
    %2005 = vmatpush1.msra.mxu0 0.0
    %2006 = vmatprep.subr.mxu0 0.0
    %2007 = vmatpush1.msra.mxu0 0.0
    %2008 = vmatprep.subr.mxu0 0.0
    %2009 = vmatpush1.msra.mxu0 0.0
    %2010 = vmatprep.subr.mxu0 0.0
    %2011 = vmatpush1.msra.mxu0 0.0
    %2012 = vmatprep.mubr.f32.mxu0 0.0
    %2013 = vmatmul.mubr.f32.gmra.mrb[0].mxu0 %v1925
    %v2014 = vpop.f32.mrb[0].mxu0
    %v2015 = vadd.f32 0.0, %v2014
    %v2016 = vpop.f32.mrb[0].mxu0
    %v2017 = vadd.f32 0.0, %v2016
    %2018 = vmatprep.mubr.f32.mxu0 0.0
    %2019 = vmatmul.mubr.f32.gmra.mrb[0].mxu0 %v1928
    %v2020 = vpop.f32.mrb[0].mxu0
    %v2021 = vadd.f32 0.0, %v2020
    %v2022 = vpop.f32.mrb[0].mxu0
    %v2023 = vadd.f32 0.0, %v2022
    %2024 = vmatprep.mubr.f32.mxu0 0.0
    %2025 = vmatmul.mubr.f32.gmra.mrb[0].mxu0 %v1931
    %v2026 = vpop.f32.mrb[0].mxu0
    %v2027 = vadd.f32 0.0, %v2026
    %v2028 = vpop.f32.mrb[0].mxu0
    %v2029 = vadd.f32 0.0, %v2028
    %2030 = vdwg.mxu0
    %2031 = vmatprep.subr.mxu0 %v1898
    %2032 = vmatpush1.msra.mxu0 %v1897
    %2033 = vmatprep.subr.mxu0 %v1903
    %2034 = vmatpush1.msra.mxu0 %v1902
    %2035 = vmatprep.subr.mxu0 %v1908
    %2036 = vmatpush1.msra.mxu0 %v1907
    %2037 = vmatprep.subr.mxu0 %v1913
    %2038 = vmatpush1.msra.mxu0 %v1912
    %2039 = vmatprep.subr.mxu0 %v1943
    %2040 = vmatpush1.msra.mxu0 %v1940
    %2041 = vmatprep.subr.mxu0 0.0
    %2042 = vmatpush1.msra.mxu0 0.0
    %2043 = vmatprep.subr.mxu0 0.0
    %2044 = vmatpush1.msra.mxu0 0.0
    %2045 = vmatprep.subr.mxu0 0.0
    %2046 = vmatpush1.msra.mxu0 0.0
    %2047 = vmatprep.subr.mxu0 0.0
    %2048 = vmatpush1.msra.mxu0 0.0
    %2049 = vmatprep.subr.mxu0 0.0
    %2050 = vmatpush1.msra.mxu0 0.0
    %2051 = vmatprep.subr.mxu0 0.0
    %2052 = vmatpush1.msra.mxu0 0.0
    %2053 = vmatprep.subr.mxu0 0.0
    %2054 = vmatpush1.msra.mxu0 0.0
    %2055 = vmatprep.subr.mxu0 0.0
    %2056 = vmatpush1.msra.mxu0 0.0
    %2057 = vmatprep.subr.mxu0 0.0
    %2058 = vmatpush1.msra.mxu0 0.0
    %2059 = vmatprep.subr.mxu0 0.0
    %2060 = vmatpush1.msra.mxu0 0.0
    %2061 = vmatprep.subr.mxu0 0.0
    %2062 = vmatpush1.msra.mxu0 0.0
    %2063 = vmatprep.subr.mxu0 0.0
    %2064 = vmatpush1.msra.mxu0 0.0
    %2065 = vmatprep.subr.mxu0 0.0
    %2066 = vmatpush1.msra.mxu0 0.0
    %2067 = vmatprep.subr.mxu0 0.0
    %2068 = vmatpush1.msra.mxu0 0.0
    %2069 = vmatprep.subr.mxu0 0.0
    %2070 = vmatpush1.msra.mxu0 0.0
    %2071 = vmatprep.subr.mxu0 0.0
    %2072 = vmatpush1.msra.mxu0 0.0
    %2073 = vmatprep.subr.mxu0 0.0
    %2074 = vmatpush1.msra.mxu0 0.0
    %2075 = vmatprep.subr.mxu0 0.0
    %2076 = vmatpush1.msra.mxu0 0.0
    %2077 = vmatprep.subr.mxu0 0.0
    %2078 = vmatpush1.msra.mxu0 0.0
    %2079 = vmatprep.subr.mxu0 0.0
    %2080 = vmatpush1.msra.mxu0 0.0
    %2081 = vmatprep.subr.mxu0 0.0
    %2082 = vmatpush1.msra.mxu0 0.0
    %2083 = vmatprep.subr.mxu0 0.0
    %2084 = vmatpush1.msra.mxu0 0.0
    %2085 = vmatprep.subr.mxu0 0.0
    %2086 = vmatpush1.msra.mxu0 0.0
    %2087 = vmatprep.subr.mxu0 0.0
    %2088 = vmatpush1.msra.mxu0 0.0
    %2089 = vmatprep.subr.mxu0 0.0
    %2090 = vmatpush1.msra.mxu0 0.0
    %2091 = vmatprep.subr.mxu0 0.0
    %2092 = vmatpush1.msra.mxu0 0.0
    %2093 = vmatprep.subr.mxu0 0.0
    %2094 = vmatpush1.msra.mxu0 0.0
    %2095 = vmatprep.mubr.f32.mxu0 0.0
    %2096 = vmatmul.mubr.f32.gmra.mrb[0].mxu0 %v1925
    %v2097 = vpop.f32.mrb[0].mxu0
    %v2098 = vadd.f32 0.0, %v2097
    %v2099 = vpop.f32.mrb[0].mxu0
    %v2100 = vadd.f32 0.0, %v2099
    %2101 = vmatprep.mubr.f32.mxu0 0.0
    %2102 = vmatmul.mubr.f32.gmra.mrb[0].mxu0 %v1928
    %v2103 = vpop.f32.mrb[0].mxu0
    %v2104 = vadd.f32 0.0, %v2103
    %v2105 = vpop.f32.mrb[0].mxu0
    %v2106 = vadd.f32 0.0, %v2105
    %2107 = vmatprep.mubr.f32.mxu0 0.0
    %2108 = vmatmul.mubr.f32.gmra.mrb[0].mxu0 %v1931
    %v2109 = vpop.f32.mrb[0].mxu0
    %v2110 = vadd.f32 0.0, %v2109
    %v2111 = vpop.f32.mrb[0].mxu0
    %v2112 = vadd.f32 0.0, %v2111
    %2113 = vdwg.mxu0
    %2114 = vmatprep.subr.mxu0 0.0
    %2115 = vmatpush1.msra.mxu0 %v1899
    %2116 = vmatprep.subr.mxu0 0.0
    %2117 = vmatpush1.msra.mxu0 %v1904
    %2118 = vmatprep.subr.mxu0 0.0
    %2119 = vmatpush1.msra.mxu0 %v1909
    %2120 = vmatprep.subr.mxu0 0.0
    %2121 = vmatpush1.msra.mxu0 %v1914
    %2122 = vmatprep.subr.mxu0 0.0
    %2123 = vmatpush1.msra.mxu0 %v1946
    %2124 = vmatprep.subr.mxu0 0.0
    %2125 = vmatpush1.msra.mxu0 0.0
    %2126 = vmatprep.subr.mxu0 0.0
    %2127 = vmatpush1.msra.mxu0 0.0
    %2128 = vmatprep.subr.mxu0 0.0
    %2129 = vmatpush1.msra.mxu0 0.0
    %2130 = vmatprep.subr.mxu0 0.0
    %2131 = vmatpush1.msra.mxu0 0.0
    %2132 = vmatprep.subr.mxu0 0.0
    %2133 = vmatpush1.msra.mxu0 0.0
    %2134 = vmatprep.subr.mxu0 0.0
    %2135 = vmatpush1.msra.mxu0 0.0
    %2136 = vmatprep.subr.mxu0 0.0
    %2137 = vmatpush1.msra.mxu0 0.0
    %2138 = vmatprep.subr.mxu0 0.0
    %2139 = vmatpush1.msra.mxu0 0.0
    %2140 = vmatprep.subr.mxu0 0.0
    %2141 = vmatpush1.msra.mxu0 0.0
    %2142 = vmatprep.subr.mxu0 0.0
    %2143 = vmatpush1.msra.mxu0 0.0
    %2144 = vmatprep.subr.mxu0 0.0
    %2145 = vmatpush1.msra.mxu0 0.0
    %2146 = vmatprep.subr.mxu0 0.0
    %2147 = vmatpush1.msra.mxu0 0.0
    %2148 = vmatprep.subr.mxu0 0.0
    %2149 = vmatpush1.msra.mxu0 0.0
    %2150 = vmatprep.subr.mxu0 0.0
    %2151 = vmatpush1.msra.mxu0 0.0
    %2152 = vmatprep.subr.mxu0 0.0
    %2153 = vmatpush1.msra.mxu0 0.0
    %2154 = vmatprep.subr.mxu0 0.0
    %2155 = vmatpush1.msra.mxu0 0.0
    %2156 = vmatprep.subr.mxu0 0.0
    %2157 = vmatpush1.msra.mxu0 0.0
    %2158 = vmatprep.subr.mxu0 0.0
    %2159 = vmatpush1.msra.mxu0 0.0
    %2160 = vmatprep.subr.mxu0 0.0
    %2161 = vmatpush1.msra.mxu0 0.0
    %2162 = vmatprep.subr.mxu0 0.0
    %2163 = vmatpush1.msra.mxu0 0.0
    %2164 = vmatprep.subr.mxu0 0.0
    %2165 = vmatpush1.msra.mxu0 0.0
    %2166 = vmatprep.subr.mxu0 0.0
    %2167 = vmatpush1.msra.mxu0 0.0
    %2168 = vmatprep.subr.mxu0 0.0
    %2169 = vmatpush1.msra.mxu0 0.0
    %2170 = vmatprep.subr.mxu0 0.0
    %2171 = vmatpush1.msra.mxu0 0.0
    %2172 = vmatprep.subr.mxu0 0.0
    %2173 = vmatpush1.msra.mxu0 0.0
    %2174 = vmatprep.subr.mxu0 0.0
    %2175 = vmatpush1.msra.mxu0 0.0
    %2176 = vmatprep.subr.mxu0 0.0
    %2177 = vmatpush1.msra.mxu0 0.0
    %2178 = vmatprep.mubr.f32.mxu0 0.0
    %2179 = vmatmul.mubr.f32.gmra.mrb[0].mxu0 %v1925
    %v2180 = vpop.f32.mrb[0].mxu0
    %v2181 = vadd.f32 0.0, %v2180
    %v2182 = vpop.f32.mrb[0].mxu0
    %2183 = vmatprep.mubr.f32.mxu0 0.0
    %2184 = vmatmul.mubr.f32.gmra.mrb[0].mxu0 %v1928
    %v2185 = vpop.f32.mrb[0].mxu0
    %v2186 = vadd.f32 0.0, %v2185
    %v2187 = vpop.f32.mrb[0].mxu0
    %2188 = vmatprep.mubr.f32.mxu0 0.0
    %2189 = vmatmul.mubr.f32.gmra.mrb[0].mxu0 %v1931
    %v2190 = vpop.f32.mrb[0].mxu0
    %v2191 = vadd.f32 0.0, %v2190
    %v2192 = vpop.f32.mrb[0].mxu0
    %2193 = vdwg.mxu0
    %v2194 = vld [vmem:[%s5] sm:$0xff]
    %v2195 = vld [vmem:[%s5 + $0x8] sm:$0xff]
    %v2196 = vld [vmem:[%s5 + $0x10] sm:$0xff]
    %v2197 = vld [vmem:[%s5 + $0x18] sm:$0xff]
    %v2198 = vld [vmem:[%s5 + $0x20] sm:$0xff]
    %v2199 = vld [vmem:[%s5 + $0x28] sm:$0xff]
    %v2200 = vld [vmem:[%s5 + $0x30] sm:$0xff]
    %v2201 = vld [vmem:[%s5 + $0x38] sm:$0xff]
    %v2202 = vld [vmem:[%s5 + $0x40] sm:$0xff]
    %v2203 = vld [vmem:[%s5 + $0x48] sm:$0xff]
    %v2204 = vld [vmem:[%s5 + $0x50] sm:$0xff]
    %v2205 = vld [vmem:[%s5 + $0x58] sm:$0xff]
    %v2206 = vld [vmem:[%s5 + $0x60] sm:$0xff]
    %v2207 = vld [vmem:[%s5 + $0x68] sm:$0xff]
    %v2208 = vld [vmem:[%s5 + $0x70] sm:$0xff]
    %v2209 = vld [vmem:[%s5 + $0x78] sm:$0xff]
    %v2210 = vld [vmem:[%s5 + $0x80] sm:$0xff]
    %v2211 = vld [vmem:[%s5 + $0x88] sm:$0xff]
    %v2212 = vld [vmem:[%s5 + $0x90] sm:$0xff]
    %v2213 = vld [vmem:[%s5 + $0x98] sm:$0xff]
    %v2214 = vld [vmem:[%s5 + $0xa0] sm:$0xff]
    %v2215 = vld [vmem:[%s5 + $0xa8] sm:$0xff]
    %v2216 = vld [vmem:[%s5 + $0xb0] sm:$0xff]
    %v2217 = vld [vmem:[%s5 + $0xb8] sm:$0xff]
    %v2218 = vld [vmem:[%s5 + $0xc0] sm:$0xff]
    %v2219 = vld [vmem:[%s5 + $0xc8] sm:$0xff]
    %v2220 = vld [vmem:[%s5 + $0xd0] sm:$0xff]
    %v2221 = vld [vmem:[%s5 + $0xd8] sm:$0xff]
    %v2222 = vld [vmem:[%s5 + $0xe0] sm:$0xff]
    %v2223 = vld [vmem:[%s5 + $0xe8] sm:$0xff]
    %v2224 = vld [vmem:[%s5 + $0xf0] sm:$0xff]
    %v2225 = vld [vmem:[%s5 + $0xf8] sm:$0xff]
    %v2226 = vld [vmem:[%s5 + $0x100] sm:$0xff]
    %v2227 = vld [vmem:[%s5 + $0x108] sm:$0xff]
    %v2228 = vld [vmem:[%s5 + $0x110] sm:$0xff]
    %v2229 = vld [vmem:[%s5 + $0x118] sm:$0xff]
    %v2230 = vld [vmem:[%s5 + $0x120] sm:$0xff]
    %v2231 = vld [vmem:[%s5 + $0x128] sm:$0xff]
    %v2232 = vld [vmem:[%s5 + $0x130] sm:$0xff]
    %v2233 = vld [vmem:[%s5 + $0x138] sm:$0xff]
    %v2234 = vld [vmem:[%s5 + $0x140] sm:$0xff]
    %v2235 = vld [vmem:[%s5 + $0x148] sm:$0xff]
    %v2236 = vld [vmem:[%s5 + $0x150] sm:$0xff]
    %v2237 = vld [vmem:[%s5 + $0x158] sm:$0xff]
    %v2238 = vld [vmem:[%s5 + $0x160] sm:$0xff]
    %v2239 = vld [vmem:[%s5 + $0x168] sm:$0xff]
    %v2240 = vld [vmem:[%s5 + $0x170] sm:$0xff]
    %v2241 = vld [vmem:[%s5 + $0x178] sm:$0xff]
    %v2242 = vld [vmem:[%s5 + $0x180] sm:$0xff]
    %v2243 = vld [vmem:[%s5 + $0x188] sm:$0xff]
    %v2244 = vld [vmem:[%s5 + $0x190] sm:$0xff]
    %v2245 = vld [vmem:[%s5 + $0x198] sm:$0xff]
    %v2246 = vld [vmem:[%s5 + $0x1a0] sm:$0xff]
    %v2247 = vld [vmem:[%s5 + $0x1a8] sm:$0xff]
    %v2248 = vld [vmem:[%s5 + $0x1b0] sm:$0xff]
    %v2249 = vld [vmem:[%s5 + $0x1b8] sm:$0xff]
    %v2250 = vld [vmem:[%s5 + $0x1c0] sm:$0xff]
    %v2251 = vld [vmem:[%s5 + $0x1c8] sm:$0xff]
    %v2252 = vld [vmem:[%s5 + $0x1d0] sm:$0xff]
    %v2253 = vld [vmem:[%s5 + $0x1d8] sm:$0xff]
    %v2254 = vld [vmem:[%s5 + $0x1e0] sm:$0xff]
    %v2255 = vld [vmem:[%s5 + $0x1e8] sm:$0xff]
    %v2256 = vld [vmem:[%s5 + $0x1f0] sm:$0xff]
    %v2257 = vld [vmem:[%s5 + $0x1f8] sm:$0xff]
    %v2258 = vld [vmem:[%s5 + $0x200] sm:$0xff]
    %v2259 = vld [vmem:[%s5 + $0x208] sm:$0xff]
    %v2260 = vld [vmem:[%s5 + $0x210] sm:$0xff]
    %v2261 = vld [vmem:[%s5 + $0x218] sm:$0xff]
    %v2262 = vld [vmem:[%s5 + $0x220] sm:$0xff]
    %v2263 = vld [vmem:[%s5 + $0x228] sm:$0xff]
    %v2264 = vld [vmem:[%s5 + $0x230] sm:$0xff]
    %v2265 = vld [vmem:[%s5 + $0x238] sm:$0xff]
    %v2266 = vld [vmem:[%s5 + $0x240] sm:$0xff]
    %v2267 = vld [vmem:[%s5 + $0x248] sm:$0xff]
    %v2268 = vld [vmem:[%s5 + $0x250] sm:$0xff]
    %v2269 = vld [vmem:[%s5 + $0x258] sm:$0xff]
    %v2270 = vld [vmem:[%s5 + $0x260] sm:$0xff]
    %v2271 = vld [vmem:[%s5 + $0x268] sm:$0xff]
    %v2272 = vld [vmem:[%s5 + $0x270] sm:$0xff]
    %v2273 = vld [vmem:[%s5 + $0x278] sm:$0xff]
    %v2274 = vld [vmem:[%s5 + $0x280] sm:$0xff]
    %v2275 = vld [vmem:[%s5 + $0x288] sm:$0xff]
    %v2276 = vld [vmem:[%s5 + $0x290] sm:$0xff]
    %v2277 = vld [vmem:[%s5 + $0x298] sm:$0xff]
    %v2278 = vld [vmem:[%s5 + $0x2a0] sm:$0xff]
    %v2279 = vld [vmem:[%s5 + $0x2a8] sm:$0xff]
    %v2280 = vld [vmem:[%s5 + $0x2b0] sm:$0xff]
    %v2281 = vld [vmem:[%s5 + $0x2b8] sm:$0xff]
    %v2282 = vld [vmem:[%s5 + $0x2c0] sm:$0xff]
    %v2283 = vld [vmem:[%s5 + $0x2c8] sm:$0xff]
    %v2284 = vld [vmem:[%s5 + $0x2d0] sm:$0xff]
    %v2285 = vld [vmem:[%s5 + $0x2d8] sm:$0xff]
    %v2286 = vld [vmem:[%s5 + $0x2e0] sm:$0xff]
    %v2287 = vld [vmem:[%s5 + $0x2e8] sm:$0xff]
    %v2288 = vld [vmem:[%s5 + $0x2f0] sm:$0xff]
    %v2289 = vld [vmem:[%s5 + $0x2f8] sm:$0xff]
    %v2290 = vld [vmem:[%s5 + $0x300] sm:$0xff]
    %v2291 = vld [vmem:[%s5 + $0x308] sm:$0xff]
    %v2292 = vld [vmem:[%s5 + $0x310] sm:$0xff]
    %v2293 = vld [vmem:[%s5 + $0x318] sm:$0xff]
    %v2294 = vld [vmem:[%s5 + $0x320] sm:$0xff]
    %v2295 = vld [vmem:[%s5 + $0x328] sm:$0xff]
    %v2296 = vld [vmem:[%s5 + $0x330] sm:$0xff]
    %v2297 = vld [vmem:[%s5 + $0x338] sm:$0xff]
    %v2298 = vld [vmem:[%s5 + $0x340] sm:$0xff]
    %v2299 = vld [vmem:[%s5 + $0x348] sm:$0xff]
    %v2300 = vld [vmem:[%s5 + $0x350] sm:$0xff]
    %v2301 = vld [vmem:[%s5 + $0x358] sm:$0xff]
    %v2302 = vld [vmem:[%s5 + $0x360] sm:$0xff]
    %v2303 = vld [vmem:[%s5 + $0x368] sm:$0xff]
    %v2304 = vld [vmem:[%s5 + $0x370] sm:$0xff]
    %v2305 = vld [vmem:[%s5 + $0x378] sm:$0xff]
    %v2306 = vld [vmem:[%s5 + $0x380] sm:$0xff]
    %v2307 = vld [vmem:[%s5 + $0x388] sm:$0xff]
    %v2308 = vld [vmem:[%s5 + $0x390] sm:$0xff]
    %v2309 = vld [vmem:[%s5 + $0x398] sm:$0xff]
    %v2310 = vld [vmem:[%s5 + $0x3a0] sm:$0xff]
    %v2311 = vld [vmem:[%s5 + $0x3a8] sm:$0xff]
    %v2312 = vld [vmem:[%s5 + $0x3b0] sm:$0xff]
    %v2313 = vld [vmem:[%s5 + $0x3b8] sm:$0xff]
    %v2314 = vld [vmem:[%s5 + $0x3c0] sm:$0xff]
    %v2315 = vld [vmem:[%s5 + $0x3c8] sm:$0xff]
    %v2316 = vld [vmem:[%s5 + $0x3d0] sm:$0xff]
    %v2317 = vld [vmem:[%s5 + $0x3d8] sm:$0xff]
    %v2318 = vld [vmem:[%s5 + $0x3e0] sm:$0xff]
    %v2319 = vld [vmem:[%s5 + $0x3e8] sm:$0xff]
    %v2320 = vld [vmem:[%s5 + $0x3f0] sm:$0xff]
    %v2321 = vld [vmem:[%s5 + $0x3f8] sm:$0xff]
    %v2322 = vld [vmem:[%s5 + $0x400] sm:$0xff]
    %v2323 = vld [vmem:[%s5 + $0x408] sm:$0xff]
    %v2324 = vld [vmem:[%s5 + $0x410] sm:$0xff]
    %v2325 = vld [vmem:[%s5 + $0x418] sm:$0xff]
    %v2326 = vld [vmem:[%s5 + $0x420] sm:$0xff]
    %v2327 = vld [vmem:[%s5 + $0x428] sm:$0xff]
    %v2328 = vld [vmem:[%s5 + $0x430] sm:$0xff]
    %v2329 = vld [vmem:[%s5 + $0x438] sm:$0xff]
    %v2330 = vld [vmem:[%s5 + $0x440] sm:$0xff]
    %v2331 = vld [vmem:[%s5 + $0x448] sm:$0xff]
    %v2332 = vld [vmem:[%s5 + $0x450] sm:$0xff]
    %v2333 = vld [vmem:[%s5 + $0x458] sm:$0xff]
    %v2334 = vld [vmem:[%s5 + $0x460] sm:$0xff]
    %v2335 = vld [vmem:[%s5 + $0x468] sm:$0xff]
    %v2336 = vld [vmem:[%s5 + $0x470] sm:$0xff]
    %v2337 = vld [vmem:[%s5 + $0x478] sm:$0xff]
    %v2338 = vld [vmem:[%s5 + $0x480] sm:$0xff]
    %v2339 = vld [vmem:[%s5 + $0x488] sm:$0xff]
    %v2340 = vld [vmem:[%s5 + $0x490] sm:$0xff]
    %v2341 = vld [vmem:[%s5 + $0x498] sm:$0xff]
    %v2342 = vld [vmem:[%s5 + $0x4a0] sm:$0xff]
    %v2343 = vld [vmem:[%s5 + $0x4a8] sm:$0xff]
    %v2344 = vld [vmem:[%s5 + $0x4b0] sm:$0xff]
    %v2345 = vld [vmem:[%s5 + $0x4b8] sm:$0xff]
    %v2346 = vld [vmem:[%s5 + $0x4c0] sm:$0xff]
    %v2347 = vld [vmem:[%s5 + $0x4c8] sm:$0xff]
    %v2348 = vld [vmem:[%s5 + $0x4d0] sm:$0xff]
    %v2349 = vld [vmem:[%s5 + $0x4d8] sm:$0xff]
    %v2350 = vld [vmem:[%s5 + $0x4e0] sm:$0xff]
    %v2351 = vld [vmem:[%s5 + $0x4e8] sm:$0xff]
    %v2352 = vld [vmem:[%s5 + $0x4f0] sm:$0xff]
    %v2353 = vld [vmem:[%s5 + $0x4f8] sm:$0xff]
    %v2354 = vld [vmem:[%s5 + $0x500] sm:$0xff]
    %v2355 = vld [vmem:[%s5 + $0x508] sm:$0xff]
    %v2356 = vld [vmem:[%s5 + $0x510] sm:$0xff]
    %v2357 = vld [vmem:[%s5 + $0x518] sm:$0xff]
    %v2358 = vld [vmem:[%s5 + $0x520] sm:$0xff]
    %v2359 = vld [vmem:[%s5 + $0x528] sm:$0xff]
    %v2360 = vld [vmem:[%s5 + $0x530] sm:$0xff]
    %v2361 = vld [vmem:[%s5 + $0x538] sm:$0xff]
    %v2362 = vld [vmem:[%s5 + $0x540] sm:$0xff]
    %v2363 = vld [vmem:[%s5 + $0x548] sm:$0xff]
    %v2364 = vld [vmem:[%s5 + $0x550] sm:$0xff]
    %v2365 = vld [vmem:[%s5 + $0x558] sm:$0xff]
    %v2366 = vld [vmem:[%s5 + $0x560] sm:$0xff]
    %v2367 = vld [vmem:[%s5 + $0x568] sm:$0xff]
    %v2368 = vld [vmem:[%s5 + $0x570] sm:$0xff]
    %v2369 = vld [vmem:[%s5 + $0x578] sm:$0xff]
    %v2370 = vld [vmem:[%s5 + $0x580] sm:$0xff]
    %v2371 = vld [vmem:[%s5 + $0x588] sm:$0xff]
    %v2372 = vld [vmem:[%s5 + $0x590] sm:$0xff]
    %v2373 = vld [vmem:[%s5 + $0x598] sm:$0xff]
    %v2374 = vld [vmem:[%s5 + $0x5a0] sm:$0xff]
    %v2375 = vld [vmem:[%s5 + $0x5a8] sm:$0xff]
    %v2376 = vld [vmem:[%s5 + $0x5b0] sm:$0xff]
    %v2377 = vld [vmem:[%s5 + $0x5b8] sm:$0xff]
    %v2378 = vld [vmem:[%s5 + $0x5c0] sm:$0xff]
    %v2379 = vld [vmem:[%s5 + $0x5c8] sm:$0xff]
    %v2380 = vld [vmem:[%s5 + $0x5d0] sm:$0xff]
    %v2381 = vld [vmem:[%s5 + $0x5d8] sm:$0xff]
    %v2382 = vld [vmem:[%s5 + $0x5e0] sm:$0xff]
    %v2383 = vld [vmem:[%s5 + $0x5e8] sm:$0xff]
    %v2384 = vld [vmem:[%s5 + $0x5f0] sm:$0xff]
    %v2385 = vld [vmem:[%s5 + $0x5f8] sm:$0xff]
    %v2386 = vld [vmem:[%s5 + $0x600] sm:$0xff]
    %v2387 = vld [vmem:[%s5 + $0x608] sm:$0xff]
    %v2388 = vld [vmem:[%s5 + $0x610] sm:$0xff]
    %v2389 = vld [vmem:[%s5 + $0x618] sm:$0xff]
    %v2390 = vld [vmem:[%s5 + $0x620] sm:$0xff]
    %v2391 = vld [vmem:[%s5 + $0x628] sm:$0xff]
    %v2392 = vld [vmem:[%s5 + $0x630] sm:$0xff]
    %v2393 = vld [vmem:[%s5 + $0x638] sm:$0xff]
    %v2394 = vld [vmem:[%s5 + $0x640] sm:$0xff]
    %v2395 = vld [vmem:[%s5 + $0x648] sm:$0xff]
    %v2396 = vld [vmem:[%s5 + $0x650] sm:$0xff]
    %v2397 = vld [vmem:[%s5 + $0x658] sm:$0xff]
    %v2398 = vld [vmem:[%s5 + $0x660] sm:$0xff]
    %v2399 = vld [vmem:[%s5 + $0x668] sm:$0xff]
    %v2400 = vld [vmem:[%s5 + $0x670] sm:$0xff]
    %v2401 = vld [vmem:[%s5 + $0x678] sm:$0xff]
    %v2402 = vld [vmem:[%s5 + $0x680] sm:$0xff]
    %v2403 = vld [vmem:[%s5 + $0x688] sm:$0xff]
    %v2404 = vld [vmem:[%s5 + $0x690] sm:$0xff]
    %v2405 = vld [vmem:[%s5 + $0x698] sm:$0xff]
    %v2406 = vld [vmem:[%s5 + $0x6a0] sm:$0xff]
    %v2407 = vld [vmem:[%s5 + $0x6a8] sm:$0xff]
    %v2408 = vld [vmem:[%s5 + $0x6b0] sm:$0xff]
    %v2409 = vld [vmem:[%s5 + $0x6b8] sm:$0xff]
    %v2410 = vld [vmem:[%s5 + $0x6c0] sm:$0xff]
    %v2411 = vld [vmem:[%s5 + $0x6c8] sm:$0xff]
    %v2412 = vld [vmem:[%s5 + $0x6d0] sm:$0xff]
    %v2413 = vld [vmem:[%s5 + $0x6d8] sm:$0xff]
    %v2414 = vld [vmem:[%s5 + $0x6e0] sm:$0xff]
    %v2415 = vld [vmem:[%s5 + $0x6e8] sm:$0xff]
    %v2416 = vld [vmem:[%s5 + $0x6f0] sm:$0xff]
    %v2417 = vld [vmem:[%s5 + $0x6f8] sm:$0xff]
    %v2418 = vld [vmem:[%s5 + $0x700] sm:$0xff]
    %v2419 = vld [vmem:[%s5 + $0x708] sm:$0xff]
    %v2420 = vld [vmem:[%s5 + $0x710] sm:$0xff]
    %v2421 = vld [vmem:[%s5 + $0x718] sm:$0xff]
    %v2422 = vld [vmem:[%s5 + $0x720] sm:$0xff]
    %v2423 = vld [vmem:[%s5 + $0x728] sm:$0xff]
    %v2424 = vld [vmem:[%s5 + $0x730] sm:$0xff]
    %v2425 = vld [vmem:[%s5 + $0x738] sm:$0xff]
    %v2426 = vld [vmem:[%s5 + $0x740] sm:$0xff]
    %v2427 = vld [vmem:[%s5 + $0x748] sm:$0xff]
    %s2428 = scalar_lea.vmem %s4, 24
    %v2429 = vld [vmem:[%s2428] sm:$0xff]
    %v2430 = vld [vmem:[%s2428 + $0x8] sm:$0xff]
    %v2431 = vld [vmem:[%s2428 + $0x10] sm:$0x7]
    %v2433 = vsel %vm1923, %v2429, 0
    %v2436 = vsel %vm1923, %v2430, 0
    %v2439 = vsel %vm1923, %v2431, 0
    %2441 = vmatprep.subr.mxu0 %v1896
    %2442 = vmatpush1.msra.mxu0 %v1895
    %2443 = vmatprep.subr.mxu0 %v1901
    %2444 = vmatpush1.msra.mxu0 %v1900
    %2445 = vmatprep.subr.mxu0 %v1906
    %2446 = vmatpush1.msra.mxu0 %v1905
    %2447 = vmatprep.subr.mxu0 %v1911
    %2448 = vmatpush1.msra.mxu0 %v1910
    %2449 = vmatprep.subr.mxu0 %v1937
    %2450 = vmatpush1.msra.mxu0 %v1934
    %2451 = vmatprep.subr.mxu0 0.0
    %2452 = vmatpush1.msra.mxu0 0.0
    %2453 = vmatprep.subr.mxu0 0.0
    %2454 = vmatpush1.msra.mxu0 0.0
    %2455 = vmatprep.subr.mxu0 0.0
    %2456 = vmatpush1.msra.mxu0 0.0
    %2457 = vmatprep.subr.mxu0 0.0
    %2458 = vmatpush1.msra.mxu0 0.0
    %2459 = vmatprep.subr.mxu0 0.0
    %2460 = vmatpush1.msra.mxu0 0.0
    %2461 = vmatprep.subr.mxu0 0.0
    %2462 = vmatpush1.msra.mxu0 0.0
    %2463 = vmatprep.subr.mxu0 0.0
    %2464 = vmatpush1.msra.mxu0 0.0
    %2465 = vmatprep.subr.mxu0 0.0
    %2466 = vmatpush1.msra.mxu0 0.0
    %2467 = vmatprep.subr.mxu0 0.0
    %2468 = vmatpush1.msra.mxu0 0.0
    %2469 = vmatprep.subr.mxu0 0.0
    %2470 = vmatpush1.msra.mxu0 0.0
    %2471 = vmatprep.subr.mxu0 0.0
    %2472 = vmatpush1.msra.mxu0 0.0
    %2473 = vmatprep.subr.mxu0 0.0
    %2474 = vmatpush1.msra.mxu0 0.0
    %2475 = vmatprep.subr.mxu0 0.0
    %2476 = vmatpush1.msra.mxu0 0.0
    %2477 = vmatprep.subr.mxu0 0.0
    %2478 = vmatpush1.msra.mxu0 0.0
    %2479 = vmatprep.subr.mxu0 0.0
    %2480 = vmatpush1.msra.mxu0 0.0
    %2481 = vmatprep.subr.mxu0 0.0
    %2482 = vmatpush1.msra.mxu0 0.0
    %2483 = vmatprep.subr.mxu0 0.0
    %2484 = vmatpush1.msra.mxu0 0.0
    %2485 = vmatprep.subr.mxu0 0.0
    %2486 = vmatpush1.msra.mxu0 0.0
    %2487 = vmatprep.subr.mxu0 0.0
    %2488 = vmatpush1.msra.mxu0 0.0
    %2489 = vmatprep.subr.mxu0 0.0
    %2490 = vmatpush1.msra.mxu0 0.0
    %2491 = vmatprep.subr.mxu0 0.0
    %2492 = vmatpush1.msra.mxu0 0.0
    %2493 = vmatprep.subr.mxu0 0.0
    %2494 = vmatpush1.msra.mxu0 0.0
    %2495 = vmatprep.subr.mxu0 0.0
    %2496 = vmatpush1.msra.mxu0 0.0
    %2497 = vmatprep.subr.mxu0 0.0
    %2498 = vmatpush1.msra.mxu0 0.0
    %2499 = vmatprep.subr.mxu0 0.0
    %2500 = vmatpush1.msra.mxu0 0.0
    %2501 = vmatprep.subr.mxu0 0.0
    %2502 = vmatpush1.msra.mxu0 0.0
    %2503 = vmatprep.subr.mxu0 0.0
    %2504 = vmatpush1.msra.mxu0 0.0
    %2505 = vmatprep.mubr.f32.mxu0 0.0
    %2506 = vmatmul.mubr.f32.gmra.mrb[0].mxu0 %v2433
    %v2507 = vpop.f32.mrb[0].mxu0
    %v2508 = vadd.f32 0.0, %v2507
    %v2509 = vpop.f32.mrb[0].mxu0
    %v2510 = vadd.f32 0.0, %v2509
    %2511 = vmatprep.mubr.f32.mxu0 0.0
    %2512 = vmatmul.mubr.f32.gmra.mrb[0].mxu0 %v2436
    %v2513 = vpop.f32.mrb[0].mxu0
    %v2514 = vadd.f32 0.0, %v2513
    %v2515 = vpop.f32.mrb[0].mxu0
    %v2516 = vadd.f32 0.0, %v2515
    %2517 = vmatprep.mubr.f32.mxu0 0.0
    %2518 = vmatmul.mubr.f32.gmra.mrb[0].mxu0 %v2439
    %v2519 = vpop.f32.mrb[0].mxu0
    %v2520 = vadd.f32 0.0, %v2519
    %v2521 = vpop.f32.mrb[0].mxu0
    %v2522 = vadd.f32 0.0, %v2521
    %2523 = vdwg.mxu0
    %2524 = vmatprep.subr.mxu0 %v1898
    %2525 = vmatpush1.msra.mxu0 %v1897
    %2526 = vmatprep.subr.mxu0 %v1903
    %2527 = vmatpush1.msra.mxu0 %v1902
    %2528 = vmatprep.subr.mxu0 %v1908
    %2529 = vmatpush1.msra.mxu0 %v1907
    %2530 = vmatprep.subr.mxu0 %v1913
    %2531 = vmatpush1.msra.mxu0 %v1912
    %2532 = vmatprep.subr.mxu0 %v1943
    %2533 = vmatpush1.msra.mxu0 %v1940
    %2534 = vmatprep.subr.mxu0 0.0
    %2535 = vmatpush1.msra.mxu0 0.0
    %2536 = vmatprep.subr.mxu0 0.0
    %2537 = vmatpush1.msra.mxu0 0.0
    %2538 = vmatprep.subr.mxu0 0.0
    %2539 = vmatpush1.msra.mxu0 0.0
    %2540 = vmatprep.subr.mxu0 0.0
    %2541 = vmatpush1.msra.mxu0 0.0
    %2542 = vmatprep.subr.mxu0 0.0
    %2543 = vmatpush1.msra.mxu0 0.0
    %2544 = vmatprep.subr.mxu0 0.0
    %2545 = vmatpush1.msra.mxu0 0.0
    %2546 = vmatprep.subr.mxu0 0.0
    %2547 = vmatpush1.msra.mxu0 0.0
    %2548 = vmatprep.subr.mxu0 0.0
    %2549 = vmatpush1.msra.mxu0 0.0
    %2550 = vmatprep.subr.mxu0 0.0
    %2551 = vmatpush1.msra.mxu0 0.0
    %2552 = vmatprep.subr.mxu0 0.0
    %2553 = vmatpush1.msra.mxu0 0.0
    %2554 = vmatprep.subr.mxu0 0.0
    %2555 = vmatpush1.msra.mxu0 0.0
    %2556 = vmatprep.subr.mxu0 0.0
    %2557 = vmatpush1.msra.mxu0 0.0
    %2558 = vmatprep.subr.mxu0 0.0
    %2559 = vmatpush1.msra.mxu0 0.0
    %2560 = vmatprep.subr.mxu0 0.0
    %2561 = vmatpush1.msra.mxu0 0.0
    %2562 = vmatprep.subr.mxu0 0.0
    %2563 = vmatpush1.msra.mxu0 0.0
    %2564 = vmatprep.subr.mxu0 0.0
    %2565 = vmatpush1.msra.mxu0 0.0
    %2566 = vmatprep.subr.mxu0 0.0
    %2567 = vmatpush1.msra.mxu0 0.0
    %2568 = vmatprep.subr.mxu0 0.0
    %2569 = vmatpush1.msra.mxu0 0.0
    %2570 = vmatprep.subr.mxu0 0.0
    %2571 = vmatpush1.msra.mxu0 0.0
    %2572 = vmatprep.subr.mxu0 0.0
    %2573 = vmatpush1.msra.mxu0 0.0
    %2574 = vmatprep.subr.mxu0 0.0
    %2575 = vmatpush1.msra.mxu0 0.0
    %2576 = vmatprep.subr.mxu0 0.0
    %2577 = vmatpush1.msra.mxu0 0.0
    %2578 = vmatprep.subr.mxu0 0.0
    %2579 = vmatpush1.msra.mxu0 0.0
    %2580 = vmatprep.subr.mxu0 0.0
    %2581 = vmatpush1.msra.mxu0 0.0
    %2582 = vmatprep.subr.mxu0 0.0
    %2583 = vmatpush1.msra.mxu0 0.0
    %2584 = vmatprep.subr.mxu0 0.0
    %2585 = vmatpush1.msra.mxu0 0.0
    %2586 = vmatprep.subr.mxu0 0.0
    %2587 = vmatpush1.msra.mxu0 0.0
    %2588 = vmatprep.mubr.f32.mxu0 0.0
    %2589 = vmatmul.mubr.f32.gmra.mrb[0].mxu0 %v2433
    %v2590 = vpop.f32.mrb[0].mxu0
    %v2591 = vadd.f32 0.0, %v2590
    %v2592 = vpop.f32.mrb[0].mxu0
    %v2593 = vadd.f32 0.0, %v2592
    %2594 = vmatprep.mubr.f32.mxu0 0.0
    %2595 = vmatmul.mubr.f32.gmra.mrb[0].mxu0 %v2436
    %v2596 = vpop.f32.mrb[0].mxu0
    %v2597 = vadd.f32 0.0, %v2596
    %v2598 = vpop.f32.mrb[0].mxu0
    %v2599 = vadd.f32 0.0, %v2598
    %2600 = vmatprep.mubr.f32.mxu0 0.0
    %2601 = vmatmul.mubr.f32.gmra.mrb[0].mxu0 %v2439
    %v2602 = vpop.f32.mrb[0].mxu0
    %v2603 = vadd.f32 0.0, %v2602
    %v2604 = vpop.f32.mrb[0].mxu0
    %v2605 = vadd.f32 0.0, %v2604
    %2606 = vdwg.mxu0
    %2607 = vmatprep.subr.mxu0 0.0
    %2608 = vmatpush1.msra.mxu0 %v1899
    %2609 = vmatprep.subr.mxu0 0.0
    %2610 = vmatpush1.msra.mxu0 %v1904
    %2611 = vmatprep.subr.mxu0 0.0
    %2612 = vmatpush1.msra.mxu0 %v1909
    %2613 = vmatprep.subr.mxu0 0.0
    %2614 = vmatpush1.msra.mxu0 %v1914
    %2615 = vmatprep.subr.mxu0 0.0
    %2616 = vmatpush1.msra.mxu0 %v1946
    %2617 = vmatprep.subr.mxu0 0.0
    %2618 = vmatpush1.msra.mxu0 0.0
    %2619 = vmatprep.subr.mxu0 0.0
    %2620 = vmatpush1.msra.mxu0 0.0
    %2621 = vmatprep.subr.mxu0 0.0
    %2622 = vmatpush1.msra.mxu0 0.0
    %2623 = vmatprep.subr.mxu0 0.0
    %2624 = vmatpush1.msra.mxu0 0.0
    %2625 = vmatprep.subr.mxu0 0.0
    %2626 = vmatpush1.msra.mxu0 0.0
    %2627 = vmatprep.subr.mxu0 0.0
    %2628 = vmatpush1.msra.mxu0 0.0
    %2629 = vmatprep.subr.mxu0 0.0
    %2630 = vmatpush1.msra.mxu0 0.0
    %2631 = vmatprep.subr.mxu0 0.0
    %2632 = vmatpush1.msra.mxu0 0.0
    %2633 = vmatprep.subr.mxu0 0.0
    %2634 = vmatpush1.msra.mxu0 0.0
    %2635 = vmatprep.subr.mxu0 0.0
    %2636 = vmatpush1.msra.mxu0 0.0
    %2637 = vmatprep.subr.mxu0 0.0
    %2638 = vmatpush1.msra.mxu0 0.0
    %2639 = vmatprep.subr.mxu0 0.0
    %2640 = vmatpush1.msra.mxu0 0.0
    %2641 = vmatprep.subr.mxu0 0.0
    %2642 = vmatpush1.msra.mxu0 0.0
    %2643 = vmatprep.subr.mxu0 0.0
    %2644 = vmatpush1.msra.mxu0 0.0
    %2645 = vmatprep.subr.mxu0 0.0
    %2646 = vmatpush1.msra.mxu0 0.0
    %2647 = vmatprep.subr.mxu0 0.0
    %2648 = vmatpush1.msra.mxu0 0.0
    %2649 = vmatprep.subr.mxu0 0.0
    %2650 = vmatpush1.msra.mxu0 0.0
    %2651 = vmatprep.subr.mxu0 0.0
    %2652 = vmatpush1.msra.mxu0 0.0
    %2653 = vmatprep.subr.mxu0 0.0
    %2654 = vmatpush1.msra.mxu0 0.0
    %2655 = vmatprep.subr.mxu0 0.0
    %2656 = vmatpush1.msra.mxu0 0.0
    %2657 = vmatprep.subr.mxu0 0.0
    %2658 = vmatpush1.msra.mxu0 0.0
    %2659 = vmatprep.subr.mxu0 0.0
    %2660 = vmatpush1.msra.mxu0 0.0
    %2661 = vmatprep.subr.mxu0 0.0
    %2662 = vmatpush1.msra.mxu0 0.0
    %2663 = vmatprep.subr.mxu0 0.0
    %2664 = vmatpush1.msra.mxu0 0.0
    %2665 = vmatprep.subr.mxu0 0.0
    %2666 = vmatpush1.msra.mxu0 0.0
    %2667 = vmatprep.subr.mxu0 0.0
    %2668 = vmatpush1.msra.mxu0 0.0
    %2669 = vmatprep.subr.mxu0 0.0
    %2670 = vmatpush1.msra.mxu0 0.0
    %2671 = vmatprep.mubr.f32.mxu0 0.0
    %2672 = vmatmul.mubr.f32.gmra.mrb[0].mxu0 %v2433
    %v2673 = vpop.f32.mrb[0].mxu0
    %v2674 = vadd.f32 0.0, %v2673
    %v2675 = vpop.f32.mrb[0].mxu0
    %2676 = vmatprep.mubr.f32.mxu0 0.0
    %2677 = vmatmul.mubr.f32.gmra.mrb[0].mxu0 %v2436
    %v2678 = vpop.f32.mrb[0].mxu0
    %v2679 = vadd.f32 0.0, %v2678
    %v2680 = vpop.f32.mrb[0].mxu0
    %2681 = vmatprep.mubr.f32.mxu0 0.0
    %2682 = vmatmul.mubr.f32.gmra.mrb[0].mxu0 %v2439
    %v2683 = vpop.f32.mrb[0].mxu0
    %v2684 = vadd.f32 0.0, %v2683
    %v2685 = vpop.f32.mrb[0].mxu0
    %2686 = vdwg.mxu0
    %s2687 = scalar_lea.vmem %s5, 1872
    %v2688 = vld [vmem:[%s2687] sm:$0xff]
    %v2689 = vld [vmem:[%s2687 + $0x8] sm:$0xff]
    %v2690 = vld [vmem:[%s2687 + $0x10] sm:$0xff]
    %v2691 = vld [vmem:[%s2687 + $0x18] sm:$0xff]
    %v2692 = vld [vmem:[%s2687 + $0x20] sm:$0xff]
    %v2693 = vld [vmem:[%s2687 + $0x28] sm:$0xff]
    %v2694 = vld [vmem:[%s2687 + $0x30] sm:$0xff]
    %v2695 = vld [vmem:[%s2687 + $0x38] sm:$0xff]
    %v2696 = vld [vmem:[%s2687 + $0x40] sm:$0xff]
    %v2697 = vld [vmem:[%s2687 + $0x48] sm:$0xff]
    %v2698 = vld [vmem:[%s2687 + $0x50] sm:$0xff]
    %v2699 = vld [vmem:[%s2687 + $0x58] sm:$0xff]
    %v2700 = vld [vmem:[%s2687 + $0x60] sm:$0xff]
    %v2701 = vld [vmem:[%s2687 + $0x68] sm:$0xff]
    %v2702 = vld [vmem:[%s2687 + $0x70] sm:$0xff]
    %v2703 = vld [vmem:[%s2687 + $0x78] sm:$0xff]
    %v2704 = vld [vmem:[%s2687 + $0x80] sm:$0xff]
    %v2705 = vld [vmem:[%s2687 + $0x88] sm:$0xff]
    %v2706 = vld [vmem:[%s2687 + $0x90] sm:$0xff]
    %v2707 = vld [vmem:[%s2687 + $0x98] sm:$0xff]
    %v2708 = vld [vmem:[%s2687 + $0xa0] sm:$0xff]
    %v2709 = vld [vmem:[%s2687 + $0xa8] sm:$0xff]
    %v2710 = vld [vmem:[%s2687 + $0xb0] sm:$0xff]
    %v2711 = vld [vmem:[%s2687 + $0xb8] sm:$0xff]
    %v2712 = vld [vmem:[%s2687 + $0xc0] sm:$0xff]
    %v2713 = vld [vmem:[%s2687 + $0xc8] sm:$0xff]
    %v2714 = vld [vmem:[%s2687 + $0xd0] sm:$0xff]
    %v2715 = vld [vmem:[%s2687 + $0xd8] sm:$0xff]
    %v2716 = vld [vmem:[%s2687 + $0xe0] sm:$0xff]
    %v2717 = vld [vmem:[%s2687 + $0xe8] sm:$0xff]
    %v2718 = vld [vmem:[%s2687 + $0xf0] sm:$0xff]
    %v2719 = vld [vmem:[%s2687 + $0xf8] sm:$0xff]
    %v2720 = vld [vmem:[%s2687 + $0x100] sm:$0xff]
    %v2721 = vld [vmem:[%s2687 + $0x108] sm:$0xff]
    %v2722 = vld [vmem:[%s2687 + $0x110] sm:$0xff]
    %v2723 = vld [vmem:[%s2687 + $0x118] sm:$0xff]
    %v2724 = vld [vmem:[%s2687 + $0x120] sm:$0xff]
    %v2725 = vld [vmem:[%s2687 + $0x128] sm:$0xff]
    %v2726 = vld [vmem:[%s2687 + $0x130] sm:$0xff]
    %v2727 = vld [vmem:[%s2687 + $0x138] sm:$0xff]
    %v2728 = vld [vmem:[%s2687 + $0x140] sm:$0xff]
    %v2729 = vld [vmem:[%s2687 + $0x148] sm:$0xff]
    %v2730 = vld [vmem:[%s2687 + $0x150] sm:$0xff]
    %v2731 = vld [vmem:[%s2687 + $0x158] sm:$0xff]
    %v2732 = vld [vmem:[%s2687 + $0x160] sm:$0xff]
    %v2733 = vld [vmem:[%s2687 + $0x168] sm:$0xff]
    %v2734 = vld [vmem:[%s2687 + $0x170] sm:$0xff]
    %v2735 = vld [vmem:[%s2687 + $0x178] sm:$0xff]
    %v2736 = vld [vmem:[%s2687 + $0x180] sm:$0xff]
    %v2737 = vld [vmem:[%s2687 + $0x188] sm:$0xff]
    %v2738 = vld [vmem:[%s2687 + $0x190] sm:$0xff]
    %v2739 = vld [vmem:[%s2687 + $0x198] sm:$0xff]
    %v2740 = vld [vmem:[%s2687 + $0x1a0] sm:$0xff]
    %v2741 = vld [vmem:[%s2687 + $0x1a8] sm:$0xff]
    %v2742 = vld [vmem:[%s2687 + $0x1b0] sm:$0xff]
    %v2743 = vld [vmem:[%s2687 + $0x1b8] sm:$0xff]
    %v2744 = vld [vmem:[%s2687 + $0x1c0] sm:$0xff]
    %v2745 = vld [vmem:[%s2687 + $0x1c8] sm:$0xff]
    %v2746 = vld [vmem:[%s2687 + $0x1d0] sm:$0xff]
    %v2747 = vld [vmem:[%s2687 + $0x1d8] sm:$0xff]
    %v2748 = vld [vmem:[%s2687 + $0x1e0] sm:$0xff]
    %v2749 = vld [vmem:[%s2687 + $0x1e8] sm:$0xff]
    %v2750 = vld [vmem:[%s2687 + $0x1f0] sm:$0xff]
    %v2751 = vld [vmem:[%s2687 + $0x1f8] sm:$0xff]
    %v2752 = vld [vmem:[%s2687 + $0x200] sm:$0xff]
    %v2753 = vld [vmem:[%s2687 + $0x208] sm:$0xff]
    %v2754 = vld [vmem:[%s2687 + $0x210] sm:$0xff]
    %v2755 = vld [vmem:[%s2687 + $0x218] sm:$0xff]
    %v2756 = vld [vmem:[%s2687 + $0x220] sm:$0xff]
    %v2757 = vld [vmem:[%s2687 + $0x228] sm:$0xff]
    %v2758 = vld [vmem:[%s2687 + $0x230] sm:$0xff]
    %v2759 = vld [vmem:[%s2687 + $0x238] sm:$0xff]
    %v2760 = vld [vmem:[%s2687 + $0x240] sm:$0xff]
    %v2761 = vld [vmem:[%s2687 + $0x248] sm:$0xff]
    %v2762 = vld [vmem:[%s2687 + $0x250] sm:$0xff]
    %v2763 = vld [vmem:[%s2687 + $0x258] sm:$0xff]
    %v2764 = vld [vmem:[%s2687 + $0x260] sm:$0xff]
    %v2765 = vld [vmem:[%s2687 + $0x268] sm:$0xff]
    %v2766 = vld [vmem:[%s2687 + $0x270] sm:$0xff]
    %v2767 = vld [vmem:[%s2687 + $0x278] sm:$0xff]
    %v2768 = vld [vmem:[%s2687 + $0x280] sm:$0xff]
    %v2769 = vld [vmem:[%s2687 + $0x288] sm:$0xff]
    %v2770 = vld [vmem:[%s2687 + $0x290] sm:$0xff]
    %v2771 = vld [vmem:[%s2687 + $0x298] sm:$0xff]
    %v2772 = vld [vmem:[%s2687 + $0x2a0] sm:$0xff]
    %v2773 = vld [vmem:[%s2687 + $0x2a8] sm:$0xff]
    %v2774 = vld [vmem:[%s2687 + $0x2b0] sm:$0xff]
    %v2775 = vld [vmem:[%s2687 + $0x2b8] sm:$0xff]
    %v2776 = vld [vmem:[%s2687 + $0x2c0] sm:$0xff]
    %v2777 = vld [vmem:[%s2687 + $0x2c8] sm:$0xff]
    %v2778 = vld [vmem:[%s2687 + $0x2d0] sm:$0xff]
    %v2779 = vld [vmem:[%s2687 + $0x2d8] sm:$0xff]
    %v2780 = vld [vmem:[%s2687 + $0x2e0] sm:$0xff]
    %v2781 = vld [vmem:[%s2687 + $0x2e8] sm:$0xff]
    %v2782 = vld [vmem:[%s2687 + $0x2f0] sm:$0xff]
    %v2783 = vld [vmem:[%s2687 + $0x2f8] sm:$0xff]
    %v2784 = vld [vmem:[%s2687 + $0x300] sm:$0xff]
    %v2785 = vld [vmem:[%s2687 + $0x308] sm:$0xff]
    %v2786 = vld [vmem:[%s2687 + $0x310] sm:$0xff]
    %v2787 = vld [vmem:[%s2687 + $0x318] sm:$0xff]
    %v2788 = vld [vmem:[%s2687 + $0x320] sm:$0xff]
    %v2789 = vld [vmem:[%s2687 + $0x328] sm:$0xff]
    %v2790 = vld [vmem:[%s2687 + $0x330] sm:$0xff]
    %v2791 = vld [vmem:[%s2687 + $0x338] sm:$0xff]
    %v2792 = vld [vmem:[%s2687 + $0x340] sm:$0xff]
    %v2793 = vld [vmem:[%s2687 + $0x348] sm:$0xff]
    %v2794 = vld [vmem:[%s2687 + $0x350] sm:$0xff]
    %v2795 = vld [vmem:[%s2687 + $0x358] sm:$0xff]
    %v2796 = vld [vmem:[%s2687 + $0x360] sm:$0xff]
    %v2797 = vld [vmem:[%s2687 + $0x368] sm:$0xff]
    %v2798 = vld [vmem:[%s2687 + $0x370] sm:$0xff]
    %v2799 = vld [vmem:[%s2687 + $0x378] sm:$0xff]
    %v2800 = vld [vmem:[%s2687 + $0x380] sm:$0xff]
    %v2801 = vld [vmem:[%s2687 + $0x388] sm:$0xff]
    %v2802 = vld [vmem:[%s2687 + $0x390] sm:$0xff]
    %v2803 = vld [vmem:[%s2687 + $0x398] sm:$0xff]
    %v2804 = vld [vmem:[%s2687 + $0x3a0] sm:$0xff]
    %v2805 = vld [vmem:[%s2687 + $0x3a8] sm:$0xff]
    %v2806 = vld [vmem:[%s2687 + $0x3b0] sm:$0xff]
    %v2807 = vld [vmem:[%s2687 + $0x3b8] sm:$0xff]
    %v2808 = vld [vmem:[%s2687 + $0x3c0] sm:$0xff]
    %v2809 = vld [vmem:[%s2687 + $0x3c8] sm:$0xff]
    %v2810 = vld [vmem:[%s2687 + $0x3d0] sm:$0xff]
    %v2811 = vld [vmem:[%s2687 + $0x3d8] sm:$0xff]
    %v2812 = vld [vmem:[%s2687 + $0x3e0] sm:$0xff]
    %v2813 = vld [vmem:[%s2687 + $0x3e8] sm:$0xff]
    %v2814 = vld [vmem:[%s2687 + $0x3f0] sm:$0xff]
    %v2815 = vld [vmem:[%s2687 + $0x3f8] sm:$0xff]
    %v2816 = vld [vmem:[%s2687 + $0x400] sm:$0xff]
    %v2817 = vld [vmem:[%s2687 + $0x408] sm:$0xff]
    %v2818 = vld [vmem:[%s2687 + $0x410] sm:$0xff]
    %v2819 = vld [vmem:[%s2687 + $0x418] sm:$0xff]
    %v2820 = vld [vmem:[%s2687 + $0x420] sm:$0xff]
    %v2821 = vld [vmem:[%s2687 + $0x428] sm:$0xff]
    %v2822 = vld [vmem:[%s2687 + $0x430] sm:$0xff]
    %v2823 = vld [vmem:[%s2687 + $0x438] sm:$0xff]
    %v2824 = vld [vmem:[%s2687 + $0x440] sm:$0xff]
    %v2825 = vld [vmem:[%s2687 + $0x448] sm:$0xff]
    %v2826 = vld [vmem:[%s2687 + $0x450] sm:$0xff]
    %v2827 = vld [vmem:[%s2687 + $0x458] sm:$0xff]
    %v2828 = vld [vmem:[%s2687 + $0x460] sm:$0xff]
    %v2829 = vld [vmem:[%s2687 + $0x468] sm:$0xff]
    %v2830 = vld [vmem:[%s2687 + $0x470] sm:$0xff]
    %v2831 = vld [vmem:[%s2687 + $0x478] sm:$0xff]
    %v2832 = vld [vmem:[%s2687 + $0x480] sm:$0xff]
    %v2833 = vld [vmem:[%s2687 + $0x488] sm:$0xff]
    %v2834 = vld [vmem:[%s2687 + $0x490] sm:$0xff]
    %v2835 = vld [vmem:[%s2687 + $0x498] sm:$0xff]
    %v2836 = vld [vmem:[%s2687 + $0x4a0] sm:$0xff]
    %v2837 = vld [vmem:[%s2687 + $0x4a8] sm:$0xff]
    %v2838 = vld [vmem:[%s2687 + $0x4b0] sm:$0xff]
    %v2839 = vld [vmem:[%s2687 + $0x4b8] sm:$0xff]
    %v2840 = vld [vmem:[%s2687 + $0x4c0] sm:$0xff]
    %v2841 = vld [vmem:[%s2687 + $0x4c8] sm:$0xff]
    %v2842 = vld [vmem:[%s2687 + $0x4d0] sm:$0xff]
    %v2843 = vld [vmem:[%s2687 + $0x4d8] sm:$0xff]
    %v2844 = vld [vmem:[%s2687 + $0x4e0] sm:$0xff]
    %v2845 = vld [vmem:[%s2687 + $0x4e8] sm:$0xff]
    %v2846 = vld [vmem:[%s2687 + $0x4f0] sm:$0xff]
    %v2847 = vld [vmem:[%s2687 + $0x4f8] sm:$0xff]
    %v2848 = vld [vmem:[%s2687 + $0x500] sm:$0xff]
    %v2849 = vld [vmem:[%s2687 + $0x508] sm:$0xff]
    %v2850 = vld [vmem:[%s2687 + $0x510] sm:$0xff]
    %v2851 = vld [vmem:[%s2687 + $0x518] sm:$0xff]
    %v2852 = vld [vmem:[%s2687 + $0x520] sm:$0xff]
    %v2853 = vld [vmem:[%s2687 + $0x528] sm:$0xff]
    %v2854 = vld [vmem:[%s2687 + $0x530] sm:$0xff]
    %v2855 = vld [vmem:[%s2687 + $0x538] sm:$0xff]
    %v2856 = vld [vmem:[%s2687 + $0x540] sm:$0xff]
    %v2857 = vld [vmem:[%s2687 + $0x548] sm:$0xff]
    %v2858 = vld [vmem:[%s2687 + $0x550] sm:$0xff]
    %v2859 = vld [vmem:[%s2687 + $0x558] sm:$0xff]
    %v2860 = vld [vmem:[%s2687 + $0x560] sm:$0xff]
    %v2861 = vld [vmem:[%s2687 + $0x568] sm:$0xff]
    %v2862 = vld [vmem:[%s2687 + $0x570] sm:$0xff]
    %v2863 = vld [vmem:[%s2687 + $0x578] sm:$0xff]
    %v2864 = vld [vmem:[%s2687 + $0x580] sm:$0xff]
    %v2865 = vld [vmem:[%s2687 + $0x588] sm:$0xff]
    %v2866 = vld [vmem:[%s2687 + $0x590] sm:$0xff]
    %v2867 = vld [vmem:[%s2687 + $0x598] sm:$0xff]
    %v2868 = vld [vmem:[%s2687 + $0x5a0] sm:$0xff]
    %v2869 = vld [vmem:[%s2687 + $0x5a8] sm:$0xff]
    %v2870 = vld [vmem:[%s2687 + $0x5b0] sm:$0xff]
    %v2871 = vld [vmem:[%s2687 + $0x5b8] sm:$0xff]
    %v2872 = vld [vmem:[%s2687 + $0x5c0] sm:$0xff]
    %v2873 = vld [vmem:[%s2687 + $0x5c8] sm:$0xff]
    %v2874 = vld [vmem:[%s2687 + $0x5d0] sm:$0xff]
    %v2875 = vld [vmem:[%s2687 + $0x5d8] sm:$0xff]
    %v2876 = vld [vmem:[%s2687 + $0x5e0] sm:$0xff]
    %v2877 = vld [vmem:[%s2687 + $0x5e8] sm:$0xff]
    %v2878 = vld [vmem:[%s2687 + $0x5f0] sm:$0xff]
    %v2879 = vld [vmem:[%s2687 + $0x5f8] sm:$0xff]
    %v2880 = vld [vmem:[%s2687 + $0x600] sm:$0xff]
    %v2881 = vld [vmem:[%s2687 + $0x608] sm:$0xff]
    %v2882 = vld [vmem:[%s2687 + $0x610] sm:$0xff]
    %v2883 = vld [vmem:[%s2687 + $0x618] sm:$0xff]
    %v2884 = vld [vmem:[%s2687 + $0x620] sm:$0xff]
    %v2885 = vld [vmem:[%s2687 + $0x628] sm:$0xff]
    %v2886 = vld [vmem:[%s2687 + $0x630] sm:$0xff]
    %v2887 = vld [vmem:[%s2687 + $0x638] sm:$0xff]
    %v2888 = vld [vmem:[%s2687 + $0x640] sm:$0xff]
    %v2889 = vld [vmem:[%s2687 + $0x648] sm:$0xff]
    %v2890 = vld [vmem:[%s2687 + $0x650] sm:$0xff]
    %v2891 = vld [vmem:[%s2687 + $0x658] sm:$0xff]
    %v2892 = vld [vmem:[%s2687 + $0x660] sm:$0xff]
    %v2893 = vld [vmem:[%s2687 + $0x668] sm:$0xff]
    %v2894 = vld [vmem:[%s2687 + $0x670] sm:$0xff]
    %v2895 = vld [vmem:[%s2687 + $0x678] sm:$0xff]
    %v2896 = vld [vmem:[%s2687 + $0x680] sm:$0xff]
    %v2897 = vld [vmem:[%s2687 + $0x688] sm:$0xff]
    %v2898 = vld [vmem:[%s2687 + $0x690] sm:$0xff]
    %v2899 = vld [vmem:[%s2687 + $0x698] sm:$0xff]
    %v2900 = vld [vmem:[%s2687 + $0x6a0] sm:$0xff]
    %v2901 = vld [vmem:[%s2687 + $0x6a8] sm:$0xff]
    %v2902 = vld [vmem:[%s2687 + $0x6b0] sm:$0xff]
    %v2903 = vld [vmem:[%s2687 + $0x6b8] sm:$0xff]
    %v2904 = vld [vmem:[%s2687 + $0x6c0] sm:$0xff]
    %v2905 = vld [vmem:[%s2687 + $0x6c8] sm:$0xff]
    %v2906 = vld [vmem:[%s2687 + $0x6d0] sm:$0xff]
    %v2907 = vld [vmem:[%s2687 + $0x6d8] sm:$0xff]
    %v2908 = vld [vmem:[%s2687 + $0x6e0] sm:$0xff]
    %v2909 = vld [vmem:[%s2687 + $0x6e8] sm:$0xff]
    %v2910 = vld [vmem:[%s2687 + $0x6f0] sm:$0xff]
    %v2911 = vld [vmem:[%s2687 + $0x6f8] sm:$0xff]
    %v2912 = vld [vmem:[%s2687 + $0x700] sm:$0xff]
    %v2913 = vld [vmem:[%s2687 + $0x708] sm:$0xff]
    %v2914 = vld [vmem:[%s2687 + $0x710] sm:$0xff]
    %v2915 = vld [vmem:[%s2687 + $0x718] sm:$0xff]
    %v2916 = vld [vmem:[%s2687 + $0x720] sm:$0xff]
    %v2917 = vld [vmem:[%s2687 + $0x728] sm:$0xff]
    %v2918 = vld [vmem:[%s2687 + $0x730] sm:$0xff]
    %v2919 = vld [vmem:[%s2687 + $0x738] sm:$0xff]
    %v2920 = vld [vmem:[%s2687 + $0x740] sm:$0xff]
    %v2921 = vld [vmem:[%s2687 + $0x748] sm:$0xff]
    %vm2922 = vcmask 916480
    %v2924 = vsel %vm2922, %v2674, 0
    %v2927 = vsel %vm2922, %v2679, 0
    %v2930 = vsel %vm2922, %v2684, 0
    %2932 = vmatprep.subr.mxu0 %v2689
    %2933 = vmatpush1.msra.mxu0 %v2688
    %2934 = vmatprep.subr.mxu0 %v2692
    %2935 = vmatpush1.msra.mxu0 %v2691
    %2936 = vmatprep.subr.mxu0 %v2695
    %2937 = vmatpush1.msra.mxu0 %v2694
    %2938 = vmatprep.subr.mxu0 %v2698
    %2939 = vmatpush1.msra.mxu0 %v2697
    %2940 = vmatprep.subr.mxu0 %v2701
    %2941 = vmatpush1.msra.mxu0 %v2700
    %2942 = vmatprep.subr.mxu0 %v2704
    %2943 = vmatpush1.msra.mxu0 %v2703
    %2944 = vmatprep.subr.mxu0 %v2707
    %2945 = vmatpush1.msra.mxu0 %v2706
    %2946 = vmatprep.subr.mxu0 %v2710
    %2947 = vmatpush1.msra.mxu0 %v2709
    %2948 = vmatprep.subr.mxu0 %v2713
    %2949 = vmatpush1.msra.mxu0 %v2712
    %2950 = vmatprep.subr.mxu0 %v2716
    %2951 = vmatpush1.msra.mxu0 %v2715
    %2952 = vmatprep.subr.mxu0 %v2719
    %2953 = vmatpush1.msra.mxu0 %v2718
    %2954 = vmatprep.subr.mxu0 %v2722
    %2955 = vmatpush1.msra.mxu0 %v2721
    %2956 = vmatprep.subr.mxu0 %v2725
    %2957 = vmatpush1.msra.mxu0 %v2724
    %2958 = vmatprep.subr.mxu0 %v2728
    %2959 = vmatpush1.msra.mxu0 %v2727
    %2960 = vmatprep.subr.mxu0 %v2731
    %2961 = vmatpush1.msra.mxu0 %v2730
    %2962 = vmatprep.subr.mxu0 %v2734
    %2963 = vmatpush1.msra.mxu0 %v2733
    %2964 = vmatprep.subr.mxu0 %v2737
    %2965 = vmatpush1.msra.mxu0 %v2736
    %2966 = vmatprep.subr.mxu0 %v2740
    %2967 = vmatpush1.msra.mxu0 %v2739
    %2968 = vmatprep.subr.mxu0 %v2743
    %2969 = vmatpush1.msra.mxu0 %v2742
    %2970 = vmatprep.subr.mxu0 %v2746
    %2971 = vmatpush1.msra.mxu0 %v2745
    %2972 = vmatprep.subr.mxu0 %v2749
    %2973 = vmatpush1.msra.mxu0 %v2748
    %2974 = vmatprep.subr.mxu0 %v2752
    %2975 = vmatpush1.msra.mxu0 %v2751
    %2976 = vmatprep.subr.mxu0 %v2755
    %2977 = vmatpush1.msra.mxu0 %v2754
    %2978 = vmatprep.subr.mxu0 %v2758
    %2979 = vmatpush1.msra.mxu0 %v2757
    %2980 = vmatprep.subr.mxu0 %v2761
    %2981 = vmatpush1.msra.mxu0 %v2760
    %2982 = vmatprep.subr.mxu0 %v2764
    %2983 = vmatpush1.msra.mxu0 %v2763
    %2984 = vmatprep.subr.mxu0 %v2767
    %2985 = vmatpush1.msra.mxu0 %v2766
    %2986 = vmatprep.subr.mxu0 %v2770
    %2987 = vmatpush1.msra.mxu0 %v2769
    %2988 = vmatprep.subr.mxu0 %v2773
    %2989 = vmatpush1.msra.mxu0 %v2772
    %2990 = vmatprep.subr.mxu0 %v2776
    %2991 = vmatpush1.msra.mxu0 %v2775
    %2992 = vmatprep.subr.mxu0 %v2779
    %2993 = vmatpush1.msra.mxu0 %v2778
    %2994 = vmatprep.subr.mxu0 %v2782
    %2995 = vmatpush1.msra.mxu0 %v2781
    %2996 = vmatprep.mubr.f32.mxu0 %v2510
    %2997 = vmatmul.mubr.f32.gmra.mrb[0].mxu0 %v2508
    %v2998 = vpop.f32.mrb[0].mxu0
    %v2999 = vadd.f32 0.0, %v2998
    %v3000 = vpop.f32.mrb[0].mxu0
    %v3001 = vadd.f32 0.0, %v3000
    %3002 = vmatprep.mubr.f32.mxu0 %v2516
    %3003 = vmatmul.mubr.f32.gmra.mrb[0].mxu0 %v2514
    %v3004 = vpop.f32.mrb[0].mxu0
    %v3005 = vadd.f32 0.0, %v3004
    %v3006 = vpop.f32.mrb[0].mxu0
    %v3007 = vadd.f32 0.0, %v3006
    %3008 = vmatprep.mubr.f32.mxu0 %v2522
    %3009 = vmatmul.mubr.f32.gmra.mrb[0].mxu0 %v2520
    %v3010 = vpop.f32.mrb[0].mxu0
    %v3011 = vadd.f32 0.0, %v3010
    %v3012 = vpop.f32.mrb[0].mxu0
    %v3013 = vadd.f32 0.0, %v3012
    %3014 = vdwg.mxu0
    %3015 = vmatprep.subr.mxu0 %v2785
    %3016 = vmatpush1.msra.mxu0 %v2784
    %3017 = vmatprep.subr.mxu0 %v2788
    %3018 = vmatpush1.msra.mxu0 %v2787
    %3019 = vmatprep.subr.mxu0 %v2791
    %3020 = vmatpush1.msra.mxu0 %v2790
    %3021 = vmatprep.subr.mxu0 %v2794
    %3022 = vmatpush1.msra.mxu0 %v2793
    %3023 = vmatprep.subr.mxu0 %v2797
    %3024 = vmatpush1.msra.mxu0 %v2796
    %3025 = vmatprep.subr.mxu0 %v2800
    %3026 = vmatpush1.msra.mxu0 %v2799
    %3027 = vmatprep.subr.mxu0 %v2803
    %3028 = vmatpush1.msra.mxu0 %v2802
    %3029 = vmatprep.subr.mxu0 %v2806
    %3030 = vmatpush1.msra.mxu0 %v2805
    %3031 = vmatprep.subr.mxu0 %v2809
    %3032 = vmatpush1.msra.mxu0 %v2808
    %3033 = vmatprep.subr.mxu0 %v2812
    %3034 = vmatpush1.msra.mxu0 %v2811
    %3035 = vmatprep.subr.mxu0 %v2815
    %3036 = vmatpush1.msra.mxu0 %v2814
    %3037 = vmatprep.subr.mxu0 %v2818
    %3038 = vmatpush1.msra.mxu0 %v2817
    %3039 = vmatprep.subr.mxu0 %v2821
    %3040 = vmatpush1.msra.mxu0 %v2820
    %3041 = vmatprep.subr.mxu0 %v2824
    %3042 = vmatpush1.msra.mxu0 %v2823
    %3043 = vmatprep.subr.mxu0 %v2827
    %3044 = vmatpush1.msra.mxu0 %v2826
    %3045 = vmatprep.subr.mxu0 %v2830
    %3046 = vmatpush1.msra.mxu0 %v2829
    %3047 = vmatprep.subr.mxu0 %v2833
    %3048 = vmatpush1.msra.mxu0 %v2832
    %3049 = vmatprep.subr.mxu0 %v2836
    %3050 = vmatpush1.msra.mxu0 %v2835
    %3051 = vmatprep.subr.mxu0 %v2839
    %3052 = vmatpush1.msra.mxu0 %v2838
    %3053 = vmatprep.subr.mxu0 %v2842
    %3054 = vmatpush1.msra.mxu0 %v2841
    %3055 = vmatprep.subr.mxu0 %v2845
    %3056 = vmatpush1.msra.mxu0 %v2844
    %3057 = vmatprep.subr.mxu0 %v2848
    %3058 = vmatpush1.msra.mxu0 %v2847
    %3059 = vmatprep.subr.mxu0 %v2851
    %3060 = vmatpush1.msra.mxu0 %v2850
    %3061 = vmatprep.subr.mxu0 %v2854
    %3062 = vmatpush1.msra.mxu0 %v2853
    %3063 = vmatprep.subr.mxu0 %v2857
    %3064 = vmatpush1.msra.mxu0 %v2856
    %3065 = vmatprep.subr.mxu0 %v2860
    %3066 = vmatpush1.msra.mxu0 %v2859
    %3067 = vmatprep.subr.mxu0 %v2863
    %3068 = vmatpush1.msra.mxu0 %v2862
    %3069 = vmatprep.subr.mxu0 %v2866
    %3070 = vmatpush1.msra.mxu0 %v2865
    %3071 = vmatprep.subr.mxu0 %v2869
    %3072 = vmatpush1.msra.mxu0 %v2868
    %3073 = vmatprep.subr.mxu0 %v2872
    %3074 = vmatpush1.msra.mxu0 %v2871
    %3075 = vmatprep.subr.mxu0 %v2875
    %3076 = vmatpush1.msra.mxu0 %v2874
    %3077 = vmatprep.subr.mxu0 %v2878
    %3078 = vmatpush1.msra.mxu0 %v2877
    %3079 = vmatprep.mubr.f32.mxu0 %v2593
    %3080 = vmatmul.mubr.f32.gmra.mrb[0].mxu0 %v2591
    %v3081 = vpop.f32.mrb[0].mxu0
    %v3082 = vadd.f32 %v2999, %v3081
    %v3083 = vpop.f32.mrb[0].mxu0
    %v3084 = vadd.f32 %v3001, %v3083
    %3085 = vmatprep.mubr.f32.mxu0 %v2599
    %3086 = vmatmul.mubr.f32.gmra.mrb[0].mxu0 %v2597
    %v3087 = vpop.f32.mrb[0].mxu0
    %v3088 = vadd.f32 %v3005, %v3087
    %v3089 = vpop.f32.mrb[0].mxu0
    %v3090 = vadd.f32 %v3007, %v3089
    %3091 = vmatprep.mubr.f32.mxu0 %v2605
    %3092 = vmatmul.mubr.f32.gmra.mrb[0].mxu0 %v2603
    %v3093 = vpop.f32.mrb[0].mxu0
    %v3094 = vadd.f32 %v3011, %v3093
    %v3095 = vpop.f32.mrb[0].mxu0
    %v3096 = vadd.f32 %v3013, %v3095
    %3097 = vdwg.mxu0
    %3098 = vmatprep.subr.mxu0 %v2881
    %3099 = vmatpush1.msra.mxu0 %v2880
    %3100 = vmatprep.subr.mxu0 %v2884
    %3101 = vmatpush1.msra.mxu0 %v2883
    %3102 = vmatprep.subr.mxu0 %v2887
    %3103 = vmatpush1.msra.mxu0 %v2886
    %3104 = vmatprep.subr.mxu0 %v2890
    %3105 = vmatpush1.msra.mxu0 %v2889
    %3106 = vmatprep.subr.mxu0 %v2893
    %3107 = vmatpush1.msra.mxu0 %v2892
    %3108 = vmatprep.subr.mxu0 %v2896
    %3109 = vmatpush1.msra.mxu0 %v2895
    %3110 = vmatprep.subr.mxu0 %v2899
    %3111 = vmatpush1.msra.mxu0 %v2898
    %3112 = vmatprep.subr.mxu0 %v2902
    %3113 = vmatpush1.msra.mxu0 %v2901
    %3114 = vmatprep.subr.mxu0 %v2905
    %3115 = vmatpush1.msra.mxu0 %v2904
    %3116 = vmatprep.subr.mxu0 %v2908
    %3117 = vmatpush1.msra.mxu0 %v2907
    %3118 = vmatprep.subr.mxu0 %v2911
    %3119 = vmatpush1.msra.mxu0 %v2910
    %3120 = vmatprep.subr.mxu0 %v2914
    %3121 = vmatpush1.msra.mxu0 %v2913
    %3122 = vmatprep.subr.mxu0 %v2917
    %3123 = vmatpush1.msra.mxu0 %v2916
    %3124 = vmatprep.subr.mxu0 %v2920
    %3125 = vmatpush1.msra.mxu0 %v2919
    %3126 = vmatprep.subr.mxu0 0.0
    %3127 = vmatpush1.msra.mxu0 0.0
    %3128 = vmatprep.subr.mxu0 0.0
    %3129 = vmatpush1.msra.mxu0 0.0
    %3130 = vmatprep.subr.mxu0 0.0
    %3131 = vmatpush1.msra.mxu0 0.0
    %3132 = vmatprep.subr.mxu0 0.0
    %3133 = vmatpush1.msra.mxu0 0.0
    %3134 = vmatprep.subr.mxu0 0.0
    %3135 = vmatpush1.msra.mxu0 0.0
    %3136 = vmatprep.subr.mxu0 0.0
    %3137 = vmatpush1.msra.mxu0 0.0
    %3138 = vmatprep.subr.mxu0 0.0
    %3139 = vmatpush1.msra.mxu0 0.0
    %3140 = vmatprep.subr.mxu0 0.0
    %3141 = vmatpush1.msra.mxu0 0.0
    %3142 = vmatprep.subr.mxu0 0.0
    %3143 = vmatpush1.msra.mxu0 0.0
    %3144 = vmatprep.subr.mxu0 0.0
    %3145 = vmatpush1.msra.mxu0 0.0
    %3146 = vmatprep.subr.mxu0 0.0
    %3147 = vmatpush1.msra.mxu0 0.0
    %3148 = vmatprep.subr.mxu0 0.0
    %3149 = vmatpush1.msra.mxu0 0.0
    %3150 = vmatprep.subr.mxu0 0.0
    %3151 = vmatpush1.msra.mxu0 0.0
    %3152 = vmatprep.subr.mxu0 0.0
    %3153 = vmatpush1.msra.mxu0 0.0
    %3154 = vmatprep.subr.mxu0 0.0
    %3155 = vmatpush1.msra.mxu0 0.0
    %3156 = vmatprep.subr.mxu0 0.0
    %3157 = vmatpush1.msra.mxu0 0.0
    %3158 = vmatprep.subr.mxu0 0.0
    %3159 = vmatpush1.msra.mxu0 0.0
    %3160 = vmatprep.subr.mxu0 0.0
    %3161 = vmatpush1.msra.mxu0 0.0
    %3162 = vmatprep.mubr.f32.mxu0 0.0
    %3163 = vmatmul.mubr.f32.gmra.mrb[0].mxu0 %v2924
    %v3164 = vpop.f32.mrb[0].mxu0
    %v3165 = vadd.f32 %v3082, %v3164
    %v3166 = vpop.f32.mrb[0].mxu0
    %v3167 = vadd.f32 %v3084, %v3166
    %3168 = vmatprep.mubr.f32.mxu0 0.0
    %3169 = vmatmul.mubr.f32.gmra.mrb[0].mxu0 %v2927
    %v3170 = vpop.f32.mrb[0].mxu0
    %v3171 = vadd.f32 %v3088, %v3170
    %v3172 = vpop.f32.mrb[0].mxu0
    %v3173 = vadd.f32 %v3090, %v3172
    %3174 = vmatprep.mubr.f32.mxu0 0.0
    %3175 = vmatmul.mubr.f32.gmra.mrb[0].mxu0 %v2930
    %v3176 = vpop.f32.mrb[0].mxu0
    %v3177 = vadd.f32 %v3094, %v3176
    %v3178 = vpop.f32.mrb[0].mxu0
    %v3179 = vadd.f32 %v3096, %v3178
    %3180 = vdwg.mxu0
    %3181 = vmatprep.subr.mxu0 0.0
    %3182 = vmatpush1.msra.mxu0 %v2690
    %3183 = vmatprep.subr.mxu0 0.0
    %3184 = vmatpush1.msra.mxu0 %v2693
    %3185 = vmatprep.subr.mxu0 0.0
    %3186 = vmatpush1.msra.mxu0 %v2696
    %3187 = vmatprep.subr.mxu0 0.0
    %3188 = vmatpush1.msra.mxu0 %v2699
    %3189 = vmatprep.subr.mxu0 0.0
    %3190 = vmatpush1.msra.mxu0 %v2702
    %3191 = vmatprep.subr.mxu0 0.0
    %3192 = vmatpush1.msra.mxu0 %v2705
    %3193 = vmatprep.subr.mxu0 0.0
    %3194 = vmatpush1.msra.mxu0 %v2708
    %3195 = vmatprep.subr.mxu0 0.0
    %3196 = vmatpush1.msra.mxu0 %v2711
    %3197 = vmatprep.subr.mxu0 0.0
    %3198 = vmatpush1.msra.mxu0 %v2714
    %3199 = vmatprep.subr.mxu0 0.0
    %3200 = vmatpush1.msra.mxu0 %v2717
    %3201 = vmatprep.subr.mxu0 0.0
    %3202 = vmatpush1.msra.mxu0 %v2720
    %3203 = vmatprep.subr.mxu0 0.0
    %3204 = vmatpush1.msra.mxu0 %v2723
    %3205 = vmatprep.subr.mxu0 0.0
    %3206 = vmatpush1.msra.mxu0 %v2726
    %3207 = vmatprep.subr.mxu0 0.0
    %3208 = vmatpush1.msra.mxu0 %v2729
    %3209 = vmatprep.subr.mxu0 0.0
    %3210 = vmatpush1.msra.mxu0 %v2732
    %3211 = vmatprep.subr.mxu0 0.0
    %3212 = vmatpush1.msra.mxu0 %v2735
    %3213 = vmatprep.subr.mxu0 0.0
    %3214 = vmatpush1.msra.mxu0 %v2738
    %3215 = vmatprep.subr.mxu0 0.0
    %3216 = vmatpush1.msra.mxu0 %v2741
    %3217 = vmatprep.subr.mxu0 0.0
    %3218 = vmatpush1.msra.mxu0 %v2744
    %3219 = vmatprep.subr.mxu0 0.0
    %3220 = vmatpush1.msra.mxu0 %v2747
    %3221 = vmatprep.subr.mxu0 0.0
    %3222 = vmatpush1.msra.mxu0 %v2750
    %3223 = vmatprep.subr.mxu0 0.0
    %3224 = vmatpush1.msra.mxu0 %v2753
    %3225 = vmatprep.subr.mxu0 0.0
    %3226 = vmatpush1.msra.mxu0 %v2756
    %3227 = vmatprep.subr.mxu0 0.0
    %3228 = vmatpush1.msra.mxu0 %v2759
    %3229 = vmatprep.subr.mxu0 0.0
    %3230 = vmatpush1.msra.mxu0 %v2762
    %3231 = vmatprep.subr.mxu0 0.0
    %3232 = vmatpush1.msra.mxu0 %v2765
    %3233 = vmatprep.subr.mxu0 0.0
    %3234 = vmatpush1.msra.mxu0 %v2768
    %3235 = vmatprep.subr.mxu0 0.0
    %3236 = vmatpush1.msra.mxu0 %v2771
    %3237 = vmatprep.subr.mxu0 0.0
    %3238 = vmatpush1.msra.mxu0 %v2774
    %3239 = vmatprep.subr.mxu0 0.0
    %3240 = vmatpush1.msra.mxu0 %v2777
    %3241 = vmatprep.subr.mxu0 0.0
    %3242 = vmatpush1.msra.mxu0 %v2780
    %3243 = vmatprep.subr.mxu0 0.0
    %3244 = vmatpush1.msra.mxu0 %v2783
    %3245 = vmatprep.mubr.f32.mxu0 %v2510
    %3246 = vmatmul.mubr.f32.gmra.mrb[0].mxu0 %v2508
    %v3247 = vpop.f32.mrb[0].mxu0
    %v3248 = vadd.f32 0.0, %v3247
    %v3249 = vpop.f32.mrb[0].mxu0
    %3250 = vmatprep.mubr.f32.mxu0 %v2516
    %3251 = vmatmul.mubr.f32.gmra.mrb[0].mxu0 %v2514
    %v3252 = vpop.f32.mrb[0].mxu0
    %v3253 = vadd.f32 0.0, %v3252
    %v3254 = vpop.f32.mrb[0].mxu0
    %3255 = vmatprep.mubr.f32.mxu0 %v2522
    %3256 = vmatmul.mubr.f32.gmra.mrb[0].mxu0 %v2520
    %v3257 = vpop.f32.mrb[0].mxu0
    %v3258 = vadd.f32 0.0, %v3257
    %v3259 = vpop.f32.mrb[0].mxu0
    %3260 = vdwg.mxu0
    %3261 = vmatprep.subr.mxu0 0.0
    %3262 = vmatpush1.msra.mxu0 %v2786
    %3263 = vmatprep.subr.mxu0 0.0
    %3264 = vmatpush1.msra.mxu0 %v2789
    %3265 = vmatprep.subr.mxu0 0.0
    %3266 = vmatpush1.msra.mxu0 %v2792
    %3267 = vmatprep.subr.mxu0 0.0
    %3268 = vmatpush1.msra.mxu0 %v2795
    %3269 = vmatprep.subr.mxu0 0.0
    %3270 = vmatpush1.msra.mxu0 %v2798
    %3271 = vmatprep.subr.mxu0 0.0
    %3272 = vmatpush1.msra.mxu0 %v2801
    %3273 = vmatprep.subr.mxu0 0.0
    %3274 = vmatpush1.msra.mxu0 %v2804
    %3275 = vmatprep.subr.mxu0 0.0
    %3276 = vmatpush1.msra.mxu0 %v2807
    %3277 = vmatprep.subr.mxu0 0.0
    %3278 = vmatpush1.msra.mxu0 %v2810
    %3279 = vmatprep.subr.mxu0 0.0
    %3280 = vmatpush1.msra.mxu0 %v2813
    %3281 = vmatprep.subr.mxu0 0.0
    %3282 = vmatpush1.msra.mxu0 %v2816
    %3283 = vmatprep.subr.mxu0 0.0
    %3284 = vmatpush1.msra.mxu0 %v2819
    %3285 = vmatprep.subr.mxu0 0.0
    %3286 = vmatpush1.msra.mxu0 %v2822
    %3287 = vmatprep.subr.mxu0 0.0
    %3288 = vmatpush1.msra.mxu0 %v2825
    %3289 = vmatprep.subr.mxu0 0.0
    %3290 = vmatpush1.msra.mxu0 %v2828
    %3291 = vmatprep.subr.mxu0 0.0
    %3292 = vmatpush1.msra.mxu0 %v2831
    %3293 = vmatprep.subr.mxu0 0.0
    %3294 = vmatpush1.msra.mxu0 %v2834
    %3295 = vmatprep.subr.mxu0 0.0
    %3296 = vmatpush1.msra.mxu0 %v2837
    %3297 = vmatprep.subr.mxu0 0.0
    %3298 = vmatpush1.msra.mxu0 %v2840
    %3299 = vmatprep.subr.mxu0 0.0
    %3300 = vmatpush1.msra.mxu0 %v2843
    %3301 = vmatprep.subr.mxu0 0.0
    %3302 = vmatpush1.msra.mxu0 %v2846
    %3303 = vmatprep.subr.mxu0 0.0
    %3304 = vmatpush1.msra.mxu0 %v2849
    %3305 = vmatprep.subr.mxu0 0.0
    %3306 = vmatpush1.msra.mxu0 %v2852
    %3307 = vmatprep.subr.mxu0 0.0
    %3308 = vmatpush1.msra.mxu0 %v2855
    %3309 = vmatprep.subr.mxu0 0.0
    %3310 = vmatpush1.msra.mxu0 %v2858
    %3311 = vmatprep.subr.mxu0 0.0
    %3312 = vmatpush1.msra.mxu0 %v2861
    %3313 = vmatprep.subr.mxu0 0.0
    %3314 = vmatpush1.msra.mxu0 %v2864
    %3315 = vmatprep.subr.mxu0 0.0
    %3316 = vmatpush1.msra.mxu0 %v2867
    %3317 = vmatprep.subr.mxu0 0.0
    %3318 = vmatpush1.msra.mxu0 %v2870
    %3319 = vmatprep.subr.mxu0 0.0
    %3320 = vmatpush1.msra.mxu0 %v2873
    %3321 = vmatprep.subr.mxu0 0.0
    %3322 = vmatpush1.msra.mxu0 %v2876
    %3323 = vmatprep.subr.mxu0 0.0
    %3324 = vmatpush1.msra.mxu0 %v2879
    %3325 = vmatprep.mubr.f32.mxu0 %v2593
    %3326 = vmatmul.mubr.f32.gmra.mrb[0].mxu0 %v2591
    %v3327 = vpop.f32.mrb[0].mxu0
    %v3328 = vadd.f32 %v3248, %v3327
    %v3329 = vpop.f32.mrb[0].mxu0
    %3330 = vmatprep.mubr.f32.mxu0 %v2599
    %3331 = vmatmul.mubr.f32.gmra.mrb[0].mxu0 %v2597
    %v3332 = vpop.f32.mrb[0].mxu0
    %v3333 = vadd.f32 %v3253, %v3332
    %v3334 = vpop.f32.mrb[0].mxu0
    %3335 = vmatprep.mubr.f32.mxu0 %v2605
    %3336 = vmatmul.mubr.f32.gmra.mrb[0].mxu0 %v2603
    %v3337 = vpop.f32.mrb[0].mxu0
    %v3338 = vadd.f32 %v3258, %v3337
    %v3339 = vpop.f32.mrb[0].mxu0
    %3340 = vdwg.mxu0
    %3341 = vmatprep.subr.mxu0 0.0
    %3342 = vmatpush1.msra.mxu0 %v2882
    %3343 = vmatprep.subr.mxu0 0.0
    %3344 = vmatpush1.msra.mxu0 %v2885
    %3345 = vmatprep.subr.mxu0 0.0
    %3346 = vmatpush1.msra.mxu0 %v2888
    %3347 = vmatprep.subr.mxu0 0.0
    %3348 = vmatpush1.msra.mxu0 %v2891
    %3349 = vmatprep.subr.mxu0 0.0
    %3350 = vmatpush1.msra.mxu0 %v2894
    %3351 = vmatprep.subr.mxu0 0.0
    %3352 = vmatpush1.msra.mxu0 %v2897
    %3353 = vmatprep.subr.mxu0 0.0
    %3354 = vmatpush1.msra.mxu0 %v2900
    %3355 = vmatprep.subr.mxu0 0.0
    %3356 = vmatpush1.msra.mxu0 %v2903
    %3357 = vmatprep.subr.mxu0 0.0
    %3358 = vmatpush1.msra.mxu0 %v2906
    %3359 = vmatprep.subr.mxu0 0.0
    %3360 = vmatpush1.msra.mxu0 %v2909
    %3361 = vmatprep.subr.mxu0 0.0
    %3362 = vmatpush1.msra.mxu0 %v2912
    %3363 = vmatprep.subr.mxu0 0.0
    %3364 = vmatpush1.msra.mxu0 %v2915
    %3365 = vmatprep.subr.mxu0 0.0
    %3366 = vmatpush1.msra.mxu0 %v2918
    %3367 = vmatprep.subr.mxu0 0.0
    %3368 = vmatpush1.msra.mxu0 %v2921
    %3369 = vmatprep.subr.mxu0 0.0
    %3370 = vmatpush1.msra.mxu0 0.0
    %3371 = vmatprep.subr.mxu0 0.0
    %3372 = vmatpush1.msra.mxu0 0.0
    %3373 = vmatprep.subr.mxu0 0.0
    %3374 = vmatpush1.msra.mxu0 0.0
    %3375 = vmatprep.subr.mxu0 0.0
    %3376 = vmatpush1.msra.mxu0 0.0
    %3377 = vmatprep.subr.mxu0 0.0
    %3378 = vmatpush1.msra.mxu0 0.0
    %3379 = vmatprep.subr.mxu0 0.0
    %3380 = vmatpush1.msra.mxu0 0.0
    %3381 = vmatprep.subr.mxu0 0.0
    %3382 = vmatpush1.msra.mxu0 0.0
    %3383 = vmatprep.subr.mxu0 0.0
    %3384 = vmatpush1.msra.mxu0 0.0
    %3385 = vmatprep.subr.mxu0 0.0
    %3386 = vmatpush1.msra.mxu0 0.0
    %3387 = vmatprep.subr.mxu0 0.0
    %3388 = vmatpush1.msra.mxu0 0.0
    %3389 = vmatprep.subr.mxu0 0.0
    %3390 = vmatpush1.msra.mxu0 0.0
    %3391 = vmatprep.subr.mxu0 0.0
    %3392 = vmatpush1.msra.mxu0 0.0
    %3393 = vmatprep.subr.mxu0 0.0
    %3394 = vmatpush1.msra.mxu0 0.0
    %3395 = vmatprep.subr.mxu0 0.0
    %3396 = vmatpush1.msra.mxu0 0.0
    %3397 = vmatprep.subr.mxu0 0.0
    %3398 = vmatpush1.msra.mxu0 0.0
    %3399 = vmatprep.subr.mxu0 0.0
    %3400 = vmatpush1.msra.mxu0 0.0
    %3401 = vmatprep.subr.mxu0 0.0
    %3402 = vmatpush1.msra.mxu0 0.0
    %3403 = vmatprep.subr.mxu0 0.0
    %3404 = vmatpush1.msra.mxu0 0.0
    %3405 = vmatprep.mubr.f32.mxu0 0.0
    %3406 = vmatmul.mubr.f32.gmra.mrb[0].mxu0 %v2924
    %v3407 = vpop.f32.mrb[0].mxu0
    %v3408 = vadd.f32 %v3328, %v3407
    %v3409 = vpop.f32.mrb[0].mxu0
    %3410 = vmatprep.mubr.f32.mxu0 0.0
    %3411 = vmatmul.mubr.f32.gmra.mrb[0].mxu0 %v2927
    %v3412 = vpop.f32.mrb[0].mxu0
    %v3413 = vadd.f32 %v3333, %v3412
    %v3414 = vpop.f32.mrb[0].mxu0
    %3415 = vmatprep.mubr.f32.mxu0 0.0
    %3416 = vmatmul.mubr.f32.gmra.mrb[0].mxu0 %v2930
    %v3417 = vpop.f32.mrb[0].mxu0
    %v3418 = vadd.f32 %v3338, %v3417
    %v3419 = vpop.f32.mrb[0].mxu0
    %3420 = vdwg.mxu0
    %v3422 = vsel %vm2922, %v2181, 0
    %v3425 = vsel %vm2922, %v2186, 0
    %v3428 = vsel %vm2922, %v2191, 0
    %3430 = vmatprep.subr.mxu0 %v2195
    %3431 = vmatpush1.msra.mxu0 %v2194
    %3432 = vmatprep.subr.mxu0 %v2198
    %3433 = vmatpush1.msra.mxu0 %v2197
    %3434 = vmatprep.subr.mxu0 %v2201
    %3435 = vmatpush1.msra.mxu0 %v2200
    %3436 = vmatprep.subr.mxu0 %v2204
    %3437 = vmatpush1.msra.mxu0 %v2203
    %3438 = vmatprep.subr.mxu0 %v2207
    %3439 = vmatpush1.msra.mxu0 %v2206
    %3440 = vmatprep.subr.mxu0 %v2210
    %3441 = vmatpush1.msra.mxu0 %v2209
    %3442 = vmatprep.subr.mxu0 %v2213
    %3443 = vmatpush1.msra.mxu0 %v2212
    %3444 = vmatprep.subr.mxu0 %v2216
    %3445 = vmatpush1.msra.mxu0 %v2215
    %3446 = vmatprep.subr.mxu0 %v2219
    %3447 = vmatpush1.msra.mxu0 %v2218
    %3448 = vmatprep.subr.mxu0 %v2222
    %3449 = vmatpush1.msra.mxu0 %v2221
    %3450 = vmatprep.subr.mxu0 %v2225
    %3451 = vmatpush1.msra.mxu0 %v2224
    %3452 = vmatprep.subr.mxu0 %v2228
    %3453 = vmatpush1.msra.mxu0 %v2227
    %3454 = vmatprep.subr.mxu0 %v2231
    %3455 = vmatpush1.msra.mxu0 %v2230
    %3456 = vmatprep.subr.mxu0 %v2234
    %3457 = vmatpush1.msra.mxu0 %v2233
    %3458 = vmatprep.subr.mxu0 %v2237
    %3459 = vmatpush1.msra.mxu0 %v2236
    %3460 = vmatprep.subr.mxu0 %v2240
    %3461 = vmatpush1.msra.mxu0 %v2239
    %3462 = vmatprep.subr.mxu0 %v2243
    %3463 = vmatpush1.msra.mxu0 %v2242
    %3464 = vmatprep.subr.mxu0 %v2246
    %3465 = vmatpush1.msra.mxu0 %v2245
    %3466 = vmatprep.subr.mxu0 %v2249
    %3467 = vmatpush1.msra.mxu0 %v2248
    %3468 = vmatprep.subr.mxu0 %v2252
    %3469 = vmatpush1.msra.mxu0 %v2251
    %3470 = vmatprep.subr.mxu0 %v2255
    %3471 = vmatpush1.msra.mxu0 %v2254
    %3472 = vmatprep.subr.mxu0 %v2258
    %3473 = vmatpush1.msra.mxu0 %v2257
    %3474 = vmatprep.subr.mxu0 %v2261
    %3475 = vmatpush1.msra.mxu0 %v2260
    %3476 = vmatprep.subr.mxu0 %v2264
    %3477 = vmatpush1.msra.mxu0 %v2263
    %3478 = vmatprep.subr.mxu0 %v2267
    %3479 = vmatpush1.msra.mxu0 %v2266
    %3480 = vmatprep.subr.mxu0 %v2270
    %3481 = vmatpush1.msra.mxu0 %v2269
    %3482 = vmatprep.subr.mxu0 %v2273
    %3483 = vmatpush1.msra.mxu0 %v2272
    %3484 = vmatprep.subr.mxu0 %v2276
    %3485 = vmatpush1.msra.mxu0 %v2275
    %3486 = vmatprep.subr.mxu0 %v2279
    %3487 = vmatpush1.msra.mxu0 %v2278
    %3488 = vmatprep.subr.mxu0 %v2282
    %3489 = vmatpush1.msra.mxu0 %v2281
    %3490 = vmatprep.subr.mxu0 %v2285
    %3491 = vmatpush1.msra.mxu0 %v2284
    %3492 = vmatprep.subr.mxu0 %v2288
    %3493 = vmatpush1.msra.mxu0 %v2287
    %3494 = vmatprep.mubr.f32.mxu0 %v2017
    %3495 = vmatmul.mubr.f32.gmra.mrb[0].mxu0 %v2015
    %v3496 = vpop.f32.mrb[0].mxu0
    %v3497 = vadd.f32 %v3165, %v3496
    %v3498 = vpop.f32.mrb[0].mxu0
    %v3499 = vadd.f32 %v3167, %v3498
    %3500 = vmatprep.mubr.f32.mxu0 %v2023
    %3501 = vmatmul.mubr.f32.gmra.mrb[0].mxu0 %v2021
    %v3502 = vpop.f32.mrb[0].mxu0
    %v3503 = vadd.f32 %v3171, %v3502
    %v3504 = vpop.f32.mrb[0].mxu0
    %v3505 = vadd.f32 %v3173, %v3504
    %3506 = vmatprep.mubr.f32.mxu0 %v2029
    %3507 = vmatmul.mubr.f32.gmra.mrb[0].mxu0 %v2027
    %v3508 = vpop.f32.mrb[0].mxu0
    %v3509 = vadd.f32 %v3177, %v3508
    %v3510 = vpop.f32.mrb[0].mxu0
    %v3511 = vadd.f32 %v3179, %v3510
    %3512 = vdwg.mxu0
    %3513 = vmatprep.subr.mxu0 %v2291
    %3514 = vmatpush1.msra.mxu0 %v2290
    %3515 = vmatprep.subr.mxu0 %v2294
    %3516 = vmatpush1.msra.mxu0 %v2293
    %3517 = vmatprep.subr.mxu0 %v2297
    %3518 = vmatpush1.msra.mxu0 %v2296
    %3519 = vmatprep.subr.mxu0 %v2300
    %3520 = vmatpush1.msra.mxu0 %v2299
    %3521 = vmatprep.subr.mxu0 %v2303
    %3522 = vmatpush1.msra.mxu0 %v2302
    %3523 = vmatprep.subr.mxu0 %v2306
    %3524 = vmatpush1.msra.mxu0 %v2305
    %3525 = vmatprep.subr.mxu0 %v2309
    %3526 = vmatpush1.msra.mxu0 %v2308
    %3527 = vmatprep.subr.mxu0 %v2312
    %3528 = vmatpush1.msra.mxu0 %v2311
    %3529 = vmatprep.subr.mxu0 %v2315
    %3530 = vmatpush1.msra.mxu0 %v2314
    %3531 = vmatprep.subr.mxu0 %v2318
    %3532 = vmatpush1.msra.mxu0 %v2317
    %3533 = vmatprep.subr.mxu0 %v2321
    %3534 = vmatpush1.msra.mxu0 %v2320
    %3535 = vmatprep.subr.mxu0 %v2324
    %3536 = vmatpush1.msra.mxu0 %v2323
    %3537 = vmatprep.subr.mxu0 %v2327
    %3538 = vmatpush1.msra.mxu0 %v2326
    %3539 = vmatprep.subr.mxu0 %v2330
    %3540 = vmatpush1.msra.mxu0 %v2329
    %3541 = vmatprep.subr.mxu0 %v2333
    %3542 = vmatpush1.msra.mxu0 %v2332
    %3543 = vmatprep.subr.mxu0 %v2336
    %3544 = vmatpush1.msra.mxu0 %v2335
    %3545 = vmatprep.subr.mxu0 %v2339
    %3546 = vmatpush1.msra.mxu0 %v2338
    %3547 = vmatprep.subr.mxu0 %v2342
    %3548 = vmatpush1.msra.mxu0 %v2341
    %3549 = vmatprep.subr.mxu0 %v2345
    %3550 = vmatpush1.msra.mxu0 %v2344
    %3551 = vmatprep.subr.mxu0 %v2348
    %3552 = vmatpush1.msra.mxu0 %v2347
    %3553 = vmatprep.subr.mxu0 %v2351
    %3554 = vmatpush1.msra.mxu0 %v2350
    %3555 = vmatprep.subr.mxu0 %v2354
    %3556 = vmatpush1.msra.mxu0 %v2353
    %3557 = vmatprep.subr.mxu0 %v2357
    %3558 = vmatpush1.msra.mxu0 %v2356
    %3559 = vmatprep.subr.mxu0 %v2360
    %3560 = vmatpush1.msra.mxu0 %v2359
    %3561 = vmatprep.subr.mxu0 %v2363
    %3562 = vmatpush1.msra.mxu0 %v2362
    %3563 = vmatprep.subr.mxu0 %v2366
    %3564 = vmatpush1.msra.mxu0 %v2365
    %3565 = vmatprep.subr.mxu0 %v2369
    %3566 = vmatpush1.msra.mxu0 %v2368
    %3567 = vmatprep.subr.mxu0 %v2372
    %3568 = vmatpush1.msra.mxu0 %v2371
    %3569 = vmatprep.subr.mxu0 %v2375
    %3570 = vmatpush1.msra.mxu0 %v2374
    %3571 = vmatprep.subr.mxu0 %v2378
    %3572 = vmatpush1.msra.mxu0 %v2377
    %3573 = vmatprep.subr.mxu0 %v2381
    %3574 = vmatpush1.msra.mxu0 %v2380
    %3575 = vmatprep.subr.mxu0 %v2384
    %3576 = vmatpush1.msra.mxu0 %v2383
    %3577 = vmatprep.mubr.f32.mxu0 %v2100
    %3578 = vmatmul.mubr.f32.gmra.mrb[0].mxu0 %v2098
    %v3579 = vpop.f32.mrb[0].mxu0
    %v3580 = vadd.f32 %v3497, %v3579
    %v3581 = vpop.f32.mrb[0].mxu0
    %v3582 = vadd.f32 %v3499, %v3581
    %3583 = vmatprep.mubr.f32.mxu0 %v2106
    %3584 = vmatmul.mubr.f32.gmra.mrb[0].mxu0 %v2104
    %v3585 = vpop.f32.mrb[0].mxu0
    %v3586 = vadd.f32 %v3503, %v3585
    %v3587 = vpop.f32.mrb[0].mxu0
    %v3588 = vadd.f32 %v3505, %v3587
    %3589 = vmatprep.mubr.f32.mxu0 %v2112
    %3590 = vmatmul.mubr.f32.gmra.mrb[0].mxu0 %v2110
    %v3591 = vpop.f32.mrb[0].mxu0
    %v3592 = vadd.f32 %v3509, %v3591
    %v3593 = vpop.f32.mrb[0].mxu0
    %v3594 = vadd.f32 %v3511, %v3593
    %3595 = vdwg.mxu0
    %3596 = vmatprep.subr.mxu0 %v2387
    %3597 = vmatpush1.msra.mxu0 %v2386
    %3598 = vmatprep.subr.mxu0 %v2390
    %3599 = vmatpush1.msra.mxu0 %v2389
    %3600 = vmatprep.subr.mxu0 %v2393
    %3601 = vmatpush1.msra.mxu0 %v2392
    %3602 = vmatprep.subr.mxu0 %v2396
    %3603 = vmatpush1.msra.mxu0 %v2395
    %3604 = vmatprep.subr.mxu0 %v2399
    %3605 = vmatpush1.msra.mxu0 %v2398
    %3606 = vmatprep.subr.mxu0 %v2402
    %3607 = vmatpush1.msra.mxu0 %v2401
    %3608 = vmatprep.subr.mxu0 %v2405
    %3609 = vmatpush1.msra.mxu0 %v2404
    %3610 = vmatprep.subr.mxu0 %v2408
    %3611 = vmatpush1.msra.mxu0 %v2407
    %3612 = vmatprep.subr.mxu0 %v2411
    %3613 = vmatpush1.msra.mxu0 %v2410
    %3614 = vmatprep.subr.mxu0 %v2414
    %3615 = vmatpush1.msra.mxu0 %v2413
    %3616 = vmatprep.subr.mxu0 %v2417
    %3617 = vmatpush1.msra.mxu0 %v2416
    %3618 = vmatprep.subr.mxu0 %v2420
    %3619 = vmatpush1.msra.mxu0 %v2419
    %3620 = vmatprep.subr.mxu0 %v2423
    %3621 = vmatpush1.msra.mxu0 %v2422
    %3622 = vmatprep.subr.mxu0 %v2426
    %3623 = vmatpush1.msra.mxu0 %v2425
    %3624 = vmatprep.subr.mxu0 0.0
    %3625 = vmatpush1.msra.mxu0 0.0
    %3626 = vmatprep.subr.mxu0 0.0
    %3627 = vmatpush1.msra.mxu0 0.0
    %3628 = vmatprep.subr.mxu0 0.0
    %3629 = vmatpush1.msra.mxu0 0.0
    %3630 = vmatprep.subr.mxu0 0.0
    %3631 = vmatpush1.msra.mxu0 0.0
    %3632 = vmatprep.subr.mxu0 0.0
    %3633 = vmatpush1.msra.mxu0 0.0
    %3634 = vmatprep.subr.mxu0 0.0
    %3635 = vmatpush1.msra.mxu0 0.0
    %3636 = vmatprep.subr.mxu0 0.0
    %3637 = vmatpush1.msra.mxu0 0.0
    %3638 = vmatprep.subr.mxu0 0.0
    %3639 = vmatpush1.msra.mxu0 0.0
    %3640 = vmatprep.subr.mxu0 0.0
    %3641 = vmatpush1.msra.mxu0 0.0
    %3642 = vmatprep.subr.mxu0 0.0
    %3643 = vmatpush1.msra.mxu0 0.0
    %3644 = vmatprep.subr.mxu0 0.0
    %3645 = vmatpush1.msra.mxu0 0.0
    %3646 = vmatprep.subr.mxu0 0.0
    %3647 = vmatpush1.msra.mxu0 0.0
    %3648 = vmatprep.subr.mxu0 0.0
    %3649 = vmatpush1.msra.mxu0 0.0
    %3650 = vmatprep.subr.mxu0 0.0
    %3651 = vmatpush1.msra.mxu0 0.0
    %3652 = vmatprep.subr.mxu0 0.0
    %3653 = vmatpush1.msra.mxu0 0.0
    %3654 = vmatprep.subr.mxu0 0.0
    %3655 = vmatpush1.msra.mxu0 0.0
    %3656 = vmatprep.subr.mxu0 0.0
    %3657 = vmatpush1.msra.mxu0 0.0
    %3658 = vmatprep.subr.mxu0 0.0
    %3659 = vmatpush1.msra.mxu0 0.0
    %3660 = vmatprep.mubr.f32.mxu0 0.0
    %3661 = vmatmul.mubr.f32.gmra.mrb[0].mxu0 %v3422
    %v3662 = vpop.f32.mrb[0].mxu0
    %v3663 = vadd.f32 %v3580, %v3662
    %v3664 = vpop.f32.mrb[0].mxu0
    %v3665 = vadd.f32 %v3582, %v3664
    %3666 = vmatprep.mubr.f32.mxu0 0.0
    %3667 = vmatmul.mubr.f32.gmra.mrb[0].mxu0 %v3425
    %v3668 = vpop.f32.mrb[0].mxu0
    %v3669 = vadd.f32 %v3586, %v3668
    %v3670 = vpop.f32.mrb[0].mxu0
    %v3671 = vadd.f32 %v3588, %v3670
    %3672 = vmatprep.mubr.f32.mxu0 0.0
    %3673 = vmatmul.mubr.f32.gmra.mrb[0].mxu0 %v3428
    %v3674 = vpop.f32.mrb[0].mxu0
    %v3675 = vadd.f32 %v3592, %v3674
    %v3676 = vpop.f32.mrb[0].mxu0
    %v3677 = vadd.f32 %v3594, %v3676
    %3678 = vdwg.mxu0
    %3679 = vmatprep.subr.mxu0 0.0
    %3680 = vmatpush1.msra.mxu0 %v2196
    %3681 = vmatprep.subr.mxu0 0.0
    %3682 = vmatpush1.msra.mxu0 %v2199
    %3683 = vmatprep.subr.mxu0 0.0
    %3684 = vmatpush1.msra.mxu0 %v2202
    %3685 = vmatprep.subr.mxu0 0.0
    %3686 = vmatpush1.msra.mxu0 %v2205
    %3687 = vmatprep.subr.mxu0 0.0
    %3688 = vmatpush1.msra.mxu0 %v2208
    %3689 = vmatprep.subr.mxu0 0.0
    %3690 = vmatpush1.msra.mxu0 %v2211
    %3691 = vmatprep.subr.mxu0 0.0
    %3692 = vmatpush1.msra.mxu0 %v2214
    %3693 = vmatprep.subr.mxu0 0.0
    %3694 = vmatpush1.msra.mxu0 %v2217
    %3695 = vmatprep.subr.mxu0 0.0
    %3696 = vmatpush1.msra.mxu0 %v2220
    %3697 = vmatprep.subr.mxu0 0.0
    %3698 = vmatpush1.msra.mxu0 %v2223
    %3699 = vmatprep.subr.mxu0 0.0
    %3700 = vmatpush1.msra.mxu0 %v2226
    %3701 = vmatprep.subr.mxu0 0.0
    %3702 = vmatpush1.msra.mxu0 %v2229
    %3703 = vmatprep.subr.mxu0 0.0
    %3704 = vmatpush1.msra.mxu0 %v2232
    %3705 = vmatprep.subr.mxu0 0.0
    %3706 = vmatpush1.msra.mxu0 %v2235
    %3707 = vmatprep.subr.mxu0 0.0
    %3708 = vmatpush1.msra.mxu0 %v2238
    %3709 = vmatprep.subr.mxu0 0.0
    %3710 = vmatpush1.msra.mxu0 %v2241
    %3711 = vmatprep.subr.mxu0 0.0
    %3712 = vmatpush1.msra.mxu0 %v2244
    %3713 = vmatprep.subr.mxu0 0.0
    %3714 = vmatpush1.msra.mxu0 %v2247
    %3715 = vmatprep.subr.mxu0 0.0
    %3716 = vmatpush1.msra.mxu0 %v2250
    %3717 = vmatprep.subr.mxu0 0.0
    %3718 = vmatpush1.msra.mxu0 %v2253
    %3719 = vmatprep.subr.mxu0 0.0
    %3720 = vmatpush1.msra.mxu0 %v2256
    %3721 = vmatprep.subr.mxu0 0.0
    %3722 = vmatpush1.msra.mxu0 %v2259
    %3723 = vmatprep.subr.mxu0 0.0
    %3724 = vmatpush1.msra.mxu0 %v2262
    %3725 = vmatprep.subr.mxu0 0.0
    %3726 = vmatpush1.msra.mxu0 %v2265
    %3727 = vmatprep.subr.mxu0 0.0
    %3728 = vmatpush1.msra.mxu0 %v2268
    %3729 = vmatprep.subr.mxu0 0.0
    %3730 = vmatpush1.msra.mxu0 %v2271
    %3731 = vmatprep.subr.mxu0 0.0
    %3732 = vmatpush1.msra.mxu0 %v2274
    %3733 = vmatprep.subr.mxu0 0.0
    %3734 = vmatpush1.msra.mxu0 %v2277
    %3735 = vmatprep.subr.mxu0 0.0
    %3736 = vmatpush1.msra.mxu0 %v2280
    %3737 = vmatprep.subr.mxu0 0.0
    %3738 = vmatpush1.msra.mxu0 %v2283
    %3739 = vmatprep.subr.mxu0 0.0
    %3740 = vmatpush1.msra.mxu0 %v2286
    %3741 = vmatprep.subr.mxu0 0.0
    %3742 = vmatpush1.msra.mxu0 %v2289
    %3743 = vmatprep.mubr.f32.mxu0 %v2017
    %3744 = vmatmul.mubr.f32.gmra.mrb[0].mxu0 %v2015
    %v3745 = vpop.f32.mrb[0].mxu0
    %v3746 = vadd.f32 %v3408, %v3745
    %v3747 = vpop.f32.mrb[0].mxu0
    %3748 = vmatprep.mubr.f32.mxu0 %v2023
    %3749 = vmatmul.mubr.f32.gmra.mrb[0].mxu0 %v2021
    %v3750 = vpop.f32.mrb[0].mxu0
    %v3751 = vadd.f32 %v3413, %v3750
    %v3752 = vpop.f32.mrb[0].mxu0
    %3753 = vmatprep.mubr.f32.mxu0 %v2029
    %3754 = vmatmul.mubr.f32.gmra.mrb[0].mxu0 %v2027
    %v3755 = vpop.f32.mrb[0].mxu0
    %v3756 = vadd.f32 %v3418, %v3755
    %v3757 = vpop.f32.mrb[0].mxu0
    %3758 = vdwg.mxu0
    %3759 = vmatprep.subr.mxu0 0.0
    %3760 = vmatpush1.msra.mxu0 %v2292
    %3761 = vmatprep.subr.mxu0 0.0
    %3762 = vmatpush1.msra.mxu0 %v2295
    %3763 = vmatprep.subr.mxu0 0.0
    %3764 = vmatpush1.msra.mxu0 %v2298
    %3765 = vmatprep.subr.mxu0 0.0
    %3766 = vmatpush1.msra.mxu0 %v2301
    %3767 = vmatprep.subr.mxu0 0.0
    %3768 = vmatpush1.msra.mxu0 %v2304
    %3769 = vmatprep.subr.mxu0 0.0
    %3770 = vmatpush1.msra.mxu0 %v2307
    %3771 = vmatprep.subr.mxu0 0.0
    %3772 = vmatpush1.msra.mxu0 %v2310
    %3773 = vmatprep.subr.mxu0 0.0
    %3774 = vmatpush1.msra.mxu0 %v2313
    %3775 = vmatprep.subr.mxu0 0.0
    %3776 = vmatpush1.msra.mxu0 %v2316
    %3777 = vmatprep.subr.mxu0 0.0
    %3778 = vmatpush1.msra.mxu0 %v2319
    %3779 = vmatprep.subr.mxu0 0.0
    %3780 = vmatpush1.msra.mxu0 %v2322
    %3781 = vmatprep.subr.mxu0 0.0
    %3782 = vmatpush1.msra.mxu0 %v2325
    %3783 = vmatprep.subr.mxu0 0.0
    %3784 = vmatpush1.msra.mxu0 %v2328
    %3785 = vmatprep.subr.mxu0 0.0
    %3786 = vmatpush1.msra.mxu0 %v2331
    %3787 = vmatprep.subr.mxu0 0.0
    %3788 = vmatpush1.msra.mxu0 %v2334
    %3789 = vmatprep.subr.mxu0 0.0
    %3790 = vmatpush1.msra.mxu0 %v2337
    %3791 = vmatprep.subr.mxu0 0.0
    %3792 = vmatpush1.msra.mxu0 %v2340
    %3793 = vmatprep.subr.mxu0 0.0
    %3794 = vmatpush1.msra.mxu0 %v2343
    %3795 = vmatprep.subr.mxu0 0.0
    %3796 = vmatpush1.msra.mxu0 %v2346
    %3797 = vmatprep.subr.mxu0 0.0
    %3798 = vmatpush1.msra.mxu0 %v2349
    %3799 = vmatprep.subr.mxu0 0.0
    %3800 = vmatpush1.msra.mxu0 %v2352
    %3801 = vmatprep.subr.mxu0 0.0
    %3802 = vmatpush1.msra.mxu0 %v2355
    %3803 = vmatprep.subr.mxu0 0.0
    %3804 = vmatpush1.msra.mxu0 %v2358
    %3805 = vmatprep.subr.mxu0 0.0
    %3806 = vmatpush1.msra.mxu0 %v2361
    %3807 = vmatprep.subr.mxu0 0.0
    %3808 = vmatpush1.msra.mxu0 %v2364
    %3809 = vmatprep.subr.mxu0 0.0
    %3810 = vmatpush1.msra.mxu0 %v2367
    %3811 = vmatprep.subr.mxu0 0.0
    %3812 = vmatpush1.msra.mxu0 %v2370
    %3813 = vmatprep.subr.mxu0 0.0
    %3814 = vmatpush1.msra.mxu0 %v2373
    %3815 = vmatprep.subr.mxu0 0.0
    %3816 = vmatpush1.msra.mxu0 %v2376
    %3817 = vmatprep.subr.mxu0 0.0
    %3818 = vmatpush1.msra.mxu0 %v2379
    %3819 = vmatprep.subr.mxu0 0.0
    %3820 = vmatpush1.msra.mxu0 %v2382
    %3821 = vmatprep.subr.mxu0 0.0
    %3822 = vmatpush1.msra.mxu0 %v2385
    %3823 = vmatprep.mubr.f32.mxu0 %v2100
    %3824 = vmatmul.mubr.f32.gmra.mrb[0].mxu0 %v2098
    %v3825 = vpop.f32.mrb[0].mxu0
    %v3826 = vadd.f32 %v3746, %v3825
    %v3827 = vpop.f32.mrb[0].mxu0
    %3828 = vmatprep.mubr.f32.mxu0 %v2106
    %3829 = vmatmul.mubr.f32.gmra.mrb[0].mxu0 %v2104
    %v3830 = vpop.f32.mrb[0].mxu0
    %v3831 = vadd.f32 %v3751, %v3830
    %v3832 = vpop.f32.mrb[0].mxu0
    %3833 = vmatprep.mubr.f32.mxu0 %v2112
    %3834 = vmatmul.mubr.f32.gmra.mrb[0].mxu0 %v2110
    %v3835 = vpop.f32.mrb[0].mxu0
    %v3836 = vadd.f32 %v3756, %v3835
    %v3837 = vpop.f32.mrb[0].mxu0
    %3838 = vdwg.mxu0
    %3839 = vmatprep.subr.mxu0 0.0
    %3840 = vmatpush1.msra.mxu0 %v2388
    %3841 = vmatprep.subr.mxu0 0.0
    %3842 = vmatpush1.msra.mxu0 %v2391
    %3843 = vmatprep.subr.mxu0 0.0
    %3844 = vmatpush1.msra.mxu0 %v2394
    %3845 = vmatprep.subr.mxu0 0.0
    %3846 = vmatpush1.msra.mxu0 %v2397
    %3847 = vmatprep.subr.mxu0 0.0
    %3848 = vmatpush1.msra.mxu0 %v2400
    %3849 = vmatprep.subr.mxu0 0.0
    %3850 = vmatpush1.msra.mxu0 %v2403
    %3851 = vmatprep.subr.mxu0 0.0
    %3852 = vmatpush1.msra.mxu0 %v2406
    %3853 = vmatprep.subr.mxu0 0.0
    %3854 = vmatpush1.msra.mxu0 %v2409
    %3855 = vmatprep.subr.mxu0 0.0
    %3856 = vmatpush1.msra.mxu0 %v2412
    %3857 = vmatprep.subr.mxu0 0.0
    %3858 = vmatpush1.msra.mxu0 %v2415
    %3859 = vmatprep.subr.mxu0 0.0
    %3860 = vmatpush1.msra.mxu0 %v2418
    %3861 = vmatprep.subr.mxu0 0.0
    %3862 = vmatpush1.msra.mxu0 %v2421
    %3863 = vmatprep.subr.mxu0 0.0
    %3864 = vmatpush1.msra.mxu0 %v2424
    %3865 = vmatprep.subr.mxu0 0.0
    %3866 = vmatpush1.msra.mxu0 %v2427
    %3867 = vmatprep.subr.mxu0 0.0
    %3868 = vmatpush1.msra.mxu0 0.0
    %3869 = vmatprep.subr.mxu0 0.0
    %3870 = vmatpush1.msra.mxu0 0.0
    %3871 = vmatprep.subr.mxu0 0.0
    %3872 = vmatpush1.msra.mxu0 0.0
    %3873 = vmatprep.subr.mxu0 0.0
    %3874 = vmatpush1.msra.mxu0 0.0
    %3875 = vmatprep.subr.mxu0 0.0
    %3876 = vmatpush1.msra.mxu0 0.0
    %3877 = vmatprep.subr.mxu0 0.0
    %3878 = vmatpush1.msra.mxu0 0.0
    %3879 = vmatprep.subr.mxu0 0.0
    %3880 = vmatpush1.msra.mxu0 0.0
    %3881 = vmatprep.subr.mxu0 0.0
    %3882 = vmatpush1.msra.mxu0 0.0
    %3883 = vmatprep.subr.mxu0 0.0
    %3884 = vmatpush1.msra.mxu0 0.0
    %3885 = vmatprep.subr.mxu0 0.0
    %3886 = vmatpush1.msra.mxu0 0.0
    %3887 = vmatprep.subr.mxu0 0.0
    %3888 = vmatpush1.msra.mxu0 0.0
    %3889 = vmatprep.subr.mxu0 0.0
    %3890 = vmatpush1.msra.mxu0 0.0
    %3891 = vmatprep.subr.mxu0 0.0
    %3892 = vmatpush1.msra.mxu0 0.0
    %3893 = vmatprep.subr.mxu0 0.0
    %3894 = vmatpush1.msra.mxu0 0.0
    %3895 = vmatprep.subr.mxu0 0.0
    %3896 = vmatpush1.msra.mxu0 0.0
    %3897 = vmatprep.subr.mxu0 0.0
    %3898 = vmatpush1.msra.mxu0 0.0
    %3899 = vmatprep.subr.mxu0 0.0
    %3900 = vmatpush1.msra.mxu0 0.0
    %3901 = vmatprep.subr.mxu0 0.0
    %3902 = vmatpush1.msra.mxu0 0.0
    %3903 = vmatprep.mubr.f32.mxu0 0.0
    %3904 = vmatmul.mubr.f32.gmra.mrb[0].mxu0 %v3422
    %v3905 = vpop.f32.mrb[0].mxu0
    %v3906 = vadd.f32 %v3826, %v3905
    %v3907 = vpop.f32.mrb[0].mxu0
    %3908 = vmatprep.mubr.f32.mxu0 0.0
    %3909 = vmatmul.mubr.f32.gmra.mrb[0].mxu0 %v3425
    %v3910 = vpop.f32.mrb[0].mxu0
    %v3911 = vadd.f32 %v3831, %v3910
    %v3912 = vpop.f32.mrb[0].mxu0
    %3913 = vmatprep.mubr.f32.mxu0 0.0
    %3914 = vmatmul.mubr.f32.gmra.mrb[0].mxu0 %v3428
    %v3915 = vpop.f32.mrb[0].mxu0
    %v3916 = vadd.f32 %v3836, %v3915
    %v3917 = vpop.f32.mrb[0].mxu0
    %3918 = vdwg.mxu0
    %s3919 = scalar_lea.vmem %s4, 48
    %v3920 = vld [vmem:[%s3919] sm:$0xff]
    %v3921 = vld [vmem:[%s3919 + $0x8] sm:$0xff]
    %v3922 = vld [vmem:[%s3919 + $0x10] sm:$0x7]
    %v3924 = vsel %vm1923, %v3920, 0
    %v3927 = vsel %vm1923, %v3921, 0
    %v3930 = vsel %vm1923, %v3922, 0
    %3932 = vmatprep.subr.mxu0 %v1896
    %3933 = vmatpush1.msra.mxu0 %v1895
    %3934 = vmatprep.subr.mxu0 %v1901
    %3935 = vmatpush1.msra.mxu0 %v1900
    %3936 = vmatprep.subr.mxu0 %v1906
    %3937 = vmatpush1.msra.mxu0 %v1905
    %3938 = vmatprep.subr.mxu0 %v1911
    %3939 = vmatpush1.msra.mxu0 %v1910
    %3940 = vmatprep.subr.mxu0 %v1937
    %3941 = vmatpush1.msra.mxu0 %v1934
    %3942 = vmatprep.subr.mxu0 0.0
    %3943 = vmatpush1.msra.mxu0 0.0
    %3944 = vmatprep.subr.mxu0 0.0
    %3945 = vmatpush1.msra.mxu0 0.0
    %3946 = vmatprep.subr.mxu0 0.0
    %3947 = vmatpush1.msra.mxu0 0.0
    %3948 = vmatprep.subr.mxu0 0.0
    %3949 = vmatpush1.msra.mxu0 0.0
    %3950 = vmatprep.subr.mxu0 0.0
    %3951 = vmatpush1.msra.mxu0 0.0
    %3952 = vmatprep.subr.mxu0 0.0
    %3953 = vmatpush1.msra.mxu0 0.0
    %3954 = vmatprep.subr.mxu0 0.0
    %3955 = vmatpush1.msra.mxu0 0.0
    %3956 = vmatprep.subr.mxu0 0.0
    %3957 = vmatpush1.msra.mxu0 0.0
    %3958 = vmatprep.subr.mxu0 0.0
    %3959 = vmatpush1.msra.mxu0 0.0
    %3960 = vmatprep.subr.mxu0 0.0
    %3961 = vmatpush1.msra.mxu0 0.0
    %3962 = vmatprep.subr.mxu0 0.0
    %3963 = vmatpush1.msra.mxu0 0.0
    %3964 = vmatprep.subr.mxu0 0.0
    %3965 = vmatpush1.msra.mxu0 0.0
    %3966 = vmatprep.subr.mxu0 0.0
    %3967 = vmatpush1.msra.mxu0 0.0
    %3968 = vmatprep.subr.mxu0 0.0
    %3969 = vmatpush1.msra.mxu0 0.0
    %3970 = vmatprep.subr.mxu0 0.0
    %3971 = vmatpush1.msra.mxu0 0.0
    %3972 = vmatprep.subr.mxu0 0.0
    %3973 = vmatpush1.msra.mxu0 0.0
    %3974 = vmatprep.subr.mxu0 0.0
    %3975 = vmatpush1.msra.mxu0 0.0
    %3976 = vmatprep.subr.mxu0 0.0
    %3977 = vmatpush1.msra.mxu0 0.0
    %3978 = vmatprep.subr.mxu0 0.0
    %3979 = vmatpush1.msra.mxu0 0.0
    %3980 = vmatprep.subr.mxu0 0.0
    %3981 = vmatpush1.msra.mxu0 0.0
    %3982 = vmatprep.subr.mxu0 0.0
    %3983 = vmatpush1.msra.mxu0 0.0
    %3984 = vmatprep.subr.mxu0 0.0
    %3985 = vmatpush1.msra.mxu0 0.0
    %3986 = vmatprep.subr.mxu0 0.0
    %3987 = vmatpush1.msra.mxu0 0.0
    %3988 = vmatprep.subr.mxu0 0.0
    %3989 = vmatpush1.msra.mxu0 0.0
    %3990 = vmatprep.subr.mxu0 0.0
    %3991 = vmatpush1.msra.mxu0 0.0
    %3992 = vmatprep.subr.mxu0 0.0
    %3993 = vmatpush1.msra.mxu0 0.0
    %3994 = vmatprep.subr.mxu0 0.0
    %3995 = vmatpush1.msra.mxu0 0.0
    %3996 = vmatprep.mubr.f32.mxu0 0.0
    %3997 = vmatmul.mubr.f32.gmra.mrb[0].mxu0 %v3924
    %v3998 = vpop.f32.mrb[0].mxu0
    %v3999 = vadd.f32 0.0, %v3998
    %v4000 = vpop.f32.mrb[0].mxu0
    %v4001 = vadd.f32 0.0, %v4000
    %4002 = vmatprep.mubr.f32.mxu0 0.0
    %4003 = vmatmul.mubr.f32.gmra.mrb[0].mxu0 %v3927
    %v4004 = vpop.f32.mrb[0].mxu0
    %v4005 = vadd.f32 0.0, %v4004
    %v4006 = vpop.f32.mrb[0].mxu0
    %v4007 = vadd.f32 0.0, %v4006
    %4008 = vmatprep.mubr.f32.mxu0 0.0
    %4009 = vmatmul.mubr.f32.gmra.mrb[0].mxu0 %v3930
    %v4010 = vpop.f32.mrb[0].mxu0
    %v4011 = vadd.f32 0.0, %v4010
    %v4012 = vpop.f32.mrb[0].mxu0
    %v4013 = vadd.f32 0.0, %v4012
    %4014 = vdwg.mxu0
    %4015 = vmatprep.subr.mxu0 %v1898
    %4016 = vmatpush1.msra.mxu0 %v1897
    %4017 = vmatprep.subr.mxu0 %v1903
    %4018 = vmatpush1.msra.mxu0 %v1902
    %4019 = vmatprep.subr.mxu0 %v1908
    %4020 = vmatpush1.msra.mxu0 %v1907
    %4021 = vmatprep.subr.mxu0 %v1913
    %4022 = vmatpush1.msra.mxu0 %v1912
    %4023 = vmatprep.subr.mxu0 %v1943
    %4024 = vmatpush1.msra.mxu0 %v1940
    %4025 = vmatprep.subr.mxu0 0.0
    %4026 = vmatpush1.msra.mxu0 0.0
    %4027 = vmatprep.subr.mxu0 0.0
    %4028 = vmatpush1.msra.mxu0 0.0
    %4029 = vmatprep.subr.mxu0 0.0
    %4030 = vmatpush1.msra.mxu0 0.0
    %4031 = vmatprep.subr.mxu0 0.0
    %4032 = vmatpush1.msra.mxu0 0.0
    %4033 = vmatprep.subr.mxu0 0.0
    %4034 = vmatpush1.msra.mxu0 0.0
    %4035 = vmatprep.subr.mxu0 0.0
    %4036 = vmatpush1.msra.mxu0 0.0
    %4037 = vmatprep.subr.mxu0 0.0
    %4038 = vmatpush1.msra.mxu0 0.0
    %4039 = vmatprep.subr.mxu0 0.0
    %4040 = vmatpush1.msra.mxu0 0.0
    %4041 = vmatprep.subr.mxu0 0.0
    %4042 = vmatpush1.msra.mxu0 0.0
    %4043 = vmatprep.subr.mxu0 0.0
    %4044 = vmatpush1.msra.mxu0 0.0
    %4045 = vmatprep.subr.mxu0 0.0
    %4046 = vmatpush1.msra.mxu0 0.0
    %4047 = vmatprep.subr.mxu0 0.0
    %4048 = vmatpush1.msra.mxu0 0.0
    %4049 = vmatprep.subr.mxu0 0.0
    %4050 = vmatpush1.msra.mxu0 0.0
    %4051 = vmatprep.subr.mxu0 0.0
    %4052 = vmatpush1.msra.mxu0 0.0
    %4053 = vmatprep.subr.mxu0 0.0
    %4054 = vmatpush1.msra.mxu0 0.0
    %4055 = vmatprep.subr.mxu0 0.0
    %4056 = vmatpush1.msra.mxu0 0.0
    %4057 = vmatprep.subr.mxu0 0.0
    %4058 = vmatpush1.msra.mxu0 0.0
    %4059 = vmatprep.subr.mxu0 0.0
    %4060 = vmatpush1.msra.mxu0 0.0
    %4061 = vmatprep.subr.mxu0 0.0
    %4062 = vmatpush1.msra.mxu0 0.0
    %4063 = vmatprep.subr.mxu0 0.0
    %4064 = vmatpush1.msra.mxu0 0.0
    %4065 = vmatprep.subr.mxu0 0.0
    %4066 = vmatpush1.msra.mxu0 0.0
    %4067 = vmatprep.subr.mxu0 0.0
    %4068 = vmatpush1.msra.mxu0 0.0
    %4069 = vmatprep.subr.mxu0 0.0
    %4070 = vmatpush1.msra.mxu0 0.0
    %4071 = vmatprep.subr.mxu0 0.0
    %4072 = vmatpush1.msra.mxu0 0.0
    %4073 = vmatprep.subr.mxu0 0.0
    %4074 = vmatpush1.msra.mxu0 0.0
    %4075 = vmatprep.subr.mxu0 0.0
    %4076 = vmatpush1.msra.mxu0 0.0
    %4077 = vmatprep.subr.mxu0 0.0
    %4078 = vmatpush1.msra.mxu0 0.0
    %4079 = vmatprep.mubr.f32.mxu0 0.0
    %4080 = vmatmul.mubr.f32.gmra.mrb[0].mxu0 %v3924
    %v4081 = vpop.f32.mrb[0].mxu0
    %v4082 = vadd.f32 0.0, %v4081
    %v4083 = vpop.f32.mrb[0].mxu0
    %v4084 = vadd.f32 0.0, %v4083
    %4085 = vmatprep.mubr.f32.mxu0 0.0
    %4086 = vmatmul.mubr.f32.gmra.mrb[0].mxu0 %v3927
    %v4087 = vpop.f32.mrb[0].mxu0
    %v4088 = vadd.f32 0.0, %v4087
    %v4089 = vpop.f32.mrb[0].mxu0
    %v4090 = vadd.f32 0.0, %v4089
    %4091 = vmatprep.mubr.f32.mxu0 0.0
    %4092 = vmatmul.mubr.f32.gmra.mrb[0].mxu0 %v3930
    %v4093 = vpop.f32.mrb[0].mxu0
    %v4094 = vadd.f32 0.0, %v4093
    %v4095 = vpop.f32.mrb[0].mxu0
    %v4096 = vadd.f32 0.0, %v4095
    %4097 = vdwg.mxu0
    %4098 = vmatprep.subr.mxu0 0.0
    %4099 = vmatpush1.msra.mxu0 %v1899
    %4100 = vmatprep.subr.mxu0 0.0
    %4101 = vmatpush1.msra.mxu0 %v1904
    %4102 = vmatprep.subr.mxu0 0.0
    %4103 = vmatpush1.msra.mxu0 %v1909
    %4104 = vmatprep.subr.mxu0 0.0
    %4105 = vmatpush1.msra.mxu0 %v1914
    %4106 = vmatprep.subr.mxu0 0.0
    %4107 = vmatpush1.msra.mxu0 %v1946
    %4108 = vmatprep.subr.mxu0 0.0
    %4109 = vmatpush1.msra.mxu0 0.0
    %4110 = vmatprep.subr.mxu0 0.0
    %4111 = vmatpush1.msra.mxu0 0.0
    %4112 = vmatprep.subr.mxu0 0.0
    %4113 = vmatpush1.msra.mxu0 0.0
    %4114 = vmatprep.subr.mxu0 0.0
    %4115 = vmatpush1.msra.mxu0 0.0
    %4116 = vmatprep.subr.mxu0 0.0
    %4117 = vmatpush1.msra.mxu0 0.0
    %4118 = vmatprep.subr.mxu0 0.0
    %4119 = vmatpush1.msra.mxu0 0.0
    %4120 = vmatprep.subr.mxu0 0.0
    %4121 = vmatpush1.msra.mxu0 0.0
    %4122 = vmatprep.subr.mxu0 0.0
    %4123 = vmatpush1.msra.mxu0 0.0
    %4124 = vmatprep.subr.mxu0 0.0
    %4125 = vmatpush1.msra.mxu0 0.0
    %4126 = vmatprep.subr.mxu0 0.0
    %4127 = vmatpush1.msra.mxu0 0.0
    %4128 = vmatprep.subr.mxu0 0.0
    %4129 = vmatpush1.msra.mxu0 0.0
    %4130 = vmatprep.subr.mxu0 0.0
    %4131 = vmatpush1.msra.mxu0 0.0
    %4132 = vmatprep.subr.mxu0 0.0
    %4133 = vmatpush1.msra.mxu0 0.0
    %4134 = vmatprep.subr.mxu0 0.0
    %4135 = vmatpush1.msra.mxu0 0.0
    %4136 = vmatprep.subr.mxu0 0.0
    %4137 = vmatpush1.msra.mxu0 0.0
    %4138 = vmatprep.subr.mxu0 0.0
    %4139 = vmatpush1.msra.mxu0 0.0
    %4140 = vmatprep.subr.mxu0 0.0
    %4141 = vmatpush1.msra.mxu0 0.0
    %4142 = vmatprep.subr.mxu0 0.0
    %4143 = vmatpush1.msra.mxu0 0.0
    %4144 = vmatprep.subr.mxu0 0.0
    %4145 = vmatpush1.msra.mxu0 0.0
    %4146 = vmatprep.subr.mxu0 0.0
    %4147 = vmatpush1.msra.mxu0 0.0
    %4148 = vmatprep.subr.mxu0 0.0
    %4149 = vmatpush1.msra.mxu0 0.0
    %4150 = vmatprep.subr.mxu0 0.0
    %4151 = vmatpush1.msra.mxu0 0.0
    %4152 = vmatprep.subr.mxu0 0.0
    %4153 = vmatpush1.msra.mxu0 0.0
    %4154 = vmatprep.subr.mxu0 0.0
    %4155 = vmatpush1.msra.mxu0 0.0
    %4156 = vmatprep.subr.mxu0 0.0
    %4157 = vmatpush1.msra.mxu0 0.0
    %4158 = vmatprep.subr.mxu0 0.0
    %4159 = vmatpush1.msra.mxu0 0.0
    %4160 = vmatprep.subr.mxu0 0.0
    %4161 = vmatpush1.msra.mxu0 0.0
    %4162 = vmatprep.mubr.f32.mxu0 0.0
    %4163 = vmatmul.mubr.f32.gmra.mrb[0].mxu0 %v3924
    %v4164 = vpop.f32.mrb[0].mxu0
    %v4165 = vadd.f32 0.0, %v4164
    %v4166 = vpop.f32.mrb[0].mxu0
    %4167 = vmatprep.mubr.f32.mxu0 0.0
    %4168 = vmatmul.mubr.f32.gmra.mrb[0].mxu0 %v3927
    %v4169 = vpop.f32.mrb[0].mxu0
    %v4170 = vadd.f32 0.0, %v4169
    %v4171 = vpop.f32.mrb[0].mxu0
    %4172 = vmatprep.mubr.f32.mxu0 0.0
    %4173 = vmatmul.mubr.f32.gmra.mrb[0].mxu0 %v3930
    %v4174 = vpop.f32.mrb[0].mxu0
    %v4175 = vadd.f32 0.0, %v4174
    %v4176 = vpop.f32.mrb[0].mxu0
    %4177 = vdwg.mxu0
    %s4178 = scalar_lea.vmem %s5, 3744
    %v4179 = vld [vmem:[%s4178] sm:$0xff]
    %v4180 = vld [vmem:[%s4178 + $0x8] sm:$0xff]
    %v4181 = vld [vmem:[%s4178 + $0x10] sm:$0xff]
    %v4182 = vld [vmem:[%s4178 + $0x18] sm:$0xff]
    %v4183 = vld [vmem:[%s4178 + $0x20] sm:$0xff]
    %v4184 = vld [vmem:[%s4178 + $0x28] sm:$0xff]
    %v4185 = vld [vmem:[%s4178 + $0x30] sm:$0xff]
    %v4186 = vld [vmem:[%s4178 + $0x38] sm:$0xff]
    %v4187 = vld [vmem:[%s4178 + $0x40] sm:$0xff]
    %v4188 = vld [vmem:[%s4178 + $0x48] sm:$0xff]
    %v4189 = vld [vmem:[%s4178 + $0x50] sm:$0xff]
    %v4190 = vld [vmem:[%s4178 + $0x58] sm:$0xff]
    %v4191 = vld [vmem:[%s4178 + $0x60] sm:$0xff]
    %v4192 = vld [vmem:[%s4178 + $0x68] sm:$0xff]
    %v4193 = vld [vmem:[%s4178 + $0x70] sm:$0xff]
    %v4194 = vld [vmem:[%s4178 + $0x78] sm:$0xff]
    %v4195 = vld [vmem:[%s4178 + $0x80] sm:$0xff]
    %v4196 = vld [vmem:[%s4178 + $0x88] sm:$0xff]
    %v4197 = vld [vmem:[%s4178 + $0x90] sm:$0xff]
    %v4198 = vld [vmem:[%s4178 + $0x98] sm:$0xff]
    %v4199 = vld [vmem:[%s4178 + $0xa0] sm:$0xff]
    %v4200 = vld [vmem:[%s4178 + $0xa8] sm:$0xff]
    %v4201 = vld [vmem:[%s4178 + $0xb0] sm:$0xff]
    %v4202 = vld [vmem:[%s4178 + $0xb8] sm:$0xff]
    %v4203 = vld [vmem:[%s4178 + $0xc0] sm:$0xff]
    %v4204 = vld [vmem:[%s4178 + $0xc8] sm:$0xff]
    %v4205 = vld [vmem:[%s4178 + $0xd0] sm:$0xff]
    %v4206 = vld [vmem:[%s4178 + $0xd8] sm:$0xff]
    %v4207 = vld [vmem:[%s4178 + $0xe0] sm:$0xff]
    %v4208 = vld [vmem:[%s4178 + $0xe8] sm:$0xff]
    %v4209 = vld [vmem:[%s4178 + $0xf0] sm:$0xff]
    %v4210 = vld [vmem:[%s4178 + $0xf8] sm:$0xff]
    %v4211 = vld [vmem:[%s4178 + $0x100] sm:$0xff]
    %v4212 = vld [vmem:[%s4178 + $0x108] sm:$0xff]
    %v4213 = vld [vmem:[%s4178 + $0x110] sm:$0xff]
    %v4214 = vld [vmem:[%s4178 + $0x118] sm:$0xff]
    %v4215 = vld [vmem:[%s4178 + $0x120] sm:$0xff]
    %v4216 = vld [vmem:[%s4178 + $0x128] sm:$0xff]
    %v4217 = vld [vmem:[%s4178 + $0x130] sm:$0xff]
    %v4218 = vld [vmem:[%s4178 + $0x138] sm:$0xff]
    %v4219 = vld [vmem:[%s4178 + $0x140] sm:$0xff]
    %v4220 = vld [vmem:[%s4178 + $0x148] sm:$0xff]
    %v4221 = vld [vmem:[%s4178 + $0x150] sm:$0xff]
    %v4222 = vld [vmem:[%s4178 + $0x158] sm:$0xff]
    %v4223 = vld [vmem:[%s4178 + $0x160] sm:$0xff]
    %v4224 = vld [vmem:[%s4178 + $0x168] sm:$0xff]
    %v4225 = vld [vmem:[%s4178 + $0x170] sm:$0xff]
    %v4226 = vld [vmem:[%s4178 + $0x178] sm:$0xff]
    %v4227 = vld [vmem:[%s4178 + $0x180] sm:$0xff]
    %v4228 = vld [vmem:[%s4178 + $0x188] sm:$0xff]
    %v4229 = vld [vmem:[%s4178 + $0x190] sm:$0xff]
    %v4230 = vld [vmem:[%s4178 + $0x198] sm:$0xff]
    %v4231 = vld [vmem:[%s4178 + $0x1a0] sm:$0xff]
    %v4232 = vld [vmem:[%s4178 + $0x1a8] sm:$0xff]
    %v4233 = vld [vmem:[%s4178 + $0x1b0] sm:$0xff]
    %v4234 = vld [vmem:[%s4178 + $0x1b8] sm:$0xff]
    %v4235 = vld [vmem:[%s4178 + $0x1c0] sm:$0xff]
    %v4236 = vld [vmem:[%s4178 + $0x1c8] sm:$0xff]
    %v4237 = vld [vmem:[%s4178 + $0x1d0] sm:$0xff]
    %v4238 = vld [vmem:[%s4178 + $0x1d8] sm:$0xff]
    %v4239 = vld [vmem:[%s4178 + $0x1e0] sm:$0xff]
    %v4240 = vld [vmem:[%s4178 + $0x1e8] sm:$0xff]
    %v4241 = vld [vmem:[%s4178 + $0x1f0] sm:$0xff]
    %v4242 = vld [vmem:[%s4178 + $0x1f8] sm:$0xff]
    %v4243 = vld [vmem:[%s4178 + $0x200] sm:$0xff]
    %v4244 = vld [vmem:[%s4178 + $0x208] sm:$0xff]
    %v4245 = vld [vmem:[%s4178 + $0x210] sm:$0xff]
    %v4246 = vld [vmem:[%s4178 + $0x218] sm:$0xff]
    %v4247 = vld [vmem:[%s4178 + $0x220] sm:$0xff]
    %v4248 = vld [vmem:[%s4178 + $0x228] sm:$0xff]
    %v4249 = vld [vmem:[%s4178 + $0x230] sm:$0xff]
    %v4250 = vld [vmem:[%s4178 + $0x238] sm:$0xff]
    %v4251 = vld [vmem:[%s4178 + $0x240] sm:$0xff]
    %v4252 = vld [vmem:[%s4178 + $0x248] sm:$0xff]
    %v4253 = vld [vmem:[%s4178 + $0x250] sm:$0xff]
    %v4254 = vld [vmem:[%s4178 + $0x258] sm:$0xff]
    %v4255 = vld [vmem:[%s4178 + $0x260] sm:$0xff]
    %v4256 = vld [vmem:[%s4178 + $0x268] sm:$0xff]
    %v4257 = vld [vmem:[%s4178 + $0x270] sm:$0xff]
    %v4258 = vld [vmem:[%s4178 + $0x278] sm:$0xff]
    %v4259 = vld [vmem:[%s4178 + $0x280] sm:$0xff]
    %v4260 = vld [vmem:[%s4178 + $0x288] sm:$0xff]
    %v4261 = vld [vmem:[%s4178 + $0x290] sm:$0xff]
    %v4262 = vld [vmem:[%s4178 + $0x298] sm:$0xff]
    %v4263 = vld [vmem:[%s4178 + $0x2a0] sm:$0xff]
    %v4264 = vld [vmem:[%s4178 + $0x2a8] sm:$0xff]
    %v4265 = vld [vmem:[%s4178 + $0x2b0] sm:$0xff]
    %v4266 = vld [vmem:[%s4178 + $0x2b8] sm:$0xff]
    %v4267 = vld [vmem:[%s4178 + $0x2c0] sm:$0xff]
    %v4268 = vld [vmem:[%s4178 + $0x2c8] sm:$0xff]
    %v4269 = vld [vmem:[%s4178 + $0x2d0] sm:$0xff]
    %v4270 = vld [vmem:[%s4178 + $0x2d8] sm:$0xff]
    %v4271 = vld [vmem:[%s4178 + $0x2e0] sm:$0xff]
    %v4272 = vld [vmem:[%s4178 + $0x2e8] sm:$0xff]
    %v4273 = vld [vmem:[%s4178 + $0x2f0] sm:$0xff]
    %v4274 = vld [vmem:[%s4178 + $0x2f8] sm:$0xff]
    %v4275 = vld [vmem:[%s4178 + $0x300] sm:$0xff]
    %v4276 = vld [vmem:[%s4178 + $0x308] sm:$0xff]
    %v4277 = vld [vmem:[%s4178 + $0x310] sm:$0xff]
    %v4278 = vld [vmem:[%s4178 + $0x318] sm:$0xff]
    %v4279 = vld [vmem:[%s4178 + $0x320] sm:$0xff]
    %v4280 = vld [vmem:[%s4178 + $0x328] sm:$0xff]
    %v4281 = vld [vmem:[%s4178 + $0x330] sm:$0xff]
    %v4282 = vld [vmem:[%s4178 + $0x338] sm:$0xff]
    %v4283 = vld [vmem:[%s4178 + $0x340] sm:$0xff]
    %v4284 = vld [vmem:[%s4178 + $0x348] sm:$0xff]
    %v4285 = vld [vmem:[%s4178 + $0x350] sm:$0xff]
    %v4286 = vld [vmem:[%s4178 + $0x358] sm:$0xff]
    %v4287 = vld [vmem:[%s4178 + $0x360] sm:$0xff]
    %v4288 = vld [vmem:[%s4178 + $0x368] sm:$0xff]
    %v4289 = vld [vmem:[%s4178 + $0x370] sm:$0xff]
    %v4290 = vld [vmem:[%s4178 + $0x378] sm:$0xff]
    %v4291 = vld [vmem:[%s4178 + $0x380] sm:$0xff]
    %v4292 = vld [vmem:[%s4178 + $0x388] sm:$0xff]
    %v4293 = vld [vmem:[%s4178 + $0x390] sm:$0xff]
    %v4294 = vld [vmem:[%s4178 + $0x398] sm:$0xff]
    %v4295 = vld [vmem:[%s4178 + $0x3a0] sm:$0xff]
    %v4296 = vld [vmem:[%s4178 + $0x3a8] sm:$0xff]
    %v4297 = vld [vmem:[%s4178 + $0x3b0] sm:$0xff]
    %v4298 = vld [vmem:[%s4178 + $0x3b8] sm:$0xff]
    %v4299 = vld [vmem:[%s4178 + $0x3c0] sm:$0xff]
    %v4300 = vld [vmem:[%s4178 + $0x3c8] sm:$0xff]
    %v4301 = vld [vmem:[%s4178 + $0x3d0] sm:$0xff]
    %v4302 = vld [vmem:[%s4178 + $0x3d8] sm:$0xff]
    %v4303 = vld [vmem:[%s4178 + $0x3e0] sm:$0xff]
    %v4304 = vld [vmem:[%s4178 + $0x3e8] sm:$0xff]
    %v4305 = vld [vmem:[%s4178 + $0x3f0] sm:$0xff]
    %v4306 = vld [vmem:[%s4178 + $0x3f8] sm:$0xff]
    %v4307 = vld [vmem:[%s4178 + $0x400] sm:$0xff]
    %v4308 = vld [vmem:[%s4178 + $0x408] sm:$0xff]
    %v4309 = vld [vmem:[%s4178 + $0x410] sm:$0xff]
    %v4310 = vld [vmem:[%s4178 + $0x418] sm:$0xff]
    %v4311 = vld [vmem:[%s4178 + $0x420] sm:$0xff]
    %v4312 = vld [vmem:[%s4178 + $0x428] sm:$0xff]
    %v4313 = vld [vmem:[%s4178 + $0x430] sm:$0xff]
    %v4314 = vld [vmem:[%s4178 + $0x438] sm:$0xff]
    %v4315 = vld [vmem:[%s4178 + $0x440] sm:$0xff]
    %v4316 = vld [vmem:[%s4178 + $0x448] sm:$0xff]
    %v4317 = vld [vmem:[%s4178 + $0x450] sm:$0xff]
    %v4318 = vld [vmem:[%s4178 + $0x458] sm:$0xff]
    %v4319 = vld [vmem:[%s4178 + $0x460] sm:$0xff]
    %v4320 = vld [vmem:[%s4178 + $0x468] sm:$0xff]
    %v4321 = vld [vmem:[%s4178 + $0x470] sm:$0xff]
    %v4322 = vld [vmem:[%s4178 + $0x478] sm:$0xff]
    %v4323 = vld [vmem:[%s4178 + $0x480] sm:$0xff]
    %v4324 = vld [vmem:[%s4178 + $0x488] sm:$0xff]
    %v4325 = vld [vmem:[%s4178 + $0x490] sm:$0xff]
    %v4326 = vld [vmem:[%s4178 + $0x498] sm:$0xff]
    %v4327 = vld [vmem:[%s4178 + $0x4a0] sm:$0xff]
    %v4328 = vld [vmem:[%s4178 + $0x4a8] sm:$0xff]
    %v4329 = vld [vmem:[%s4178 + $0x4b0] sm:$0xff]
    %v4330 = vld [vmem:[%s4178 + $0x4b8] sm:$0xff]
    %v4331 = vld [vmem:[%s4178 + $0x4c0] sm:$0xff]
    %v4332 = vld [vmem:[%s4178 + $0x4c8] sm:$0xff]
    %v4333 = vld [vmem:[%s4178 + $0x4d0] sm:$0xff]
    %v4334 = vld [vmem:[%s4178 + $0x4d8] sm:$0xff]
    %v4335 = vld [vmem:[%s4178 + $0x4e0] sm:$0xff]
    %v4336 = vld [vmem:[%s4178 + $0x4e8] sm:$0xff]
    %v4337 = vld [vmem:[%s4178 + $0x4f0] sm:$0xff]
    %v4338 = vld [vmem:[%s4178 + $0x4f8] sm:$0xff]
    %v4339 = vld [vmem:[%s4178 + $0x500] sm:$0xff]
    %v4340 = vld [vmem:[%s4178 + $0x508] sm:$0xff]
    %v4341 = vld [vmem:[%s4178 + $0x510] sm:$0xff]
    %v4342 = vld [vmem:[%s4178 + $0x518] sm:$0xff]
    %v4343 = vld [vmem:[%s4178 + $0x520] sm:$0xff]
    %v4344 = vld [vmem:[%s4178 + $0x528] sm:$0xff]
    %v4345 = vld [vmem:[%s4178 + $0x530] sm:$0xff]
    %v4346 = vld [vmem:[%s4178 + $0x538] sm:$0xff]
    %v4347 = vld [vmem:[%s4178 + $0x540] sm:$0xff]
    %v4348 = vld [vmem:[%s4178 + $0x548] sm:$0xff]
    %v4349 = vld [vmem:[%s4178 + $0x550] sm:$0xff]
    %v4350 = vld [vmem:[%s4178 + $0x558] sm:$0xff]
    %v4351 = vld [vmem:[%s4178 + $0x560] sm:$0xff]
    %v4352 = vld [vmem:[%s4178 + $0x568] sm:$0xff]
    %v4353 = vld [vmem:[%s4178 + $0x570] sm:$0xff]
    %v4354 = vld [vmem:[%s4178 + $0x578] sm:$0xff]
    %v4355 = vld [vmem:[%s4178 + $0x580] sm:$0xff]
    %v4356 = vld [vmem:[%s4178 + $0x588] sm:$0xff]
    %v4357 = vld [vmem:[%s4178 + $0x590] sm:$0xff]
    %v4358 = vld [vmem:[%s4178 + $0x598] sm:$0xff]
    %v4359 = vld [vmem:[%s4178 + $0x5a0] sm:$0xff]
    %v4360 = vld [vmem:[%s4178 + $0x5a8] sm:$0xff]
    %v4361 = vld [vmem:[%s4178 + $0x5b0] sm:$0xff]
    %v4362 = vld [vmem:[%s4178 + $0x5b8] sm:$0xff]
    %v4363 = vld [vmem:[%s4178 + $0x5c0] sm:$0xff]
    %v4364 = vld [vmem:[%s4178 + $0x5c8] sm:$0xff]
    %v4365 = vld [vmem:[%s4178 + $0x5d0] sm:$0xff]
    %v4366 = vld [vmem:[%s4178 + $0x5d8] sm:$0xff]
    %v4367 = vld [vmem:[%s4178 + $0x5e0] sm:$0xff]
    %v4368 = vld [vmem:[%s4178 + $0x5e8] sm:$0xff]
    %v4369 = vld [vmem:[%s4178 + $0x5f0] sm:$0xff]
    %v4370 = vld [vmem:[%s4178 + $0x5f8] sm:$0xff]
    %v4371 = vld [vmem:[%s4178 + $0x600] sm:$0xff]
    %v4372 = vld [vmem:[%s4178 + $0x608] sm:$0xff]
    %v4373 = vld [vmem:[%s4178 + $0x610] sm:$0xff]
    %v4374 = vld [vmem:[%s4178 + $0x618] sm:$0xff]
    %v4375 = vld [vmem:[%s4178 + $0x620] sm:$0xff]
    %v4376 = vld [vmem:[%s4178 + $0x628] sm:$0xff]
    %v4377 = vld [vmem:[%s4178 + $0x630] sm:$0xff]
    %v4378 = vld [vmem:[%s4178 + $0x638] sm:$0xff]
    %v4379 = vld [vmem:[%s4178 + $0x640] sm:$0xff]
    %v4380 = vld [vmem:[%s4178 + $0x648] sm:$0xff]
    %v4381 = vld [vmem:[%s4178 + $0x650] sm:$0xff]
    %v4382 = vld [vmem:[%s4178 + $0x658] sm:$0xff]
    %v4383 = vld [vmem:[%s4178 + $0x660] sm:$0xff]
    %v4384 = vld [vmem:[%s4178 + $0x668] sm:$0xff]
    %v4385 = vld [vmem:[%s4178 + $0x670] sm:$0xff]
    %v4386 = vld [vmem:[%s4178 + $0x678] sm:$0xff]
    %v4387 = vld [vmem:[%s4178 + $0x680] sm:$0xff]
    %v4388 = vld [vmem:[%s4178 + $0x688] sm:$0xff]
    %v4389 = vld [vmem:[%s4178 + $0x690] sm:$0xff]
    %v4390 = vld [vmem:[%s4178 + $0x698] sm:$0xff]
    %v4391 = vld [vmem:[%s4178 + $0x6a0] sm:$0xff]
    %v4392 = vld [vmem:[%s4178 + $0x6a8] sm:$0xff]
    %v4393 = vld [vmem:[%s4178 + $0x6b0] sm:$0xff]
    %v4394 = vld [vmem:[%s4178 + $0x6b8] sm:$0xff]
    %v4395 = vld [vmem:[%s4178 + $0x6c0] sm:$0xff]
    %v4396 = vld [vmem:[%s4178 + $0x6c8] sm:$0xff]
    %v4397 = vld [vmem:[%s4178 + $0x6d0] sm:$0xff]
    %v4398 = vld [vmem:[%s4178 + $0x6d8] sm:$0xff]
    %v4399 = vld [vmem:[%s4178 + $0x6e0] sm:$0xff]
    %v4400 = vld [vmem:[%s4178 + $0x6e8] sm:$0xff]
    %v4401 = vld [vmem:[%s4178 + $0x6f0] sm:$0xff]
    %v4402 = vld [vmem:[%s4178 + $0x6f8] sm:$0xff]
    %v4403 = vld [vmem:[%s4178 + $0x700] sm:$0xff]
    %v4404 = vld [vmem:[%s4178 + $0x708] sm:$0xff]
    %v4405 = vld [vmem:[%s4178 + $0x710] sm:$0xff]
    %v4406 = vld [vmem:[%s4178 + $0x718] sm:$0xff]
    %v4407 = vld [vmem:[%s4178 + $0x720] sm:$0xff]
    %v4408 = vld [vmem:[%s4178 + $0x728] sm:$0xff]
    %v4409 = vld [vmem:[%s4178 + $0x730] sm:$0xff]
    %v4410 = vld [vmem:[%s4178 + $0x738] sm:$0xff]
    %v4411 = vld [vmem:[%s4178 + $0x740] sm:$0xff]
    %v4412 = vld [vmem:[%s4178 + $0x748] sm:$0xff]
    %v4414 = vsel %vm2922, %v4165, 0
    %v4417 = vsel %vm2922, %v4170, 0
    %v4420 = vsel %vm2922, %v4175, 0
    %4422 = vmatprep.subr.mxu0 %v4180
    %4423 = vmatpush1.msra.mxu0 %v4179
    %4424 = vmatprep.subr.mxu0 %v4183
    %4425 = vmatpush1.msra.mxu0 %v4182
    %4426 = vmatprep.subr.mxu0 %v4186
    %4427 = vmatpush1.msra.mxu0 %v4185
    %4428 = vmatprep.subr.mxu0 %v4189
    %4429 = vmatpush1.msra.mxu0 %v4188
    %4430 = vmatprep.subr.mxu0 %v4192
    %4431 = vmatpush1.msra.mxu0 %v4191
    %4432 = vmatprep.subr.mxu0 %v4195
    %4433 = vmatpush1.msra.mxu0 %v4194
    %4434 = vmatprep.subr.mxu0 %v4198
    %4435 = vmatpush1.msra.mxu0 %v4197
    %4436 = vmatprep.subr.mxu0 %v4201
    %4437 = vmatpush1.msra.mxu0 %v4200
    %4438 = vmatprep.subr.mxu0 %v4204
    %4439 = vmatpush1.msra.mxu0 %v4203
    %4440 = vmatprep.subr.mxu0 %v4207
    %4441 = vmatpush1.msra.mxu0 %v4206
    %4442 = vmatprep.subr.mxu0 %v4210
    %4443 = vmatpush1.msra.mxu0 %v4209
    %4444 = vmatprep.subr.mxu0 %v4213
    %4445 = vmatpush1.msra.mxu0 %v4212
    %4446 = vmatprep.subr.mxu0 %v4216
    %4447 = vmatpush1.msra.mxu0 %v4215
    %4448 = vmatprep.subr.mxu0 %v4219
    %4449 = vmatpush1.msra.mxu0 %v4218
    %4450 = vmatprep.subr.mxu0 %v4222
    %4451 = vmatpush1.msra.mxu0 %v4221
    %4452 = vmatprep.subr.mxu0 %v4225
    %4453 = vmatpush1.msra.mxu0 %v4224
    %4454 = vmatprep.subr.mxu0 %v4228
    %4455 = vmatpush1.msra.mxu0 %v4227
    %4456 = vmatprep.subr.mxu0 %v4231
    %4457 = vmatpush1.msra.mxu0 %v4230
    %4458 = vmatprep.subr.mxu0 %v4234
    %4459 = vmatpush1.msra.mxu0 %v4233
    %4460 = vmatprep.subr.mxu0 %v4237
    %4461 = vmatpush1.msra.mxu0 %v4236
    %4462 = vmatprep.subr.mxu0 %v4240
    %4463 = vmatpush1.msra.mxu0 %v4239
    %4464 = vmatprep.subr.mxu0 %v4243
    %4465 = vmatpush1.msra.mxu0 %v4242
    %4466 = vmatprep.subr.mxu0 %v4246
    %4467 = vmatpush1.msra.mxu0 %v4245
    %4468 = vmatprep.subr.mxu0 %v4249
    %4469 = vmatpush1.msra.mxu0 %v4248
    %4470 = vmatprep.subr.mxu0 %v4252
    %4471 = vmatpush1.msra.mxu0 %v4251
    %4472 = vmatprep.subr.mxu0 %v4255
    %4473 = vmatpush1.msra.mxu0 %v4254
    %4474 = vmatprep.subr.mxu0 %v4258
    %4475 = vmatpush1.msra.mxu0 %v4257
    %4476 = vmatprep.subr.mxu0 %v4261
    %4477 = vmatpush1.msra.mxu0 %v4260
    %4478 = vmatprep.subr.mxu0 %v4264
    %4479 = vmatpush1.msra.mxu0 %v4263
    %4480 = vmatprep.subr.mxu0 %v4267
    %4481 = vmatpush1.msra.mxu0 %v4266
    %4482 = vmatprep.subr.mxu0 %v4270
    %4483 = vmatpush1.msra.mxu0 %v4269
    %4484 = vmatprep.subr.mxu0 %v4273
    %4485 = vmatpush1.msra.mxu0 %v4272
    %4486 = vmatprep.mubr.f32.mxu0 %v4001
    %4487 = vmatmul.mubr.f32.gmra.mrb[0].mxu0 %v3999
    %v4488 = vpop.f32.mrb[0].mxu0
    %v4489 = vadd.f32 0.0, %v4488
    %v4490 = vpop.f32.mrb[0].mxu0
    %v4491 = vadd.f32 0.0, %v4490
    %4492 = vmatprep.mubr.f32.mxu0 %v4007
    %4493 = vmatmul.mubr.f32.gmra.mrb[0].mxu0 %v4005
    %v4494 = vpop.f32.mrb[0].mxu0
    %v4495 = vadd.f32 0.0, %v4494
    %v4496 = vpop.f32.mrb[0].mxu0
    %v4497 = vadd.f32 0.0, %v4496
    %4498 = vmatprep.mubr.f32.mxu0 %v4013
    %4499 = vmatmul.mubr.f32.gmra.mrb[0].mxu0 %v4011
    %v4500 = vpop.f32.mrb[0].mxu0
    %v4501 = vadd.f32 0.0, %v4500
    %v4502 = vpop.f32.mrb[0].mxu0
    %v4503 = vadd.f32 0.0, %v4502
    %4504 = vdwg.mxu0
    %4505 = vmatprep.subr.mxu0 %v4276
    %4506 = vmatpush1.msra.mxu0 %v4275
    %4507 = vmatprep.subr.mxu0 %v4279
    %4508 = vmatpush1.msra.mxu0 %v4278
    %4509 = vmatprep.subr.mxu0 %v4282
    %4510 = vmatpush1.msra.mxu0 %v4281
    %4511 = vmatprep.subr.mxu0 %v4285
    %4512 = vmatpush1.msra.mxu0 %v4284
    %4513 = vmatprep.subr.mxu0 %v4288
    %4514 = vmatpush1.msra.mxu0 %v4287
    %4515 = vmatprep.subr.mxu0 %v4291
    %4516 = vmatpush1.msra.mxu0 %v4290
    %4517 = vmatprep.subr.mxu0 %v4294
    %4518 = vmatpush1.msra.mxu0 %v4293
    %4519 = vmatprep.subr.mxu0 %v4297
    %4520 = vmatpush1.msra.mxu0 %v4296
    %4521 = vmatprep.subr.mxu0 %v4300
    %4522 = vmatpush1.msra.mxu0 %v4299
    %4523 = vmatprep.subr.mxu0 %v4303
    %4524 = vmatpush1.msra.mxu0 %v4302
    %4525 = vmatprep.subr.mxu0 %v4306
    %4526 = vmatpush1.msra.mxu0 %v4305
    %4527 = vmatprep.subr.mxu0 %v4309
    %4528 = vmatpush1.msra.mxu0 %v4308
    %4529 = vmatprep.subr.mxu0 %v4312
    %4530 = vmatpush1.msra.mxu0 %v4311
    %4531 = vmatprep.subr.mxu0 %v4315
    %4532 = vmatpush1.msra.mxu0 %v4314
    %4533 = vmatprep.subr.mxu0 %v4318
    %4534 = vmatpush1.msra.mxu0 %v4317
    %4535 = vmatprep.subr.mxu0 %v4321
    %4536 = vmatpush1.msra.mxu0 %v4320
    %4537 = vmatprep.subr.mxu0 %v4324
    %4538 = vmatpush1.msra.mxu0 %v4323
    %4539 = vmatprep.subr.mxu0 %v4327
    %4540 = vmatpush1.msra.mxu0 %v4326
    %4541 = vmatprep.subr.mxu0 %v4330
    %4542 = vmatpush1.msra.mxu0 %v4329
    %4543 = vmatprep.subr.mxu0 %v4333
    %4544 = vmatpush1.msra.mxu0 %v4332
    %4545 = vmatprep.subr.mxu0 %v4336
    %4546 = vmatpush1.msra.mxu0 %v4335
    %4547 = vmatprep.subr.mxu0 %v4339
    %4548 = vmatpush1.msra.mxu0 %v4338
    %4549 = vmatprep.subr.mxu0 %v4342
    %4550 = vmatpush1.msra.mxu0 %v4341
    %4551 = vmatprep.subr.mxu0 %v4345
    %4552 = vmatpush1.msra.mxu0 %v4344
    %4553 = vmatprep.subr.mxu0 %v4348
    %4554 = vmatpush1.msra.mxu0 %v4347
    %4555 = vmatprep.subr.mxu0 %v4351
    %4556 = vmatpush1.msra.mxu0 %v4350
    %4557 = vmatprep.subr.mxu0 %v4354
    %4558 = vmatpush1.msra.mxu0 %v4353
    %4559 = vmatprep.subr.mxu0 %v4357
    %4560 = vmatpush1.msra.mxu0 %v4356
    %4561 = vmatprep.subr.mxu0 %v4360
    %4562 = vmatpush1.msra.mxu0 %v4359
    %4563 = vmatprep.subr.mxu0 %v4363
    %4564 = vmatpush1.msra.mxu0 %v4362
    %4565 = vmatprep.subr.mxu0 %v4366
    %4566 = vmatpush1.msra.mxu0 %v4365
    %4567 = vmatprep.subr.mxu0 %v4369
    %4568 = vmatpush1.msra.mxu0 %v4368
    %4569 = vmatprep.mubr.f32.mxu0 %v4084
    %4570 = vmatmul.mubr.f32.gmra.mrb[0].mxu0 %v4082
    %v4571 = vpop.f32.mrb[0].mxu0
    %v4572 = vadd.f32 %v4489, %v4571
    %v4573 = vpop.f32.mrb[0].mxu0
    %v4574 = vadd.f32 %v4491, %v4573
    %4575 = vmatprep.mubr.f32.mxu0 %v4090
    %4576 = vmatmul.mubr.f32.gmra.mrb[0].mxu0 %v4088
    %v4577 = vpop.f32.mrb[0].mxu0
    %v4578 = vadd.f32 %v4495, %v4577
    %v4579 = vpop.f32.mrb[0].mxu0
    %v4580 = vadd.f32 %v4497, %v4579
    %4581 = vmatprep.mubr.f32.mxu0 %v4096
    %4582 = vmatmul.mubr.f32.gmra.mrb[0].mxu0 %v4094
    %v4583 = vpop.f32.mrb[0].mxu0
    %v4584 = vadd.f32 %v4501, %v4583
    %v4585 = vpop.f32.mrb[0].mxu0
    %v4586 = vadd.f32 %v4503, %v4585
    %4587 = vdwg.mxu0
    %4588 = vmatprep.subr.mxu0 %v4372
    %4589 = vmatpush1.msra.mxu0 %v4371
    %4590 = vmatprep.subr.mxu0 %v4375
    %4591 = vmatpush1.msra.mxu0 %v4374
    %4592 = vmatprep.subr.mxu0 %v4378
    %4593 = vmatpush1.msra.mxu0 %v4377
    %4594 = vmatprep.subr.mxu0 %v4381
    %4595 = vmatpush1.msra.mxu0 %v4380
    %4596 = vmatprep.subr.mxu0 %v4384
    %4597 = vmatpush1.msra.mxu0 %v4383
    %4598 = vmatprep.subr.mxu0 %v4387
    %4599 = vmatpush1.msra.mxu0 %v4386
    %4600 = vmatprep.subr.mxu0 %v4390
    %4601 = vmatpush1.msra.mxu0 %v4389
    %4602 = vmatprep.subr.mxu0 %v4393
    %4603 = vmatpush1.msra.mxu0 %v4392
    %4604 = vmatprep.subr.mxu0 %v4396
    %4605 = vmatpush1.msra.mxu0 %v4395
    %4606 = vmatprep.subr.mxu0 %v4399
    %4607 = vmatpush1.msra.mxu0 %v4398
    %4608 = vmatprep.subr.mxu0 %v4402
    %4609 = vmatpush1.msra.mxu0 %v4401
    %4610 = vmatprep.subr.mxu0 %v4405
    %4611 = vmatpush1.msra.mxu0 %v4404
    %4612 = vmatprep.subr.mxu0 %v4408
    %4613 = vmatpush1.msra.mxu0 %v4407
    %4614 = vmatprep.subr.mxu0 %v4411
    %4615 = vmatpush1.msra.mxu0 %v4410
    %4616 = vmatprep.subr.mxu0 0.0
    %4617 = vmatpush1.msra.mxu0 0.0
    %4618 = vmatprep.subr.mxu0 0.0
    %4619 = vmatpush1.msra.mxu0 0.0
    %4620 = vmatprep.subr.mxu0 0.0
    %4621 = vmatpush1.msra.mxu0 0.0
    %4622 = vmatprep.subr.mxu0 0.0
    %4623 = vmatpush1.msra.mxu0 0.0
    %4624 = vmatprep.subr.mxu0 0.0
    %4625 = vmatpush1.msra.mxu0 0.0
    %4626 = vmatprep.subr.mxu0 0.0
    %4627 = vmatpush1.msra.mxu0 0.0
    %4628 = vmatprep.subr.mxu0 0.0
    %4629 = vmatpush1.msra.mxu0 0.0
    %4630 = vmatprep.subr.mxu0 0.0
    %4631 = vmatpush1.msra.mxu0 0.0
    %4632 = vmatprep.subr.mxu0 0.0
    %4633 = vmatpush1.msra.mxu0 0.0
    %4634 = vmatprep.subr.mxu0 0.0
    %4635 = vmatpush1.msra.mxu0 0.0
    %4636 = vmatprep.subr.mxu0 0.0
    %4637 = vmatpush1.msra.mxu0 0.0
    %4638 = vmatprep.subr.mxu0 0.0
    %4639 = vmatpush1.msra.mxu0 0.0
    %4640 = vmatprep.subr.mxu0 0.0
    %4641 = vmatpush1.msra.mxu0 0.0
    %4642 = vmatprep.subr.mxu0 0.0
    %4643 = vmatpush1.msra.mxu0 0.0
    %4644 = vmatprep.subr.mxu0 0.0
    %4645 = vmatpush1.msra.mxu0 0.0
    %4646 = vmatprep.subr.mxu0 0.0
    %4647 = vmatpush1.msra.mxu0 0.0
    %4648 = vmatprep.subr.mxu0 0.0
    %4649 = vmatpush1.msra.mxu0 0.0
    %4650 = vmatprep.subr.mxu0 0.0
    %4651 = vmatpush1.msra.mxu0 0.0
    %4652 = vmatprep.mubr.f32.mxu0 0.0
    %4653 = vmatmul.mubr.f32.gmra.mrb[0].mxu0 %v4414
    %v4654 = vpop.f32.mrb[0].mxu0
    %v4655 = vadd.f32 %v4572, %v4654
    %v4656 = vpop.f32.mrb[0].mxu0
    %v4657 = vadd.f32 %v4574, %v4656
    %4658 = vmatprep.mubr.f32.mxu0 0.0
    %4659 = vmatmul.mubr.f32.gmra.mrb[0].mxu0 %v4417
    %v4660 = vpop.f32.mrb[0].mxu0
    %v4661 = vadd.f32 %v4578, %v4660
    %v4662 = vpop.f32.mrb[0].mxu0
    %v4663 = vadd.f32 %v4580, %v4662
    %4664 = vmatprep.mubr.f32.mxu0 0.0
    %4665 = vmatmul.mubr.f32.gmra.mrb[0].mxu0 %v4420
    %v4666 = vpop.f32.mrb[0].mxu0
    %v4667 = vadd.f32 %v4584, %v4666
    %v4668 = vpop.f32.mrb[0].mxu0
    %v4669 = vadd.f32 %v4586, %v4668
    %4670 = vdwg.mxu0
    %4671 = vmatprep.subr.mxu0 0.0
    %4672 = vmatpush1.msra.mxu0 %v4181
    %4673 = vmatprep.subr.mxu0 0.0
    %4674 = vmatpush1.msra.mxu0 %v4184
    %4675 = vmatprep.subr.mxu0 0.0
    %4676 = vmatpush1.msra.mxu0 %v4187
    %4677 = vmatprep.subr.mxu0 0.0
    %4678 = vmatpush1.msra.mxu0 %v4190
    %4679 = vmatprep.subr.mxu0 0.0
    %4680 = vmatpush1.msra.mxu0 %v4193
    %4681 = vmatprep.subr.mxu0 0.0
    %4682 = vmatpush1.msra.mxu0 %v4196
    %4683 = vmatprep.subr.mxu0 0.0
    %4684 = vmatpush1.msra.mxu0 %v4199
    %4685 = vmatprep.subr.mxu0 0.0
    %4686 = vmatpush1.msra.mxu0 %v4202
    %4687 = vmatprep.subr.mxu0 0.0
    %4688 = vmatpush1.msra.mxu0 %v4205
    %4689 = vmatprep.subr.mxu0 0.0
    %4690 = vmatpush1.msra.mxu0 %v4208
    %4691 = vmatprep.subr.mxu0 0.0
    %4692 = vmatpush1.msra.mxu0 %v4211
    %4693 = vmatprep.subr.mxu0 0.0
    %4694 = vmatpush1.msra.mxu0 %v4214
    %4695 = vmatprep.subr.mxu0 0.0
    %4696 = vmatpush1.msra.mxu0 %v4217
    %4697 = vmatprep.subr.mxu0 0.0
    %4698 = vmatpush1.msra.mxu0 %v4220
    %4699 = vmatprep.subr.mxu0 0.0
    %4700 = vmatpush1.msra.mxu0 %v4223
    %4701 = vmatprep.subr.mxu0 0.0
    %4702 = vmatpush1.msra.mxu0 %v4226
    %4703 = vmatprep.subr.mxu0 0.0
    %4704 = vmatpush1.msra.mxu0 %v4229
    %4705 = vmatprep.subr.mxu0 0.0
    %4706 = vmatpush1.msra.mxu0 %v4232
    %4707 = vmatprep.subr.mxu0 0.0
    %4708 = vmatpush1.msra.mxu0 %v4235
    %4709 = vmatprep.subr.mxu0 0.0
    %4710 = vmatpush1.msra.mxu0 %v4238
    %4711 = vmatprep.subr.mxu0 0.0
    %4712 = vmatpush1.msra.mxu0 %v4241
    %4713 = vmatprep.subr.mxu0 0.0
    %4714 = vmatpush1.msra.mxu0 %v4244
    %4715 = vmatprep.subr.mxu0 0.0
    %4716 = vmatpush1.msra.mxu0 %v4247
    %4717 = vmatprep.subr.mxu0 0.0
    %4718 = vmatpush1.msra.mxu0 %v4250
    %4719 = vmatprep.subr.mxu0 0.0
    %4720 = vmatpush1.msra.mxu0 %v4253
    %4721 = vmatprep.subr.mxu0 0.0
    %4722 = vmatpush1.msra.mxu0 %v4256
    %4723 = vmatprep.subr.mxu0 0.0
    %4724 = vmatpush1.msra.mxu0 %v4259
    %4725 = vmatprep.subr.mxu0 0.0
    %4726 = vmatpush1.msra.mxu0 %v4262
    %4727 = vmatprep.subr.mxu0 0.0
    %4728 = vmatpush1.msra.mxu0 %v4265
    %4729 = vmatprep.subr.mxu0 0.0
    %4730 = vmatpush1.msra.mxu0 %v4268
    %4731 = vmatprep.subr.mxu0 0.0
    %4732 = vmatpush1.msra.mxu0 %v4271
    %4733 = vmatprep.subr.mxu0 0.0
    %4734 = vmatpush1.msra.mxu0 %v4274
    %4735 = vmatprep.mubr.f32.mxu0 %v4001
    %4736 = vmatmul.mubr.f32.gmra.mrb[0].mxu0 %v3999
    %v4737 = vpop.f32.mrb[0].mxu0
    %v4738 = vadd.f32 0.0, %v4737
    %v4739 = vpop.f32.mrb[0].mxu0
    %4740 = vmatprep.mubr.f32.mxu0 %v4007
    %4741 = vmatmul.mubr.f32.gmra.mrb[0].mxu0 %v4005
    %v4742 = vpop.f32.mrb[0].mxu0
    %v4743 = vadd.f32 0.0, %v4742
    %v4744 = vpop.f32.mrb[0].mxu0
    %4745 = vmatprep.mubr.f32.mxu0 %v4013
    %4746 = vmatmul.mubr.f32.gmra.mrb[0].mxu0 %v4011
    %v4747 = vpop.f32.mrb[0].mxu0
    %v4748 = vadd.f32 0.0, %v4747
    %v4749 = vpop.f32.mrb[0].mxu0
    %4750 = vdwg.mxu0
    %4751 = vmatprep.subr.mxu0 0.0
    %4752 = vmatpush1.msra.mxu0 %v4277
    %4753 = vmatprep.subr.mxu0 0.0
    %4754 = vmatpush1.msra.mxu0 %v4280
    %4755 = vmatprep.subr.mxu0 0.0
    %4756 = vmatpush1.msra.mxu0 %v4283
    %4757 = vmatprep.subr.mxu0 0.0
    %4758 = vmatpush1.msra.mxu0 %v4286
    %4759 = vmatprep.subr.mxu0 0.0
    %4760 = vmatpush1.msra.mxu0 %v4289
    %4761 = vmatprep.subr.mxu0 0.0
    %4762 = vmatpush1.msra.mxu0 %v4292
    %4763 = vmatprep.subr.mxu0 0.0
    %4764 = vmatpush1.msra.mxu0 %v4295
    %4765 = vmatprep.subr.mxu0 0.0
    %4766 = vmatpush1.msra.mxu0 %v4298
    %4767 = vmatprep.subr.mxu0 0.0
    %4768 = vmatpush1.msra.mxu0 %v4301
    %4769 = vmatprep.subr.mxu0 0.0
    %4770 = vmatpush1.msra.mxu0 %v4304
    %4771 = vmatprep.subr.mxu0 0.0
    %4772 = vmatpush1.msra.mxu0 %v4307
    %4773 = vmatprep.subr.mxu0 0.0
    %4774 = vmatpush1.msra.mxu0 %v4310
    %4775 = vmatprep.subr.mxu0 0.0
    %4776 = vmatpush1.msra.mxu0 %v4313
    %4777 = vmatprep.subr.mxu0 0.0
    %4778 = vmatpush1.msra.mxu0 %v4316
    %4779 = vmatprep.subr.mxu0 0.0
    %4780 = vmatpush1.msra.mxu0 %v4319
    %4781 = vmatprep.subr.mxu0 0.0
    %4782 = vmatpush1.msra.mxu0 %v4322
    %4783 = vmatprep.subr.mxu0 0.0
    %4784 = vmatpush1.msra.mxu0 %v4325
    %4785 = vmatprep.subr.mxu0 0.0
    %4786 = vmatpush1.msra.mxu0 %v4328
    %4787 = vmatprep.subr.mxu0 0.0
    %4788 = vmatpush1.msra.mxu0 %v4331
    %4789 = vmatprep.subr.mxu0 0.0
    %4790 = vmatpush1.msra.mxu0 %v4334
    %4791 = vmatprep.subr.mxu0 0.0
    %4792 = vmatpush1.msra.mxu0 %v4337
    %4793 = vmatprep.subr.mxu0 0.0
    %4794 = vmatpush1.msra.mxu0 %v4340
    %4795 = vmatprep.subr.mxu0 0.0
    %4796 = vmatpush1.msra.mxu0 %v4343
    %4797 = vmatprep.subr.mxu0 0.0
    %4798 = vmatpush1.msra.mxu0 %v4346
    %4799 = vmatprep.subr.mxu0 0.0
    %4800 = vmatpush1.msra.mxu0 %v4349
    %4801 = vmatprep.subr.mxu0 0.0
    %4802 = vmatpush1.msra.mxu0 %v4352
    %4803 = vmatprep.subr.mxu0 0.0
    %4804 = vmatpush1.msra.mxu0 %v4355
    %4805 = vmatprep.subr.mxu0 0.0
    %4806 = vmatpush1.msra.mxu0 %v4358
    %4807 = vmatprep.subr.mxu0 0.0
    %4808 = vmatpush1.msra.mxu0 %v4361
    %4809 = vmatprep.subr.mxu0 0.0
    %4810 = vmatpush1.msra.mxu0 %v4364
    %4811 = vmatprep.subr.mxu0 0.0
    %4812 = vmatpush1.msra.mxu0 %v4367
    %4813 = vmatprep.subr.mxu0 0.0
    %4814 = vmatpush1.msra.mxu0 %v4370
    %4815 = vmatprep.mubr.f32.mxu0 %v4084
    %4816 = vmatmul.mubr.f32.gmra.mrb[0].mxu0 %v4082
    %v4817 = vpop.f32.mrb[0].mxu0
    %v4818 = vadd.f32 %v4738, %v4817
    %v4819 = vpop.f32.mrb[0].mxu0
    %4820 = vmatprep.mubr.f32.mxu0 %v4090
    %4821 = vmatmul.mubr.f32.gmra.mrb[0].mxu0 %v4088
    %v4822 = vpop.f32.mrb[0].mxu0
    %v4823 = vadd.f32 %v4743, %v4822
    %v4824 = vpop.f32.mrb[0].mxu0
    %4825 = vmatprep.mubr.f32.mxu0 %v4096
    %4826 = vmatmul.mubr.f32.gmra.mrb[0].mxu0 %v4094
    %v4827 = vpop.f32.mrb[0].mxu0
    %v4828 = vadd.f32 %v4748, %v4827
    %v4829 = vpop.f32.mrb[0].mxu0
    %4830 = vdwg.mxu0
    %4831 = vmatprep.subr.mxu0 0.0
    %4832 = vmatpush1.msra.mxu0 %v4373
    %4833 = vmatprep.subr.mxu0 0.0
    %4834 = vmatpush1.msra.mxu0 %v4376
    %4835 = vmatprep.subr.mxu0 0.0
    %4836 = vmatpush1.msra.mxu0 %v4379
    %4837 = vmatprep.subr.mxu0 0.0
    %4838 = vmatpush1.msra.mxu0 %v4382
    %4839 = vmatprep.subr.mxu0 0.0
    %4840 = vmatpush1.msra.mxu0 %v4385
    %4841 = vmatprep.subr.mxu0 0.0
    %4842 = vmatpush1.msra.mxu0 %v4388
    %4843 = vmatprep.subr.mxu0 0.0
    %4844 = vmatpush1.msra.mxu0 %v4391
    %4845 = vmatprep.subr.mxu0 0.0
    %4846 = vmatpush1.msra.mxu0 %v4394
    %4847 = vmatprep.subr.mxu0 0.0
    %4848 = vmatpush1.msra.mxu0 %v4397
    %4849 = vmatprep.subr.mxu0 0.0
    %4850 = vmatpush1.msra.mxu0 %v4400
    %4851 = vmatprep.subr.mxu0 0.0
    %4852 = vmatpush1.msra.mxu0 %v4403
    %4853 = vmatprep.subr.mxu0 0.0
    %4854 = vmatpush1.msra.mxu0 %v4406
    %4855 = vmatprep.subr.mxu0 0.0
    %4856 = vmatpush1.msra.mxu0 %v4409
    %4857 = vmatprep.subr.mxu0 0.0
    %4858 = vmatpush1.msra.mxu0 %v4412
    %4859 = vmatprep.subr.mxu0 0.0
    %4860 = vmatpush1.msra.mxu0 0.0
    %4861 = vmatprep.subr.mxu0 0.0
    %4862 = vmatpush1.msra.mxu0 0.0
    %4863 = vmatprep.subr.mxu0 0.0
    %4864 = vmatpush1.msra.mxu0 0.0
    %4865 = vmatprep.subr.mxu0 0.0
    %4866 = vmatpush1.msra.mxu0 0.0
    %4867 = vmatprep.subr.mxu0 0.0
    %4868 = vmatpush1.msra.mxu0 0.0
    %4869 = vmatprep.subr.mxu0 0.0
    %4870 = vmatpush1.msra.mxu0 0.0
    %4871 = vmatprep.subr.mxu0 0.0
    %4872 = vmatpush1.msra.mxu0 0.0
    %4873 = vmatprep.subr.mxu0 0.0
    %4874 = vmatpush1.msra.mxu0 0.0
    %4875 = vmatprep.subr.mxu0 0.0
    %4876 = vmatpush1.msra.mxu0 0.0
    %4877 = vmatprep.subr.mxu0 0.0
    %4878 = vmatpush1.msra.mxu0 0.0
    %4879 = vmatprep.subr.mxu0 0.0
    %4880 = vmatpush1.msra.mxu0 0.0
    %4881 = vmatprep.subr.mxu0 0.0
    %4882 = vmatpush1.msra.mxu0 0.0
    %4883 = vmatprep.subr.mxu0 0.0
    %4884 = vmatpush1.msra.mxu0 0.0
    %4885 = vmatprep.subr.mxu0 0.0
    %4886 = vmatpush1.msra.mxu0 0.0
    %4887 = vmatprep.subr.mxu0 0.0
    %4888 = vmatpush1.msra.mxu0 0.0
    %4889 = vmatprep.subr.mxu0 0.0
    %4890 = vmatpush1.msra.mxu0 0.0
    %4891 = vmatprep.subr.mxu0 0.0
    %4892 = vmatpush1.msra.mxu0 0.0
    %4893 = vmatprep.subr.mxu0 0.0
    %4894 = vmatpush1.msra.mxu0 0.0
    %4895 = vmatprep.mubr.f32.mxu0 0.0
    %4896 = vmatmul.mubr.f32.gmra.mrb[0].mxu0 %v4414
    %v4897 = vpop.f32.mrb[0].mxu0
    %v4898 = vadd.f32 %v4818, %v4897
    %v4899 = vpop.f32.mrb[0].mxu0
    %4900 = vmatprep.mubr.f32.mxu0 0.0
    %4901 = vmatmul.mubr.f32.gmra.mrb[0].mxu0 %v4417
    %v4902 = vpop.f32.mrb[0].mxu0
    %v4903 = vadd.f32 %v4823, %v4902
    %v4904 = vpop.f32.mrb[0].mxu0
    %4905 = vmatprep.mubr.f32.mxu0 0.0
    %4906 = vmatmul.mubr.f32.gmra.mrb[0].mxu0 %v4420
    %v4907 = vpop.f32.mrb[0].mxu0
    %v4908 = vadd.f32 %v4828, %v4907
    %v4909 = vpop.f32.mrb[0].mxu0
    %4910 = vdwg.mxu0
    %v4911 = vadd.f32 %v3663, %v4655
    %v4912 = vadd.f32 %v3665, %v4657
    %v4913 = vadd.f32 %v3906, %v4898
    %v4914 = vadd.f32 %v3669, %v4661
    %v4915 = vadd.f32 %v3671, %v4663
    %v4916 = vadd.f32 %v3911, %v4903
    %v4917 = vadd.f32 %v3675, %v4667
    %v4918 = vadd.f32 %v3677, %v4669
    %v4919 = vadd.f32 %v3916, %v4908
    %v4920 = vld [vmem:[%s6] sm:$0x7]
    %v4922 = vlaneseq
    %v4923 = vshrl.u32 %v4922, 7
    %v4924 = vsub.s32 0, %v4923
    %v4925 = vrot.slane %v4920, %v4924
    %v4926 = vlaneseq
    %v4927 = vshrl.u32 %v4926, 7
    %v4928 = vsub.s32 1, %v4927
    %v4929 = vrot.slane %v4920, %v4928
    %v4930 = vlaneseq
    %v4931 = vshrl.u32 %v4930, 7
    %v4932 = vsub.s32 2, %v4931
    %v4933 = vrot.slane %v4920, %v4932
    %v4937 = vadd.f32 %v4911, %v4925
    %v4938 = vadd.f32 %v4912, %v4929
    %v4939 = vadd.f32 %v4913, %v4933
    %v4940 = vadd.f32 %v4914, %v4925
    %v4941 = vadd.f32 %v4915, %v4929
    %v4942 = vadd.f32 %v4916, %v4933
    %v4943 = vadd.f32 %v4917, %v4925
    %v4944 = vadd.f32 %v4918, %v4929
    %v4945 = vadd.f32 %v4919, %v4933
    %v4946 = vmax.f32 %v4937, 0.0
    %v4947 = vmax.f32 %v4938, 0.0
    %v4948 = vmax.f32 %v4939, 0.0
    %v4949 = vmax.f32 %v4940, 0.0
    %v4950 = vmax.f32 %v4941, 0.0
    %v4951 = vmax.f32 %v4942, 0.0
    %v4952 = vmax.f32 %v4943, 0.0
    %v4953 = vmax.f32 %v4944, 0.0
    %v4954 = vmax.f32 %v4945, 0.0
    %v4955 = vld [vmem:[%s7] sm:$0xff]
    %v4956 = vld [vmem:[%s7 + $0x8] sm:$0x1]
    %vm4957 = vcmask 154624
    %v4959 = vsel %vm4957, %v4955, 0
    %v4962 = vsel %vm4957, %v4956, 0
    %vm4964 = vcmask 1042432
    %v4966 = vsel %vm4964, %v4952, 0
    %v4969 = vsel %vm4964, %v4953, 0
    %v4972 = vsel %vm4964, %v4954, 0
    %4974 = vmatprep.subr.mxu0 %v4947
    %4975 = vmatpush1.msra.mxu0 %v4946
    %4976 = vmatprep.subr.mxu0 %v4950
    %4977 = vmatpush1.msra.mxu0 %v4949
    %4978 = vmatprep.subr.mxu0 %v4969
    %4979 = vmatpush1.msra.mxu0 %v4966
    %4980 = vmatprep.subr.mxu0 0.0
    %4981 = vmatpush1.msra.mxu0 0.0
    %4982 = vmatprep.subr.mxu0 0.0
    %4983 = vmatpush1.msra.mxu0 0.0
    %4984 = vmatprep.subr.mxu0 0.0
    %4985 = vmatpush1.msra.mxu0 0.0
    %4986 = vmatprep.subr.mxu0 0.0
    %4987 = vmatpush1.msra.mxu0 0.0
    %4988 = vmatprep.subr.mxu0 0.0
    %4989 = vmatpush1.msra.mxu0 0.0
    %4990 = vmatprep.subr.mxu0 0.0
    %4991 = vmatpush1.msra.mxu0 0.0
    %4992 = vmatprep.subr.mxu0 0.0
    %4993 = vmatpush1.msra.mxu0 0.0
    %4994 = vmatprep.subr.mxu0 0.0
    %4995 = vmatpush1.msra.mxu0 0.0
    %4996 = vmatprep.subr.mxu0 0.0
    %4997 = vmatpush1.msra.mxu0 0.0
    %4998 = vmatprep.subr.mxu0 0.0
    %4999 = vmatpush1.msra.mxu0 0.0
    %5000 = vmatprep.subr.mxu0 0.0
    %5001 = vmatpush1.msra.mxu0 0.0
    %5002 = vmatprep.subr.mxu0 0.0
    %5003 = vmatpush1.msra.mxu0 0.0
    %5004 = vmatprep.subr.mxu0 0.0
    %5005 = vmatpush1.msra.mxu0 0.0
    %5006 = vmatprep.subr.mxu0 0.0
    %5007 = vmatpush1.msra.mxu0 0.0
    %5008 = vmatprep.subr.mxu0 0.0
    %5009 = vmatpush1.msra.mxu0 0.0
    %5010 = vmatprep.subr.mxu0 0.0
    %5011 = vmatpush1.msra.mxu0 0.0
    %5012 = vmatprep.subr.mxu0 0.0
    %5013 = vmatpush1.msra.mxu0 0.0
    %5014 = vmatprep.subr.mxu0 0.0
    %5015 = vmatpush1.msra.mxu0 0.0
    %5016 = vmatprep.subr.mxu0 0.0
    %5017 = vmatpush1.msra.mxu0 0.0
    %5018 = vmatprep.subr.mxu0 0.0
    %5019 = vmatpush1.msra.mxu0 0.0
    %5020 = vmatprep.subr.mxu0 0.0
    %5021 = vmatpush1.msra.mxu0 0.0
    %5022 = vmatprep.subr.mxu0 0.0
    %5023 = vmatpush1.msra.mxu0 0.0
    %5024 = vmatprep.subr.mxu0 0.0
    %5025 = vmatpush1.msra.mxu0 0.0
    %5026 = vmatprep.subr.mxu0 0.0
    %5027 = vmatpush1.msra.mxu0 0.0
    %5028 = vmatprep.subr.mxu0 0.0
    %5029 = vmatpush1.msra.mxu0 0.0
    %5030 = vmatprep.subr.mxu0 0.0
    %5031 = vmatpush1.msra.mxu0 0.0
    %5032 = vmatprep.subr.mxu0 0.0
    %5033 = vmatpush1.msra.mxu0 0.0
    %5034 = vmatprep.subr.mxu0 0.0
    %5035 = vmatpush1.msra.mxu0 0.0
    %5036 = vmatprep.subr.mxu0 0.0
    %5037 = vmatpush1.msra.mxu0 0.0
    %5038 = vmatprep.mubr.f32.mxu0 0.0
    %5039 = vmatmul.mubr.f32.gmra.mrb[0].mxu0 %v4959
    %v5040 = vpop.f32.mrb[0].mxu0
    %v5041 = vadd.f32 0.0, %v5040
    %v5042 = vpop.f32.mrb[0].mxu0
    %v5043 = vadd.f32 0.0, %v5042
    %5044 = vmatprep.mubr.f32.mxu0 0.0
    %5045 = vmatmul.mubr.f32.gmra.mrb[0].mxu0 %v4962
    %v5046 = vpop.f32.mrb[0].mxu0
    %v5047 = vadd.f32 0.0, %v5046
    %v5048 = vpop.f32.mrb[0].mxu0
    %v5049 = vadd.f32 0.0, %v5048
    %5050 = vdwg.mxu0
    %5051 = vmatprep.subr.mxu0 0.0
    %5052 = vmatpush1.msra.mxu0 %v4948
    %5053 = vmatprep.subr.mxu0 0.0
    %5054 = vmatpush1.msra.mxu0 %v4951
    %5055 = vmatprep.subr.mxu0 0.0
    %5056 = vmatpush1.msra.mxu0 %v4972
    %5057 = vmatprep.subr.mxu0 0.0
    %5058 = vmatpush1.msra.mxu0 0.0
    %5059 = vmatprep.subr.mxu0 0.0
    %5060 = vmatpush1.msra.mxu0 0.0
    %5061 = vmatprep.subr.mxu0 0.0
    %5062 = vmatpush1.msra.mxu0 0.0
    %5063 = vmatprep.subr.mxu0 0.0
    %5064 = vmatpush1.msra.mxu0 0.0
    %5065 = vmatprep.subr.mxu0 0.0
    %5066 = vmatpush1.msra.mxu0 0.0
    %5067 = vmatprep.subr.mxu0 0.0
    %5068 = vmatpush1.msra.mxu0 0.0
    %5069 = vmatprep.subr.mxu0 0.0
    %5070 = vmatpush1.msra.mxu0 0.0
    %5071 = vmatprep.subr.mxu0 0.0
    %5072 = vmatpush1.msra.mxu0 0.0
    %5073 = vmatprep.subr.mxu0 0.0
    %5074 = vmatpush1.msra.mxu0 0.0
    %5075 = vmatprep.subr.mxu0 0.0
    %5076 = vmatpush1.msra.mxu0 0.0
    %5077 = vmatprep.subr.mxu0 0.0
    %5078 = vmatpush1.msra.mxu0 0.0
    %5079 = vmatprep.subr.mxu0 0.0
    %5080 = vmatpush1.msra.mxu0 0.0
    %5081 = vmatprep.subr.mxu0 0.0
    %5082 = vmatpush1.msra.mxu0 0.0
    %5083 = vmatprep.subr.mxu0 0.0
    %5084 = vmatpush1.msra.mxu0 0.0
    %5085 = vmatprep.subr.mxu0 0.0
    %5086 = vmatpush1.msra.mxu0 0.0
    %5087 = vmatprep.subr.mxu0 0.0
    %5088 = vmatpush1.msra.mxu0 0.0
    %5089 = vmatprep.subr.mxu0 0.0
    %5090 = vmatpush1.msra.mxu0 0.0
    %5091 = vmatprep.subr.mxu0 0.0
    %5092 = vmatpush1.msra.mxu0 0.0
    %5093 = vmatprep.subr.mxu0 0.0
    %5094 = vmatpush1.msra.mxu0 0.0
    %5095 = vmatprep.subr.mxu0 0.0
    %5096 = vmatpush1.msra.mxu0 0.0
    %5097 = vmatprep.subr.mxu0 0.0
    %5098 = vmatpush1.msra.mxu0 0.0
    %5099 = vmatprep.subr.mxu0 0.0
    %5100 = vmatpush1.msra.mxu0 0.0
    %5101 = vmatprep.subr.mxu0 0.0
    %5102 = vmatpush1.msra.mxu0 0.0
    %5103 = vmatprep.subr.mxu0 0.0
    %5104 = vmatpush1.msra.mxu0 0.0
    %5105 = vmatprep.subr.mxu0 0.0
    %5106 = vmatpush1.msra.mxu0 0.0
    %5107 = vmatprep.subr.mxu0 0.0
    %5108 = vmatpush1.msra.mxu0 0.0
    %5109 = vmatprep.subr.mxu0 0.0
    %5110 = vmatpush1.msra.mxu0 0.0
    %5111 = vmatprep.subr.mxu0 0.0
    %5112 = vmatpush1.msra.mxu0 0.0
    %5113 = vmatprep.subr.mxu0 0.0
    %5114 = vmatpush1.msra.mxu0 0.0
    %5115 = vmatprep.mubr.f32.mxu0 0.0
    %5116 = vmatmul.mubr.f32.gmra.mrb[0].mxu0 %v4959
    %v5117 = vpop.f32.mrb[0].mxu0
    %v5118 = vadd.f32 0.0, %v5117
    %v5119 = vpop.f32.mrb[0].mxu0
    %5120 = vmatprep.mubr.f32.mxu0 0.0
    %5121 = vmatmul.mubr.f32.gmra.mrb[0].mxu0 %v4962
    %v5122 = vpop.f32.mrb[0].mxu0
    %v5123 = vadd.f32 0.0, %v5122
    %v5124 = vpop.f32.mrb[0].mxu0
    %5125 = vdwg.mxu0
    %v5126 = vld [vmem:[%s8] sm:$0xff]
    %v5127 = vld [vmem:[%s8 + $0x8] sm:$0xff]
    %v5128 = vld [vmem:[%s8 + $0x10] sm:$0xff]
    %v5129 = vld [vmem:[%s8 + $0x18] sm:$0xff]
    %v5130 = vld [vmem:[%s8 + $0x20] sm:$0xff]
    %v5131 = vld [vmem:[%s8 + $0x28] sm:$0xff]
    %v5132 = vld [vmem:[%s8 + $0x30] sm:$0xff]
    %v5133 = vld [vmem:[%s8 + $0x38] sm:$0xff]
    %v5134 = vld [vmem:[%s8 + $0x40] sm:$0xff]
    %v5135 = vld [vmem:[%s8 + $0x48] sm:$0xff]
    %v5136 = vld [vmem:[%s8 + $0x50] sm:$0xff]
    %v5137 = vld [vmem:[%s8 + $0x58] sm:$0xff]
    %v5138 = vld [vmem:[%s8 + $0x60] sm:$0xff]
    %v5139 = vld [vmem:[%s8 + $0x68] sm:$0xff]
    %v5140 = vld [vmem:[%s8 + $0x70] sm:$0xff]
    %v5141 = vld [vmem:[%s8 + $0x78] sm:$0xff]
    %v5142 = vld [vmem:[%s8 + $0x80] sm:$0xff]
    %v5143 = vld [vmem:[%s8 + $0x88] sm:$0xff]
    %v5144 = vld [vmem:[%s8 + $0x90] sm:$0xff]
    %v5145 = vld [vmem:[%s8 + $0x98] sm:$0xff]
    %v5146 = vld [vmem:[%s8 + $0xa0] sm:$0xff]
    %v5147 = vld [vmem:[%s8 + $0xa8] sm:$0xff]
    %v5148 = vld [vmem:[%s8 + $0xb0] sm:$0xff]
    %v5149 = vld [vmem:[%s8 + $0xb8] sm:$0xff]
    %v5150 = vld [vmem:[%s8 + $0xc0] sm:$0xff]
    %v5151 = vld [vmem:[%s8 + $0xc8] sm:$0xff]
    %v5152 = vld [vmem:[%s8 + $0xd0] sm:$0xff]
    %v5153 = vld [vmem:[%s8 + $0xd8] sm:$0xff]
    %v5154 = vld [vmem:[%s8 + $0xe0] sm:$0xff]
    %v5155 = vld [vmem:[%s8 + $0xe8] sm:$0xff]
    %v5156 = vld [vmem:[%s8 + $0xf0] sm:$0xff]
    %v5157 = vld [vmem:[%s8 + $0xf8] sm:$0xff]
    %v5158 = vld [vmem:[%s8 + $0x100] sm:$0xff]
    %v5159 = vld [vmem:[%s8 + $0x108] sm:$0xff]
    %v5160 = vld [vmem:[%s8 + $0x110] sm:$0xff]
    %v5161 = vld [vmem:[%s8 + $0x118] sm:$0xff]
    %v5162 = vld [vmem:[%s8 + $0x120] sm:$0xff]
    %v5163 = vld [vmem:[%s8 + $0x128] sm:$0xff]
    %v5164 = vld [vmem:[%s8 + $0x130] sm:$0xff]
    %v5165 = vld [vmem:[%s8 + $0x138] sm:$0xff]
    %v5166 = vld [vmem:[%s8 + $0x140] sm:$0xff]
    %v5167 = vld [vmem:[%s8 + $0x148] sm:$0xff]
    %v5168 = vld [vmem:[%s8 + $0x150] sm:$0xff]
    %v5169 = vld [vmem:[%s8 + $0x158] sm:$0xff]
    %v5170 = vld [vmem:[%s8 + $0x160] sm:$0xff]
    %v5171 = vld [vmem:[%s8 + $0x168] sm:$0xff]
    %v5172 = vld [vmem:[%s8 + $0x170] sm:$0xff]
    %v5173 = vld [vmem:[%s8 + $0x178] sm:$0xff]
    %v5174 = vld [vmem:[%s8 + $0x180] sm:$0xff]
    %v5175 = vld [vmem:[%s8 + $0x188] sm:$0xff]
    %v5176 = vld [vmem:[%s8 + $0x190] sm:$0xff]
    %v5177 = vld [vmem:[%s8 + $0x198] sm:$0xff]
    %v5178 = vld [vmem:[%s8 + $0x1a0] sm:$0xff]
    %v5179 = vld [vmem:[%s8 + $0x1a8] sm:$0xff]
    %v5180 = vld [vmem:[%s8 + $0x1b0] sm:$0xff]
    %v5181 = vld [vmem:[%s8 + $0x1b8] sm:$0xff]
    %v5182 = vld [vmem:[%s8 + $0x1c0] sm:$0xff]
    %v5183 = vld [vmem:[%s8 + $0x1c8] sm:$0xff]
    %v5184 = vld [vmem:[%s8 + $0x1d0] sm:$0xff]
    %v5185 = vld [vmem:[%s8 + $0x1d8] sm:$0xff]
    %v5186 = vld [vmem:[%s8 + $0x1e0] sm:$0xff]
    %v5187 = vld [vmem:[%s8 + $0x1e8] sm:$0xff]
    %v5188 = vld [vmem:[%s8 + $0x1f0] sm:$0xff]
    %v5189 = vld [vmem:[%s8 + $0x1f8] sm:$0xff]
    %v5190 = vld [vmem:[%s8 + $0x200] sm:$0xff]
    %v5191 = vld [vmem:[%s8 + $0x208] sm:$0xff]
    %v5192 = vld [vmem:[%s8 + $0x210] sm:$0xff]
    %v5193 = vld [vmem:[%s8 + $0x218] sm:$0xff]
    %v5194 = vld [vmem:[%s8 + $0x220] sm:$0xff]
    %v5195 = vld [vmem:[%s8 + $0x228] sm:$0xff]
    %v5196 = vld [vmem:[%s8 + $0x230] sm:$0xff]
    %v5197 = vld [vmem:[%s8 + $0x238] sm:$0xff]
    %v5198 = vld [vmem:[%s8 + $0x240] sm:$0xff]
    %v5199 = vld [vmem:[%s8 + $0x248] sm:$0xff]
    %v5200 = vld [vmem:[%s8 + $0x250] sm:$0xff]
    %v5201 = vld [vmem:[%s8 + $0x258] sm:$0xff]
    %s5202 = scalar_lea.vmem %s7, 16
    %v5203 = vld [vmem:[%s5202] sm:$0xff]
    %v5204 = vld [vmem:[%s5202 + $0x8] sm:$0x1]
    %v5206 = vsel %vm4957, %v5203, 0
    %v5209 = vsel %vm4957, %v5204, 0
    %5211 = vmatprep.subr.mxu0 %v4947
    %5212 = vmatpush1.msra.mxu0 %v4946
    %5213 = vmatprep.subr.mxu0 %v4950
    %5214 = vmatpush1.msra.mxu0 %v4949
    %5215 = vmatprep.subr.mxu0 %v4969
    %5216 = vmatpush1.msra.mxu0 %v4966
    %5217 = vmatprep.subr.mxu0 0.0
    %5218 = vmatpush1.msra.mxu0 0.0
    %5219 = vmatprep.subr.mxu0 0.0
    %5220 = vmatpush1.msra.mxu0 0.0
    %5221 = vmatprep.subr.mxu0 0.0
    %5222 = vmatpush1.msra.mxu0 0.0
    %5223 = vmatprep.subr.mxu0 0.0
    %5224 = vmatpush1.msra.mxu0 0.0
    %5225 = vmatprep.subr.mxu0 0.0
    %5226 = vmatpush1.msra.mxu0 0.0
    %5227 = vmatprep.subr.mxu0 0.0
    %5228 = vmatpush1.msra.mxu0 0.0
    %5229 = vmatprep.subr.mxu0 0.0
    %5230 = vmatpush1.msra.mxu0 0.0
    %5231 = vmatprep.subr.mxu0 0.0
    %5232 = vmatpush1.msra.mxu0 0.0
    %5233 = vmatprep.subr.mxu0 0.0
    %5234 = vmatpush1.msra.mxu0 0.0
    %5235 = vmatprep.subr.mxu0 0.0
    %5236 = vmatpush1.msra.mxu0 0.0
    %5237 = vmatprep.subr.mxu0 0.0
    %5238 = vmatpush1.msra.mxu0 0.0
    %5239 = vmatprep.subr.mxu0 0.0
    %5240 = vmatpush1.msra.mxu0 0.0
    %5241 = vmatprep.subr.mxu0 0.0
    %5242 = vmatpush1.msra.mxu0 0.0
    %5243 = vmatprep.subr.mxu0 0.0
    %5244 = vmatpush1.msra.mxu0 0.0
    %5245 = vmatprep.subr.mxu0 0.0
    %5246 = vmatpush1.msra.mxu0 0.0
    %5247 = vmatprep.subr.mxu0 0.0
    %5248 = vmatpush1.msra.mxu0 0.0
    %5249 = vmatprep.subr.mxu0 0.0
    %5250 = vmatpush1.msra.mxu0 0.0
    %5251 = vmatprep.subr.mxu0 0.0
    %5252 = vmatpush1.msra.mxu0 0.0
    %5253 = vmatprep.subr.mxu0 0.0
    %5254 = vmatpush1.msra.mxu0 0.0
    %5255 = vmatprep.subr.mxu0 0.0
    %5256 = vmatpush1.msra.mxu0 0.0
    %5257 = vmatprep.subr.mxu0 0.0
    %5258 = vmatpush1.msra.mxu0 0.0
    %5259 = vmatprep.subr.mxu0 0.0
    %5260 = vmatpush1.msra.mxu0 0.0
    %5261 = vmatprep.subr.mxu0 0.0
    %5262 = vmatpush1.msra.mxu0 0.0
    %5263 = vmatprep.subr.mxu0 0.0
    %5264 = vmatpush1.msra.mxu0 0.0
    %5265 = vmatprep.subr.mxu0 0.0
    %5266 = vmatpush1.msra.mxu0 0.0
    %5267 = vmatprep.subr.mxu0 0.0
    %5268 = vmatpush1.msra.mxu0 0.0
    %5269 = vmatprep.subr.mxu0 0.0
    %5270 = vmatpush1.msra.mxu0 0.0
    %5271 = vmatprep.subr.mxu0 0.0
    %5272 = vmatpush1.msra.mxu0 0.0
    %5273 = vmatprep.subr.mxu0 0.0
    %5274 = vmatpush1.msra.mxu0 0.0
    %5275 = vmatprep.mubr.f32.mxu0 0.0
    %5276 = vmatmul.mubr.f32.gmra.mrb[0].mxu0 %v5206
    %v5277 = vpop.f32.mrb[0].mxu0
    %v5278 = vadd.f32 0.0, %v5277
    %v5279 = vpop.f32.mrb[0].mxu0
    %v5280 = vadd.f32 0.0, %v5279
    %5281 = vmatprep.mubr.f32.mxu0 0.0
    %5282 = vmatmul.mubr.f32.gmra.mrb[0].mxu0 %v5209
    %v5283 = vpop.f32.mrb[0].mxu0
    %v5284 = vadd.f32 0.0, %v5283
    %v5285 = vpop.f32.mrb[0].mxu0
    %v5286 = vadd.f32 0.0, %v5285
    %5287 = vdwg.mxu0
    %5288 = vmatprep.subr.mxu0 0.0
    %5289 = vmatpush1.msra.mxu0 %v4948
    %5290 = vmatprep.subr.mxu0 0.0
    %5291 = vmatpush1.msra.mxu0 %v4951
    %5292 = vmatprep.subr.mxu0 0.0
    %5293 = vmatpush1.msra.mxu0 %v4972
    %5294 = vmatprep.subr.mxu0 0.0
    %5295 = vmatpush1.msra.mxu0 0.0
    %5296 = vmatprep.subr.mxu0 0.0
    %5297 = vmatpush1.msra.mxu0 0.0
    %5298 = vmatprep.subr.mxu0 0.0
    %5299 = vmatpush1.msra.mxu0 0.0
    %5300 = vmatprep.subr.mxu0 0.0
    %5301 = vmatpush1.msra.mxu0 0.0
    %5302 = vmatprep.subr.mxu0 0.0
    %5303 = vmatpush1.msra.mxu0 0.0
    %5304 = vmatprep.subr.mxu0 0.0
    %5305 = vmatpush1.msra.mxu0 0.0
    %5306 = vmatprep.subr.mxu0 0.0
    %5307 = vmatpush1.msra.mxu0 0.0
    %5308 = vmatprep.subr.mxu0 0.0
    %5309 = vmatpush1.msra.mxu0 0.0
    %5310 = vmatprep.subr.mxu0 0.0
    %5311 = vmatpush1.msra.mxu0 0.0
    %5312 = vmatprep.subr.mxu0 0.0
    %5313 = vmatpush1.msra.mxu0 0.0
    %5314 = vmatprep.subr.mxu0 0.0
    %5315 = vmatpush1.msra.mxu0 0.0
    %5316 = vmatprep.subr.mxu0 0.0
    %5317 = vmatpush1.msra.mxu0 0.0
    %5318 = vmatprep.subr.mxu0 0.0
    %5319 = vmatpush1.msra.mxu0 0.0
    %5320 = vmatprep.subr.mxu0 0.0
    %5321 = vmatpush1.msra.mxu0 0.0
    %5322 = vmatprep.subr.mxu0 0.0
    %5323 = vmatpush1.msra.mxu0 0.0
    %5324 = vmatprep.subr.mxu0 0.0
    %5325 = vmatpush1.msra.mxu0 0.0
    %5326 = vmatprep.subr.mxu0 0.0
    %5327 = vmatpush1.msra.mxu0 0.0
    %5328 = vmatprep.subr.mxu0 0.0
    %5329 = vmatpush1.msra.mxu0 0.0
    %5330 = vmatprep.subr.mxu0 0.0
    %5331 = vmatpush1.msra.mxu0 0.0
    %5332 = vmatprep.subr.mxu0 0.0
    %5333 = vmatpush1.msra.mxu0 0.0
    %5334 = vmatprep.subr.mxu0 0.0
    %5335 = vmatpush1.msra.mxu0 0.0
    %5336 = vmatprep.subr.mxu0 0.0
    %5337 = vmatpush1.msra.mxu0 0.0
    %5338 = vmatprep.subr.mxu0 0.0
    %5339 = vmatpush1.msra.mxu0 0.0
    %5340 = vmatprep.subr.mxu0 0.0
    %5341 = vmatpush1.msra.mxu0 0.0
    %5342 = vmatprep.subr.mxu0 0.0
    %5343 = vmatpush1.msra.mxu0 0.0
    %5344 = vmatprep.subr.mxu0 0.0
    %5345 = vmatpush1.msra.mxu0 0.0
    %5346 = vmatprep.subr.mxu0 0.0
    %5347 = vmatpush1.msra.mxu0 0.0
    %5348 = vmatprep.subr.mxu0 0.0
    %5349 = vmatpush1.msra.mxu0 0.0
    %5350 = vmatprep.subr.mxu0 0.0
    %5351 = vmatpush1.msra.mxu0 0.0
    %5352 = vmatprep.mubr.f32.mxu0 0.0
    %5353 = vmatmul.mubr.f32.gmra.mrb[0].mxu0 %v5206
    %v5354 = vpop.f32.mrb[0].mxu0
    %v5355 = vadd.f32 0.0, %v5354
    %v5356 = vpop.f32.mrb[0].mxu0
    %5357 = vmatprep.mubr.f32.mxu0 0.0
    %5358 = vmatmul.mubr.f32.gmra.mrb[0].mxu0 %v5209
    %v5359 = vpop.f32.mrb[0].mxu0
    %v5360 = vadd.f32 0.0, %v5359
    %v5361 = vpop.f32.mrb[0].mxu0
    %5362 = vdwg.mxu0
    %s5363 = scalar_lea.vmem %s8, 608
    %v5364 = vld [vmem:[%s5363] sm:$0xff]
    %v5365 = vld [vmem:[%s5363 + $0x8] sm:$0xff]
    %v5366 = vld [vmem:[%s5363 + $0x10] sm:$0xff]
    %v5367 = vld [vmem:[%s5363 + $0x18] sm:$0xff]
    %v5368 = vld [vmem:[%s5363 + $0x20] sm:$0xff]
    %v5369 = vld [vmem:[%s5363 + $0x28] sm:$0xff]
    %v5370 = vld [vmem:[%s5363 + $0x30] sm:$0xff]
    %v5371 = vld [vmem:[%s5363 + $0x38] sm:$0xff]
    %v5372 = vld [vmem:[%s5363 + $0x40] sm:$0xff]
    %v5373 = vld [vmem:[%s5363 + $0x48] sm:$0xff]
    %v5374 = vld [vmem:[%s5363 + $0x50] sm:$0xff]
    %v5375 = vld [vmem:[%s5363 + $0x58] sm:$0xff]
    %v5376 = vld [vmem:[%s5363 + $0x60] sm:$0xff]
    %v5377 = vld [vmem:[%s5363 + $0x68] sm:$0xff]
    %v5378 = vld [vmem:[%s5363 + $0x70] sm:$0xff]
    %v5379 = vld [vmem:[%s5363 + $0x78] sm:$0xff]
    %v5380 = vld [vmem:[%s5363 + $0x80] sm:$0xff]
    %v5381 = vld [vmem:[%s5363 + $0x88] sm:$0xff]
    %v5382 = vld [vmem:[%s5363 + $0x90] sm:$0xff]
    %v5383 = vld [vmem:[%s5363 + $0x98] sm:$0xff]
    %v5384 = vld [vmem:[%s5363 + $0xa0] sm:$0xff]
    %v5385 = vld [vmem:[%s5363 + $0xa8] sm:$0xff]
    %v5386 = vld [vmem:[%s5363 + $0xb0] sm:$0xff]
    %v5387 = vld [vmem:[%s5363 + $0xb8] sm:$0xff]
    %v5388 = vld [vmem:[%s5363 + $0xc0] sm:$0xff]
    %v5389 = vld [vmem:[%s5363 + $0xc8] sm:$0xff]
    %v5390 = vld [vmem:[%s5363 + $0xd0] sm:$0xff]
    %v5391 = vld [vmem:[%s5363 + $0xd8] sm:$0xff]
    %v5392 = vld [vmem:[%s5363 + $0xe0] sm:$0xff]
    %v5393 = vld [vmem:[%s5363 + $0xe8] sm:$0xff]
    %v5394 = vld [vmem:[%s5363 + $0xf0] sm:$0xff]
    %v5395 = vld [vmem:[%s5363 + $0xf8] sm:$0xff]
    %v5396 = vld [vmem:[%s5363 + $0x100] sm:$0xff]
    %v5397 = vld [vmem:[%s5363 + $0x108] sm:$0xff]
    %v5398 = vld [vmem:[%s5363 + $0x110] sm:$0xff]
    %v5399 = vld [vmem:[%s5363 + $0x118] sm:$0xff]
    %v5400 = vld [vmem:[%s5363 + $0x120] sm:$0xff]
    %v5401 = vld [vmem:[%s5363 + $0x128] sm:$0xff]
    %v5402 = vld [vmem:[%s5363 + $0x130] sm:$0xff]
    %v5403 = vld [vmem:[%s5363 + $0x138] sm:$0xff]
    %v5404 = vld [vmem:[%s5363 + $0x140] sm:$0xff]
    %v5405 = vld [vmem:[%s5363 + $0x148] sm:$0xff]
    %v5406 = vld [vmem:[%s5363 + $0x150] sm:$0xff]
    %v5407 = vld [vmem:[%s5363 + $0x158] sm:$0xff]
    %v5408 = vld [vmem:[%s5363 + $0x160] sm:$0xff]
    %v5409 = vld [vmem:[%s5363 + $0x168] sm:$0xff]
    %v5410 = vld [vmem:[%s5363 + $0x170] sm:$0xff]
    %v5411 = vld [vmem:[%s5363 + $0x178] sm:$0xff]
    %v5412 = vld [vmem:[%s5363 + $0x180] sm:$0xff]
    %v5413 = vld [vmem:[%s5363 + $0x188] sm:$0xff]
    %v5414 = vld [vmem:[%s5363 + $0x190] sm:$0xff]
    %v5415 = vld [vmem:[%s5363 + $0x198] sm:$0xff]
    %v5416 = vld [vmem:[%s5363 + $0x1a0] sm:$0xff]
    %v5417 = vld [vmem:[%s5363 + $0x1a8] sm:$0xff]
    %v5418 = vld [vmem:[%s5363 + $0x1b0] sm:$0xff]
    %v5419 = vld [vmem:[%s5363 + $0x1b8] sm:$0xff]
    %v5420 = vld [vmem:[%s5363 + $0x1c0] sm:$0xff]
    %v5421 = vld [vmem:[%s5363 + $0x1c8] sm:$0xff]
    %v5422 = vld [vmem:[%s5363 + $0x1d0] sm:$0xff]
    %v5423 = vld [vmem:[%s5363 + $0x1d8] sm:$0xff]
    %v5424 = vld [vmem:[%s5363 + $0x1e0] sm:$0xff]
    %v5425 = vld [vmem:[%s5363 + $0x1e8] sm:$0xff]
    %v5426 = vld [vmem:[%s5363 + $0x1f0] sm:$0xff]
    %v5427 = vld [vmem:[%s5363 + $0x1f8] sm:$0xff]
    %v5428 = vld [vmem:[%s5363 + $0x200] sm:$0xff]
    %v5429 = vld [vmem:[%s5363 + $0x208] sm:$0xff]
    %v5430 = vld [vmem:[%s5363 + $0x210] sm:$0xff]
    %v5431 = vld [vmem:[%s5363 + $0x218] sm:$0xff]
    %v5432 = vld [vmem:[%s5363 + $0x220] sm:$0xff]
    %v5433 = vld [vmem:[%s5363 + $0x228] sm:$0xff]
    %v5434 = vld [vmem:[%s5363 + $0x230] sm:$0xff]
    %v5435 = vld [vmem:[%s5363 + $0x238] sm:$0xff]
    %v5436 = vld [vmem:[%s5363 + $0x240] sm:$0xff]
    %v5437 = vld [vmem:[%s5363 + $0x248] sm:$0xff]
    %v5438 = vld [vmem:[%s5363 + $0x250] sm:$0xff]
    %v5439 = vld [vmem:[%s5363 + $0x258] sm:$0xff]
    %vm5440 = vcmask 392192
    %v5442 = vsel %vm5440, %v5355, 0
    %v5445 = vsel %vm5440, %v5360, 0
    %5447 = vmatprep.subr.mxu0 %v5365
    %5448 = vmatpush1.msra.mxu0 %v5364
    %5449 = vmatprep.subr.mxu0 %v5367
    %5450 = vmatpush1.msra.mxu0 %v5366
    %5451 = vmatprep.subr.mxu0 %v5369
    %5452 = vmatpush1.msra.mxu0 %v5368
    %5453 = vmatprep.subr.mxu0 %v5371
    %5454 = vmatpush1.msra.mxu0 %v5370
    %5455 = vmatprep.subr.mxu0 %v5373
    %5456 = vmatpush1.msra.mxu0 %v5372
    %5457 = vmatprep.subr.mxu0 %v5375
    %5458 = vmatpush1.msra.mxu0 %v5374
    %5459 = vmatprep.subr.mxu0 %v5377
    %5460 = vmatpush1.msra.mxu0 %v5376
    %5461 = vmatprep.subr.mxu0 %v5379
    %5462 = vmatpush1.msra.mxu0 %v5378
    %5463 = vmatprep.subr.mxu0 %v5381
    %5464 = vmatpush1.msra.mxu0 %v5380
    %5465 = vmatprep.subr.mxu0 %v5383
    %5466 = vmatpush1.msra.mxu0 %v5382
    %5467 = vmatprep.subr.mxu0 %v5385
    %5468 = vmatpush1.msra.mxu0 %v5384
    %5469 = vmatprep.subr.mxu0 %v5387
    %5470 = vmatpush1.msra.mxu0 %v5386
    %5471 = vmatprep.subr.mxu0 %v5389
    %5472 = vmatpush1.msra.mxu0 %v5388
    %5473 = vmatprep.subr.mxu0 %v5391
    %5474 = vmatpush1.msra.mxu0 %v5390
    %5475 = vmatprep.subr.mxu0 %v5393
    %5476 = vmatpush1.msra.mxu0 %v5392
    %5477 = vmatprep.subr.mxu0 %v5395
    %5478 = vmatpush1.msra.mxu0 %v5394
    %5479 = vmatprep.subr.mxu0 %v5397
    %5480 = vmatpush1.msra.mxu0 %v5396
    %5481 = vmatprep.subr.mxu0 %v5399
    %5482 = vmatpush1.msra.mxu0 %v5398
    %5483 = vmatprep.subr.mxu0 %v5401
    %5484 = vmatpush1.msra.mxu0 %v5400
    %5485 = vmatprep.subr.mxu0 %v5403
    %5486 = vmatpush1.msra.mxu0 %v5402
    %5487 = vmatprep.subr.mxu0 %v5405
    %5488 = vmatpush1.msra.mxu0 %v5404
    %5489 = vmatprep.subr.mxu0 %v5407
    %5490 = vmatpush1.msra.mxu0 %v5406
    %5491 = vmatprep.subr.mxu0 %v5409
    %5492 = vmatpush1.msra.mxu0 %v5408
    %5493 = vmatprep.subr.mxu0 %v5411
    %5494 = vmatpush1.msra.mxu0 %v5410
    %5495 = vmatprep.subr.mxu0 %v5413
    %5496 = vmatpush1.msra.mxu0 %v5412
    %5497 = vmatprep.subr.mxu0 %v5415
    %5498 = vmatpush1.msra.mxu0 %v5414
    %5499 = vmatprep.subr.mxu0 %v5417
    %5500 = vmatpush1.msra.mxu0 %v5416
    %5501 = vmatprep.subr.mxu0 %v5419
    %5502 = vmatpush1.msra.mxu0 %v5418
    %5503 = vmatprep.subr.mxu0 %v5421
    %5504 = vmatpush1.msra.mxu0 %v5420
    %5505 = vmatprep.subr.mxu0 %v5423
    %5506 = vmatpush1.msra.mxu0 %v5422
    %5507 = vmatprep.subr.mxu0 %v5425
    %5508 = vmatpush1.msra.mxu0 %v5424
    %5509 = vmatprep.subr.mxu0 %v5427
    %5510 = vmatpush1.msra.mxu0 %v5426
    %5511 = vmatprep.mubr.f32.mxu0 %v5280
    %5512 = vmatmul.mubr.f32.gmra.mrb[0].mxu0 %v5278
    %v5513 = vpop.f32.mrb[0].mxu0
    %v5514 = vadd.f32 0.0, %v5513
    %v5515 = vpop.f32.mrb[0].mxu0
    %v5516 = vadd.f32 0.0, %v5515
    %5517 = vmatprep.mubr.f32.mxu0 %v5286
    %5518 = vmatmul.mubr.f32.gmra.mrb[0].mxu0 %v5284
    %v5519 = vpop.f32.mrb[0].mxu0
    %v5520 = vadd.f32 0.0, %v5519
    %v5521 = vpop.f32.mrb[0].mxu0
    %v5522 = vadd.f32 0.0, %v5521
    %5523 = vdwg.mxu0
    %5524 = vmatprep.subr.mxu0 %v5429
    %5525 = vmatpush1.msra.mxu0 %v5428
    %5526 = vmatprep.subr.mxu0 %v5431
    %5527 = vmatpush1.msra.mxu0 %v5430
    %5528 = vmatprep.subr.mxu0 %v5433
    %5529 = vmatpush1.msra.mxu0 %v5432
    %5530 = vmatprep.subr.mxu0 %v5435
    %5531 = vmatpush1.msra.mxu0 %v5434
    %5532 = vmatprep.subr.mxu0 %v5437
    %5533 = vmatpush1.msra.mxu0 %v5436
    %5534 = vmatprep.subr.mxu0 %v5439
    %5535 = vmatpush1.msra.mxu0 %v5438
    %5536 = vmatprep.subr.mxu0 0.0
    %5537 = vmatpush1.msra.mxu0 0.0
    %5538 = vmatprep.subr.mxu0 0.0
    %5539 = vmatpush1.msra.mxu0 0.0
    %5540 = vmatprep.subr.mxu0 0.0
    %5541 = vmatpush1.msra.mxu0 0.0
    %5542 = vmatprep.subr.mxu0 0.0
    %5543 = vmatpush1.msra.mxu0 0.0
    %5544 = vmatprep.subr.mxu0 0.0
    %5545 = vmatpush1.msra.mxu0 0.0
    %5546 = vmatprep.subr.mxu0 0.0
    %5547 = vmatpush1.msra.mxu0 0.0
    %5548 = vmatprep.subr.mxu0 0.0
    %5549 = vmatpush1.msra.mxu0 0.0
    %5550 = vmatprep.subr.mxu0 0.0
    %5551 = vmatpush1.msra.mxu0 0.0
    %5552 = vmatprep.subr.mxu0 0.0
    %5553 = vmatpush1.msra.mxu0 0.0
    %5554 = vmatprep.subr.mxu0 0.0
    %5555 = vmatpush1.msra.mxu0 0.0
    %5556 = vmatprep.subr.mxu0 0.0
    %5557 = vmatpush1.msra.mxu0 0.0
    %5558 = vmatprep.subr.mxu0 0.0
    %5559 = vmatpush1.msra.mxu0 0.0
    %5560 = vmatprep.subr.mxu0 0.0
    %5561 = vmatpush1.msra.mxu0 0.0
    %5562 = vmatprep.subr.mxu0 0.0
    %5563 = vmatpush1.msra.mxu0 0.0
    %5564 = vmatprep.subr.mxu0 0.0
    %5565 = vmatpush1.msra.mxu0 0.0
    %5566 = vmatprep.subr.mxu0 0.0
    %5567 = vmatpush1.msra.mxu0 0.0
    %5568 = vmatprep.subr.mxu0 0.0
    %5569 = vmatpush1.msra.mxu0 0.0
    %5570 = vmatprep.subr.mxu0 0.0
    %5571 = vmatpush1.msra.mxu0 0.0
    %5572 = vmatprep.subr.mxu0 0.0
    %5573 = vmatpush1.msra.mxu0 0.0
    %5574 = vmatprep.subr.mxu0 0.0
    %5575 = vmatpush1.msra.mxu0 0.0
    %5576 = vmatprep.subr.mxu0 0.0
    %5577 = vmatpush1.msra.mxu0 0.0
    %5578 = vmatprep.subr.mxu0 0.0
    %5579 = vmatpush1.msra.mxu0 0.0
    %5580 = vmatprep.subr.mxu0 0.0
    %5581 = vmatpush1.msra.mxu0 0.0
    %5582 = vmatprep.subr.mxu0 0.0
    %5583 = vmatpush1.msra.mxu0 0.0
    %5584 = vmatprep.subr.mxu0 0.0
    %5585 = vmatpush1.msra.mxu0 0.0
    %5586 = vmatprep.subr.mxu0 0.0
    %5587 = vmatpush1.msra.mxu0 0.0
    %5588 = vmatprep.mubr.f32.mxu0 0.0
    %5589 = vmatmul.mubr.f32.gmra.mrb[0].mxu0 %v5442
    %v5590 = vpop.f32.mrb[0].mxu0
    %v5591 = vadd.f32 %v5514, %v5590
    %v5592 = vpop.f32.mrb[0].mxu0
    %v5593 = vadd.f32 %v5516, %v5592
    %5594 = vmatprep.mubr.f32.mxu0 0.0
    %5595 = vmatmul.mubr.f32.gmra.mrb[0].mxu0 %v5445
    %v5596 = vpop.f32.mrb[0].mxu0
    %v5597 = vadd.f32 %v5520, %v5596
    %v5598 = vpop.f32.mrb[0].mxu0
    %v5599 = vadd.f32 %v5522, %v5598
    %5600 = vdwg.mxu0
    %v5602 = vsel %vm5440, %v5118, 0
    %v5605 = vsel %vm5440, %v5123, 0
    %5607 = vmatprep.subr.mxu0 %v5127
    %5608 = vmatpush1.msra.mxu0 %v5126
    %5609 = vmatprep.subr.mxu0 %v5129
    %5610 = vmatpush1.msra.mxu0 %v5128
    %5611 = vmatprep.subr.mxu0 %v5131
    %5612 = vmatpush1.msra.mxu0 %v5130
    %5613 = vmatprep.subr.mxu0 %v5133
    %5614 = vmatpush1.msra.mxu0 %v5132
    %5615 = vmatprep.subr.mxu0 %v5135
    %5616 = vmatpush1.msra.mxu0 %v5134
    %5617 = vmatprep.subr.mxu0 %v5137
    %5618 = vmatpush1.msra.mxu0 %v5136
    %5619 = vmatprep.subr.mxu0 %v5139
    %5620 = vmatpush1.msra.mxu0 %v5138
    %5621 = vmatprep.subr.mxu0 %v5141
    %5622 = vmatpush1.msra.mxu0 %v5140
    %5623 = vmatprep.subr.mxu0 %v5143
    %5624 = vmatpush1.msra.mxu0 %v5142
    %5625 = vmatprep.subr.mxu0 %v5145
    %5626 = vmatpush1.msra.mxu0 %v5144
    %5627 = vmatprep.subr.mxu0 %v5147
    %5628 = vmatpush1.msra.mxu0 %v5146
    %5629 = vmatprep.subr.mxu0 %v5149
    %5630 = vmatpush1.msra.mxu0 %v5148
    %5631 = vmatprep.subr.mxu0 %v5151
    %5632 = vmatpush1.msra.mxu0 %v5150
    %5633 = vmatprep.subr.mxu0 %v5153
    %5634 = vmatpush1.msra.mxu0 %v5152
    %5635 = vmatprep.subr.mxu0 %v5155
    %5636 = vmatpush1.msra.mxu0 %v5154
    %5637 = vmatprep.subr.mxu0 %v5157
    %5638 = vmatpush1.msra.mxu0 %v5156
    %5639 = vmatprep.subr.mxu0 %v5159
    %5640 = vmatpush1.msra.mxu0 %v5158
    %5641 = vmatprep.subr.mxu0 %v5161
    %5642 = vmatpush1.msra.mxu0 %v5160
    %5643 = vmatprep.subr.mxu0 %v5163
    %5644 = vmatpush1.msra.mxu0 %v5162
    %5645 = vmatprep.subr.mxu0 %v5165
    %5646 = vmatpush1.msra.mxu0 %v5164
    %5647 = vmatprep.subr.mxu0 %v5167
    %5648 = vmatpush1.msra.mxu0 %v5166
    %5649 = vmatprep.subr.mxu0 %v5169
    %5650 = vmatpush1.msra.mxu0 %v5168
    %5651 = vmatprep.subr.mxu0 %v5171
    %5652 = vmatpush1.msra.mxu0 %v5170
    %5653 = vmatprep.subr.mxu0 %v5173
    %5654 = vmatpush1.msra.mxu0 %v5172
    %5655 = vmatprep.subr.mxu0 %v5175
    %5656 = vmatpush1.msra.mxu0 %v5174
    %5657 = vmatprep.subr.mxu0 %v5177
    %5658 = vmatpush1.msra.mxu0 %v5176
    %5659 = vmatprep.subr.mxu0 %v5179
    %5660 = vmatpush1.msra.mxu0 %v5178
    %5661 = vmatprep.subr.mxu0 %v5181
    %5662 = vmatpush1.msra.mxu0 %v5180
    %5663 = vmatprep.subr.mxu0 %v5183
    %5664 = vmatpush1.msra.mxu0 %v5182
    %5665 = vmatprep.subr.mxu0 %v5185
    %5666 = vmatpush1.msra.mxu0 %v5184
    %5667 = vmatprep.subr.mxu0 %v5187
    %5668 = vmatpush1.msra.mxu0 %v5186
    %5669 = vmatprep.subr.mxu0 %v5189
    %5670 = vmatpush1.msra.mxu0 %v5188
    %5671 = vmatprep.mubr.f32.mxu0 %v5043
    %5672 = vmatmul.mubr.f32.gmra.mrb[0].mxu0 %v5041
    %v5673 = vpop.f32.mrb[0].mxu0
    %v5674 = vadd.f32 %v5591, %v5673
    %v5675 = vpop.f32.mrb[0].mxu0
    %v5676 = vadd.f32 %v5593, %v5675
    %5677 = vmatprep.mubr.f32.mxu0 %v5049
    %5678 = vmatmul.mubr.f32.gmra.mrb[0].mxu0 %v5047
    %v5679 = vpop.f32.mrb[0].mxu0
    %v5680 = vadd.f32 %v5597, %v5679
    %v5681 = vpop.f32.mrb[0].mxu0
    %v5682 = vadd.f32 %v5599, %v5681
    %5683 = vdwg.mxu0
    %5684 = vmatprep.subr.mxu0 %v5191
    %5685 = vmatpush1.msra.mxu0 %v5190
    %5686 = vmatprep.subr.mxu0 %v5193
    %5687 = vmatpush1.msra.mxu0 %v5192
    %5688 = vmatprep.subr.mxu0 %v5195
    %5689 = vmatpush1.msra.mxu0 %v5194
    %5690 = vmatprep.subr.mxu0 %v5197
    %5691 = vmatpush1.msra.mxu0 %v5196
    %5692 = vmatprep.subr.mxu0 %v5199
    %5693 = vmatpush1.msra.mxu0 %v5198
    %5694 = vmatprep.subr.mxu0 %v5201
    %5695 = vmatpush1.msra.mxu0 %v5200
    %5696 = vmatprep.subr.mxu0 0.0
    %5697 = vmatpush1.msra.mxu0 0.0
    %5698 = vmatprep.subr.mxu0 0.0
    %5699 = vmatpush1.msra.mxu0 0.0
    %5700 = vmatprep.subr.mxu0 0.0
    %5701 = vmatpush1.msra.mxu0 0.0
    %5702 = vmatprep.subr.mxu0 0.0
    %5703 = vmatpush1.msra.mxu0 0.0
    %5704 = vmatprep.subr.mxu0 0.0
    %5705 = vmatpush1.msra.mxu0 0.0
    %5706 = vmatprep.subr.mxu0 0.0
    %5707 = vmatpush1.msra.mxu0 0.0
    %5708 = vmatprep.subr.mxu0 0.0
    %5709 = vmatpush1.msra.mxu0 0.0
    %5710 = vmatprep.subr.mxu0 0.0
    %5711 = vmatpush1.msra.mxu0 0.0
    %5712 = vmatprep.subr.mxu0 0.0
    %5713 = vmatpush1.msra.mxu0 0.0
    %5714 = vmatprep.subr.mxu0 0.0
    %5715 = vmatpush1.msra.mxu0 0.0
    %5716 = vmatprep.subr.mxu0 0.0
    %5717 = vmatpush1.msra.mxu0 0.0
    %5718 = vmatprep.subr.mxu0 0.0
    %5719 = vmatpush1.msra.mxu0 0.0
    %5720 = vmatprep.subr.mxu0 0.0
    %5721 = vmatpush1.msra.mxu0 0.0
    %5722 = vmatprep.subr.mxu0 0.0
    %5723 = vmatpush1.msra.mxu0 0.0
    %5724 = vmatprep.subr.mxu0 0.0
    %5725 = vmatpush1.msra.mxu0 0.0
    %5726 = vmatprep.subr.mxu0 0.0
    %5727 = vmatpush1.msra.mxu0 0.0
    %5728 = vmatprep.subr.mxu0 0.0
    %5729 = vmatpush1.msra.mxu0 0.0
    %5730 = vmatprep.subr.mxu0 0.0
    %5731 = vmatpush1.msra.mxu0 0.0
    %5732 = vmatprep.subr.mxu0 0.0
    %5733 = vmatpush1.msra.mxu0 0.0
    %5734 = vmatprep.subr.mxu0 0.0
    %5735 = vmatpush1.msra.mxu0 0.0
    %5736 = vmatprep.subr.mxu0 0.0
    %5737 = vmatpush1.msra.mxu0 0.0
    %5738 = vmatprep.subr.mxu0 0.0
    %5739 = vmatpush1.msra.mxu0 0.0
    %5740 = vmatprep.subr.mxu0 0.0
    %5741 = vmatpush1.msra.mxu0 0.0
    %5742 = vmatprep.subr.mxu0 0.0
    %5743 = vmatpush1.msra.mxu0 0.0
    %5744 = vmatprep.subr.mxu0 0.0
    %5745 = vmatpush1.msra.mxu0 0.0
    %5746 = vmatprep.subr.mxu0 0.0
    %5747 = vmatpush1.msra.mxu0 0.0
    %5748 = vmatprep.mubr.f32.mxu0 0.0
    %5749 = vmatmul.mubr.f32.gmra.mrb[0].mxu0 %v5602
    %v5750 = vpop.f32.mrb[0].mxu0
    %v5751 = vadd.f32 %v5674, %v5750
    %v5752 = vpop.f32.mrb[0].mxu0
    %v5753 = vadd.f32 %v5676, %v5752
    %5754 = vmatprep.mubr.f32.mxu0 0.0
    %5755 = vmatmul.mubr.f32.gmra.mrb[0].mxu0 %v5605
    %v5756 = vpop.f32.mrb[0].mxu0
    %v5757 = vadd.f32 %v5680, %v5756
    %v5758 = vpop.f32.mrb[0].mxu0
    %v5759 = vadd.f32 %v5682, %v5758
    %5760 = vdwg.mxu0
    %s5761 = scalar_lea.vmem %s7, 32
    %v5762 = vld [vmem:[%s5761] sm:$0xff]
    %v5763 = vld [vmem:[%s5761 + $0x8] sm:$0x1]
    %v5765 = vsel %vm4957, %v5762, 0
    %v5768 = vsel %vm4957, %v5763, 0
    %5770 = vmatprep.subr.mxu0 %v4947
    %5771 = vmatpush1.msra.mxu0 %v4946
    %5772 = vmatprep.subr.mxu0 %v4950
    %5773 = vmatpush1.msra.mxu0 %v4949
    %5774 = vmatprep.subr.mxu0 %v4969
    %5775 = vmatpush1.msra.mxu0 %v4966
    %5776 = vmatprep.subr.mxu0 0.0
    %5777 = vmatpush1.msra.mxu0 0.0
    %5778 = vmatprep.subr.mxu0 0.0
    %5779 = vmatpush1.msra.mxu0 0.0
    %5780 = vmatprep.subr.mxu0 0.0
    %5781 = vmatpush1.msra.mxu0 0.0
    %5782 = vmatprep.subr.mxu0 0.0
    %5783 = vmatpush1.msra.mxu0 0.0
    %5784 = vmatprep.subr.mxu0 0.0
    %5785 = vmatpush1.msra.mxu0 0.0
    %5786 = vmatprep.subr.mxu0 0.0
    %5787 = vmatpush1.msra.mxu0 0.0
    %5788 = vmatprep.subr.mxu0 0.0
    %5789 = vmatpush1.msra.mxu0 0.0
    %5790 = vmatprep.subr.mxu0 0.0
    %5791 = vmatpush1.msra.mxu0 0.0
    %5792 = vmatprep.subr.mxu0 0.0
    %5793 = vmatpush1.msra.mxu0 0.0
    %5794 = vmatprep.subr.mxu0 0.0
    %5795 = vmatpush1.msra.mxu0 0.0
    %5796 = vmatprep.subr.mxu0 0.0
    %5797 = vmatpush1.msra.mxu0 0.0
    %5798 = vmatprep.subr.mxu0 0.0
    %5799 = vmatpush1.msra.mxu0 0.0
    %5800 = vmatprep.subr.mxu0 0.0
    %5801 = vmatpush1.msra.mxu0 0.0
    %5802 = vmatprep.subr.mxu0 0.0
    %5803 = vmatpush1.msra.mxu0 0.0
    %5804 = vmatprep.subr.mxu0 0.0
    %5805 = vmatpush1.msra.mxu0 0.0
    %5806 = vmatprep.subr.mxu0 0.0
    %5807 = vmatpush1.msra.mxu0 0.0
    %5808 = vmatprep.subr.mxu0 0.0
    %5809 = vmatpush1.msra.mxu0 0.0
    %5810 = vmatprep.subr.mxu0 0.0
    %5811 = vmatpush1.msra.mxu0 0.0
    %5812 = vmatprep.subr.mxu0 0.0
    %5813 = vmatpush1.msra.mxu0 0.0
    %5814 = vmatprep.subr.mxu0 0.0
    %5815 = vmatpush1.msra.mxu0 0.0
    %5816 = vmatprep.subr.mxu0 0.0
    %5817 = vmatpush1.msra.mxu0 0.0
    %5818 = vmatprep.subr.mxu0 0.0
    %5819 = vmatpush1.msra.mxu0 0.0
    %5820 = vmatprep.subr.mxu0 0.0
    %5821 = vmatpush1.msra.mxu0 0.0
    %5822 = vmatprep.subr.mxu0 0.0
    %5823 = vmatpush1.msra.mxu0 0.0
    %5824 = vmatprep.subr.mxu0 0.0
    %5825 = vmatpush1.msra.mxu0 0.0
    %5826 = vmatprep.subr.mxu0 0.0
    %5827 = vmatpush1.msra.mxu0 0.0
    %5828 = vmatprep.subr.mxu0 0.0
    %5829 = vmatpush1.msra.mxu0 0.0
    %5830 = vmatprep.subr.mxu0 0.0
    %5831 = vmatpush1.msra.mxu0 0.0
    %5832 = vmatprep.subr.mxu0 0.0
    %5833 = vmatpush1.msra.mxu0 0.0
    %5834 = vmatprep.mubr.f32.mxu0 0.0
    %5835 = vmatmul.mubr.f32.gmra.mrb[0].mxu0 %v5765
    %v5836 = vpop.f32.mrb[0].mxu0
    %v5837 = vadd.f32 0.0, %v5836
    %v5838 = vpop.f32.mrb[0].mxu0
    %v5839 = vadd.f32 0.0, %v5838
    %5840 = vmatprep.mubr.f32.mxu0 0.0
    %5841 = vmatmul.mubr.f32.gmra.mrb[0].mxu0 %v5768
    %v5842 = vpop.f32.mrb[0].mxu0
    %v5843 = vadd.f32 0.0, %v5842
    %v5844 = vpop.f32.mrb[0].mxu0
    %v5845 = vadd.f32 0.0, %v5844
    %5846 = vdwg.mxu0
    %5847 = vmatprep.subr.mxu0 0.0
    %5848 = vmatpush1.msra.mxu0 %v4948
    %5849 = vmatprep.subr.mxu0 0.0
    %5850 = vmatpush1.msra.mxu0 %v4951
    %5851 = vmatprep.subr.mxu0 0.0
    %5852 = vmatpush1.msra.mxu0 %v4972
    %5853 = vmatprep.subr.mxu0 0.0
    %5854 = vmatpush1.msra.mxu0 0.0
    %5855 = vmatprep.subr.mxu0 0.0
    %5856 = vmatpush1.msra.mxu0 0.0
    %5857 = vmatprep.subr.mxu0 0.0
    %5858 = vmatpush1.msra.mxu0 0.0
    %5859 = vmatprep.subr.mxu0 0.0
    %5860 = vmatpush1.msra.mxu0 0.0
    %5861 = vmatprep.subr.mxu0 0.0
    %5862 = vmatpush1.msra.mxu0 0.0
    %5863 = vmatprep.subr.mxu0 0.0
    %5864 = vmatpush1.msra.mxu0 0.0
    %5865 = vmatprep.subr.mxu0 0.0
    %5866 = vmatpush1.msra.mxu0 0.0
    %5867 = vmatprep.subr.mxu0 0.0
    %5868 = vmatpush1.msra.mxu0 0.0
    %5869 = vmatprep.subr.mxu0 0.0
    %5870 = vmatpush1.msra.mxu0 0.0
    %5871 = vmatprep.subr.mxu0 0.0
    %5872 = vmatpush1.msra.mxu0 0.0
    %5873 = vmatprep.subr.mxu0 0.0
    %5874 = vmatpush1.msra.mxu0 0.0
    %5875 = vmatprep.subr.mxu0 0.0
    %5876 = vmatpush1.msra.mxu0 0.0
    %5877 = vmatprep.subr.mxu0 0.0
    %5878 = vmatpush1.msra.mxu0 0.0
    %5879 = vmatprep.subr.mxu0 0.0
    %5880 = vmatpush1.msra.mxu0 0.0
    %5881 = vmatprep.subr.mxu0 0.0
    %5882 = vmatpush1.msra.mxu0 0.0
    %5883 = vmatprep.subr.mxu0 0.0
    %5884 = vmatpush1.msra.mxu0 0.0
    %5885 = vmatprep.subr.mxu0 0.0
    %5886 = vmatpush1.msra.mxu0 0.0
    %5887 = vmatprep.subr.mxu0 0.0
    %5888 = vmatpush1.msra.mxu0 0.0
    %5889 = vmatprep.subr.mxu0 0.0
    %5890 = vmatpush1.msra.mxu0 0.0
    %5891 = vmatprep.subr.mxu0 0.0
    %5892 = vmatpush1.msra.mxu0 0.0
    %5893 = vmatprep.subr.mxu0 0.0
    %5894 = vmatpush1.msra.mxu0 0.0
    %5895 = vmatprep.subr.mxu0 0.0
    %5896 = vmatpush1.msra.mxu0 0.0
    %5897 = vmatprep.subr.mxu0 0.0
    %5898 = vmatpush1.msra.mxu0 0.0
    %5899 = vmatprep.subr.mxu0 0.0
    %5900 = vmatpush1.msra.mxu0 0.0
    %5901 = vmatprep.subr.mxu0 0.0
    %5902 = vmatpush1.msra.mxu0 0.0
    %5903 = vmatprep.subr.mxu0 0.0
    %5904 = vmatpush1.msra.mxu0 0.0
    %5905 = vmatprep.subr.mxu0 0.0
    %5906 = vmatpush1.msra.mxu0 0.0
    %5907 = vmatprep.subr.mxu0 0.0
    %5908 = vmatpush1.msra.mxu0 0.0
    %5909 = vmatprep.subr.mxu0 0.0
    %5910 = vmatpush1.msra.mxu0 0.0
    %5911 = vmatprep.mubr.f32.mxu0 0.0
    %5912 = vmatmul.mubr.f32.gmra.mrb[0].mxu0 %v5765
    %v5913 = vpop.f32.mrb[0].mxu0
    %v5914 = vadd.f32 0.0, %v5913
    %v5915 = vpop.f32.mrb[0].mxu0
    %5916 = vmatprep.mubr.f32.mxu0 0.0
    %5917 = vmatmul.mubr.f32.gmra.mrb[0].mxu0 %v5768
    %v5918 = vpop.f32.mrb[0].mxu0
    %v5919 = vadd.f32 0.0, %v5918
    %v5920 = vpop.f32.mrb[0].mxu0
    %5921 = vdwg.mxu0
    %s5922 = scalar_lea.vmem %s8, 1216
    %v5923 = vld [vmem:[%s5922] sm:$0xff]
    %v5924 = vld [vmem:[%s5922 + $0x8] sm:$0xff]
    %v5925 = vld [vmem:[%s5922 + $0x10] sm:$0xff]
    %v5926 = vld [vmem:[%s5922 + $0x18] sm:$0xff]
    %v5927 = vld [vmem:[%s5922 + $0x20] sm:$0xff]
    %v5928 = vld [vmem:[%s5922 + $0x28] sm:$0xff]
    %v5929 = vld [vmem:[%s5922 + $0x30] sm:$0xff]
    %v5930 = vld [vmem:[%s5922 + $0x38] sm:$0xff]
    %v5931 = vld [vmem:[%s5922 + $0x40] sm:$0xff]
    %v5932 = vld [vmem:[%s5922 + $0x48] sm:$0xff]
    %v5933 = vld [vmem:[%s5922 + $0x50] sm:$0xff]
    %v5934 = vld [vmem:[%s5922 + $0x58] sm:$0xff]
    %v5935 = vld [vmem:[%s5922 + $0x60] sm:$0xff]
    %v5936 = vld [vmem:[%s5922 + $0x68] sm:$0xff]
    %v5937 = vld [vmem:[%s5922 + $0x70] sm:$0xff]
    %v5938 = vld [vmem:[%s5922 + $0x78] sm:$0xff]
    %v5939 = vld [vmem:[%s5922 + $0x80] sm:$0xff]
    %v5940 = vld [vmem:[%s5922 + $0x88] sm:$0xff]
    %v5941 = vld [vmem:[%s5922 + $0x90] sm:$0xff]
    %v5942 = vld [vmem:[%s5922 + $0x98] sm:$0xff]
    %v5943 = vld [vmem:[%s5922 + $0xa0] sm:$0xff]
    %v5944 = vld [vmem:[%s5922 + $0xa8] sm:$0xff]
    %v5945 = vld [vmem:[%s5922 + $0xb0] sm:$0xff]
    %v5946 = vld [vmem:[%s5922 + $0xb8] sm:$0xff]
    %v5947 = vld [vmem:[%s5922 + $0xc0] sm:$0xff]
    %v5948 = vld [vmem:[%s5922 + $0xc8] sm:$0xff]
    %v5949 = vld [vmem:[%s5922 + $0xd0] sm:$0xff]
    %v5950 = vld [vmem:[%s5922 + $0xd8] sm:$0xff]
    %v5951 = vld [vmem:[%s5922 + $0xe0] sm:$0xff]
    %v5952 = vld [vmem:[%s5922 + $0xe8] sm:$0xff]
    %v5953 = vld [vmem:[%s5922 + $0xf0] sm:$0xff]
    %v5954 = vld [vmem:[%s5922 + $0xf8] sm:$0xff]
    %v5955 = vld [vmem:[%s5922 + $0x100] sm:$0xff]
    %v5956 = vld [vmem:[%s5922 + $0x108] sm:$0xff]
    %v5957 = vld [vmem:[%s5922 + $0x110] sm:$0xff]
    %v5958 = vld [vmem:[%s5922 + $0x118] sm:$0xff]
    %v5959 = vld [vmem:[%s5922 + $0x120] sm:$0xff]
    %v5960 = vld [vmem:[%s5922 + $0x128] sm:$0xff]
    %v5961 = vld [vmem:[%s5922 + $0x130] sm:$0xff]
    %v5962 = vld [vmem:[%s5922 + $0x138] sm:$0xff]
    %v5963 = vld [vmem:[%s5922 + $0x140] sm:$0xff]
    %v5964 = vld [vmem:[%s5922 + $0x148] sm:$0xff]
    %v5965 = vld [vmem:[%s5922 + $0x150] sm:$0xff]
    %v5966 = vld [vmem:[%s5922 + $0x158] sm:$0xff]
    %v5967 = vld [vmem:[%s5922 + $0x160] sm:$0xff]
    %v5968 = vld [vmem:[%s5922 + $0x168] sm:$0xff]
    %v5969 = vld [vmem:[%s5922 + $0x170] sm:$0xff]
    %v5970 = vld [vmem:[%s5922 + $0x178] sm:$0xff]
    %v5971 = vld [vmem:[%s5922 + $0x180] sm:$0xff]
    %v5972 = vld [vmem:[%s5922 + $0x188] sm:$0xff]
    %v5973 = vld [vmem:[%s5922 + $0x190] sm:$0xff]
    %v5974 = vld [vmem:[%s5922 + $0x198] sm:$0xff]
    %v5975 = vld [vmem:[%s5922 + $0x1a0] sm:$0xff]
    %v5976 = vld [vmem:[%s5922 + $0x1a8] sm:$0xff]
    %v5977 = vld [vmem:[%s5922 + $0x1b0] sm:$0xff]
    %v5978 = vld [vmem:[%s5922 + $0x1b8] sm:$0xff]
    %v5979 = vld [vmem:[%s5922 + $0x1c0] sm:$0xff]
    %v5980 = vld [vmem:[%s5922 + $0x1c8] sm:$0xff]
    %v5981 = vld [vmem:[%s5922 + $0x1d0] sm:$0xff]
    %v5982 = vld [vmem:[%s5922 + $0x1d8] sm:$0xff]
    %v5983 = vld [vmem:[%s5922 + $0x1e0] sm:$0xff]
    %v5984 = vld [vmem:[%s5922 + $0x1e8] sm:$0xff]
    %v5985 = vld [vmem:[%s5922 + $0x1f0] sm:$0xff]
    %v5986 = vld [vmem:[%s5922 + $0x1f8] sm:$0xff]
    %v5987 = vld [vmem:[%s5922 + $0x200] sm:$0xff]
    %v5988 = vld [vmem:[%s5922 + $0x208] sm:$0xff]
    %v5989 = vld [vmem:[%s5922 + $0x210] sm:$0xff]
    %v5990 = vld [vmem:[%s5922 + $0x218] sm:$0xff]
    %v5991 = vld [vmem:[%s5922 + $0x220] sm:$0xff]
    %v5992 = vld [vmem:[%s5922 + $0x228] sm:$0xff]
    %v5993 = vld [vmem:[%s5922 + $0x230] sm:$0xff]
    %v5994 = vld [vmem:[%s5922 + $0x238] sm:$0xff]
    %v5995 = vld [vmem:[%s5922 + $0x240] sm:$0xff]
    %v5996 = vld [vmem:[%s5922 + $0x248] sm:$0xff]
    %v5997 = vld [vmem:[%s5922 + $0x250] sm:$0xff]
    %v5998 = vld [vmem:[%s5922 + $0x258] sm:$0xff]
    %v6000 = vsel %vm5440, %v5914, 0
    %v6003 = vsel %vm5440, %v5919, 0
    %6005 = vmatprep.subr.mxu0 %v5924
    %6006 = vmatpush1.msra.mxu0 %v5923
    %6007 = vmatprep.subr.mxu0 %v5926
    %6008 = vmatpush1.msra.mxu0 %v5925
    %6009 = vmatprep.subr.mxu0 %v5928
    %6010 = vmatpush1.msra.mxu0 %v5927
    %6011 = vmatprep.subr.mxu0 %v5930
    %6012 = vmatpush1.msra.mxu0 %v5929
    %6013 = vmatprep.subr.mxu0 %v5932
    %6014 = vmatpush1.msra.mxu0 %v5931
    %6015 = vmatprep.subr.mxu0 %v5934
    %6016 = vmatpush1.msra.mxu0 %v5933
    %6017 = vmatprep.subr.mxu0 %v5936
    %6018 = vmatpush1.msra.mxu0 %v5935
    %6019 = vmatprep.subr.mxu0 %v5938
    %6020 = vmatpush1.msra.mxu0 %v5937
    %6021 = vmatprep.subr.mxu0 %v5940
    %6022 = vmatpush1.msra.mxu0 %v5939
    %6023 = vmatprep.subr.mxu0 %v5942
    %6024 = vmatpush1.msra.mxu0 %v5941
    %6025 = vmatprep.subr.mxu0 %v5944
    %6026 = vmatpush1.msra.mxu0 %v5943
    %6027 = vmatprep.subr.mxu0 %v5946
    %6028 = vmatpush1.msra.mxu0 %v5945
    %6029 = vmatprep.subr.mxu0 %v5948
    %6030 = vmatpush1.msra.mxu0 %v5947
    %6031 = vmatprep.subr.mxu0 %v5950
    %6032 = vmatpush1.msra.mxu0 %v5949
    %6033 = vmatprep.subr.mxu0 %v5952
    %6034 = vmatpush1.msra.mxu0 %v5951
    %6035 = vmatprep.subr.mxu0 %v5954
    %6036 = vmatpush1.msra.mxu0 %v5953
    %6037 = vmatprep.subr.mxu0 %v5956
    %6038 = vmatpush1.msra.mxu0 %v5955
    %6039 = vmatprep.subr.mxu0 %v5958
    %6040 = vmatpush1.msra.mxu0 %v5957
    %6041 = vmatprep.subr.mxu0 %v5960
    %6042 = vmatpush1.msra.mxu0 %v5959
    %6043 = vmatprep.subr.mxu0 %v5962
    %6044 = vmatpush1.msra.mxu0 %v5961
    %6045 = vmatprep.subr.mxu0 %v5964
    %6046 = vmatpush1.msra.mxu0 %v5963
    %6047 = vmatprep.subr.mxu0 %v5966
    %6048 = vmatpush1.msra.mxu0 %v5965
    %6049 = vmatprep.subr.mxu0 %v5968
    %6050 = vmatpush1.msra.mxu0 %v5967
    %6051 = vmatprep.subr.mxu0 %v5970
    %6052 = vmatpush1.msra.mxu0 %v5969
    %6053 = vmatprep.subr.mxu0 %v5972
    %6054 = vmatpush1.msra.mxu0 %v5971
    %6055 = vmatprep.subr.mxu0 %v5974
    %6056 = vmatpush1.msra.mxu0 %v5973
    %6057 = vmatprep.subr.mxu0 %v5976
    %6058 = vmatpush1.msra.mxu0 %v5975
    %6059 = vmatprep.subr.mxu0 %v5978
    %6060 = vmatpush1.msra.mxu0 %v5977
    %6061 = vmatprep.subr.mxu0 %v5980
    %6062 = vmatpush1.msra.mxu0 %v5979
    %6063 = vmatprep.subr.mxu0 %v5982
    %6064 = vmatpush1.msra.mxu0 %v5981
    %6065 = vmatprep.subr.mxu0 %v5984
    %6066 = vmatpush1.msra.mxu0 %v5983
    %6067 = vmatprep.subr.mxu0 %v5986
    %6068 = vmatpush1.msra.mxu0 %v5985
    %6069 = vmatprep.mubr.f32.mxu0 %v5839
    %6070 = vmatmul.mubr.f32.gmra.mrb[0].mxu0 %v5837
    %v6071 = vpop.f32.mrb[0].mxu0
    %v6072 = vadd.f32 0.0, %v6071
    %v6073 = vpop.f32.mrb[0].mxu0
    %v6074 = vadd.f32 0.0, %v6073
    %6075 = vmatprep.mubr.f32.mxu0 %v5845
    %6076 = vmatmul.mubr.f32.gmra.mrb[0].mxu0 %v5843
    %v6077 = vpop.f32.mrb[0].mxu0
    %v6078 = vadd.f32 0.0, %v6077
    %v6079 = vpop.f32.mrb[0].mxu0
    %v6080 = vadd.f32 0.0, %v6079
    %6081 = vdwg.mxu0
    %6082 = vmatprep.subr.mxu0 %v5988
    %6083 = vmatpush1.msra.mxu0 %v5987
    %6084 = vmatprep.subr.mxu0 %v5990
    %6085 = vmatpush1.msra.mxu0 %v5989
    %6086 = vmatprep.subr.mxu0 %v5992
    %6087 = vmatpush1.msra.mxu0 %v5991
    %6088 = vmatprep.subr.mxu0 %v5994
    %6089 = vmatpush1.msra.mxu0 %v5993
    %6090 = vmatprep.subr.mxu0 %v5996
    %6091 = vmatpush1.msra.mxu0 %v5995
    %6092 = vmatprep.subr.mxu0 %v5998
    %6093 = vmatpush1.msra.mxu0 %v5997
    %6094 = vmatprep.subr.mxu0 0.0
    %6095 = vmatpush1.msra.mxu0 0.0
    %6096 = vmatprep.subr.mxu0 0.0
    %6097 = vmatpush1.msra.mxu0 0.0
    %6098 = vmatprep.subr.mxu0 0.0
    %6099 = vmatpush1.msra.mxu0 0.0
    %6100 = vmatprep.subr.mxu0 0.0
    %6101 = vmatpush1.msra.mxu0 0.0
    %6102 = vmatprep.subr.mxu0 0.0
    %6103 = vmatpush1.msra.mxu0 0.0
    %6104 = vmatprep.subr.mxu0 0.0
    %6105 = vmatpush1.msra.mxu0 0.0
    %6106 = vmatprep.subr.mxu0 0.0
    %6107 = vmatpush1.msra.mxu0 0.0
    %6108 = vmatprep.subr.mxu0 0.0
    %6109 = vmatpush1.msra.mxu0 0.0
    %6110 = vmatprep.subr.mxu0 0.0
    %6111 = vmatpush1.msra.mxu0 0.0
    %6112 = vmatprep.subr.mxu0 0.0
    %6113 = vmatpush1.msra.mxu0 0.0
    %6114 = vmatprep.subr.mxu0 0.0
    %6115 = vmatpush1.msra.mxu0 0.0
    %6116 = vmatprep.subr.mxu0 0.0
    %6117 = vmatpush1.msra.mxu0 0.0
    %6118 = vmatprep.subr.mxu0 0.0
    %6119 = vmatpush1.msra.mxu0 0.0
    %6120 = vmatprep.subr.mxu0 0.0
    %6121 = vmatpush1.msra.mxu0 0.0
    %6122 = vmatprep.subr.mxu0 0.0
    %6123 = vmatpush1.msra.mxu0 0.0
    %6124 = vmatprep.subr.mxu0 0.0
    %6125 = vmatpush1.msra.mxu0 0.0
    %6126 = vmatprep.subr.mxu0 0.0
    %6127 = vmatpush1.msra.mxu0 0.0
    %6128 = vmatprep.subr.mxu0 0.0
    %6129 = vmatpush1.msra.mxu0 0.0
    %6130 = vmatprep.subr.mxu0 0.0
    %6131 = vmatpush1.msra.mxu0 0.0
    %6132 = vmatprep.subr.mxu0 0.0
    %6133 = vmatpush1.msra.mxu0 0.0
    %6134 = vmatprep.subr.mxu0 0.0
    %6135 = vmatpush1.msra.mxu0 0.0
    %6136 = vmatprep.subr.mxu0 0.0
    %6137 = vmatpush1.msra.mxu0 0.0
    %6138 = vmatprep.subr.mxu0 0.0
    %6139 = vmatpush1.msra.mxu0 0.0
    %6140 = vmatprep.subr.mxu0 0.0
    %6141 = vmatpush1.msra.mxu0 0.0
    %6142 = vmatprep.subr.mxu0 0.0
    %6143 = vmatpush1.msra.mxu0 0.0
    %6144 = vmatprep.subr.mxu0 0.0
    %6145 = vmatpush1.msra.mxu0 0.0
    %6146 = vmatprep.mubr.f32.mxu0 0.0
    %6147 = vmatmul.mubr.f32.gmra.mrb[0].mxu0 %v6000
    %v6148 = vpop.f32.mrb[0].mxu0
    %v6149 = vadd.f32 %v6072, %v6148
    %v6150 = vpop.f32.mrb[0].mxu0
    %v6151 = vadd.f32 %v6074, %v6150
    %6152 = vmatprep.mubr.f32.mxu0 0.0
    %6153 = vmatmul.mubr.f32.gmra.mrb[0].mxu0 %v6003
    %v6154 = vpop.f32.mrb[0].mxu0
    %v6155 = vadd.f32 %v6078, %v6154
    %v6156 = vpop.f32.mrb[0].mxu0
    %v6157 = vadd.f32 %v6080, %v6156
    %6158 = vdwg.mxu0
    %v6159 = vadd.f32 %v5751, %v6149
    %v6160 = vadd.f32 %v5753, %v6151
    %v6161 = vadd.f32 %v5757, %v6155
    %v6162 = vadd.f32 %v5759, %v6157
    %v6163 = vld [vmem:[%s9] sm:$0x3]
    %v6165 = vlaneseq
    %v6166 = vshrl.u32 %v6165, 7
    %v6167 = vsub.s32 0, %v6166
    %v6168 = vrot.slane %v6163, %v6167
    %v6169 = vlaneseq
    %v6170 = vshrl.u32 %v6169, 7
    %v6171 = vsub.s32 1, %v6170
    %v6172 = vrot.slane %v6163, %v6171
    %v6175 = vadd.f32 %v6159, %v6168
    %v6176 = vadd.f32 %v6160, %v6172
    %v6177 = vadd.f32 %v6161, %v6168
    %v6178 = vadd.f32 %v6162, %v6172
    %v6179 = vmax.f32 %v6175, 0.0
    %v6180 = vmax.f32 %v6176, 0.0
    %v6181 = vmax.f32 %v6177, 0.0
    %v6182 = vmax.f32 %v6178, 0.0
    %v6183 = vld [vmem:[%s10] sm:$0xf]
    %vm6184 = vcmask 72704
    %v6186 = vsel %vm6184, %v6183, 0
    %vm6188 = vcmask 1040384
    %v6190 = vsel %vm6188, %v6181, 0
    %v6193 = vsel %vm6188, %v6182, 0
    %6195 = vmatprep.subr.mxu0 %v6180
    %6196 = vmatpush1.msra.mxu0 %v6179
    %6197 = vmatprep.subr.mxu0 %v6193
    %6198 = vmatpush1.msra.mxu0 %v6190
    %6199 = vmatprep.subr.mxu0 0.0
    %6200 = vmatpush1.msra.mxu0 0.0
    %6201 = vmatprep.subr.mxu0 0.0
    %6202 = vmatpush1.msra.mxu0 0.0
    %6203 = vmatprep.subr.mxu0 0.0
    %6204 = vmatpush1.msra.mxu0 0.0
    %6205 = vmatprep.subr.mxu0 0.0
    %6206 = vmatpush1.msra.mxu0 0.0
    %6207 = vmatprep.subr.mxu0 0.0
    %6208 = vmatpush1.msra.mxu0 0.0
    %6209 = vmatprep.subr.mxu0 0.0
    %6210 = vmatpush1.msra.mxu0 0.0
    %6211 = vmatprep.subr.mxu0 0.0
    %6212 = vmatpush1.msra.mxu0 0.0
    %6213 = vmatprep.subr.mxu0 0.0
    %6214 = vmatpush1.msra.mxu0 0.0
    %6215 = vmatprep.subr.mxu0 0.0
    %6216 = vmatpush1.msra.mxu0 0.0
    %6217 = vmatprep.subr.mxu0 0.0
    %6218 = vmatpush1.msra.mxu0 0.0
    %6219 = vmatprep.subr.mxu0 0.0
    %6220 = vmatpush1.msra.mxu0 0.0
    %6221 = vmatprep.subr.mxu0 0.0
    %6222 = vmatpush1.msra.mxu0 0.0
    %6223 = vmatprep.subr.mxu0 0.0
    %6224 = vmatpush1.msra.mxu0 0.0
    %6225 = vmatprep.subr.mxu0 0.0
    %6226 = vmatpush1.msra.mxu0 0.0
    %6227 = vmatprep.subr.mxu0 0.0
    %6228 = vmatpush1.msra.mxu0 0.0
    %6229 = vmatprep.subr.mxu0 0.0
    %6230 = vmatpush1.msra.mxu0 0.0
    %6231 = vmatprep.subr.mxu0 0.0
    %6232 = vmatpush1.msra.mxu0 0.0
    %6233 = vmatprep.subr.mxu0 0.0
    %6234 = vmatpush1.msra.mxu0 0.0
    %6235 = vmatprep.subr.mxu0 0.0
    %6236 = vmatpush1.msra.mxu0 0.0
    %6237 = vmatprep.subr.mxu0 0.0
    %6238 = vmatpush1.msra.mxu0 0.0
    %6239 = vmatprep.subr.mxu0 0.0
    %6240 = vmatpush1.msra.mxu0 0.0
    %6241 = vmatprep.subr.mxu0 0.0
    %6242 = vmatpush1.msra.mxu0 0.0
    %6243 = vmatprep.subr.mxu0 0.0
    %6244 = vmatpush1.msra.mxu0 0.0
    %6245 = vmatprep.subr.mxu0 0.0
    %6246 = vmatpush1.msra.mxu0 0.0
    %6247 = vmatprep.subr.mxu0 0.0
    %6248 = vmatpush1.msra.mxu0 0.0
    %6249 = vmatprep.subr.mxu0 0.0
    %6250 = vmatpush1.msra.mxu0 0.0
    %6251 = vmatprep.subr.mxu0 0.0
    %6252 = vmatpush1.msra.mxu0 0.0
    %6253 = vmatprep.subr.mxu0 0.0
    %6254 = vmatpush1.msra.mxu0 0.0
    %6255 = vmatprep.subr.mxu0 0.0
    %6256 = vmatpush1.msra.mxu0 0.0
    %6257 = vmatprep.subr.mxu0 0.0
    %6258 = vmatpush1.msra.mxu0 0.0
    %6259 = vmatprep.mubr.f32.mxu0 0.0
    %6260 = vmatmul.mubr.f32.gmra.mrb[0].mxu0 %v6186
    %v6261 = vpop.f32.mrb[0].mxu0
    %v6262 = vadd.f32 0.0, %v6261
    %v6263 = vpop.f32.mrb[0].mxu0
    %v6264 = vadd.f32 0.0, %v6263
    %6265 = vdwg.mxu0
    %v6266 = vld [vmem:[%s11] sm:$0xff]
    %v6267 = vld [vmem:[%s11 + $0x8] sm:$0xff]
    %v6268 = vld [vmem:[%s11 + $0x10] sm:$0xff]
    %v6269 = vld [vmem:[%s11 + $0x18] sm:$0xff]
    %v6270 = vld [vmem:[%s11 + $0x20] sm:$0xff]
    %v6271 = vld [vmem:[%s11 + $0x28] sm:$0xff]
    %v6272 = vld [vmem:[%s11 + $0x30] sm:$0xff]
    %v6273 = vld [vmem:[%s11 + $0x38] sm:$0xff]
    %v6274 = vld [vmem:[%s11 + $0x40] sm:$0xff]
    %v6275 = vld [vmem:[%s11 + $0x48] sm:$0xff]
    %v6276 = vld [vmem:[%s11 + $0x50] sm:$0xff]
    %v6277 = vld [vmem:[%s11 + $0x58] sm:$0xff]
    %v6278 = vld [vmem:[%s11 + $0x60] sm:$0xff]
    %v6279 = vld [vmem:[%s11 + $0x68] sm:$0xff]
    %v6280 = vld [vmem:[%s11 + $0x70] sm:$0xff]
    %v6281 = vld [vmem:[%s11 + $0x78] sm:$0xff]
    %v6282 = vld [vmem:[%s11 + $0x80] sm:$0xff]
    %v6283 = vld [vmem:[%s11 + $0x88] sm:$0xff]
    %s6284 = scalar_lea.vmem %s10, 4
    %v6285 = vld [vmem:[%s6284] sm:$0xf]
    %v6287 = vsel %vm6184, %v6285, 0
    %6289 = vmatprep.subr.mxu0 %v6180
    %6290 = vmatpush1.msra.mxu0 %v6179
    %6291 = vmatprep.subr.mxu0 %v6193
    %6292 = vmatpush1.msra.mxu0 %v6190
    %6293 = vmatprep.subr.mxu0 0.0
    %6294 = vmatpush1.msra.mxu0 0.0
    %6295 = vmatprep.subr.mxu0 0.0
    %6296 = vmatpush1.msra.mxu0 0.0
    %6297 = vmatprep.subr.mxu0 0.0
    %6298 = vmatpush1.msra.mxu0 0.0
    %6299 = vmatprep.subr.mxu0 0.0
    %6300 = vmatpush1.msra.mxu0 0.0
    %6301 = vmatprep.subr.mxu0 0.0
    %6302 = vmatpush1.msra.mxu0 0.0
    %6303 = vmatprep.subr.mxu0 0.0
    %6304 = vmatpush1.msra.mxu0 0.0
    %6305 = vmatprep.subr.mxu0 0.0
    %6306 = vmatpush1.msra.mxu0 0.0
    %6307 = vmatprep.subr.mxu0 0.0
    %6308 = vmatpush1.msra.mxu0 0.0
    %6309 = vmatprep.subr.mxu0 0.0
    %6310 = vmatpush1.msra.mxu0 0.0
    %6311 = vmatprep.subr.mxu0 0.0
    %6312 = vmatpush1.msra.mxu0 0.0
    %6313 = vmatprep.subr.mxu0 0.0
    %6314 = vmatpush1.msra.mxu0 0.0
    %6315 = vmatprep.subr.mxu0 0.0
    %6316 = vmatpush1.msra.mxu0 0.0
    %6317 = vmatprep.subr.mxu0 0.0
    %6318 = vmatpush1.msra.mxu0 0.0
    %6319 = vmatprep.subr.mxu0 0.0
    %6320 = vmatpush1.msra.mxu0 0.0
    %6321 = vmatprep.subr.mxu0 0.0
    %6322 = vmatpush1.msra.mxu0 0.0
    %6323 = vmatprep.subr.mxu0 0.0
    %6324 = vmatpush1.msra.mxu0 0.0
    %6325 = vmatprep.subr.mxu0 0.0
    %6326 = vmatpush1.msra.mxu0 0.0
    %6327 = vmatprep.subr.mxu0 0.0
    %6328 = vmatpush1.msra.mxu0 0.0
    %6329 = vmatprep.subr.mxu0 0.0
    %6330 = vmatpush1.msra.mxu0 0.0
    %6331 = vmatprep.subr.mxu0 0.0
    %6332 = vmatpush1.msra.mxu0 0.0
    %6333 = vmatprep.subr.mxu0 0.0
    %6334 = vmatpush1.msra.mxu0 0.0
    %6335 = vmatprep.subr.mxu0 0.0
    %6336 = vmatpush1.msra.mxu0 0.0
    %6337 = vmatprep.subr.mxu0 0.0
    %6338 = vmatpush1.msra.mxu0 0.0
    %6339 = vmatprep.subr.mxu0 0.0
    %6340 = vmatpush1.msra.mxu0 0.0
    %6341 = vmatprep.subr.mxu0 0.0
    %6342 = vmatpush1.msra.mxu0 0.0
    %6343 = vmatprep.subr.mxu0 0.0
    %6344 = vmatpush1.msra.mxu0 0.0
    %6345 = vmatprep.subr.mxu0 0.0
    %6346 = vmatpush1.msra.mxu0 0.0
    %6347 = vmatprep.subr.mxu0 0.0
    %6348 = vmatpush1.msra.mxu0 0.0
    %6349 = vmatprep.subr.mxu0 0.0
    %6350 = vmatpush1.msra.mxu0 0.0
    %6351 = vmatprep.subr.mxu0 0.0
    %6352 = vmatpush1.msra.mxu0 0.0
    %6353 = vmatprep.mubr.f32.mxu0 0.0
    %6354 = vmatmul.mubr.f32.gmra.mrb[0].mxu0 %v6287
    %v6355 = vpop.f32.mrb[0].mxu0
    %v6356 = vadd.f32 0.0, %v6355
    %v6357 = vpop.f32.mrb[0].mxu0
    %v6358 = vadd.f32 0.0, %v6357
    %6359 = vdwg.mxu0
    %s6360 = scalar_lea.vmem %s11, 144
    %v6361 = vld [vmem:[%s6360] sm:$0xff]
    %v6362 = vld [vmem:[%s6360 + $0x8] sm:$0xff]
    %v6363 = vld [vmem:[%s6360 + $0x10] sm:$0xff]
    %v6364 = vld [vmem:[%s6360 + $0x18] sm:$0xff]
    %v6365 = vld [vmem:[%s6360 + $0x20] sm:$0xff]
    %v6366 = vld [vmem:[%s6360 + $0x28] sm:$0xff]
    %v6367 = vld [vmem:[%s6360 + $0x30] sm:$0xff]
    %v6368 = vld [vmem:[%s6360 + $0x38] sm:$0xff]
    %v6369 = vld [vmem:[%s6360 + $0x40] sm:$0xff]
    %v6370 = vld [vmem:[%s6360 + $0x48] sm:$0xff]
    %v6371 = vld [vmem:[%s6360 + $0x50] sm:$0xff]
    %v6372 = vld [vmem:[%s6360 + $0x58] sm:$0xff]
    %v6373 = vld [vmem:[%s6360 + $0x60] sm:$0xff]
    %v6374 = vld [vmem:[%s6360 + $0x68] sm:$0xff]
    %v6375 = vld [vmem:[%s6360 + $0x70] sm:$0xff]
    %v6376 = vld [vmem:[%s6360 + $0x78] sm:$0xff]
    %v6377 = vld [vmem:[%s6360 + $0x80] sm:$0xff]
    %v6378 = vld [vmem:[%s6360 + $0x88] sm:$0xff]
    %vm6379 = vcmask 130048
    %v6381 = vsel %vm6379, %v6358, 0
    %6383 = vmatprep.subr.mxu0 0.0
    %6384 = vmatpush1.msra.mxu0 %v6361
    %6385 = vmatprep.subr.mxu0 0.0
    %6386 = vmatpush1.msra.mxu0 %v6362
    %6387 = vmatprep.subr.mxu0 0.0
    %6388 = vmatpush1.msra.mxu0 %v6363
    %6389 = vmatprep.subr.mxu0 0.0
    %6390 = vmatpush1.msra.mxu0 %v6364
    %6391 = vmatprep.subr.mxu0 0.0
    %6392 = vmatpush1.msra.mxu0 %v6365
    %6393 = vmatprep.subr.mxu0 0.0
    %6394 = vmatpush1.msra.mxu0 %v6366
    %6395 = vmatprep.subr.mxu0 0.0
    %6396 = vmatpush1.msra.mxu0 %v6367
    %6397 = vmatprep.subr.mxu0 0.0
    %6398 = vmatpush1.msra.mxu0 %v6368
    %6399 = vmatprep.subr.mxu0 0.0
    %6400 = vmatpush1.msra.mxu0 %v6369
    %6401 = vmatprep.subr.mxu0 0.0
    %6402 = vmatpush1.msra.mxu0 %v6370
    %6403 = vmatprep.subr.mxu0 0.0
    %6404 = vmatpush1.msra.mxu0 %v6371
    %6405 = vmatprep.subr.mxu0 0.0
    %6406 = vmatpush1.msra.mxu0 %v6372
    %6407 = vmatprep.subr.mxu0 0.0
    %6408 = vmatpush1.msra.mxu0 %v6373
    %6409 = vmatprep.subr.mxu0 0.0
    %6410 = vmatpush1.msra.mxu0 %v6374
    %6411 = vmatprep.subr.mxu0 0.0
    %6412 = vmatpush1.msra.mxu0 %v6375
    %6413 = vmatprep.subr.mxu0 0.0
    %6414 = vmatpush1.msra.mxu0 %v6376
    %6415 = vmatprep.subr.mxu0 0.0
    %6416 = vmatpush1.msra.mxu0 %v6377
    %6417 = vmatprep.subr.mxu0 0.0
    %6418 = vmatpush1.msra.mxu0 %v6378
    %6419 = vmatprep.subr.mxu0 0.0
    %6420 = vmatpush1.msra.mxu0 0.0
    %6421 = vmatprep.subr.mxu0 0.0
    %6422 = vmatpush1.msra.mxu0 0.0
    %6423 = vmatprep.subr.mxu0 0.0
    %6424 = vmatpush1.msra.mxu0 0.0
    %6425 = vmatprep.subr.mxu0 0.0
    %6426 = vmatpush1.msra.mxu0 0.0
    %6427 = vmatprep.subr.mxu0 0.0
    %6428 = vmatpush1.msra.mxu0 0.0
    %6429 = vmatprep.subr.mxu0 0.0
    %6430 = vmatpush1.msra.mxu0 0.0
    %6431 = vmatprep.subr.mxu0 0.0
    %6432 = vmatpush1.msra.mxu0 0.0
    %6433 = vmatprep.subr.mxu0 0.0
    %6434 = vmatpush1.msra.mxu0 0.0
    %6435 = vmatprep.subr.mxu0 0.0
    %6436 = vmatpush1.msra.mxu0 0.0
    %6437 = vmatprep.subr.mxu0 0.0
    %6438 = vmatpush1.msra.mxu0 0.0
    %6439 = vmatprep.subr.mxu0 0.0
    %6440 = vmatpush1.msra.mxu0 0.0
    %6441 = vmatprep.subr.mxu0 0.0
    %6442 = vmatpush1.msra.mxu0 0.0
    %6443 = vmatprep.subr.mxu0 0.0
    %6444 = vmatpush1.msra.mxu0 0.0
    %6445 = vmatprep.subr.mxu0 0.0
    %6446 = vmatpush1.msra.mxu0 0.0
    %6447 = vmatprep.mubr.f32.mxu0 %v6381
    %6448 = vmatmul.mubr.f32.gmra.mrb[0].mxu0 %v6356
    %v6449 = vpop.f32.mrb[0].mxu0
    %v6450 = vadd.f32 0.0, %v6449
    %v6451 = vpop.f32.mrb[0].mxu0
    %6452 = vdwg.mxu0
    %v6454 = vsel %vm6379, %v6264, 0
    %6456 = vmatprep.subr.mxu0 0.0
    %6457 = vmatpush1.msra.mxu0 %v6266
    %6458 = vmatprep.subr.mxu0 0.0
    %6459 = vmatpush1.msra.mxu0 %v6267
    %6460 = vmatprep.subr.mxu0 0.0
    %6461 = vmatpush1.msra.mxu0 %v6268
    %6462 = vmatprep.subr.mxu0 0.0
    %6463 = vmatpush1.msra.mxu0 %v6269
    %6464 = vmatprep.subr.mxu0 0.0
    %6465 = vmatpush1.msra.mxu0 %v6270
    %6466 = vmatprep.subr.mxu0 0.0
    %6467 = vmatpush1.msra.mxu0 %v6271
    %6468 = vmatprep.subr.mxu0 0.0
    %6469 = vmatpush1.msra.mxu0 %v6272
    %6470 = vmatprep.subr.mxu0 0.0
    %6471 = vmatpush1.msra.mxu0 %v6273
    %6472 = vmatprep.subr.mxu0 0.0
    %6473 = vmatpush1.msra.mxu0 %v6274
    %6474 = vmatprep.subr.mxu0 0.0
    %6475 = vmatpush1.msra.mxu0 %v6275
    %6476 = vmatprep.subr.mxu0 0.0
    %6477 = vmatpush1.msra.mxu0 %v6276
    %6478 = vmatprep.subr.mxu0 0.0
    %6479 = vmatpush1.msra.mxu0 %v6277
    %6480 = vmatprep.subr.mxu0 0.0
    %6481 = vmatpush1.msra.mxu0 %v6278
    %6482 = vmatprep.subr.mxu0 0.0
    %6483 = vmatpush1.msra.mxu0 %v6279
    %6484 = vmatprep.subr.mxu0 0.0
    %6485 = vmatpush1.msra.mxu0 %v6280
    %6486 = vmatprep.subr.mxu0 0.0
    %6487 = vmatpush1.msra.mxu0 %v6281
    %6488 = vmatprep.subr.mxu0 0.0
    %6489 = vmatpush1.msra.mxu0 %v6282
    %6490 = vmatprep.subr.mxu0 0.0
    %6491 = vmatpush1.msra.mxu0 %v6283
    %6492 = vmatprep.subr.mxu0 0.0
    %6493 = vmatpush1.msra.mxu0 0.0
    %6494 = vmatprep.subr.mxu0 0.0
    %6495 = vmatpush1.msra.mxu0 0.0
    %6496 = vmatprep.subr.mxu0 0.0
    %6497 = vmatpush1.msra.mxu0 0.0
    %6498 = vmatprep.subr.mxu0 0.0
    %6499 = vmatpush1.msra.mxu0 0.0
    %6500 = vmatprep.subr.mxu0 0.0
    %6501 = vmatpush1.msra.mxu0 0.0
    %6502 = vmatprep.subr.mxu0 0.0
    %6503 = vmatpush1.msra.mxu0 0.0
    %6504 = vmatprep.subr.mxu0 0.0
    %6505 = vmatpush1.msra.mxu0 0.0
    %6506 = vmatprep.subr.mxu0 0.0
    %6507 = vmatpush1.msra.mxu0 0.0
    %6508 = vmatprep.subr.mxu0 0.0
    %6509 = vmatpush1.msra.mxu0 0.0
    %6510 = vmatprep.subr.mxu0 0.0
    %6511 = vmatpush1.msra.mxu0 0.0
    %6512 = vmatprep.subr.mxu0 0.0
    %6513 = vmatpush1.msra.mxu0 0.0
    %6514 = vmatprep.subr.mxu0 0.0
    %6515 = vmatpush1.msra.mxu0 0.0
    %6516 = vmatprep.subr.mxu0 0.0
    %6517 = vmatpush1.msra.mxu0 0.0
    %6518 = vmatprep.subr.mxu0 0.0
    %6519 = vmatpush1.msra.mxu0 0.0
    %6520 = vmatprep.mubr.f32.mxu0 %v6454
    %6521 = vmatmul.mubr.f32.gmra.mrb[0].mxu0 %v6262
    %v6522 = vpop.f32.mrb[0].mxu0
    %v6523 = vadd.f32 %v6450, %v6522
    %v6524 = vpop.f32.mrb[0].mxu0
    %6525 = vdwg.mxu0
    %s6526 = scalar_lea.vmem %s10, 8
    %v6527 = vld [vmem:[%s6526] sm:$0xf]
    %v6529 = vsel %vm6184, %v6527, 0
    %6531 = vmatprep.subr.mxu0 %v6180
    %6532 = vmatpush1.msra.mxu0 %v6179
    %6533 = vmatprep.subr.mxu0 %v6193
    %6534 = vmatpush1.msra.mxu0 %v6190
    %6535 = vmatprep.subr.mxu0 0.0
    %6536 = vmatpush1.msra.mxu0 0.0
    %6537 = vmatprep.subr.mxu0 0.0
    %6538 = vmatpush1.msra.mxu0 0.0
    %6539 = vmatprep.subr.mxu0 0.0
    %6540 = vmatpush1.msra.mxu0 0.0
    %6541 = vmatprep.subr.mxu0 0.0
    %6542 = vmatpush1.msra.mxu0 0.0
    %6543 = vmatprep.subr.mxu0 0.0
    %6544 = vmatpush1.msra.mxu0 0.0
    %6545 = vmatprep.subr.mxu0 0.0
    %6546 = vmatpush1.msra.mxu0 0.0
    %6547 = vmatprep.subr.mxu0 0.0
    %6548 = vmatpush1.msra.mxu0 0.0
    %6549 = vmatprep.subr.mxu0 0.0
    %6550 = vmatpush1.msra.mxu0 0.0
    %6551 = vmatprep.subr.mxu0 0.0
    %6552 = vmatpush1.msra.mxu0 0.0
    %6553 = vmatprep.subr.mxu0 0.0
    %6554 = vmatpush1.msra.mxu0 0.0
    %6555 = vmatprep.subr.mxu0 0.0
    %6556 = vmatpush1.msra.mxu0 0.0
    %6557 = vmatprep.subr.mxu0 0.0
    %6558 = vmatpush1.msra.mxu0 0.0
    %6559 = vmatprep.subr.mxu0 0.0
    %6560 = vmatpush1.msra.mxu0 0.0
    %6561 = vmatprep.subr.mxu0 0.0
    %6562 = vmatpush1.msra.mxu0 0.0
    %6563 = vmatprep.subr.mxu0 0.0
    %6564 = vmatpush1.msra.mxu0 0.0
    %6565 = vmatprep.subr.mxu0 0.0
    %6566 = vmatpush1.msra.mxu0 0.0
    %6567 = vmatprep.subr.mxu0 0.0
    %6568 = vmatpush1.msra.mxu0 0.0
    %6569 = vmatprep.subr.mxu0 0.0
    %6570 = vmatpush1.msra.mxu0 0.0
    %6571 = vmatprep.subr.mxu0 0.0
    %6572 = vmatpush1.msra.mxu0 0.0
    %6573 = vmatprep.subr.mxu0 0.0
    %6574 = vmatpush1.msra.mxu0 0.0
    %6575 = vmatprep.subr.mxu0 0.0
    %6576 = vmatpush1.msra.mxu0 0.0
    %6577 = vmatprep.subr.mxu0 0.0
    %6578 = vmatpush1.msra.mxu0 0.0
    %6579 = vmatprep.subr.mxu0 0.0
    %6580 = vmatpush1.msra.mxu0 0.0
    %6581 = vmatprep.subr.mxu0 0.0
    %6582 = vmatpush1.msra.mxu0 0.0
    %6583 = vmatprep.subr.mxu0 0.0
    %6584 = vmatpush1.msra.mxu0 0.0
    %6585 = vmatprep.subr.mxu0 0.0
    %6586 = vmatpush1.msra.mxu0 0.0
    %6587 = vmatprep.subr.mxu0 0.0
    %6588 = vmatpush1.msra.mxu0 0.0
    %6589 = vmatprep.subr.mxu0 0.0
    %6590 = vmatpush1.msra.mxu0 0.0
    %6591 = vmatprep.subr.mxu0 0.0
    %6592 = vmatpush1.msra.mxu0 0.0
    %6593 = vmatprep.subr.mxu0 0.0
    %6594 = vmatpush1.msra.mxu0 0.0
    %6595 = vmatprep.mubr.f32.mxu0 0.0
    %6596 = vmatmul.mubr.f32.gmra.mrb[0].mxu0 %v6529
    %v6597 = vpop.f32.mrb[0].mxu0
    %v6598 = vadd.f32 0.0, %v6597
    %v6599 = vpop.f32.mrb[0].mxu0
    %v6600 = vadd.f32 0.0, %v6599
    %6601 = vdwg.mxu0
    %s6602 = scalar_lea.vmem %s11, 288
    %v6603 = vld [vmem:[%s6602] sm:$0xff]
    %v6604 = vld [vmem:[%s6602 + $0x8] sm:$0xff]
    %v6605 = vld [vmem:[%s6602 + $0x10] sm:$0xff]
    %v6606 = vld [vmem:[%s6602 + $0x18] sm:$0xff]
    %v6607 = vld [vmem:[%s6602 + $0x20] sm:$0xff]
    %v6608 = vld [vmem:[%s6602 + $0x28] sm:$0xff]
    %v6609 = vld [vmem:[%s6602 + $0x30] sm:$0xff]
    %v6610 = vld [vmem:[%s6602 + $0x38] sm:$0xff]
    %v6611 = vld [vmem:[%s6602 + $0x40] sm:$0xff]
    %v6612 = vld [vmem:[%s6602 + $0x48] sm:$0xff]
    %v6613 = vld [vmem:[%s6602 + $0x50] sm:$0xff]
    %v6614 = vld [vmem:[%s6602 + $0x58] sm:$0xff]
    %v6615 = vld [vmem:[%s6602 + $0x60] sm:$0xff]
    %v6616 = vld [vmem:[%s6602 + $0x68] sm:$0xff]
    %v6617 = vld [vmem:[%s6602 + $0x70] sm:$0xff]
    %v6618 = vld [vmem:[%s6602 + $0x78] sm:$0xff]
    %v6619 = vld [vmem:[%s6602 + $0x80] sm:$0xff]
    %v6620 = vld [vmem:[%s6602 + $0x88] sm:$0xff]
    %v6622 = vsel %vm6379, %v6600, 0
    %6624 = vmatprep.subr.mxu0 0.0
    %6625 = vmatpush1.msra.mxu0 %v6603
    %6626 = vmatprep.subr.mxu0 0.0
    %6627 = vmatpush1.msra.mxu0 %v6604
    %6628 = vmatprep.subr.mxu0 0.0
    %6629 = vmatpush1.msra.mxu0 %v6605
    %6630 = vmatprep.subr.mxu0 0.0
    %6631 = vmatpush1.msra.mxu0 %v6606
    %6632 = vmatprep.subr.mxu0 0.0
    %6633 = vmatpush1.msra.mxu0 %v6607
    %6634 = vmatprep.subr.mxu0 0.0
    %6635 = vmatpush1.msra.mxu0 %v6608
    %6636 = vmatprep.subr.mxu0 0.0
    %6637 = vmatpush1.msra.mxu0 %v6609
    %6638 = vmatprep.subr.mxu0 0.0
    %6639 = vmatpush1.msra.mxu0 %v6610
    %6640 = vmatprep.subr.mxu0 0.0
    %6641 = vmatpush1.msra.mxu0 %v6611
    %6642 = vmatprep.subr.mxu0 0.0
    %6643 = vmatpush1.msra.mxu0 %v6612
    %6644 = vmatprep.subr.mxu0 0.0
    %6645 = vmatpush1.msra.mxu0 %v6613
    %6646 = vmatprep.subr.mxu0 0.0
    %6647 = vmatpush1.msra.mxu0 %v6614
    %6648 = vmatprep.subr.mxu0 0.0
    %6649 = vmatpush1.msra.mxu0 %v6615
    %6650 = vmatprep.subr.mxu0 0.0
    %6651 = vmatpush1.msra.mxu0 %v6616
    %6652 = vmatprep.subr.mxu0 0.0
    %6653 = vmatpush1.msra.mxu0 %v6617
    %6654 = vmatprep.subr.mxu0 0.0
    %6655 = vmatpush1.msra.mxu0 %v6618
    %6656 = vmatprep.subr.mxu0 0.0
    %6657 = vmatpush1.msra.mxu0 %v6619
    %6658 = vmatprep.subr.mxu0 0.0
    %6659 = vmatpush1.msra.mxu0 %v6620
    %6660 = vmatprep.subr.mxu0 0.0
    %6661 = vmatpush1.msra.mxu0 0.0
    %6662 = vmatprep.subr.mxu0 0.0
    %6663 = vmatpush1.msra.mxu0 0.0
    %6664 = vmatprep.subr.mxu0 0.0
    %6665 = vmatpush1.msra.mxu0 0.0
    %6666 = vmatprep.subr.mxu0 0.0
    %6667 = vmatpush1.msra.mxu0 0.0
    %6668 = vmatprep.subr.mxu0 0.0
    %6669 = vmatpush1.msra.mxu0 0.0
    %6670 = vmatprep.subr.mxu0 0.0
    %6671 = vmatpush1.msra.mxu0 0.0
    %6672 = vmatprep.subr.mxu0 0.0
    %6673 = vmatpush1.msra.mxu0 0.0
    %6674 = vmatprep.subr.mxu0 0.0
    %6675 = vmatpush1.msra.mxu0 0.0
    %6676 = vmatprep.subr.mxu0 0.0
    %6677 = vmatpush1.msra.mxu0 0.0
    %6678 = vmatprep.subr.mxu0 0.0
    %6679 = vmatpush1.msra.mxu0 0.0
    %6680 = vmatprep.subr.mxu0 0.0
    %6681 = vmatpush1.msra.mxu0 0.0
    %6682 = vmatprep.subr.mxu0 0.0
    %6683 = vmatpush1.msra.mxu0 0.0
    %6684 = vmatprep.subr.mxu0 0.0
    %6685 = vmatpush1.msra.mxu0 0.0
    %6686 = vmatprep.subr.mxu0 0.0
    %6687 = vmatpush1.msra.mxu0 0.0
    %6688 = vmatprep.mubr.f32.mxu0 %v6622
    %6689 = vmatmul.mubr.f32.gmra.mrb[0].mxu0 %v6598
    %v6690 = vpop.f32.mrb[0].mxu0
    %v6691 = vadd.f32 0.0, %v6690
    %v6692 = vpop.f32.mrb[0].mxu0
    %6693 = vdwg.mxu0
    %v6694 = vadd.f32 %v6523, %v6691
    %v6695 = vld [vmem:[%s12] sm:$0x1]
    %v6697 = vlaneseq
    %v6698 = vshrl.u32 %v6697, 7
    %v6699 = vsub.s32 0, %v6698
    %v6700 = vrot.slane %v6695, %v6699
    %v6702 = vadd.f32 %v6694, %v6700
    %v6703 = vmax.f32 %v6702, 0.0
    %v6704 = vld [vmem:[%s14] sm:$0x1]
    %v6705 = vld [vmem:[%s13] sm:$0xff]
    %v6706 = vld [vmem:[%s13 + $0x8] sm:$0xff]
    %v6707 = vld [vmem:[%s13 + $0x10] sm:$0xff]
    %v6708 = vld [vmem:[%s13 + $0x18] sm:$0xff]
    %v6709 = vld [vmem:[%s13 + $0x20] sm:$0xff]
    %v6710 = vld [vmem:[%s13 + $0x28] sm:$0xff]
    %v6711 = vld [vmem:[%s13 + $0x30] sm:$0xff]
    %v6712 = vld [vmem:[%s13 + $0x38] sm:$0xff]
    %vm6713 = vcmask 523264
    %v6715 = vsel %vm6713, %v6703, 0
    %6717 = vmatprep.subr.mxu0 0.0
    %6718 = vmatpush1.msra.mxu0 %v6705
    %6719 = vmatprep.subr.mxu0 0.0
    %6720 = vmatpush1.msra.mxu0 %v6706
    %6721 = vmatprep.subr.mxu0 0.0
    %6722 = vmatpush1.msra.mxu0 %v6707
    %6723 = vmatprep.subr.mxu0 0.0
    %6724 = vmatpush1.msra.mxu0 %v6708
    %6725 = vmatprep.subr.mxu0 0.0
    %6726 = vmatpush1.msra.mxu0 %v6709
    %6727 = vmatprep.subr.mxu0 0.0
    %6728 = vmatpush1.msra.mxu0 %v6710
    %6729 = vmatprep.subr.mxu0 0.0
    %6730 = vmatpush1.msra.mxu0 %v6711
    %6731 = vmatprep.subr.mxu0 0.0
    %6732 = vmatpush1.msra.mxu0 %v6712
    %6733 = vmatprep.subr.mxu0 0.0
    %6734 = vmatpush1.msra.mxu0 0.0
    %6735 = vmatprep.subr.mxu0 0.0
    %6736 = vmatpush1.msra.mxu0 0.0
    %6737 = vmatprep.subr.mxu0 0.0
    %6738 = vmatpush1.msra.mxu0 0.0
    %6739 = vmatprep.subr.mxu0 0.0
    %6740 = vmatpush1.msra.mxu0 0.0
    %6741 = vmatprep.subr.mxu0 0.0
    %6742 = vmatpush1.msra.mxu0 0.0
    %6743 = vmatprep.subr.mxu0 0.0
    %6744 = vmatpush1.msra.mxu0 0.0
    %6745 = vmatprep.subr.mxu0 0.0
    %6746 = vmatpush1.msra.mxu0 0.0
    %6747 = vmatprep.subr.mxu0 0.0
    %6748 = vmatpush1.msra.mxu0 0.0
    %6749 = vmatprep.subr.mxu0 0.0
    %6750 = vmatpush1.msra.mxu0 0.0
    %6751 = vmatprep.subr.mxu0 0.0
    %6752 = vmatpush1.msra.mxu0 0.0
    %6753 = vmatprep.subr.mxu0 0.0
    %6754 = vmatpush1.msra.mxu0 0.0
    %6755 = vmatprep.subr.mxu0 0.0
    %6756 = vmatpush1.msra.mxu0 0.0
    %6757 = vmatprep.subr.mxu0 0.0
    %6758 = vmatpush1.msra.mxu0 0.0
    %6759 = vmatprep.subr.mxu0 0.0
    %6760 = vmatpush1.msra.mxu0 0.0
    %6761 = vmatprep.subr.mxu0 0.0
    %6762 = vmatpush1.msra.mxu0 0.0
    %6763 = vmatprep.subr.mxu0 0.0
    %6764 = vmatpush1.msra.mxu0 0.0
    %6765 = vmatprep.subr.mxu0 0.0
    %6766 = vmatpush1.msra.mxu0 0.0
    %6767 = vmatprep.subr.mxu0 0.0
    %6768 = vmatpush1.msra.mxu0 0.0
    %6769 = vmatprep.subr.mxu0 0.0
    %6770 = vmatpush1.msra.mxu0 0.0
    %6771 = vmatprep.subr.mxu0 0.0
    %6772 = vmatpush1.msra.mxu0 0.0
    %6773 = vmatprep.subr.mxu0 0.0
    %6774 = vmatpush1.msra.mxu0 0.0
    %6775 = vmatprep.subr.mxu0 0.0
    %6776 = vmatpush1.msra.mxu0 0.0
    %6777 = vmatprep.subr.mxu0 0.0
    %6778 = vmatpush1.msra.mxu0 0.0
    %6779 = vmatprep.subr.mxu0 0.0
    %6780 = vmatpush1.msra.mxu0 0.0
    %6781 = vmatprep.mubr.f32.mxu0 0.0
    %6782 = vmatmul.mubr.f32.gmra.mrb[0].mxu0 %v6715
    %v6783 = vpop.f32.mrb[0].mxu0
    %v6784 = vadd.f32 0.0, %v6783
    %v6785 = vpop.f32.mrb[0].mxu0
    %6786 = vdwg.mxu0
    %v6787 = vadd.f32 %v6704, %v6784
    %s6788 = scalar_lea.vmem %s13, 64
    %v6789 = vld [vmem:[%s6788] sm:$0xff]
    %v6790 = vld [vmem:[%s6788 + $0x8] sm:$0xff]
    %v6791 = vld [vmem:[%s6788 + $0x10] sm:$0xff]
    %v6792 = vld [vmem:[%s6788 + $0x18] sm:$0xff]
    %v6793 = vld [vmem:[%s6788 + $0x20] sm:$0xff]
    %v6794 = vld [vmem:[%s6788 + $0x28] sm:$0xff]
    %v6795 = vld [vmem:[%s6788 + $0x30] sm:$0xff]
    %v6796 = vld [vmem:[%s6788 + $0x38] sm:$0xff]
    %v6797 = vrot.slane %v6703, 1
    %v6798 = vsel %vm6713, %v6797, 0
    %6800 = vmatprep.subr.mxu0 0.0
    %6801 = vmatpush1.msra.mxu0 %v6789
    %6802 = vmatprep.subr.mxu0 0.0
    %6803 = vmatpush1.msra.mxu0 %v6790
    %6804 = vmatprep.subr.mxu0 0.0
    %6805 = vmatpush1.msra.mxu0 %v6791
    %6806 = vmatprep.subr.mxu0 0.0
    %6807 = vmatpush1.msra.mxu0 %v6792
    %6808 = vmatprep.subr.mxu0 0.0
    %6809 = vmatpush1.msra.mxu0 %v6793
    %6810 = vmatprep.subr.mxu0 0.0
    %6811 = vmatpush1.msra.mxu0 %v6794
    %6812 = vmatprep.subr.mxu0 0.0
    %6813 = vmatpush1.msra.mxu0 %v6795
    %6814 = vmatprep.subr.mxu0 0.0
    %6815 = vmatpush1.msra.mxu0 %v6796
    %6816 = vmatprep.subr.mxu0 0.0
    %6817 = vmatpush1.msra.mxu0 0.0
    %6818 = vmatprep.subr.mxu0 0.0
    %6819 = vmatpush1.msra.mxu0 0.0
    %6820 = vmatprep.subr.mxu0 0.0
    %6821 = vmatpush1.msra.mxu0 0.0
    %6822 = vmatprep.subr.mxu0 0.0
    %6823 = vmatpush1.msra.mxu0 0.0
    %6824 = vmatprep.subr.mxu0 0.0
    %6825 = vmatpush1.msra.mxu0 0.0
    %6826 = vmatprep.subr.mxu0 0.0
    %6827 = vmatpush1.msra.mxu0 0.0
    %6828 = vmatprep.subr.mxu0 0.0
    %6829 = vmatpush1.msra.mxu0 0.0
    %6830 = vmatprep.subr.mxu0 0.0
    %6831 = vmatpush1.msra.mxu0 0.0
    %6832 = vmatprep.subr.mxu0 0.0
    %6833 = vmatpush1.msra.mxu0 0.0
    %6834 = vmatprep.subr.mxu0 0.0
    %6835 = vmatpush1.msra.mxu0 0.0
    %6836 = vmatprep.subr.mxu0 0.0
    %6837 = vmatpush1.msra.mxu0 0.0
    %6838 = vmatprep.subr.mxu0 0.0
    %6839 = vmatpush1.msra.mxu0 0.0
    %6840 = vmatprep.subr.mxu0 0.0
    %6841 = vmatpush1.msra.mxu0 0.0
    %6842 = vmatprep.subr.mxu0 0.0
    %6843 = vmatpush1.msra.mxu0 0.0
    %6844 = vmatprep.subr.mxu0 0.0
    %6845 = vmatpush1.msra.mxu0 0.0
    %6846 = vmatprep.subr.mxu0 0.0
    %6847 = vmatpush1.msra.mxu0 0.0
    %6848 = vmatprep.subr.mxu0 0.0
    %6849 = vmatpush1.msra.mxu0 0.0
    %6850 = vmatprep.subr.mxu0 0.0
    %6851 = vmatpush1.msra.mxu0 0.0
    %6852 = vmatprep.subr.mxu0 0.0
    %6853 = vmatpush1.msra.mxu0 0.0
    %6854 = vmatprep.subr.mxu0 0.0
    %6855 = vmatpush1.msra.mxu0 0.0
    %6856 = vmatprep.subr.mxu0 0.0
    %6857 = vmatpush1.msra.mxu0 0.0
    %6858 = vmatprep.subr.mxu0 0.0
    %6859 = vmatpush1.msra.mxu0 0.0
    %6860 = vmatprep.subr.mxu0 0.0
    %6861 = vmatpush1.msra.mxu0 0.0
    %6862 = vmatprep.subr.mxu0 0.0
    %6863 = vmatpush1.msra.mxu0 0.0
    %6864 = vmatprep.mubr.f32.mxu0 0.0
    %6865 = vmatmul.mubr.f32.gmra.mrb[0].mxu0 %v6798
    %v6866 = vpop.f32.mrb[0].mxu0
    %v6867 = vadd.f32 0.0, %v6866
    %v6868 = vpop.f32.mrb[0].mxu0
    %6869 = vdwg.mxu0
    %v6870 = vadd.f32 %v6787, %v6867
    %s6871 = scalar_lea.vmem %s13, 128
    %v6872 = vld [vmem:[%s6871] sm:$0xff]
    %v6873 = vld [vmem:[%s6871 + $0x8] sm:$0xff]
    %v6874 = vld [vmem:[%s6871 + $0x10] sm:$0xff]
    %v6875 = vld [vmem:[%s6871 + $0x18] sm:$0xff]
    %v6876 = vld [vmem:[%s6871 + $0x20] sm:$0xff]
    %v6877 = vld [vmem:[%s6871 + $0x28] sm:$0xff]
    %v6878 = vld [vmem:[%s6871 + $0x30] sm:$0xff]
    %v6879 = vld [vmem:[%s6871 + $0x38] sm:$0xff]
    %v6880 = vrot.slane %v6703, 2
    %v6881 = vsel %vm6713, %v6880, 0
    %6883 = vmatprep.subr.mxu0 0.0
    %6884 = vmatpush1.msra.mxu0 %v6872
    %6885 = vmatprep.subr.mxu0 0.0
    %6886 = vmatpush1.msra.mxu0 %v6873
    %6887 = vmatprep.subr.mxu0 0.0
    %6888 = vmatpush1.msra.mxu0 %v6874
    %6889 = vmatprep.subr.mxu0 0.0
    %6890 = vmatpush1.msra.mxu0 %v6875
    %6891 = vmatprep.subr.mxu0 0.0
    %6892 = vmatpush1.msra.mxu0 %v6876
    %6893 = vmatprep.subr.mxu0 0.0
    %6894 = vmatpush1.msra.mxu0 %v6877
    %6895 = vmatprep.subr.mxu0 0.0
    %6896 = vmatpush1.msra.mxu0 %v6878
    %6897 = vmatprep.subr.mxu0 0.0
    %6898 = vmatpush1.msra.mxu0 %v6879
    %6899 = vmatprep.subr.mxu0 0.0
    %6900 = vmatpush1.msra.mxu0 0.0
    %6901 = vmatprep.subr.mxu0 0.0
    %6902 = vmatpush1.msra.mxu0 0.0
    %6903 = vmatprep.subr.mxu0 0.0
    %6904 = vmatpush1.msra.mxu0 0.0
    %6905 = vmatprep.subr.mxu0 0.0
    %6906 = vmatpush1.msra.mxu0 0.0
    %6907 = vmatprep.subr.mxu0 0.0
    %6908 = vmatpush1.msra.mxu0 0.0
    %6909 = vmatprep.subr.mxu0 0.0
    %6910 = vmatpush1.msra.mxu0 0.0
    %6911 = vmatprep.subr.mxu0 0.0
    %6912 = vmatpush1.msra.mxu0 0.0
    %6913 = vmatprep.subr.mxu0 0.0
    %6914 = vmatpush1.msra.mxu0 0.0
    %6915 = vmatprep.subr.mxu0 0.0
    %6916 = vmatpush1.msra.mxu0 0.0
    %6917 = vmatprep.subr.mxu0 0.0
    %6918 = vmatpush1.msra.mxu0 0.0
    %6919 = vmatprep.subr.mxu0 0.0
    %6920 = vmatpush1.msra.mxu0 0.0
    %6921 = vmatprep.subr.mxu0 0.0
    %6922 = vmatpush1.msra.mxu0 0.0
    %6923 = vmatprep.subr.mxu0 0.0
    %6924 = vmatpush1.msra.mxu0 0.0
    %6925 = vmatprep.subr.mxu0 0.0
    %6926 = vmatpush1.msra.mxu0 0.0
    %6927 = vmatprep.subr.mxu0 0.0
    %6928 = vmatpush1.msra.mxu0 0.0
    %6929 = vmatprep.subr.mxu0 0.0
    %6930 = vmatpush1.msra.mxu0 0.0
    %6931 = vmatprep.subr.mxu0 0.0
    %6932 = vmatpush1.msra.mxu0 0.0
    %6933 = vmatprep.subr.mxu0 0.0
    %6934 = vmatpush1.msra.mxu0 0.0
    %6935 = vmatprep.subr.mxu0 0.0
    %6936 = vmatpush1.msra.mxu0 0.0
    %6937 = vmatprep.subr.mxu0 0.0
    %6938 = vmatpush1.msra.mxu0 0.0
    %6939 = vmatprep.subr.mxu0 0.0
    %6940 = vmatpush1.msra.mxu0 0.0
    %6941 = vmatprep.subr.mxu0 0.0
    %6942 = vmatpush1.msra.mxu0 0.0
    %6943 = vmatprep.subr.mxu0 0.0
    %6944 = vmatpush1.msra.mxu0 0.0
    %6945 = vmatprep.subr.mxu0 0.0
    %6946 = vmatpush1.msra.mxu0 0.0
    %6947 = vmatprep.mubr.f32.mxu0 0.0
    %6948 = vmatmul.mubr.f32.gmra.mrb[0].mxu0 %v6881
    %v6949 = vpop.f32.mrb[0].mxu0
    %v6950 = vadd.f32 0.0, %v6949
    %v6951 = vpop.f32.mrb[0].mxu0
    %6952 = vdwg.mxu0
    %v6953 = vadd.f32 %v6870, %v6950
    %s6954 = scalar_lea.vmem %s13, 192
    %v6955 = vld [vmem:[%s6954] sm:$0xff]
    %v6956 = vld [vmem:[%s6954 + $0x8] sm:$0xff]
    %v6957 = vld [vmem:[%s6954 + $0x10] sm:$0xff]
    %v6958 = vld [vmem:[%s6954 + $0x18] sm:$0xff]
    %v6959 = vld [vmem:[%s6954 + $0x20] sm:$0xff]
    %v6960 = vld [vmem:[%s6954 + $0x28] sm:$0xff]
    %v6961 = vld [vmem:[%s6954 + $0x30] sm:$0xff]
    %v6962 = vld [vmem:[%s6954 + $0x38] sm:$0xff]
    %v6963 = vrot.slane %v6703, 3
    %v6964 = vsel %vm6713, %v6963, 0
    %6966 = vmatprep.subr.mxu0 0.0
    %6967 = vmatpush1.msra.mxu0 %v6955
    %6968 = vmatprep.subr.mxu0 0.0
    %6969 = vmatpush1.msra.mxu0 %v6956
    %6970 = vmatprep.subr.mxu0 0.0
    %6971 = vmatpush1.msra.mxu0 %v6957
    %6972 = vmatprep.subr.mxu0 0.0
    %6973 = vmatpush1.msra.mxu0 %v6958
    %6974 = vmatprep.subr.mxu0 0.0
    %6975 = vmatpush1.msra.mxu0 %v6959
    %6976 = vmatprep.subr.mxu0 0.0
    %6977 = vmatpush1.msra.mxu0 %v6960
    %6978 = vmatprep.subr.mxu0 0.0
    %6979 = vmatpush1.msra.mxu0 %v6961
    %6980 = vmatprep.subr.mxu0 0.0
    %6981 = vmatpush1.msra.mxu0 %v6962
    %6982 = vmatprep.subr.mxu0 0.0
    %6983 = vmatpush1.msra.mxu0 0.0
    %6984 = vmatprep.subr.mxu0 0.0
    %6985 = vmatpush1.msra.mxu0 0.0
    %6986 = vmatprep.subr.mxu0 0.0
    %6987 = vmatpush1.msra.mxu0 0.0
    %6988 = vmatprep.subr.mxu0 0.0
    %6989 = vmatpush1.msra.mxu0 0.0
    %6990 = vmatprep.subr.mxu0 0.0
    %6991 = vmatpush1.msra.mxu0 0.0
    %6992 = vmatprep.subr.mxu0 0.0
    %6993 = vmatpush1.msra.mxu0 0.0
    %6994 = vmatprep.subr.mxu0 0.0
    %6995 = vmatpush1.msra.mxu0 0.0
    %6996 = vmatprep.subr.mxu0 0.0
    %6997 = vmatpush1.msra.mxu0 0.0
    %6998 = vmatprep.subr.mxu0 0.0
    %6999 = vmatpush1.msra.mxu0 0.0
    %7000 = vmatprep.subr.mxu0 0.0
    %7001 = vmatpush1.msra.mxu0 0.0
    %7002 = vmatprep.subr.mxu0 0.0
    %7003 = vmatpush1.msra.mxu0 0.0
    %7004 = vmatprep.subr.mxu0 0.0
    %7005 = vmatpush1.msra.mxu0 0.0
    %7006 = vmatprep.subr.mxu0 0.0
    %7007 = vmatpush1.msra.mxu0 0.0
    %7008 = vmatprep.subr.mxu0 0.0
    %7009 = vmatpush1.msra.mxu0 0.0
    %7010 = vmatprep.subr.mxu0 0.0
    %7011 = vmatpush1.msra.mxu0 0.0
    %7012 = vmatprep.subr.mxu0 0.0
    %7013 = vmatpush1.msra.mxu0 0.0
    %7014 = vmatprep.subr.mxu0 0.0
    %7015 = vmatpush1.msra.mxu0 0.0
    %7016 = vmatprep.subr.mxu0 0.0
    %7017 = vmatpush1.msra.mxu0 0.0
    %7018 = vmatprep.subr.mxu0 0.0
    %7019 = vmatpush1.msra.mxu0 0.0
    %7020 = vmatprep.subr.mxu0 0.0
    %7021 = vmatpush1.msra.mxu0 0.0
    %7022 = vmatprep.subr.mxu0 0.0
    %7023 = vmatpush1.msra.mxu0 0.0
    %7024 = vmatprep.subr.mxu0 0.0
    %7025 = vmatpush1.msra.mxu0 0.0
    %7026 = vmatprep.subr.mxu0 0.0
    %7027 = vmatpush1.msra.mxu0 0.0
    %7028 = vmatprep.subr.mxu0 0.0
    %7029 = vmatpush1.msra.mxu0 0.0
    %7030 = vmatprep.mubr.f32.mxu0 0.0
    %7031 = vmatmul.mubr.f32.gmra.mrb[0].mxu0 %v6964
    %v7032 = vpop.f32.mrb[0].mxu0
    %v7033 = vadd.f32 0.0, %v7032
    %v7034 = vpop.f32.mrb[0].mxu0
    %7035 = vdwg.mxu0
    %v7036 = vadd.f32 %v6953, %v7033
    %v7037 = vmax.f32 %v7036, 0.0
    %v7038 = vld [vmem:[%s15] sm:$0xff]
    %v7039 = vld [vmem:[%s15 + $0x8] sm:$0x3]
    %v7040 = vld [vmem:[#allocation2] sm:$0x1]
    %vm7041 = vcmask 80896
    %v7043 = vsel %vm7041, %v7037, 0
    %vm7045 = vcmask 1041408
    %v7047 = vsel %vm7045, %v7039, 0
    %7049 = vmatprep.subr.mxu0 0.0
    %7050 = vmatpush1.msra.mxu0 %v7038
    %7051 = vmatprep.subr.mxu0 0.0
    %7052 = vmatpush1.msra.mxu0 %v7047
    %7053 = vmatprep.subr.mxu0 0.0
    %7054 = vmatpush1.msra.mxu0 0.0
    %7055 = vmatprep.subr.mxu0 0.0
    %7056 = vmatpush1.msra.mxu0 0.0
    %7057 = vmatprep.subr.mxu0 0.0
    %7058 = vmatpush1.msra.mxu0 0.0
    %7059 = vmatprep.subr.mxu0 0.0
    %7060 = vmatpush1.msra.mxu0 0.0
    %7061 = vmatprep.subr.mxu0 0.0
    %7062 = vmatpush1.msra.mxu0 0.0
    %7063 = vmatprep.subr.mxu0 0.0
    %7064 = vmatpush1.msra.mxu0 0.0
    %7065 = vmatprep.subr.mxu0 0.0
    %7066 = vmatpush1.msra.mxu0 0.0
    %7067 = vmatprep.subr.mxu0 0.0
    %7068 = vmatpush1.msra.mxu0 0.0
    %7069 = vmatprep.subr.mxu0 0.0
    %7070 = vmatpush1.msra.mxu0 0.0
    %7071 = vmatprep.subr.mxu0 0.0
    %7072 = vmatpush1.msra.mxu0 0.0
    %7073 = vmatprep.subr.mxu0 0.0
    %7074 = vmatpush1.msra.mxu0 0.0
    %7075 = vmatprep.subr.mxu0 0.0
    %7076 = vmatpush1.msra.mxu0 0.0
    %7077 = vmatprep.subr.mxu0 0.0
    %7078 = vmatpush1.msra.mxu0 0.0
    %7079 = vmatprep.subr.mxu0 0.0
    %7080 = vmatpush1.msra.mxu0 0.0
    %7081 = vmatprep.subr.mxu0 0.0
    %7082 = vmatpush1.msra.mxu0 0.0
    %7083 = vmatprep.subr.mxu0 0.0
    %7084 = vmatpush1.msra.mxu0 0.0
    %7085 = vmatprep.subr.mxu0 0.0
    %7086 = vmatpush1.msra.mxu0 0.0
    %7087 = vmatprep.subr.mxu0 0.0
    %7088 = vmatpush1.msra.mxu0 0.0
    %7089 = vmatprep.subr.mxu0 0.0
    %7090 = vmatpush1.msra.mxu0 0.0
    %7091 = vmatprep.subr.mxu0 0.0
    %7092 = vmatpush1.msra.mxu0 0.0
    %7093 = vmatprep.subr.mxu0 0.0
    %7094 = vmatpush1.msra.mxu0 0.0
    %7095 = vmatprep.subr.mxu0 0.0
    %7096 = vmatpush1.msra.mxu0 0.0
    %7097 = vmatprep.subr.mxu0 0.0
    %7098 = vmatpush1.msra.mxu0 0.0
    %7099 = vmatprep.subr.mxu0 0.0
    %7100 = vmatpush1.msra.mxu0 0.0
    %7101 = vmatprep.subr.mxu0 0.0
    %7102 = vmatpush1.msra.mxu0 0.0
    %7103 = vmatprep.subr.mxu0 0.0
    %7104 = vmatpush1.msra.mxu0 0.0
    %7105 = vmatprep.subr.mxu0 0.0
    %7106 = vmatpush1.msra.mxu0 0.0
    %7107 = vmatprep.subr.mxu0 0.0
    %7108 = vmatpush1.msra.mxu0 0.0
    %7109 = vmatprep.subr.mxu0 0.0
    %7110 = vmatpush1.msra.mxu0 0.0
    %7111 = vmatprep.subr.mxu0 0.0
    %7112 = vmatpush1.msra.mxu0 0.0
    %7113 = vmatprep.mubr.f32.mxu0 0.0
    %7114 = vmatmul.mubr.f32.gmra.mrb[0].mxu0 %v7043
    %v7115 = vpop.f32.mrb[0].mxu0
    %v7116 = vadd.f32 %v7040, %v7115
    %v7117 = vpop.f32.mrb[0].mxu0
    %7118 = vdwg.mxu0
    %vm7119 = vcmask 0
    %7120 = vst.msk [vmem:[#allocation3] sm:$0x1] %vm7119, %v7116
    // Predicated region
    $region70: #{regression_net_forward.1} parent=1 // pred_check
      _
    $region71: #{regression_net_forward.1} parent=1 // pred_check_branch
      %7122 = sbr.rel (0) target = $region73
    $region72: #{regression_net_forward.1} parent=1 // pred_region
      %s7124 = ssub.s32 16, 16
      %7125 = vsyncadd [#allocation4], %s7124
      %s7127 = sshll.u32 [#allocation3], 4
      %s7128 = int_to_ptr.vmem [resolvable:$true] %s7127
      %7130 = dma.vmem_to_hbm [thread:$0]  %s7128, 16, %s17, [#allocation4]
    $region73: #{regression_net_forward.1} parent=1 // pred_fallthru
      _
    // Predicated region
    $region74: #{regression_net_forward.1} parent=1 // pred_check
      _
    $region75: #{regression_net_forward.1} parent=1 // pred_check_branch
      %7132 = sbr.rel (0) target = $region77
    $region76: #{regression_net_forward.1} parent=1 // pred_region
      %7133 = dma.done [#allocation4], 16
    $region77: #{regression_net_forward.1} parent=1 // pred_fallthru
      _
    %7134 = vsyncpa [#allocation4], 1

</llo_original>
